<compile_context>
chip_gen: v6e
topology: v6e:2x2x1
jax: 0.10.0
libtpu: 0.0.40
codegen_flags: <defaults>
</compile_context>

<pallas_src>
import jax
import jax.numpy as jnp
from jax.experimental import pallas as pl
from jax.experimental.pallas import tpu as pltpu


# ----------------------------------------------------------------------------
# Fused trunk kernel: conv0(+cat viewpoint) -> conv1 -> conv2 -> conv3
# ----------------------------------------------------------------------------
def _fused_trunk_kernel(p0_ref, v_ref, w0_ref, b0_ref, wv_ref, bv_ref,
                        w1_ref, b1_ref, w2_ref, b2_ref, w3_ref, b3_ref,
                        act3_ref, act0_ref, act1_ref, act2_ref):
    f32 = jnp.float32

    def leaky(x):
        # nn.LeakyReLU() default negative_slope = 0.01
        return jnp.where(x >= 0.0, x, 0.01 * x)

    # --- viewpoint_fc pre-activation; real outputs live in lanes 32:64 ------
    vp = jnp.dot(v_ref[...], wv_ref[...], preferred_element_type=f32)
    vp = vp + bv_ref[...]                                       # [16, 64] f32

    w0 = w0_ref[...]                                            # [36, 64] bf16
    b0 = b0_ref[...]                                            # [1, 64]  f32

    # --- image_conv (pre-extracted patches) + cat(viewpoint) + LeakyReLU ----
    def conv0_row(ho, carry):
        patch = p0_ref[ho]                                      # [496, 36] bf16
        acc = jnp.dot(patch, w0, preferred_element_type=f32) + b0
        # torch.cat((image, viewpoint), 1) == add of disjoint lane ranges.
        acc = acc.reshape(31, 16, 64) + vp[None, :, :]
        act0_ref[ho] = leaky(acc).astype(act0_ref.dtype)        # [31,16,64]
        return carry

    jax.lax.fori_loop(0, 31, conv0_row, 0)

    # --- generic 3x3 / stride-2 / VALID conv + LeakyReLU on [H,W,16,C] ------
    def conv_layer(in_ref, out_ref, w_ref, b_ref, h_out, w_out):
        cin = in_ref.shape[3]
        cout = w_ref.shape[2]
        bias = b_ref[...]                                       # [1, cout] f32

        def row(ho, carry):
            r0 = ho * 2
            acc = jnp.zeros((w_out * 16, cout), f32)
            for i in range(3):                                  # filter row
                ri = in_ref[r0 + i]                             # [W_in,16,cin]
                # stride-2 column selection via slice + reshape (no strided ld)
                ev = ri[0:2 * w_out].reshape(w_out, 2, 16, cin)
                od = ri[1:1 + 2 * w_out].reshape(w_out, 2, 16, cin)
                taps = (ev[:, 0], od[:, 0], od[:, 1])           # j = 0, 1, 2
                for j in range(3):                              # filter col
                    acc = acc + jnp.dot(taps[j].reshape(w_out * 16, cin),
                                        w_ref[i * 3 + j],
                                        preferred_element_type=f32)
            res = leaky(acc + bias).astype(out_ref.dtype)
            out_ref[ho] = res.reshape(w_out, 16, cout)
            return carry

        jax.lax.fori_loop(0, h_out, row, 0)

    conv_layer(act0_ref, act1_ref, w1_ref, b1_ref, 15, 15)  # [31,31,16,64]->[15,15,16,64]
    conv_layer(act1_ref, act2_ref, w2_ref, b2_ref, 7, 7)    # ->[7,7,16,128]
    conv_layer(act2_ref, act3_ref, w3_ref, b3_ref, 3, 3)    # ->[3,3,16,256]


# ----------------------------------------------------------------------------
# Final fc + sigmoid kernel
# ----------------------------------------------------------------------------
def _fc_sigmoid_kernel(x_ref, w_ref, b_ref, o_ref):
    acc = jnp.dot(x_ref[...], w_ref[...], preferred_element_type=jnp.float32)
    acc = acc + b_ref[...]
    o_ref[...] = 1.0 / (1.0 + jnp.exp(-acc))


# ----------------------------------------------------------------------------
# XLA glue: patch extraction for the first conv (4 input channels only)
# ----------------------------------------------------------------------------
def _conv0_patches(x1):
    """x1: [16,4,64,64] NCHW f32 -> patches [31, 31*16, 36] bf16.

    dim-1 row order is (wo, n); K order is tap-major (i*3+j), channel-minor,
    matching the `w0` slab layout.
    TODO(synk): move this 3x3/stride-2 extraction into the fused kernel.
    """
    n = x1.shape[0]
    x = jnp.transpose(x1, (0, 2, 3, 1)).astype(jnp.bfloat16)    # [N,64,64,4]
    taps = []
    for i in range(3):
        for j in range(3):
            taps.append(jax.lax.slice(x, (0, i, j, 0),
                                      (n, i + 61, j + 61, 4),
                                      (1, 2, 2, 1)))            # [N,31,31,4]
    p = jnp.stack(taps, axis=3)                                 # [N,31,31,9,4]
    p = jnp.transpose(p, (1, 2, 0, 3, 4))                       # [31,31,N,9,4]
    return p.reshape(31, 31 * n, 36)


# ----------------------------------------------------------------------------
# SpectralNorm (1 deterministic power iteration) -- init-time glue
# ----------------------------------------------------------------------------
def spectral_norm(key, w):
    out_dim = w.shape[0]
    w2 = w.reshape(out_dim, -1)
    u = jax.random.normal(key, (out_dim,), jnp.float32)
    u = u / (jnp.linalg.norm(u) + 1e-12)
    v = w2.T @ u
    v = v / (jnp.linalg.norm(v) + 1e-12)
    u = w2 @ v
    u = u / (jnp.linalg.norm(u) + 1e-12)
    sigma = u @ w2 @ v
    return (w2 / sigma).reshape(w.shape)


# ----------------------------------------------------------------------------
# Parameter construction (pre-transposed bf16 slabs, built once)
# ----------------------------------------------------------------------------
def init_params(key):
    ks = jax.random.split(key, 18)

    def w_init(k, shape, fan_in):
        return jax.random.normal(k, shape, jnp.float32) / jnp.sqrt(float(fan_in))

    def b_init(k, n, fan_in):
        bound = 1.0 / (float(fan_in) ** 0.5)
        return jax.random.uniform(k, (n,), jnp.float32, -bound, bound)

    ic_w = spectral_norm(ks[6], w_init(ks[0], (32, 4, 3, 3), 4 * 9))
    vp_w = spectral_norm(ks[7], w_init(ks[1], (32, 3), 3))
    c1_w = spectral_norm(ks[8], w_init(ks[2], (64, 64, 3, 3), 64 * 9))
    c2_w = spectral_norm(ks[9], w_init(ks[3], (128, 64, 3, 3), 64 * 9))
    c3_w = spectral_norm(ks[10], w_init(ks[4], (256, 128, 3, 3), 128 * 9))
    fc_w = spectral_norm(ks[11], w_init(ks[5], (1, 4 * 4 * 256), 4 * 4 * 256))

    ic_b = b_init(ks[12], 32, 4 * 9)
    vp_b = b_init(ks[13], 32, 3)
    c1_b = b_init(ks[14], 64, 64 * 9)
    c2_b = b_init(ks[15], 128, 64 * 9)
    c3_b = b_init(ks[16], 256, 128 * 9)
    fc_b = b_init(ks[17], 1, 4 * 4 * 256)

    def conv_tap_slab(w):
        # torch [Cout, Cin, 3, 3] -> [9, Cin, Cout] bf16 (tap t = i*3 + j)
        cout, cin = w.shape[0], w.shape[1]
        return (jnp.transpose(w, (2, 3, 1, 0))
                .reshape(9, cin, cout).astype(jnp.bfloat16))

    p = {}
    # image conv: K = (i*3+j)*4 + c, real outputs in lanes 0..31 of a 64 slab
    w0 = jnp.transpose(ic_w, (2, 3, 1, 0)).reshape(36, 32)
    p["w0"] = jnp.pad(w0, ((0, 0), (0, 32))).astype(jnp.bfloat16)      # [36,64]
    p["b0"] = jnp.zeros((1, 64), jnp.float32).at[0, :32].set(ic_b)
    # viewpoint fc: real outputs in lanes 32..63 (== torch.cat channel order)
    p["wv"] = jnp.pad(vp_w.T, ((0, 5), (32, 0))).astype(jnp.bfloat16)  # [8,64]
    p["bv"] = jnp.zeros((1, 64), jnp.float32).at[0, 32:].set(vp_b)
    # conv1/2/3 per-tap slabs (no zero input lanes)
    p["w1"] = conv_tap_slab(c1_w)                                      # [9,64,64]
    p["b1"] = c1_b.reshape(1, 64)
    p["w2"] = conv_tap_slab(c2_w)                                      # [9,64,128]
    p["b2"] = c2_b.reshape(1, 128)
    p["w3"] = conv_tap_slab(c3_w)                                      # [9,128,256]
    p["b3"] = c3_b.reshape(1, 256)
    # fc: 4096 -> 1 real output (padded to 128 lanes)
    p["wfc"] = jnp.pad(fc_w.T, ((0, 0), (0, 127))).astype(jnp.bfloat16)
    p["bfc"] = jnp.zeros((1, 128), jnp.float32).at[0, 0].set(fc_b[0])
    return p


# ----------------------------------------------------------------------------
# Discriminator forward
# ----------------------------------------------------------------------------
def discriminator_forward(params, x1, v1):
    n = x1.shape[0]
    assert n == 16, "the torch .view(-1, 4*4*256) flatten requires N == 16 here"

    p0 = _conv0_patches(x1)                                     # [31, 496, 36]
    v = jnp.pad(v1.astype(jnp.bfloat16), ((0, 0), (0, 5)))      # [16, 8]

    act3 = pl.pallas_call(
        _fused_trunk_kernel,
        out_shape=jax.ShapeDtypeStruct((3, 3, 16, 256), jnp.bfloat16),
        grid_spec=pltpu.PrefetchScalarGridSpec(
            num_scalar_prefetch=0,
            grid=(1,),
            in_specs=[
                pl.BlockSpec((31, 496, 36), lambda i: (0, 0, 0)),   # patches
                pl.BlockSpec((16, 8), lambda i: (0, 0)),            # viewpoint
                pl.BlockSpec((36, 64), lambda i: (0, 0)),           # w0
                pl.BlockSpec((1, 64), lambda i: (0, 0)),            # b0
                pl.BlockSpec((8, 64), lambda i: (0, 0)),            # wv
                pl.BlockSpec((1, 64), lambda i: (0, 0)),            # bv
                pl.BlockSpec((9, 64, 64), lambda i: (0, 0, 0)),     # w1
                pl.BlockSpec((1, 64), lambda i: (0, 0)),            # b1
                pl.BlockSpec((9, 64, 128), lambda i: (0, 0, 0)),    # w2
                pl.BlockSpec((1, 128), lambda i: (0, 0)),           # b2
                pl.BlockSpec((9, 128, 256), lambda i: (0, 0, 0)),   # w3
                pl.BlockSpec((1, 256), lambda i: (0, 0)),           # b3
            ],
            out_specs=pl.BlockSpec((3, 3, 16, 256), lambda i: (0, 0, 0, 0)),
            scratch_shapes=[
                pltpu.VMEM((31, 31, 16, 64), jnp.bfloat16),   # act0 (cat slab)
                pltpu.VMEM((15, 15, 16, 64), jnp.bfloat16),   # act1
                pltpu.VMEM((7, 7, 16, 128), jnp.bfloat16),    # act2
            ],
        ),
        compiler_params=pltpu.CompilerParams(
            dimension_semantics=("arbitrary",),
            vmem_limit_bytes=48 * 1024 * 1024,   # ~16 MiB used; v7x headroom
        ),
    )(p0, v, params["w0"], params["b0"], params["wv"], params["bv"],
      params["w1"], params["b1"], params["w2"], params["b2"],
      params["w3"], params["b3"])

    # GradReverse is identity in the forward pass.
    # torch .view(-1, 4*4*256) flattens NCHW memory order and mixes samples
    # (256*3*3 = 2304 != 4096) -- reproduced exactly.
    # TODO(synk): fold this tiny (72 KiB) transpose/reshape into the kernels.
    flat = jnp.transpose(act3, (2, 3, 0, 1)).reshape(-1, 4 * 4 * 256)   # [9,4096]
    rows = flat.shape[0]

    out = pl.pallas_call(
        _fc_sigmoid_kernel,
        out_shape=jax.ShapeDtypeStruct((rows, 128), jnp.float32),
        grid_spec=pltpu.PrefetchScalarGridSpec(
            num_scalar_prefetch=0,
            grid=(1,),
            in_specs=[
                pl.BlockSpec((rows, 4096), lambda i: (0, 0)),
                pl.BlockSpec((4096, 128), lambda i: (0, 0)),
                pl.BlockSpec((1, 128), lambda i: (0, 0)),
            ],
            out_specs=pl.BlockSpec((rows, 128), lambda i: (0, 0)),
        ),
    )(flat, params["wfc"], params["bfc"])
    return out[:, :1]                                           # [9, 1]


if __name__ == "__main__":
    key = jax.random.PRNGKey(0)
    kx, kv, kp = jax.random.split(key, 3)

    # N must be a multiple of 16 so that N*256*3*3 divides by 4*4*256,
    # exactly as the original .view(-1, 4*4*256) requires.
    N = 16
    x1 = jax.random.normal(kx, (N, 4, 64, 64), jnp.float32)   # NCHW, like torch
    v1 = jax.random.normal(kv, (N, 3), jnp.float32)

    params = init_params(kp)

    fwd = jax.jit(discriminator_forward)
    out = jax.block_until_ready(fwd(params, x1, v1))

    assert out.shape == (N * 256 * 3 * 3 // (4 * 4 * 256), 1), out.shape
    assert bool(jnp.all(jnp.isfinite(out)))
    assert bool(jnp.all((out >= 0.0) & (out <= 1.0)))
    print("KERNEL_OK")
</pallas_src>

<mosaic_0001>
module attributes {stable_mosaic.version = 11 : i64} {
  func.func @_fused_trunk_kernel(%arg0: i32, %arg1: memref<31x496x36xbf16, #tpu.memory_space<vmem>>, %arg2: memref<16x8xbf16, #tpu.memory_space<vmem>>, %arg3: memref<36x64xbf16, #tpu.memory_space<vmem>>, %arg4: memref<1x64xf32, #tpu.memory_space<vmem>>, %arg5: memref<8x64xbf16, #tpu.memory_space<vmem>>, %arg6: memref<1x64xf32, #tpu.memory_space<vmem>>, %arg7: memref<9x64x64xbf16, #tpu.memory_space<vmem>>, %arg8: memref<1x64xf32, #tpu.memory_space<vmem>>, %arg9: memref<9x64x128xbf16, #tpu.memory_space<vmem>>, %arg10: memref<1x128xf32, #tpu.memory_space<vmem>>, %arg11: memref<9x128x256xbf16, #tpu.memory_space<vmem>>, %arg12: memref<1x256xf32, #tpu.memory_space<vmem>>, %arg13: memref<3x3x16x256xbf16, #tpu.memory_space<vmem>>, %arg14: memref<31x31x16x64xbf16, #tpu.memory_space<vmem>>, %arg15: memref<15x15x16x64xbf16, #tpu.memory_space<vmem>>, %arg16: memref<7x7x16x128xbf16, #tpu.memory_space<vmem>>) attributes {dimension_semantics = [#tpu.dimension_semantics<arbitrary>], iteration_bounds = array<i64: 1>, scalar_prefetch = 0 : i64, scratch_operands = 3 : i64, tpu.core_type = #tpu.core_type<tc>, window_params = [{pipeline_mode = #tpu.pipeline_mode<synchronous>, transform_indices = @transform_0, window_bounds = array<i64: 31, 496, 36>}, {pipeline_mode = #tpu.pipeline_mode<synchronous>, transform_indices = @transform_1, window_bounds = array<i64: 16, 8>}, {pipeline_mode = #tpu.pipeline_mode<synchronous>, transform_indices = @transform_2, window_bounds = array<i64: 36, 64>}, {pipeline_mode = #tpu.pipeline_mode<synchronous>, transform_indices = @transform_3, window_bounds = array<i64: 1, 64>}, {pipeline_mode = #tpu.pipeline_mode<synchronous>, transform_indices = @transform_4, window_bounds = array<i64: 8, 64>}, {pipeline_mode = #tpu.pipeline_mode<synchronous>, transform_indices = @transform_5, window_bounds = array<i64: 1, 64>}, {pipeline_mode = #tpu.pipeline_mode<synchronous>, transform_indices = @transform_6, window_bounds = array<i64: 9, 64, 64>}, {pipeline_mode = #tpu.pipeline_mode<synchronous>, transform_indices = @transform_7, window_bounds = array<i64: 1, 64>}, {pipeline_mode = #tpu.pipeline_mode<synchronous>, transform_indices = @transform_8, window_bounds = array<i64: 9, 64, 128>}, {pipeline_mode = #tpu.pipeline_mode<synchronous>, transform_indices = @transform_9, window_bounds = array<i64: 1, 128>}, {pipeline_mode = #tpu.pipeline_mode<synchronous>, transform_indices = @transform_10, window_bounds = array<i64: 9, 128, 256>}, {pipeline_mode = #tpu.pipeline_mode<synchronous>, transform_indices = @transform_11, window_bounds = array<i64: 1, 256>}, {pipeline_mode = #tpu.pipeline_mode<synchronous>, transform_indices = @transform_12, window_bounds = array<i64: 3, 3, 16, 256>}]} {
    %c0 = arith.constant 0 : index
    %c0_0 = arith.constant 0 : index
    %0 = vector.load %arg2[%c0, %c0_0] : memref<16x8xbf16, #tpu.memory_space<vmem>>, vector<16x8xbf16>
    %c0_1 = arith.constant 0 : index
    %c0_2 = arith.constant 0 : index
    %1 = vector.load %arg5[%c0_1, %c0_2] : memref<8x64xbf16, #tpu.memory_space<vmem>>, vector<8x64xbf16>
    %cst = arith.constant dense<0.000000e+00> : vector<16x64xf32>
    %2 = tpu.matmul %0, %1, %cst {dimension_numbers = #tpu.dot_dimension_numbers<[1], [0], [0], [1], [0, 0, 1, 1], [], []>} : vector<16x8xbf16>, vector<8x64xbf16>, vector<16x64xf32> -> vector<16x64xf32>
    %c0_3 = arith.constant 0 : index
    %c0_4 = arith.constant 0 : index
    %3 = vector.load %arg6[%c0_3, %c0_4] : memref<1x64xf32, #tpu.memory_space<vmem>>, vector<1x64xf32>
    %4 = vector.broadcast %3 : vector<1x64xf32> to vector<16x64xf32>
    %5 = arith.addf %2, %4 : vector<16x64xf32>
    %c0_5 = arith.constant 0 : index
    %c0_6 = arith.constant 0 : index
    %6 = vector.load %arg3[%c0_5, %c0_6] : memref<36x64xbf16, #tpu.memory_space<vmem>>, vector<36x64xbf16>
    %c0_7 = arith.constant 0 : index
    %c0_8 = arith.constant 0 : index
    %7 = vector.load %arg4[%c0_7, %c0_8] : memref<1x64xf32, #tpu.memory_space<vmem>>, vector<1x64xf32>
    %c0_i32 = arith.constant 0 : i32
    %c31_i32 = arith.constant 31 : i32
    %8 = arith.addi %c0_i32, %c31_i32 : i32
    %c1_i32 = arith.constant 1 : i32
    scf.for %arg17 = %c0_i32 to %8 step %c1_i32  : i32 {
      %15 = arith.index_cast %arg17 : i32 to index
      %c0_25 = arith.constant 0 : index
      %c0_26 = arith.constant 0 : index
      %16 = vector.load %arg1[%15, %c0_25, %c0_26] : memref<31x496x36xbf16, #tpu.memory_space<vmem>>, vector<1x496x36xbf16>
      %17 = vector.shape_cast %16 : vector<1x496x36xbf16> to vector<496x36xbf16>
      %cst_27 = arith.constant dense<0.000000e+00> : vector<496x64xf32>
      %18 = tpu.matmul %17, %6, %cst_27 {dimension_numbers = #tpu.dot_dimension_numbers<[1], [0], [0], [1], [0, 0, 1, 1], [], []>} : vector<496x36xbf16>, vector<36x64xbf16>, vector<496x64xf32> -> vector<496x64xf32>
      %19 = vector.broadcast %7 : vector<1x64xf32> to vector<496x64xf32>
      %20 = arith.addf %18, %19 : vector<496x64xf32>
      %21 = vector.shape_cast %20 : vector<496x64xf32> to vector<31x16x64xf32>
      %22 = vector.shape_cast %5 : vector<16x64xf32> to vector<1x16x64xf32>
      %23 = vector.broadcast %22 : vector<1x16x64xf32> to vector<31x16x64xf32>
      %24 = arith.addf %21, %23 : vector<31x16x64xf32>
      %cst_28 = arith.constant 0.000000e+00 : f32
      %25 = vector.broadcast %cst_28 : f32 to vector<31x16x64xf32>
      %26 = arith.cmpf oge, %24, %25 : vector<31x16x64xf32>
      %cst_29 = arith.constant 0.00999999977 : f32
      %27 = vector.broadcast %cst_29 : f32 to vector<31x16x64xf32>
      %28 = arith.mulf %27, %24 : vector<31x16x64xf32>
      %29 = arith.select %26, %24, %28 : vector<31x16x64xi1>, vector<31x16x64xf32>
      %30 = arith.truncf %29 : vector<31x16x64xf32> to vector<31x16x64xbf16>
      %31 = arith.index_cast %arg17 : i32 to index
      %c0_30 = arith.constant 0 : index
      %c0_31 = arith.constant 0 : index
      %c0_32 = arith.constant 0 : index
      %32 = vector.load %arg14[%31, %c0_30, %c0_31, %c0_32] : memref<31x31x16x64xbf16, #tpu.memory_space<vmem>>, vector<1x31x16x64xbf16>
      %33 = vector.shape_cast %32 : vector<1x31x16x64xbf16> to vector<31x16x64xbf16>
      %34 = vector.shape_cast %30 : vector<31x16x64xbf16> to vector<1x31x16x64xbf16>
      tpu.vector_store %arg14[%31, %c0_30, %c0_31, %c0_32], %34 {strides = array<i32>} : memref<31x31x16x64xbf16, #tpu.memory_space<vmem>>, vector<1x31x16x64xbf16>,
    }
    %c31_i32_9 = arith.constant 31 : i32
    %c0_10 = arith.constant 0 : index
    %c0_11 = arith.constant 0 : index
    %9 = vector.load %arg8[%c0_10, %c0_11] : memref<1x64xf32, #tpu.memory_space<vmem>>, vector<1x64xf32>
    %c0_i32_12 = arith.constant 0 : i32
    %c15_i32 = arith.constant 15 : i32
    %10 = arith.addi %c0_i32_12, %c15_i32 : i32
    %c1_i32_13 = arith.constant 1 : i32
    scf.for %arg17 = %c0_i32_12 to %10 step %c1_i32_13  : i32 {
      %c2_i32 = arith.constant 2 : i32
      %15 = arith.muli %arg17, %c2_i32 : i32
      %cst_25 = arith.constant 0.000000e+00 : f32
      %16 = vector.broadcast %cst_25 : f32 to vector<240x64xf32>
      %c0_i32_26 = arith.constant 0 : i32
      %17 = arith.addi %15, %c0_i32_26 : i32
      %18 = arith.index_cast %17 : i32 to index
      %c0_27 = arith.constant 0 : index
      %c0_28 = arith.constant 0 : index
      %c0_29 = arith.constant 0 : index
      %19 = vector.load %arg14[%18, %c0_27, %c0_28, %c0_29] : memref<31x31x16x64xbf16, #tpu.memory_space<vmem>>, vector<1x31x16x64xbf16>
      %20 = vector.shape_cast %19 : vector<1x31x16x64xbf16> to vector<31x16x64xbf16>
      %21 = vector.extract_strided_slice %20 {offsets = [0, 0, 0], sizes = [30, 16, 64], strides = [1, 1, 1]} : vector<31x16x64xbf16> to vector<30x16x64xbf16>
      %22 = vector.shape_cast %21 : vector<30x16x64xbf16> to vector<15x2x16x64xbf16>
      %23 = vector.extract_strided_slice %20 {offsets = [1, 0, 0], sizes = [30, 16, 64], strides = [1, 1, 1]} : vector<31x16x64xbf16> to vector<30x16x64xbf16>
      %24 = vector.shape_cast %23 : vector<30x16x64xbf16> to vector<15x2x16x64xbf16>
      %25 = vector.extract_strided_slice %22 {offsets = [0, 0, 0, 0], sizes = [15, 1, 16, 64], strides = [1, 1, 1, 1]} : vector<15x2x16x64xbf16> to vector<15x1x16x64xbf16>
      %26 = vector.shape_cast %25 : vector<15x1x16x64xbf16> to vector<15x16x64xbf16>
      %27 = vector.extract_strided_slice %24 {offsets = [0, 0, 0, 0], sizes = [15, 1, 16, 64], strides = [1, 1, 1, 1]} : vector<15x2x16x64xbf16> to vector<15x1x16x64xbf16>
      %28 = vector.shape_cast %27 : vector<15x1x16x64xbf16> to vector<15x16x64xbf16>
      %29 = vector.extract_strided_slice %24 {offsets = [0, 1, 0, 0], sizes = [15, 1, 16, 64], strides = [1, 1, 1, 1]} : vector<15x2x16x64xbf16> to vector<15x1x16x64xbf16>
      %30 = vector.shape_cast %29 : vector<15x1x16x64xbf16> to vector<15x16x64xbf16>
      %31 = vector.shape_cast %26 : vector<15x16x64xbf16> to vector<240x64xbf16>
      %c0_30 = arith.constant 0 : index
      %c0_31 = arith.constant 0 : index
      %c0_32 = arith.constant 0 : index
      %32 = vector.load %arg7[%c0_30, %c0_31, %c0_32] : memref<9x64x64xbf16, #tpu.memory_space<vmem>>, vector<1x64x64xbf16>
      %33 = vector.shape_cast %32 : vector<1x64x64xbf16> to vector<64x64xbf16>
      %cst_33 = arith.constant dense<0.000000e+00> : vector<240x64xf32>
      %34 = tpu.matmul %31, %33, %cst_33 {dimension_numbers = #tpu.dot_dimension_numbers<[1], [0], [0], [1], [0, 0, 1, 1], [], []>} : vector<240x64xbf16>, vector<64x64xbf16>, vector<240x64xf32> -> vector<240x64xf32>
      %35 = arith.addf %16, %34 : vector<240x64xf32>
      %36 = vector.shape_cast %28 : vector<15x16x64xbf16> to vector<240x64xbf16>
      %c1 = arith.constant 1 : index
      %c0_34 = arith.constant 0 : index
      %c0_35 = arith.constant 0 : index
      %37 = vector.load %arg7[%c1, %c0_34, %c0_35] : memref<9x64x64xbf16, #tpu.memory_space<vmem>>, vector<1x64x64xbf16>
      %38 = vector.shape_cast %37 : vector<1x64x64xbf16> to vector<64x64xbf16>
      %cst_36 = arith.constant dense<0.000000e+00> : vector<240x64xf32>
      %39 = tpu.matmul %36, %38, %cst_36 {dimension_numbers = #tpu.dot_dimension_numbers<[1], [0], [0], [1], [0, 0, 1, 1], [], []>} : vector<240x64xbf16>, vector<64x64xbf16>, vector<240x64xf32> -> vector<240x64xf32>
      %40 = arith.addf %35, %39 : vector<240x64xf32>
      %41 = vector.shape_cast %30 : vector<15x16x64xbf16> to vector<240x64xbf16>
      %c2 = arith.constant 2 : index
      %c0_37 = arith.constant 0 : index
      %c0_38 = arith.constant 0 : index
      %42 = vector.load %arg7[%c2, %c0_37, %c0_38] : memref<9x64x64xbf16, #tpu.memory_space<vmem>>, vector<1x64x64xbf16>
      %43 = vector.shape_cast %42 : vector<1x64x64xbf16> to vector<64x64xbf16>
      %cst_39 = arith.constant dense<0.000000e+00> : vector<240x64xf32>
      %44 = tpu.matmul %41, %43, %cst_39 {dimension_numbers = #tpu.dot_dimension_numbers<[1], [0], [0], [1], [0, 0, 1, 1], [], []>} : vector<240x64xbf16>, vector<64x64xbf16>, vector<240x64xf32> -> vector<240x64xf32>
      %45 = arith.addf %40, %44 : vector<240x64xf32>
      %c1_i32_40 = arith.constant 1 : i32
      %46 = arith.addi %15, %c1_i32_40 : i32
      %47 = arith.index_cast %46 : i32 to index
      %c0_41 = arith.constant 0 : index
      %c0_42 = arith.constant 0 : index
      %c0_43 = arith.constant 0 : index
      %48 = vector.load %arg14[%47, %c0_41, %c0_42, %c0_43] : memref<31x31x16x64xbf16, #tpu.memory_space<vmem>>, vector<1x31x16x64xbf16>
      %49 = vector.shape_cast %48 : vector<1x31x16x64xbf16> to vector<31x16x64xbf16>
      %50 = vector.extract_strided_slice %49 {offsets = [0, 0, 0], sizes = [30, 16, 64], strides = [1, 1, 1]} : vector<31x16x64xbf16> to vector<30x16x64xbf16>
      %51 = vector.shape_cast %50 : vector<30x16x64xbf16> to vector<15x2x16x64xbf16>
      %52 = vector.extract_strided_slice %49 {offsets = [1, 0, 0], sizes = [30, 16, 64], strides = [1, 1, 1]} : vector<31x16x64xbf16> to vector<30x16x64xbf16>
      %53 = vector.shape_cast %52 : vector<30x16x64xbf16> to vector<15x2x16x64xbf16>
      %54 = vector.extract_strided_slice %51 {offsets = [0, 0, 0, 0], sizes = [15, 1, 16, 64], strides = [1, 1, 1, 1]} : vector<15x2x16x64xbf16> to vector<15x1x16x64xbf16>
      %55 = vector.shape_cast %54 : vector<15x1x16x64xbf16> to vector<15x16x64xbf16>
      %56 = vector.extract_strided_slice %53 {offsets = [0, 0, 0, 0], sizes = [15, 1, 16, 64], strides = [1, 1, 1, 1]} : vector<15x2x16x64xbf16> to vector<15x1x16x64xbf16>
      %57 = vector.shape_cast %56 : vector<15x1x16x64xbf16> to vector<15x16x64xbf16>
      %58 = vector.extract_strided_slice %53 {offsets = [0, 1, 0, 0], sizes = [15, 1, 16, 64], strides = [1, 1, 1, 1]} : vector<15x2x16x64xbf16> to vector<15x1x16x64xbf16>
      %59 = vector.shape_cast %58 : vector<15x1x16x64xbf16> to vector<15x16x64xbf16>
      %60 = vector.shape_cast %55 : vector<15x16x64xbf16> to vector<240x64xbf16>
      %c3 = arith.constant 3 : index
      %c0_44 = arith.constant 0 : index
      %c0_45 = arith.constant 0 : index
      %61 = vector.load %arg7[%c3, %c0_44, %c0_45] : memref<9x64x64xbf16, #tpu.memory_space<vmem>>, vector<1x64x64xbf16>
      %62 = vector.shape_cast %61 : vector<1x64x64xbf16> to vector<64x64xbf16>
      %cst_46 = arith.constant dense<0.000000e+00> : vector<240x64xf32>
      %63 = tpu.matmul %60, %62, %cst_46 {dimension_numbers = #tpu.dot_dimension_numbers<[1], [0], [0], [1], [0, 0, 1, 1], [], []>} : vector<240x64xbf16>, vector<64x64xbf16>, vector<240x64xf32> -> vector<240x64xf32>
      %64 = arith.addf %45, %63 : vector<240x64xf32>
      %65 = vector.shape_cast %57 : vector<15x16x64xbf16> to vector<240x64xbf16>
      %c4 = arith.constant 4 : index
      %c0_47 = arith.constant 0 : index
      %c0_48 = arith.constant 0 : index
      %66 = vector.load %arg7[%c4, %c0_47, %c0_48] : memref<9x64x64xbf16, #tpu.memory_space<vmem>>, vector<1x64x64xbf16>
      %67 = vector.shape_cast %66 : vector<1x64x64xbf16> to vector<64x64xbf16>
      %cst_49 = arith.constant dense<0.000000e+00> : vector<240x64xf32>
      %68 = tpu.matmul %65, %67, %cst_49 {dimension_numbers = #tpu.dot_dimension_numbers<[1], [0], [0], [1], [0, 0, 1, 1], [], []>} : vector<240x64xbf16>, vector<64x64xbf16>, vector<240x64xf32> -> vector<240x64xf32>
      %69 = arith.addf %64, %68 : vector<240x64xf32>
      %70 = vector.shape_cast %59 : vector<15x16x64xbf16> to vector<240x64xbf16>
      %c5 = arith.constant 5 : index
      %c0_50 = arith.constant 0 : index
      %c0_51 = arith.constant 0 : index
      %71 = vector.load %arg7[%c5, %c0_50, %c0_51] : memref<9x64x64xbf16, #tpu.memory_space<vmem>>, vector<1x64x64xbf16>
      %72 = vector.shape_cast %71 : vector<1x64x64xbf16> to vector<64x64xbf16>
      %cst_52 = arith.constant dense<0.000000e+00> : vector<240x64xf32>
      %73 = tpu.matmul %70, %72, %cst_52 {dimension_numbers = #tpu.dot_dimension_numbers<[1], [0], [0], [1], [0, 0, 1, 1], [], []>} : vector<240x64xbf16>, vector<64x64xbf16>, vector<240x64xf32> -> vector<240x64xf32>
      %74 = arith.addf %69, %73 : vector<240x64xf32>
      %c2_i32_53 = arith.constant 2 : i32
      %75 = arith.addi %15, %c2_i32_53 : i32
      %76 = arith.index_cast %75 : i32 to index
      %c0_54 = arith.constant 0 : index
      %c0_55 = arith.constant 0 : index
      %c0_56 = arith.constant 0 : index
      %77 = vector.load %arg14[%76, %c0_54, %c0_55, %c0_56] : memref<31x31x16x64xbf16, #tpu.memory_space<vmem>>, vector<1x31x16x64xbf16>
      %78 = vector.shape_cast %77 : vector<1x31x16x64xbf16> to vector<31x16x64xbf16>
      %79 = vector.extract_strided_slice %78 {offsets = [0, 0, 0], sizes = [30, 16, 64], strides = [1, 1, 1]} : vector<31x16x64xbf16> to vector<30x16x64xbf16>
      %80 = vector.shape_cast %79 : vector<30x16x64xbf16> to vector<15x2x16x64xbf16>
      %81 = vector.extract_strided_slice %78 {offsets = [1, 0, 0], sizes = [30, 16, 64], strides = [1, 1, 1]} : vector<31x16x64xbf16> to vector<30x16x64xbf16>
      %82 = vector.shape_cast %81 : vector<30x16x64xbf16> to vector<15x2x16x64xbf16>
      %83 = vector.extract_strided_slice %80 {offsets = [0, 0, 0, 0], sizes = [15, 1, 16, 64], strides = [1, 1, 1, 1]} : vector<15x2x16x64xbf16> to vector<15x1x16x64xbf16>
      %84 = vector.shape_cast %83 : vector<15x1x16x64xbf16> to vector<15x16x64xbf16>
      %85 = vector.extract_strided_slice %82 {offsets = [0, 0, 0, 0], sizes = [15, 1, 16, 64], strides = [1, 1, 1, 1]} : vector<15x2x16x64xbf16> to vector<15x1x16x64xbf16>
      %86 = vector.shape_cast %85 : vector<15x1x16x64xbf16> to vector<15x16x64xbf16>
      %87 = vector.extract_strided_slice %82 {offsets = [0, 1, 0, 0], sizes = [15, 1, 16, 64], strides = [1, 1, 1, 1]} : vector<15x2x16x64xbf16> to vector<15x1x16x64xbf16>
      %88 = vector.shape_cast %87 : vector<15x1x16x64xbf16> to vector<15x16x64xbf16>
      %89 = vector.shape_cast %84 : vector<15x16x64xbf16> to vector<240x64xbf16>
      %c6 = arith.constant 6 : index
      %c0_57 = arith.constant 0 : index
      %c0_58 = arith.constant 0 : index
      %90 = vector.load %arg7[%c6, %c0_57, %c0_58] : memref<9x64x64xbf16, #tpu.memory_space<vmem>>, vector<1x64x64xbf16>
      %91 = vector.shape_cast %90 : vector<1x64x64xbf16> to vector<64x64xbf16>
      %cst_59 = arith.constant dense<0.000000e+00> : vector<240x64xf32>
      %92 = tpu.matmul %89, %91, %cst_59 {dimension_numbers = #tpu.dot_dimension_numbers<[1], [0], [0], [1], [0, 0, 1, 1], [], []>} : vector<240x64xbf16>, vector<64x64xbf16>, vector<240x64xf32> -> vector<240x64xf32>
      %93 = arith.addf %74, %92 : vector<240x64xf32>
      %94 = vector.shape_cast %86 : vector<15x16x64xbf16> to vector<240x64xbf16>
      %c7 = arith.constant 7 : index
      %c0_60 = arith.constant 0 : index
      %c0_61 = arith.constant 0 : index
      %95 = vector.load %arg7[%c7, %c0_60, %c0_61] : memref<9x64x64xbf16, #tpu.memory_space<vmem>>, vector<1x64x64xbf16>
      %96 = vector.shape_cast %95 : vector<1x64x64xbf16> to vector<64x64xbf16>
      %cst_62 = arith.constant dense<0.000000e+00> : vector<240x64xf32>
      %97 = tpu.matmul %94, %96, %cst_62 {dimension_numbers = #tpu.dot_dimension_numbers<[1], [0], [0], [1], [0, 0, 1, 1], [], []>} : vector<240x64xbf16>, vector<64x64xbf16>, vector<240x64xf32> -> vector<240x64xf32>
      %98 = arith.addf %93, %97 : vector<240x64xf32>
      %99 = vector.shape_cast %88 : vector<15x16x64xbf16> to vector<240x64xbf16>
      %c8 = arith.constant 8 : index
      %c0_63 = arith.constant 0 : index
      %c0_64 = arith.constant 0 : index
      %100 = vector.load %arg7[%c8, %c0_63, %c0_64] : memref<9x64x64xbf16, #tpu.memory_space<vmem>>, vector<1x64x64xbf16>
      %101 = vector.shape_cast %100 : vector<1x64x64xbf16> to vector<64x64xbf16>
      %cst_65 = arith.constant dense<0.000000e+00> : vector<240x64xf32>
      %102 = tpu.matmul %99, %101, %cst_65 {dimension_numbers = #tpu.dot_dimension_numbers<[1], [0], [0], [1], [0, 0, 1, 1], [], []>} : vector<240x64xbf16>, vector<64x64xbf16>, vector<240x64xf32> -> vector<240x64xf32>
      %103 = arith.addf %98, %102 : vector<240x64xf32>
      %104 = vector.broadcast %9 : vector<1x64xf32> to vector<240x64xf32>
      %105 = arith.addf %103, %104 : vector<240x64xf32>
      %cst_66 = arith.constant 0.000000e+00 : f32
      %106 = vector.broadcast %cst_66 : f32 to vector<240x64xf32>
      %107 = arith.cmpf oge, %105, %106 : vector<240x64xf32>
      %cst_67 = arith.constant 0.00999999977 : f32
      %108 = vector.broadcast %cst_67 : f32 to vector<240x64xf32>
      %109 = arith.mulf %108, %105 : vector<240x64xf32>
      %110 = arith.select %107, %105, %109 : vector<240x64xi1>, vector<240x64xf32>
      %111 = arith.truncf %110 : vector<240x64xf32> to vector<240x64xbf16>
      %112 = vector.shape_cast %111 : vector<240x64xbf16> to vector<15x16x64xbf16>
      %113 = arith.index_cast %arg17 : i32 to index
      %c0_68 = arith.constant 0 : index
      %c0_69 = arith.constant 0 : index
      %c0_70 = arith.constant 0 : index
      %114 = vector.load %arg15[%113, %c0_68, %c0_69, %c0_70] : memref<15x15x16x64xbf16, #tpu.memory_space<vmem>>, vector<1x15x16x64xbf16>
      %115 = vector.shape_cast %114 : vector<1x15x16x64xbf16> to vector<15x16x64xbf16>
      %116 = vector.shape_cast %112 : vector<15x16x64xbf16> to vector<1x15x16x64xbf16>
      tpu.vector_store %arg15[%113, %c0_68, %c0_69, %c0_70], %116 {strides = array<i32>} : memref<15x15x16x64xbf16, #tpu.memory_space<vmem>>, vector<1x15x16x64xbf16>,
    }
    %c15_i32_14 = arith.constant 15 : i32
    %c0_15 = arith.constant 0 : index
    %c0_16 = arith.constant 0 : index
    %11 = vector.load %arg10[%c0_15, %c0_16] : memref<1x128xf32, #tpu.memory_space<vmem>>, vector<1x128xf32>
    %c0_i32_17 = arith.constant 0 : i32
    %c7_i32 = arith.constant 7 : i32
    %12 = arith.addi %c0_i32_17, %c7_i32 : i32
    %c1_i32_18 = arith.constant 1 : i32
    scf.for %arg17 = %c0_i32_17 to %12 step %c1_i32_18  : i32 {
      %c2_i32 = arith.constant 2 : i32
      %15 = arith.muli %arg17, %c2_i32 : i32
      %cst_25 = arith.constant 0.000000e+00 : f32
      %16 = vector.broadcast %cst_25 : f32 to vector<112x128xf32>
      %c0_i32_26 = arith.constant 0 : i32
      %17 = arith.addi %15, %c0_i32_26 : i32
      %18 = arith.index_cast %17 : i32 to index
      %c0_27 = arith.constant 0 : index
      %c0_28 = arith.constant 0 : index
      %c0_29 = arith.constant 0 : index
      %19 = vector.load %arg15[%18, %c0_27, %c0_28, %c0_29] : memref<15x15x16x64xbf16, #tpu.memory_space<vmem>>, vector<1x15x16x64xbf16>
      %20 = vector.shape_cast %19 : vector<1x15x16x64xbf16> to vector<15x16x64xbf16>
      %21 = vector.extract_strided_slice %20 {offsets = [0, 0, 0], sizes = [14, 16, 64], strides = [1, 1, 1]} : vector<15x16x64xbf16> to vector<14x16x64xbf16>
      %22 = vector.shape_cast %21 : vector<14x16x64xbf16> to vector<7x2x16x64xbf16>
      %23 = vector.extract_strided_slice %20 {offsets = [1, 0, 0], sizes = [14, 16, 64], strides = [1, 1, 1]} : vector<15x16x64xbf16> to vector<14x16x64xbf16>
      %24 = vector.shape_cast %23 : vector<14x16x64xbf16> to vector<7x2x16x64xbf16>
      %25 = vector.extract_strided_slice %22 {offsets = [0, 0, 0, 0], sizes = [7, 1, 16, 64], strides = [1, 1, 1, 1]} : vector<7x2x16x64xbf16> to vector<7x1x16x64xbf16>
      %26 = vector.shape_cast %25 : vector<7x1x16x64xbf16> to vector<7x16x64xbf16>
      %27 = vector.extract_strided_slice %24 {offsets = [0, 0, 0, 0], sizes = [7, 1, 16, 64], strides = [1, 1, 1, 1]} : vector<7x2x16x64xbf16> to vector<7x1x16x64xbf16>
      %28 = vector.shape_cast %27 : vector<7x1x16x64xbf16> to vector<7x16x64xbf16>
      %29 = vector.extract_strided_slice %24 {offsets = [0, 1, 0, 0], sizes = [7, 1, 16, 64], strides = [1, 1, 1, 1]} : vector<7x2x16x64xbf16> to vector<7x1x16x64xbf16>
      %30 = vector.shape_cast %29 : vector<7x1x16x64xbf16> to vector<7x16x64xbf16>
      %31 = vector.shape_cast %26 : vector<7x16x64xbf16> to vector<112x64xbf16>
      %c0_30 = arith.constant 0 : index
      %c0_31 = arith.constant 0 : index
      %c0_32 = arith.constant 0 : index
      %32 = vector.load %arg9[%c0_30, %c0_31, %c0_32] : memref<9x64x128xbf16, #tpu.memory_space<vmem>>, vector<1x64x128xbf16>
      %33 = vector.shape_cast %32 : vector<1x64x128xbf16> to vector<64x128xbf16>
      %cst_33 = arith.constant dense<0.000000e+00> : vector<112x128xf32>
      %34 = tpu.matmul %31, %33, %cst_33 {dimension_numbers = #tpu.dot_dimension_numbers<[1], [0], [0], [1], [0, 0, 1, 1], [], []>} : vector<112x64xbf16>, vector<64x128xbf16>, vector<112x128xf32> -> vector<112x128xf32>
      %35 = arith.addf %16, %34 : vector<112x128xf32>
      %36 = vector.shape_cast %28 : vector<7x16x64xbf16> to vector<112x64xbf16>
      %c1 = arith.constant 1 : index
      %c0_34 = arith.constant 0 : index
      %c0_35 = arith.constant 0 : index
      %37 = vector.load %arg9[%c1, %c0_34, %c0_35] : memref<9x64x128xbf16, #tpu.memory_space<vmem>>, vector<1x64x128xbf16>
      %38 = vector.shape_cast %37 : vector<1x64x128xbf16> to vector<64x128xbf16>
      %cst_36 = arith.constant dense<0.000000e+00> : vector<112x128xf32>
      %39 = tpu.matmul %36, %38, %cst_36 {dimension_numbers = #tpu.dot_dimension_numbers<[1], [0], [0], [1], [0, 0, 1, 1], [], []>} : vector<112x64xbf16>, vector<64x128xbf16>, vector<112x128xf32> -> vector<112x128xf32>
      %40 = arith.addf %35, %39 : vector<112x128xf32>
      %41 = vector.shape_cast %30 : vector<7x16x64xbf16> to vector<112x64xbf16>
      %c2 = arith.constant 2 : index
      %c0_37 = arith.constant 0 : index
      %c0_38 = arith.constant 0 : index
      %42 = vector.load %arg9[%c2, %c0_37, %c0_38] : memref<9x64x128xbf16, #tpu.memory_space<vmem>>, vector<1x64x128xbf16>
      %43 = vector.shape_cast %42 : vector<1x64x128xbf16> to vector<64x128xbf16>
      %cst_39 = arith.constant dense<0.000000e+00> : vector<112x128xf32>
      %44 = tpu.matmul %41, %43, %cst_39 {dimension_numbers = #tpu.dot_dimension_numbers<[1], [0], [0], [1], [0, 0, 1, 1], [], []>} : vector<112x64xbf16>, vector<64x128xbf16>, vector<112x128xf32> -> vector<112x128xf32>
      %45 = arith.addf %40, %44 : vector<112x128xf32>
      %c1_i32_40 = arith.constant 1 : i32
      %46 = arith.addi %15, %c1_i32_40 : i32
      %47 = arith.index_cast %46 : i32 to index
      %c0_41 = arith.constant 0 : index
      %c0_42 = arith.constant 0 : index
      %c0_43 = arith.constant 0 : index
      %48 = vector.load %arg15[%47, %c0_41, %c0_42, %c0_43] : memref<15x15x16x64xbf16, #tpu.memory_space<vmem>>, vector<1x15x16x64xbf16>
      %49 = vector.shape_cast %48 : vector<1x15x16x64xbf16> to vector<15x16x64xbf16>
      %50 = vector.extract_strided_slice %49 {offsets = [0, 0, 0], sizes = [14, 16, 64], strides = [1, 1, 1]} : vector<15x16x64xbf16> to vector<14x16x64xbf16>
      %51 = vector.shape_cast %50 : vector<14x16x64xbf16> to vector<7x2x16x64xbf16>
      %52 = vector.extract_strided_slice %49 {offsets = [1, 0, 0], sizes = [14, 16, 64], strides = [1, 1, 1]} : vector<15x16x64xbf16> to vector<14x16x64xbf16>
      %53 = vector.shape_cast %52 : vector<14x16x64xbf16> to vector<7x2x16x64xbf16>
      %54 = vector.extract_strided_slice %51 {offsets = [0, 0, 0, 0], sizes = [7, 1, 16, 64], strides = [1, 1, 1, 1]} : vector<7x2x16x64xbf16> to vector<7x1x16x64xbf16>
      %55 = vector.shape_cast %54 : vector<7x1x16x64xbf16> to vector<7x16x64xbf16>
      %56 = vector.extract_strided_slice %53 {offsets = [0, 0, 0, 0], sizes = [7, 1, 16, 64], strides = [1, 1, 1, 1]} : vector<7x2x16x64xbf16> to vector<7x1x16x64xbf16>
      %57 = vector.shape_cast %56 : vector<7x1x16x64xbf16> to vector<7x16x64xbf16>
      %58 = vector.extract_strided_slice %53 {offsets = [0, 1, 0, 0], sizes = [7, 1, 16, 64], strides = [1, 1, 1, 1]} : vector<7x2x16x64xbf16> to vector<7x1x16x64xbf16>
      %59 = vector.shape_cast %58 : vector<7x1x16x64xbf16> to vector<7x16x64xbf16>
      %60 = vector.shape_cast %55 : vector<7x16x64xbf16> to vector<112x64xbf16>
      %c3 = arith.constant 3 : index
      %c0_44 = arith.constant 0 : index
      %c0_45 = arith.constant 0 : index
      %61 = vector.load %arg9[%c3, %c0_44, %c0_45] : memref<9x64x128xbf16, #tpu.memory_space<vmem>>, vector<1x64x128xbf16>
      %62 = vector.shape_cast %61 : vector<1x64x128xbf16> to vector<64x128xbf16>
      %cst_46 = arith.constant dense<0.000000e+00> : vector<112x128xf32>
      %63 = tpu.matmul %60, %62, %cst_46 {dimension_numbers = #tpu.dot_dimension_numbers<[1], [0], [0], [1], [0, 0, 1, 1], [], []>} : vector<112x64xbf16>, vector<64x128xbf16>, vector<112x128xf32> -> vector<112x128xf32>
      %64 = arith.addf %45, %63 : vector<112x128xf32>
      %65 = vector.shape_cast %57 : vector<7x16x64xbf16> to vector<112x64xbf16>
      %c4 = arith.constant 4 : index
      %c0_47 = arith.constant 0 : index
      %c0_48 = arith.constant 0 : index
      %66 = vector.load %arg9[%c4, %c0_47, %c0_48] : memref<9x64x128xbf16, #tpu.memory_space<vmem>>, vector<1x64x128xbf16>
      %67 = vector.shape_cast %66 : vector<1x64x128xbf16> to vector<64x128xbf16>
      %cst_49 = arith.constant dense<0.000000e+00> : vector<112x128xf32>
      %68 = tpu.matmul %65, %67, %cst_49 {dimension_numbers = #tpu.dot_dimension_numbers<[1], [0], [0], [1], [0, 0, 1, 1], [], []>} : vector<112x64xbf16>, vector<64x128xbf16>, vector<112x128xf32> -> vector<112x128xf32>
      %69 = arith.addf %64, %68 : vector<112x128xf32>
      %70 = vector.shape_cast %59 : vector<7x16x64xbf16> to vector<112x64xbf16>
      %c5 = arith.constant 5 : index
      %c0_50 = arith.constant 0 : index
      %c0_51 = arith.constant 0 : index
      %71 = vector.load %arg9[%c5, %c0_50, %c0_51] : memref<9x64x128xbf16, #tpu.memory_space<vmem>>, vector<1x64x128xbf16>
      %72 = vector.shape_cast %71 : vector<1x64x128xbf16> to vector<64x128xbf16>
      %cst_52 = arith.constant dense<0.000000e+00> : vector<112x128xf32>
      %73 = tpu.matmul %70, %72, %cst_52 {dimension_numbers = #tpu.dot_dimension_numbers<[1], [0], [0], [1], [0, 0, 1, 1], [], []>} : vector<112x64xbf16>, vector<64x128xbf16>, vector<112x128xf32> -> vector<112x128xf32>
      %74 = arith.addf %69, %73 : vector<112x128xf32>
      %c2_i32_53 = arith.constant 2 : i32
      %75 = arith.addi %15, %c2_i32_53 : i32
      %76 = arith.index_cast %75 : i32 to index
      %c0_54 = arith.constant 0 : index
      %c0_55 = arith.constant 0 : index
      %c0_56 = arith.constant 0 : index
      %77 = vector.load %arg15[%76, %c0_54, %c0_55, %c0_56] : memref<15x15x16x64xbf16, #tpu.memory_space<vmem>>, vector<1x15x16x64xbf16>
      %78 = vector.shape_cast %77 : vector<1x15x16x64xbf16> to vector<15x16x64xbf16>
      %79 = vector.extract_strided_slice %78 {offsets = [0, 0, 0], sizes = [14, 16, 64], strides = [1, 1, 1]} : vector<15x16x64xbf16> to vector<14x16x64xbf16>
      %80 = vector.shape_cast %79 : vector<14x16x64xbf16> to vector<7x2x16x64xbf16>
      %81 = vector.extract_strided_slice %78 {offsets = [1, 0, 0], sizes = [14, 16, 64], strides = [1, 1, 1]} : vector<15x16x64xbf16> to vector<14x16x64xbf16>
      %82 = vector.shape_cast %81 : vector<14x16x64xbf16> to vector<7x2x16x64xbf16>
      %83 = vector.extract_strided_slice %80 {offsets = [0, 0, 0, 0], sizes = [7, 1, 16, 64], strides = [1, 1, 1, 1]} : vector<7x2x16x64xbf16> to vector<7x1x16x64xbf16>
      %84 = vector.shape_cast %83 : vector<7x1x16x64xbf16> to vector<7x16x64xbf16>
      %85 = vector.extract_strided_slice %82 {offsets = [0, 0, 0, 0], sizes = [7, 1, 16, 64], strides = [1, 1, 1, 1]} : vector<7x2x16x64xbf16> to vector<7x1x16x64xbf16>
      %86 = vector.shape_cast %85 : vector<7x1x16x64xbf16> to vector<7x16x64xbf16>
      %87 = vector.extract_strided_slice %82 {offsets = [0, 1, 0, 0], sizes = [7, 1, 16, 64], strides = [1, 1, 1, 1]} : vector<7x2x16x64xbf16> to vector<7x1x16x64xbf16>
      %88 = vector.shape_cast %87 : vector<7x1x16x64xbf16> to vector<7x16x64xbf16>
      %89 = vector.shape_cast %84 : vector<7x16x64xbf16> to vector<112x64xbf16>
      %c6 = arith.constant 6 : index
      %c0_57 = arith.constant 0 : index
      %c0_58 = arith.constant 0 : index
      %90 = vector.load %arg9[%c6, %c0_57, %c0_58] : memref<9x64x128xbf16, #tpu.memory_space<vmem>>, vector<1x64x128xbf16>
      %91 = vector.shape_cast %90 : vector<1x64x128xbf16> to vector<64x128xbf16>
      %cst_59 = arith.constant dense<0.000000e+00> : vector<112x128xf32>
      %92 = tpu.matmul %89, %91, %cst_59 {dimension_numbers = #tpu.dot_dimension_numbers<[1], [0], [0], [1], [0, 0, 1, 1], [], []>} : vector<112x64xbf16>, vector<64x128xbf16>, vector<112x128xf32> -> vector<112x128xf32>
      %93 = arith.addf %74, %92 : vector<112x128xf32>
      %94 = vector.shape_cast %86 : vector<7x16x64xbf16> to vector<112x64xbf16>
      %c7 = arith.constant 7 : index
      %c0_60 = arith.constant 0 : index
      %c0_61 = arith.constant 0 : index
      %95 = vector.load %arg9[%c7, %c0_60, %c0_61] : memref<9x64x128xbf16, #tpu.memory_space<vmem>>, vector<1x64x128xbf16>
      %96 = vector.shape_cast %95 : vector<1x64x128xbf16> to vector<64x128xbf16>
      %cst_62 = arith.constant dense<0.000000e+00> : vector<112x128xf32>
      %97 = tpu.matmul %94, %96, %cst_62 {dimension_numbers = #tpu.dot_dimension_numbers<[1], [0], [0], [1], [0, 0, 1, 1], [], []>} : vector<112x64xbf16>, vector<64x128xbf16>, vector<112x128xf32> -> vector<112x128xf32>
      %98 = arith.addf %93, %97 : vector<112x128xf32>
      %99 = vector.shape_cast %88 : vector<7x16x64xbf16> to vector<112x64xbf16>
      %c8 = arith.constant 8 : index
      %c0_63 = arith.constant 0 : index
      %c0_64 = arith.constant 0 : index
      %100 = vector.load %arg9[%c8, %c0_63, %c0_64] : memref<9x64x128xbf16, #tpu.memory_space<vmem>>, vector<1x64x128xbf16>
      %101 = vector.shape_cast %100 : vector<1x64x128xbf16> to vector<64x128xbf16>
      %cst_65 = arith.constant dense<0.000000e+00> : vector<112x128xf32>
      %102 = tpu.matmul %99, %101, %cst_65 {dimension_numbers = #tpu.dot_dimension_numbers<[1], [0], [0], [1], [0, 0, 1, 1], [], []>} : vector<112x64xbf16>, vector<64x128xbf16>, vector<112x128xf32> -> vector<112x128xf32>
      %103 = arith.addf %98, %102 : vector<112x128xf32>
      %104 = vector.broadcast %11 : vector<1x128xf32> to vector<112x128xf32>
      %105 = arith.addf %103, %104 : vector<112x128xf32>
      %cst_66 = arith.constant 0.000000e+00 : f32
      %106 = vector.broadcast %cst_66 : f32 to vector<112x128xf32>
      %107 = arith.cmpf oge, %105, %106 : vector<112x128xf32>
      %cst_67 = arith.constant 0.00999999977 : f32
      %108 = vector.broadcast %cst_67 : f32 to vector<112x128xf32>
      %109 = arith.mulf %108, %105 : vector<112x128xf32>
      %110 = arith.select %107, %105, %109 : vector<112x128xi1>, vector<112x128xf32>
      %111 = arith.truncf %110 : vector<112x128xf32> to vector<112x128xbf16>
      %112 = vector.shape_cast %111 : vector<112x128xbf16> to vector<7x16x128xbf16>
      %113 = arith.index_cast %arg17 : i32 to index
      %c0_68 = arith.constant 0 : index
      %c0_69 = arith.constant 0 : index
      %c0_70 = arith.constant 0 : index
      %114 = vector.load %arg16[%113, %c0_68, %c0_69, %c0_70] : memref<7x7x16x128xbf16, #tpu.memory_space<vmem>>, vector<1x7x16x128xbf16>
      %115 = vector.shape_cast %114 : vector<1x7x16x128xbf16> to vector<7x16x128xbf16>
      %116 = vector.shape_cast %112 : vector<7x16x128xbf16> to vector<1x7x16x128xbf16>
      tpu.vector_store %arg16[%113, %c0_68, %c0_69, %c0_70], %116 {strides = array<i32>} : memref<7x7x16x128xbf16, #tpu.memory_space<vmem>>, vector<1x7x16x128xbf16>,
    }
    %c7_i32_19 = arith.constant 7 : i32
    %c0_20 = arith.constant 0 : index
    %c0_21 = arith.constant 0 : index
    %13 = vector.load %arg12[%c0_20, %c0_21] : memref<1x256xf32, #tpu.memory_space<vmem>>, vector<1x256xf32>
    %c0_i32_22 = arith.constant 0 : i32
    %c3_i32 = arith.constant 3 : i32
    %14 = arith.addi %c0_i32_22, %c3_i32 : i32
    %c1_i32_23 = arith.constant 1 : i32
    scf.for %arg17 = %c0_i32_22 to %14 step %c1_i32_23  : i32 {
      %c2_i32 = arith.constant 2 : i32
      %15 = arith.muli %arg17, %c2_i32 : i32
      %cst_25 = arith.constant 0.000000e+00 : f32
      %16 = vector.broadcast %cst_25 : f32 to vector<48x256xf32>
      %c0_i32_26 = arith.constant 0 : i32
      %17 = arith.addi %15, %c0_i32_26 : i32
      %18 = arith.index_cast %17 : i32 to index
      %c0_27 = arith.constant 0 : index
      %c0_28 = arith.constant 0 : index
      %c0_29 = arith.constant 0 : index
      %19 = vector.load %arg16[%18, %c0_27, %c0_28, %c0_29] : memref<7x7x16x128xbf16, #tpu.memory_space<vmem>>, vector<1x7x16x128xbf16>
      %20 = vector.shape_cast %19 : vector<1x7x16x128xbf16> to vector<7x16x128xbf16>
      %21 = vector.extract_strided_slice %20 {offsets = [0, 0, 0], sizes = [6, 16, 128], strides = [1, 1, 1]} : vector<7x16x128xbf16> to vector<6x16x128xbf16>
      %22 = vector.shape_cast %21 : vector<6x16x128xbf16> to vector<3x2x16x128xbf16>
      %23 = vector.extract_strided_slice %20 {offsets = [1, 0, 0], sizes = [6, 16, 128], strides = [1, 1, 1]} : vector<7x16x128xbf16> to vector<6x16x128xbf16>
      %24 = vector.shape_cast %23 : vector<6x16x128xbf16> to vector<3x2x16x128xbf16>
      %25 = vector.extract_strided_slice %22 {offsets = [0, 0, 0, 0], sizes = [3, 1, 16, 128], strides = [1, 1, 1, 1]} : vector<3x2x16x128xbf16> to vector<3x1x16x128xbf16>
      %26 = vector.shape_cast %25 : vector<3x1x16x128xbf16> to vector<3x16x128xbf16>
      %27 = vector.extract_strided_slice %24 {offsets = [0, 0, 0, 0], sizes = [3, 1, 16, 128], strides = [1, 1, 1, 1]} : vector<3x2x16x128xbf16> to vector<3x1x16x128xbf16>
      %28 = vector.shape_cast %27 : vector<3x1x16x128xbf16> to vector<3x16x128xbf16>
      %29 = vector.extract_strided_slice %24 {offsets = [0, 1, 0, 0], sizes = [3, 1, 16, 128], strides = [1, 1, 1, 1]} : vector<3x2x16x128xbf16> to vector<3x1x16x128xbf16>
      %30 = vector.shape_cast %29 : vector<3x1x16x128xbf16> to vector<3x16x128xbf16>
      %31 = vector.shape_cast %26 : vector<3x16x128xbf16> to vector<48x128xbf16>
      %c0_30 = arith.constant 0 : index
      %c0_31 = arith.constant 0 : index
      %c0_32 = arith.constant 0 : index
      %32 = vector.load %arg11[%c0_30, %c0_31, %c0_32] : memref<9x128x256xbf16, #tpu.memory_space<vmem>>, vector<1x128x256xbf16>
      %33 = vector.shape_cast %32 : vector<1x128x256xbf16> to vector<128x256xbf16>
      %cst_33 = arith.constant dense<0.000000e+00> : vector<48x256xf32>
      %34 = tpu.matmul %31, %33, %cst_33 {dimension_numbers = #tpu.dot_dimension_numbers<[1], [0], [0], [1], [0, 0, 1, 1], [], []>} : vector<48x128xbf16>, vector<128x256xbf16>, vector<48x256xf32> -> vector<48x256xf32>
      %35 = arith.addf %16, %34 : vector<48x256xf32>
      %36 = vector.shape_cast %28 : vector<3x16x128xbf16> to vector<48x128xbf16>
      %c1 = arith.constant 1 : index
      %c0_34 = arith.constant 0 : index
      %c0_35 = arith.constant 0 : index
      %37 = vector.load %arg11[%c1, %c0_34, %c0_35] : memref<9x128x256xbf16, #tpu.memory_space<vmem>>, vector<1x128x256xbf16>
      %38 = vector.shape_cast %37 : vector<1x128x256xbf16> to vector<128x256xbf16>
      %cst_36 = arith.constant dense<0.000000e+00> : vector<48x256xf32>
      %39 = tpu.matmul %36, %38, %cst_36 {dimension_numbers = #tpu.dot_dimension_numbers<[1], [0], [0], [1], [0, 0, 1, 1], [], []>} : vector<48x128xbf16>, vector<128x256xbf16>, vector<48x256xf32> -> vector<48x256xf32>
      %40 = arith.addf %35, %39 : vector<48x256xf32>
      %41 = vector.shape_cast %30 : vector<3x16x128xbf16> to vector<48x128xbf16>
      %c2 = arith.constant 2 : index
      %c0_37 = arith.constant 0 : index
      %c0_38 = arith.constant 0 : index
      %42 = vector.load %arg11[%c2, %c0_37, %c0_38] : memref<9x128x256xbf16, #tpu.memory_space<vmem>>, vector<1x128x256xbf16>
      %43 = vector.shape_cast %42 : vector<1x128x256xbf16> to vector<128x256xbf16>
      %cst_39 = arith.constant dense<0.000000e+00> : vector<48x256xf32>
      %44 = tpu.matmul %41, %43, %cst_39 {dimension_numbers = #tpu.dot_dimension_numbers<[1], [0], [0], [1], [0, 0, 1, 1], [], []>} : vector<48x128xbf16>, vector<128x256xbf16>, vector<48x256xf32> -> vector<48x256xf32>
      %45 = arith.addf %40, %44 : vector<48x256xf32>
      %c1_i32_40 = arith.constant 1 : i32
      %46 = arith.addi %15, %c1_i32_40 : i32
      %47 = arith.index_cast %46 : i32 to index
      %c0_41 = arith.constant 0 : index
      %c0_42 = arith.constant 0 : index
      %c0_43 = arith.constant 0 : index
      %48 = vector.load %arg16[%47, %c0_41, %c0_42, %c0_43] : memref<7x7x16x128xbf16, #tpu.memory_space<vmem>>, vector<1x7x16x128xbf16>
      %49 = vector.shape_cast %48 : vector<1x7x16x128xbf16> to vector<7x16x128xbf16>
      %50 = vector.extract_strided_slice %49 {offsets = [0, 0, 0], sizes = [6, 16, 128], strides = [1, 1, 1]} : vector<7x16x128xbf16> to vector<6x16x128xbf16>
      %51 = vector.shape_cast %50 : vector<6x16x128xbf16> to vector<3x2x16x128xbf16>
      %52 = vector.extract_strided_slice %49 {offsets = [1, 0, 0], sizes = [6, 16, 128], strides = [1, 1, 1]} : vector<7x16x128xbf16> to vector<6x16x128xbf16>
      %53 = vector.shape_cast %52 : vector<6x16x128xbf16> to vector<3x2x16x128xbf16>
      %54 = vector.extract_strided_slice %51 {offsets = [0, 0, 0, 0], sizes = [3, 1, 16, 128], strides = [1, 1, 1, 1]} : vector<3x2x16x128xbf16> to vector<3x1x16x128xbf16>
      %55 = vector.shape_cast %54 : vector<3x1x16x128xbf16> to vector<3x16x128xbf16>
      %56 = vector.extract_strided_slice %53 {offsets = [0, 0, 0, 0], sizes = [3, 1, 16, 128], strides = [1, 1, 1, 1]} : vector<3x2x16x128xbf16> to vector<3x1x16x128xbf16>
      %57 = vector.shape_cast %56 : vector<3x1x16x128xbf16> to vector<3x16x128xbf16>
      %58 = vector.extract_strided_slice %53 {offsets = [0, 1, 0, 0], sizes = [3, 1, 16, 128], strides = [1, 1, 1, 1]} : vector<3x2x16x128xbf16> to vector<3x1x16x128xbf16>
      %59 = vector.shape_cast %58 : vector<3x1x16x128xbf16> to vector<3x16x128xbf16>
      %60 = vector.shape_cast %55 : vector<3x16x128xbf16> to vector<48x128xbf16>
      %c3 = arith.constant 3 : index
      %c0_44 = arith.constant 0 : index
      %c0_45 = arith.constant 0 : index
      %61 = vector.load %arg11[%c3, %c0_44, %c0_45] : memref<9x128x256xbf16, #tpu.memory_space<vmem>>, vector<1x128x256xbf16>
      %62 = vector.shape_cast %61 : vector<1x128x256xbf16> to vector<128x256xbf16>
      %cst_46 = arith.constant dense<0.000000e+00> : vector<48x256xf32>
      %63 = tpu.matmul %60, %62, %cst_46 {dimension_numbers = #tpu.dot_dimension_numbers<[1], [0], [0], [1], [0, 0, 1, 1], [], []>} : vector<48x128xbf16>, vector<128x256xbf16>, vector<48x256xf32> -> vector<48x256xf32>
      %64 = arith.addf %45, %63 : vector<48x256xf32>
      %65 = vector.shape_cast %57 : vector<3x16x128xbf16> to vector<48x128xbf16>
      %c4 = arith.constant 4 : index
      %c0_47 = arith.constant 0 : index
      %c0_48 = arith.constant 0 : index
      %66 = vector.load %arg11[%c4, %c0_47, %c0_48] : memref<9x128x256xbf16, #tpu.memory_space<vmem>>, vector<1x128x256xbf16>
      %67 = vector.shape_cast %66 : vector<1x128x256xbf16> to vector<128x256xbf16>
      %cst_49 = arith.constant dense<0.000000e+00> : vector<48x256xf32>
      %68 = tpu.matmul %65, %67, %cst_49 {dimension_numbers = #tpu.dot_dimension_numbers<[1], [0], [0], [1], [0, 0, 1, 1], [], []>} : vector<48x128xbf16>, vector<128x256xbf16>, vector<48x256xf32> -> vector<48x256xf32>
      %69 = arith.addf %64, %68 : vector<48x256xf32>
      %70 = vector.shape_cast %59 : vector<3x16x128xbf16> to vector<48x128xbf16>
      %c5 = arith.constant 5 : index
      %c0_50 = arith.constant 0 : index
      %c0_51 = arith.constant 0 : index
      %71 = vector.load %arg11[%c5, %c0_50, %c0_51] : memref<9x128x256xbf16, #tpu.memory_space<vmem>>, vector<1x128x256xbf16>
      %72 = vector.shape_cast %71 : vector<1x128x256xbf16> to vector<128x256xbf16>
      %cst_52 = arith.constant dense<0.000000e+00> : vector<48x256xf32>
      %73 = tpu.matmul %70, %72, %cst_52 {dimension_numbers = #tpu.dot_dimension_numbers<[1], [0], [0], [1], [0, 0, 1, 1], [], []>} : vector<48x128xbf16>, vector<128x256xbf16>, vector<48x256xf32> -> vector<48x256xf32>
      %74 = arith.addf %69, %73 : vector<48x256xf32>
      %c2_i32_53 = arith.constant 2 : i32
      %75 = arith.addi %15, %c2_i32_53 : i32
      %76 = arith.index_cast %75 : i32 to index
      %c0_54 = arith.constant 0 : index
      %c0_55 = arith.constant 0 : index
      %c0_56 = arith.constant 0 : index
      %77 = vector.load %arg16[%76, %c0_54, %c0_55, %c0_56] : memref<7x7x16x128xbf16, #tpu.memory_space<vmem>>, vector<1x7x16x128xbf16>
      %78 = vector.shape_cast %77 : vector<1x7x16x128xbf16> to vector<7x16x128xbf16>
      %79 = vector.extract_strided_slice %78 {offsets = [0, 0, 0], sizes = [6, 16, 128], strides = [1, 1, 1]} : vector<7x16x128xbf16> to vector<6x16x128xbf16>
      %80 = vector.shape_cast %79 : vector<6x16x128xbf16> to vector<3x2x16x128xbf16>
      %81 = vector.extract_strided_slice %78 {offsets = [1, 0, 0], sizes = [6, 16, 128], strides = [1, 1, 1]} : vector<7x16x128xbf16> to vector<6x16x128xbf16>
      %82 = vector.shape_cast %81 : vector<6x16x128xbf16> to vector<3x2x16x128xbf16>
      %83 = vector.extract_strided_slice %80 {offsets = [0, 0, 0, 0], sizes = [3, 1, 16, 128], strides = [1, 1, 1, 1]} : vector<3x2x16x128xbf16> to vector<3x1x16x128xbf16>
      %84 = vector.shape_cast %83 : vector<3x1x16x128xbf16> to vector<3x16x128xbf16>
      %85 = vector.extract_strided_slice %82 {offsets = [0, 0, 0, 0], sizes = [3, 1, 16, 128], strides = [1, 1, 1, 1]} : vector<3x2x16x128xbf16> to vector<3x1x16x128xbf16>
      %86 = vector.shape_cast %85 : vector<3x1x16x128xbf16> to vector<3x16x128xbf16>
      %87 = vector.extract_strided_slice %82 {offsets = [0, 1, 0, 0], sizes = [3, 1, 16, 128], strides = [1, 1, 1, 1]} : vector<3x2x16x128xbf16> to vector<3x1x16x128xbf16>
      %88 = vector.shape_cast %87 : vector<3x1x16x128xbf16> to vector<3x16x128xbf16>
      %89 = vector.shape_cast %84 : vector<3x16x128xbf16> to vector<48x128xbf16>
      %c6 = arith.constant 6 : index
      %c0_57 = arith.constant 0 : index
      %c0_58 = arith.constant 0 : index
      %90 = vector.load %arg11[%c6, %c0_57, %c0_58] : memref<9x128x256xbf16, #tpu.memory_space<vmem>>, vector<1x128x256xbf16>
      %91 = vector.shape_cast %90 : vector<1x128x256xbf16> to vector<128x256xbf16>
      %cst_59 = arith.constant dense<0.000000e+00> : vector<48x256xf32>
      %92 = tpu.matmul %89, %91, %cst_59 {dimension_numbers = #tpu.dot_dimension_numbers<[1], [0], [0], [1], [0, 0, 1, 1], [], []>} : vector<48x128xbf16>, vector<128x256xbf16>, vector<48x256xf32> -> vector<48x256xf32>
      %93 = arith.addf %74, %92 : vector<48x256xf32>
      %94 = vector.shape_cast %86 : vector<3x16x128xbf16> to vector<48x128xbf16>
      %c7 = arith.constant 7 : index
      %c0_60 = arith.constant 0 : index
      %c0_61 = arith.constant 0 : index
      %95 = vector.load %arg11[%c7, %c0_60, %c0_61] : memref<9x128x256xbf16, #tpu.memory_space<vmem>>, vector<1x128x256xbf16>
      %96 = vector.shape_cast %95 : vector<1x128x256xbf16> to vector<128x256xbf16>
      %cst_62 = arith.constant dense<0.000000e+00> : vector<48x256xf32>
      %97 = tpu.matmul %94, %96, %cst_62 {dimension_numbers = #tpu.dot_dimension_numbers<[1], [0], [0], [1], [0, 0, 1, 1], [], []>} : vector<48x128xbf16>, vector<128x256xbf16>, vector<48x256xf32> -> vector<48x256xf32>
      %98 = arith.addf %93, %97 : vector<48x256xf32>
      %99 = vector.shape_cast %88 : vector<3x16x128xbf16> to vector<48x128xbf16>
      %c8 = arith.constant 8 : index
      %c0_63 = arith.constant 0 : index
      %c0_64 = arith.constant 0 : index
      %100 = vector.load %arg11[%c8, %c0_63, %c0_64] : memref<9x128x256xbf16, #tpu.memory_space<vmem>>, vector<1x128x256xbf16>
      %101 = vector.shape_cast %100 : vector<1x128x256xbf16> to vector<128x256xbf16>
      %cst_65 = arith.constant dense<0.000000e+00> : vector<48x256xf32>
      %102 = tpu.matmul %99, %101, %cst_65 {dimension_numbers = #tpu.dot_dimension_numbers<[1], [0], [0], [1], [0, 0, 1, 1], [], []>} : vector<48x128xbf16>, vector<128x256xbf16>, vector<48x256xf32> -> vector<48x256xf32>
      %103 = arith.addf %98, %102 : vector<48x256xf32>
      %104 = vector.broadcast %13 : vector<1x256xf32> to vector<48x256xf32>
      %105 = arith.addf %103, %104 : vector<48x256xf32>
      %cst_66 = arith.constant 0.000000e+00 : f32
      %106 = vector.broadcast %cst_66 : f32 to vector<48x256xf32>
      %107 = arith.cmpf oge, %105, %106 : vector<48x256xf32>
      %cst_67 = arith.constant 0.00999999977 : f32
      %108 = vector.broadcast %cst_67 : f32 to vector<48x256xf32>
      %109 = arith.mulf %108, %105 : vector<48x256xf32>
      %110 = arith.select %107, %105, %109 : vector<48x256xi1>, vector<48x256xf32>
      %111 = arith.truncf %110 : vector<48x256xf32> to vector<48x256xbf16>
      %112 = vector.shape_cast %111 : vector<48x256xbf16> to vector<3x16x256xbf16>
      %113 = arith.index_cast %arg17 : i32 to index
      %c0_68 = arith.constant 0 : index
      %c0_69 = arith.constant 0 : index
      %c0_70 = arith.constant 0 : index
      %114 = vector.load %arg13[%113, %c0_68, %c0_69, %c0_70] : memref<3x3x16x256xbf16, #tpu.memory_space<vmem>>, vector<1x3x16x256xbf16>
      %115 = vector.shape_cast %114 : vector<1x3x16x256xbf16> to vector<3x16x256xbf16>
      %116 = vector.shape_cast %112 : vector<3x16x256xbf16> to vector<1x3x16x256xbf16>
      tpu.vector_store %arg13[%113, %c0_68, %c0_69, %c0_70], %116 {strides = array<i32>} : memref<3x3x16x256xbf16, #tpu.memory_space<vmem>>, vector<1x3x16x256xbf16>,
    }
    %c3_i32_24 = arith.constant 3 : i32
    return
  }
  func.func @transform_0(%arg0: i32) -> (i32, i32, i32) {
    %c0_i32 = arith.constant 0 : i32
    %c0_i32_0 = arith.constant 0 : i32
    %c0_i32_1 = arith.constant 0 : i32
    %c0_i32_2 = arith.constant 0 : i32
    return %c0_i32, %c0_i32_0, %c0_i32_1 : i32, i32, i32
  }
  func.func @transform_1(%arg0: i32) -> (i32, i32) {
    %c0_i32 = arith.constant 0 : i32
    %c0_i32_0 = arith.constant 0 : i32
    %c0_i32_1 = arith.constant 0 : i32
    return %c0_i32, %c0_i32_0 : i32, i32
  }
  func.func @transform_2(%arg0: i32) -> (i32, i32) {
    %c0_i32 = arith.constant 0 : i32
    %c0_i32_0 = arith.constant 0 : i32
    %c0_i32_1 = arith.constant 0 : i32
    return %c0_i32, %c0_i32_0 : i32, i32
  }
  func.func @transform_3(%arg0: i32) -> (i32, i32) {
    %c0_i32 = arith.constant 0 : i32
    %c0_i32_0 = arith.constant 0 : i32
    %c0_i32_1 = arith.constant 0 : i32
    return %c0_i32, %c0_i32_0 : i32, i32
  }
  func.func @transform_4(%arg0: i32) -> (i32, i32) {
    %c0_i32 = arith.constant 0 : i32
    %c0_i32_0 = arith.constant 0 : i32
    %c0_i32_1 = arith.constant 0 : i32
    return %c0_i32, %c0_i32_0 : i32, i32
  }
  func.func @transform_5(%arg0: i32) -> (i32, i32) {
    %c0_i32 = arith.constant 0 : i32
    %c0_i32_0 = arith.constant 0 : i32
    %c0_i32_1 = arith.constant 0 : i32
    return %c0_i32, %c0_i32_0 : i32, i32
  }
  func.func @transform_6(%arg0: i32) -> (i32, i32, i32) {
    %c0_i32 = arith.constant 0 : i32
    %c0_i32_0 = arith.constant 0 : i32
    %c0_i32_1 = arith.constant 0 : i32
    %c0_i32_2 = arith.constant 0 : i32
    return %c0_i32, %c0_i32_0, %c0_i32_1 : i32, i32, i32
  }
  func.func @transform_7(%arg0: i32) -> (i32, i32) {
    %c0_i32 = arith.constant 0 : i32
    %c0_i32_0 = arith.constant 0 : i32
    %c0_i32_1 = arith.constant 0 : i32
    return %c0_i32, %c0_i32_0 : i32, i32
  }
  func.func @transform_8(%arg0: i32) -> (i32, i32, i32) {
    %c0_i32 = arith.constant 0 : i32
    %c0_i32_0 = arith.constant 0 : i32
    %c0_i32_1 = arith.constant 0 : i32
    %c0_i32_2 = arith.constant 0 : i32
    return %c0_i32, %c0_i32_0, %c0_i32_1 : i32, i32, i32
  }
  func.func @transform_9(%arg0: i32) -> (i32, i32) {
    %c0_i32 = arith.constant 0 : i32
    %c0_i32_0 = arith.constant 0 : i32
    %c0_i32_1 = arith.constant 0 : i32
    return %c0_i32, %c0_i32_0 : i32, i32
  }
  func.func @transform_10(%arg0: i32) -> (i32, i32, i32) {
    %c0_i32 = arith.constant 0 : i32
    %c0_i32_0 = arith.constant 0 : i32
    %c0_i32_1 = arith.constant 0 : i32
    %c0_i32_2 = arith.constant 0 : i32
    return %c0_i32, %c0_i32_0, %c0_i32_1 : i32, i32, i32
  }
  func.func @transform_11(%arg0: i32) -> (i32, i32) {
    %c0_i32 = arith.constant 0 : i32
    %c0_i32_0 = arith.constant 0 : i32
    %c0_i32_1 = arith.constant 0 : i32
    return %c0_i32, %c0_i32_0 : i32, i32
  }
  func.func @transform_12(%arg0: i32) -> (i32, i32, i32, i32) {
    %c0_i32 = arith.constant 0 : i32
    %c0_i32_0 = arith.constant 0 : i32
    %c0_i32_1 = arith.constant 0 : i32
    %c0_i32_2 = arith.constant 0 : i32
    %c0_i32_3 = arith.constant 0 : i32
    return %c0_i32, %c0_i32_0, %c0_i32_1, %c0_i32_2 : i32, i32, i32, i32
  }
}

module attributes {stable_mosaic.version = 11 : i64} {
  func.func @_fc_sigmoid_kernel(%arg0: i32, %arg1: memref<9x4096xbf16, #tpu.memory_space<vmem>>, %arg2: memref<4096x128xbf16, #tpu.memory_space<vmem>>, %arg3: memref<1x128xf32, #tpu.memory_space<vmem>>, %arg4: memref<9x128xf32, #tpu.memory_space<vmem>>) attributes {dimension_semantics = [#tpu.dimension_semantics<arbitrary>], iteration_bounds = array<i64: 1>, scalar_prefetch = 0 : i64, scratch_operands = 0 : i64, tpu.core_type = #tpu.core_type<tc>, window_params = [{pipeline_mode = #tpu.pipeline_mode<synchronous>, transform_indices = @transform_0, window_bounds = array<i64: 9, 4096>}, {pipeline_mode = #tpu.pipeline_mode<synchronous>, transform_indices = @transform_1, window_bounds = array<i64: 4096, 128>}, {pipeline_mode = #tpu.pipeline_mode<synchronous>, transform_indices = @transform_2, window_bounds = array<i64: 1, 128>}, {pipeline_mode = #tpu.pipeline_mode<synchronous>, transform_indices = @transform_3, window_bounds = array<i64: 9, 128>}]} {
    %c0 = arith.constant 0 : index
    %c0_0 = arith.constant 0 : index
    %0 = vector.load %arg1[%c0, %c0_0] : memref<9x4096xbf16, #tpu.memory_space<vmem>>, vector<9x4096xbf16>
    %c0_1 = arith.constant 0 : index
    %c0_2 = arith.constant 0 : index
    %1 = vector.load %arg2[%c0_1, %c0_2] : memref<4096x128xbf16, #tpu.memory_space<vmem>>, vector<4096x128xbf16>
    %cst = arith.constant dense<0.000000e+00> : vector<9x128xf32>
    %2 = tpu.matmul %0, %1, %cst {dimension_numbers = #tpu.dot_dimension_numbers<[1], [0], [0], [1], [0, 0, 1, 1], [], []>} : vector<9x4096xbf16>, vector<4096x128xbf16>, vector<9x128xf32> -> vector<9x128xf32>
    %c0_3 = arith.constant 0 : index
    %c0_4 = arith.constant 0 : index
    %3 = vector.load %arg3[%c0_3, %c0_4] : memref<1x128xf32, #tpu.memory_space<vmem>>, vector<1x128xf32>
    %4 = vector.broadcast %3 : vector<1x128xf32> to vector<9x128xf32>
    %5 = arith.addf %2, %4 : vector<9x128xf32>
    %cst_5 = arith.constant 0.000000e+00 : f32
    %6 = vector.broadcast %cst_5 : f32 to vector<9x128xf32>
    %7 = arith.subf %6, %5 : vector<9x128xf32>
    %8 = math.exp %7 : vector<9x128xf32>
    %cst_6 = arith.constant 1.000000e+00 : f32
    %9 = vector.broadcast %cst_6 : f32 to vector<9x128xf32>
    %10 = arith.addf %9, %8 : vector<9x128xf32>
    %cst_7 = arith.constant 1.000000e+00 : f32
    %11 = vector.broadcast %cst_7 : f32 to vector<9x128xf32>
    %12 = arith.divf %11, %10 : vector<9x128xf32>
    %c0_8 = arith.constant 0 : index
    %c0_9 = arith.constant 0 : index
    %13 = vector.load %arg4[%c0_8, %c0_9] : memref<9x128xf32, #tpu.memory_space<vmem>>, vector<9x128xf32>
    tpu.vector_store %arg4[%c0_8, %c0_9], %12 {strides = array<i32>} : memref<9x128xf32, #tpu.memory_space<vmem>>, vector<9x128xf32>,
    return
  }
  func.func @transform_0(%arg0: i32) -> (i32, i32) {
    %c0_i32 = arith.constant 0 : i32
    %c0_i32_0 = arith.constant 0 : i32
    %c0_i32_1 = arith.constant 0 : i32
    return %c0_i32, %c0_i32_0 : i32, i32
  }
  func.func @transform_1(%arg0: i32) -> (i32, i32) {
    %c0_i32 = arith.constant 0 : i32
    %c0_i32_0 = arith.constant 0 : i32
    %c0_i32_1 = arith.constant 0 : i32
    return %c0_i32, %c0_i32_0 : i32, i32
  }
  func.func @transform_2(%arg0: i32) -> (i32, i32) {
    %c0_i32 = arith.constant 0 : i32
    %c0_i32_0 = arith.constant 0 : i32
    %c0_i32_1 = arith.constant 0 : i32
    return %c0_i32, %c0_i32_0 : i32, i32
  }
  func.func @transform_3(%arg0: i32) -> (i32, i32) {
    %c0_i32 = arith.constant 0 : i32
    %c0_i32_0 = arith.constant 0 : i32
    %c0_i32_1 = arith.constant 0 : i32
    return %c0_i32, %c0_i32_0 : i32, i32
  }
}

</mosaic_0001>

<llo_original>
// kernel: discriminator_forward.2
$region0: #{discriminator_forward.2}
  #allocation0 [shape = 'u32[]', space=smem, size = 0x4, offset = 0x4, fixed_abs, tag = 'smem constant byte address 0x4 - core index']
  #allocation1 [shape = 'u32[144,128]{1,0:T(1,128)}', space=vmem, size = 0x12000, scoped, tag = 'internal scratch']
  #allocation2 [shape = 'bf16[31,31,16,64]{3,2,1,0:T(8,128)(2,1)}', space=vmem, size = 0x3c1000, scoped, tag = 'scratch operand']
  #allocation3 [shape = 'bf16[15,15,16,64]{3,2,1,0:T(8,128)(2,1)}', space=vmem, size = 0xe1000, scoped, tag = 'scratch operand']
  #allocation4 [shape = 'bf16[7,7,16,128]{3,2,1,0:T(8,128)(2,1)}', space=vmem, size = 0x31000, scoped, tag = 'scratch operand']
  %s0 = inlined_call_operand.vmem [shape: bf16[31,496,36], index: 0, kind: input, shape index: {}]
  %s1 = inlined_call_operand.vmem [shape: bf16[16,8], index: 1, kind: input, shape index: {}]
  %s2 = inlined_call_operand.vmem [shape: bf16[36,64], index: 2, kind: input, shape index: {}]
  %s3 = inlined_call_operand.vmem [shape: f32[1,64], index: 3, kind: input, shape index: {}]
  %s4 = inlined_call_operand.vmem [shape: bf16[8,64], index: 4, kind: input, shape index: {}]
  %s5 = inlined_call_operand.vmem [shape: f32[1,64], index: 5, kind: input, shape index: {}]
  %s6 = inlined_call_operand.vmem [shape: bf16[9,64,64], index: 6, kind: input, shape index: {}]
  %s7 = inlined_call_operand.vmem [shape: f32[1,64], index: 7, kind: input, shape index: {}]
  %s8 = inlined_call_operand.vmem [shape: bf16[9,64,128], index: 8, kind: input, shape index: {}]
  %s9 = inlined_call_operand.vmem [shape: f32[1,128], index: 9, kind: input, shape index: {}]
  %s10 = inlined_call_operand.vmem [shape: bf16[9,128,256], index: 10, kind: input, shape index: {}]
  %s11 = inlined_call_operand.vmem [shape: f32[1,256], index: 11, kind: input, shape index: {}]
  %s12 = inlined_call_operand.vmem [shape: bf16[3,3,16,256], index: 12, kind: output, shape index: {}]
  %s13 = sld [smem:[#allocation0]]
  $region86: #{discriminator_forward.2} parent=0
    _
  %s15 = ssub.s32 1, %s13
  %s16 = scalar_select 0, %s15, %s13
  // Predicated region
  $region2: #{discriminator_forward.2} parent=0 // pred_check
    _
  $region3: #{discriminator_forward.2} parent=0 // pred_check_branch
    %18 = sbr.rel (0) target = $region5
  $region4: #{discriminator_forward.2} parent=0 // pred_region
    _
  $region5: #{discriminator_forward.2} parent=0 // pred_fallthru
    _
  // Predicated region
  $region6: #{discriminator_forward.2} parent=0 // pred_check
    _
  $region7: #{discriminator_forward.2} parent=0 // pred_check_branch
    %20 = sbr.rel (0) target = $region9
  $region8: #{discriminator_forward.2} parent=0 // pred_region
    _
  $region9: #{discriminator_forward.2} parent=0 // pred_fallthru
    _
  // Predicated region
  $region10: #{discriminator_forward.2} parent=0 // pred_check
    _
  $region11: #{discriminator_forward.2} parent=0 // pred_check_branch
    %22 = sbr.rel (0) target = $region13
  $region12: #{discriminator_forward.2} parent=0 // pred_region
    _
  $region13: #{discriminator_forward.2} parent=0 // pred_fallthru
    _
  // Predicated region
  $region14: #{discriminator_forward.2} parent=0 // pred_check
    _
  $region15: #{discriminator_forward.2} parent=0 // pred_check_branch
    %24 = sbr.rel (0) target = $region17
  $region16: #{discriminator_forward.2} parent=0 // pred_region
    _
  $region17: #{discriminator_forward.2} parent=0 // pred_fallthru
    _
  // Predicated region
  $region18: #{discriminator_forward.2} parent=0 // pred_check
    _
  $region19: #{discriminator_forward.2} parent=0 // pred_check_branch
    %26 = sbr.rel (0) target = $region21
  $region20: #{discriminator_forward.2} parent=0 // pred_region
    _
  $region21: #{discriminator_forward.2} parent=0 // pred_fallthru
    _
  // Predicated region
  $region22: #{discriminator_forward.2} parent=0 // pred_check
    _
  $region23: #{discriminator_forward.2} parent=0 // pred_check_branch
    %28 = sbr.rel (0) target = $region25
  $region24: #{discriminator_forward.2} parent=0 // pred_region
    _
  $region25: #{discriminator_forward.2} parent=0 // pred_fallthru
    _
  // Predicated region
  $region26: #{discriminator_forward.2} parent=0 // pred_check
    _
  $region27: #{discriminator_forward.2} parent=0 // pred_check_branch
    %30 = sbr.rel (0) target = $region29
  $region28: #{discriminator_forward.2} parent=0 // pred_region
    _
  $region29: #{discriminator_forward.2} parent=0 // pred_fallthru
    _
  // Predicated region
  $region30: #{discriminator_forward.2} parent=0 // pred_check
    _
  $region31: #{discriminator_forward.2} parent=0 // pred_check_branch
    %32 = sbr.rel (0) target = $region33
  $region32: #{discriminator_forward.2} parent=0 // pred_region
    _
  $region33: #{discriminator_forward.2} parent=0 // pred_fallthru
    _
  // Predicated region
  $region34: #{discriminator_forward.2} parent=0 // pred_check
    _
  $region35: #{discriminator_forward.2} parent=0 // pred_check_branch
    %34 = sbr.rel (0) target = $region37
  $region36: #{discriminator_forward.2} parent=0 // pred_region
    _
  $region37: #{discriminator_forward.2} parent=0 // pred_fallthru
    _
  // Predicated region
  $region38: #{discriminator_forward.2} parent=0 // pred_check
    _
  $region39: #{discriminator_forward.2} parent=0 // pred_check_branch
    %36 = sbr.rel (0) target = $region41
  $region40: #{discriminator_forward.2} parent=0 // pred_region
    _
  $region41: #{discriminator_forward.2} parent=0 // pred_fallthru
    _
  // Predicated region
  $region42: #{discriminator_forward.2} parent=0 // pred_check
    _
  $region43: #{discriminator_forward.2} parent=0 // pred_check_branch
    %38 = sbr.rel (0) target = $region45
  $region44: #{discriminator_forward.2} parent=0 // pred_region
    _
  $region45: #{discriminator_forward.2} parent=0 // pred_fallthru
    _
  // Predicated region
  $region46: #{discriminator_forward.2} parent=0 // pred_check
    _
  $region47: #{discriminator_forward.2} parent=0 // pred_check_branch
    %40 = sbr.rel (0) target = $region49
  $region48: #{discriminator_forward.2} parent=0 // pred_region
    _
  $region49: #{discriminator_forward.2} parent=0 // pred_fallthru
    _
  %v42 = vld [vmem:[%s1] sm:$0xf]
  %v43 = vld [vmem:[%s1 + $0x4] sm:$0xf]
  %v44 = vld [vmem:[%s4] sm:$0xf]
  %v45 = vld [vmem:[%s5] sm:$0x1]
  %v47 = vlaneseq
  %v48 = vshrl.u32 %v47, 7
  %v49 = vsub.s32 0, %v48
  %v50 = vrot.slane %v45, %v49
  %v54 = vunpack.c.l.b16 %v42
  %v55 = vunpack.c.l.b16 %v43
  %v56 = vpack.c.b16 %v55, %v54
  %vm57 = vcmask 64512
  %v59 = vsel %vm57, %v56, 0
  %vm61 = vcmask 1043456
  %v63 = vsel %vm61, %v44, 0
  %65 = vmatprep.subr.bf16.mxu0 0
  %66 = vmatpush1.bf16.msra.mxu0 0
  %67 = vmatprep.subr.bf16.mxu0 0
  %68 = vmatpush1.bf16.msra.mxu0 0
  %69 = vmatprep.subr.bf16.mxu0 0
  %70 = vmatpush1.bf16.msra.mxu0 0
  %71 = vmatprep.subr.bf16.mxu0 0
  %72 = vmatpush1.bf16.msra.mxu0 0
  %73 = vmatprep.subr.bf16.mxu0 0
  %74 = vmatpush1.bf16.msra.mxu0 0
  %75 = vmatprep.subr.bf16.mxu0 0
  %76 = vmatpush1.bf16.msra.mxu0 0
  %77 = vmatprep.subr.bf16.mxu0 0
  %78 = vmatpush1.bf16.msra.mxu0 0
  %79 = vmatprep.subr.bf16.mxu0 0
  %80 = vmatpush1.bf16.msra.mxu0 %v63
  %81 = vmatprep.subr.bf16.mxu0 0
  %82 = vmatpush2.bf16.msra.mxu0 0
  %83 = vmatprep.subr.bf16.mxu0 0
  %84 = vmatpush2.bf16.msra.mxu0 0
  %85 = vmatprep.subr.bf16.mxu0 0
  %86 = vmatpush2.bf16.msra.mxu0 0
  %87 = vmatprep.subr.bf16.mxu0 0
  %88 = vmatpush2.bf16.msra.mxu0 0
  %89 = vmatprep.subr.bf16.mxu0 0
  %90 = vmatpush2.bf16.msra.mxu0 0
  %91 = vmatprep.subr.bf16.mxu0 0
  %92 = vmatpush2.bf16.msra.mxu0 0
  %93 = vmatprep.subr.bf16.mxu0 0
  %94 = vmatpush2.bf16.msra.mxu0 0
  %95 = vmatprep.subr.bf16.mxu0 0
  %96 = vmatpush2.bf16.msra.mxu0 0
  %97 = vmatprep.mubr.bf16.mxu0 0
  %98 = vmatmul.mubr.bf16.gmra.mxu0 %v59
  %v99 = vpop.f32.mrf.mxu0
  %v100 = vadd.f32 %v50, %v99
  %v101 = vpop.f32.mrf.mxu0
  %v102 = vpop.f32.mrf.mxu0
  %v103 = vadd.f32 %v50, %v102
  %v104 = vpop.f32.mrf.mxu0
  %105 = vdwg.mxu0
  %v106 = vld [vmem:[%s2] sm:$0xf]
  %v107 = vld [vmem:[%s2 + $0x4] sm:$0xf]
  %v108 = vld [vmem:[%s2 + $0x8] sm:$0xf]
  %v109 = vld [vmem:[%s2 + $0xc] sm:$0xf]
  %v110 = vld [vmem:[%s2 + $0x10] sm:$0x3]
  %v111 = vld [vmem:[%s3] sm:$0x1]
  loop: start=0, step=1, limit=31
  $region50: #{discriminator_forward.2} parent=0 // loop_pre_header
    _
  $region51: #{discriminator_forward.2} parent=0 // loop_header
    %s113 = sphi 0, %s117
    %p114 = scmp.ge.s32.totalorder %s113, 31
  $region52: #{discriminator_forward.2} parent=0 // loop_header_branch
    %116 = sbr.rel (%p114) target = $region56
  $region53: #{discriminator_forward.2} parent=0 // loop_body
    %s118 = smul.u32 %s113, 62
    %s119 = smul.addr %s118, 4
    %s120 = scalar_lea.vmem %s0, %s119
    %v121 = vld [vmem:[%s120] sm:$0xf]
    %v122 = vld [vmem:[%s120 + $0x4] sm:$0xf]
    %v123 = vld [vmem:[%s120 + $0x8] sm:$0xf]
    %v124 = vld [vmem:[%s120 + $0xc] sm:$0xf]
    %v125 = vld [vmem:[%s120 + $0x10] sm:$0xf]
    %v126 = vld [vmem:[%s120 + $0x14] sm:$0xf]
    %v127 = vld [vmem:[%s120 + $0x18] sm:$0xf]
    %v128 = vld [vmem:[%s120 + $0x1c] sm:$0xf]
    %v129 = vld [vmem:[%s120 + $0x20] sm:$0xf]
    %v130 = vld [vmem:[%s120 + $0x24] sm:$0xf]
    %v131 = vld [vmem:[%s120 + $0x28] sm:$0xf]
    %v132 = vld [vmem:[%s120 + $0x2c] sm:$0xf]
    %v133 = vld [vmem:[%s120 + $0x30] sm:$0xf]
    %v134 = vld [vmem:[%s120 + $0x34] sm:$0xf]
    %v135 = vld [vmem:[%s120 + $0x38] sm:$0xf]
    %v136 = vld [vmem:[%s120 + $0x3c] sm:$0xf]
    %v137 = vld [vmem:[%s120 + $0x40] sm:$0xf]
    %v138 = vld [vmem:[%s120 + $0x44] sm:$0xf]
    %v139 = vld [vmem:[%s120 + $0x48] sm:$0xf]
    %v140 = vld [vmem:[%s120 + $0x4c] sm:$0xf]
    %v141 = vld [vmem:[%s120 + $0x50] sm:$0xf]
    %v142 = vld [vmem:[%s120 + $0x54] sm:$0xf]
    %v143 = vld [vmem:[%s120 + $0x58] sm:$0xf]
    %v144 = vld [vmem:[%s120 + $0x5c] sm:$0xf]
    %v145 = vld [vmem:[%s120 + $0x60] sm:$0xf]
    %v146 = vld [vmem:[%s120 + $0x64] sm:$0xf]
    %v147 = vld [vmem:[%s120 + $0x68] sm:$0xf]
    %v148 = vld [vmem:[%s120 + $0x6c] sm:$0xf]
    %v149 = vld [vmem:[%s120 + $0x70] sm:$0xf]
    %v150 = vld [vmem:[%s120 + $0x74] sm:$0xf]
    %v151 = vld [vmem:[%s120 + $0x78] sm:$0xf]
    %v152 = vld [vmem:[%s120 + $0x7c] sm:$0xf]
    %v153 = vld [vmem:[%s120 + $0x80] sm:$0xf]
    %v154 = vld [vmem:[%s120 + $0x84] sm:$0xf]
    %v155 = vld [vmem:[%s120 + $0x88] sm:$0xf]
    %v156 = vld [vmem:[%s120 + $0x8c] sm:$0xf]
    %v157 = vld [vmem:[%s120 + $0x90] sm:$0xf]
    %v158 = vld [vmem:[%s120 + $0x94] sm:$0xf]
    %v159 = vld [vmem:[%s120 + $0x98] sm:$0xf]
    %v160 = vld [vmem:[%s120 + $0x9c] sm:$0xf]
    %v161 = vld [vmem:[%s120 + $0xa0] sm:$0xf]
    %v162 = vld [vmem:[%s120 + $0xa4] sm:$0xf]
    %v163 = vld [vmem:[%s120 + $0xa8] sm:$0xf]
    %v164 = vld [vmem:[%s120 + $0xac] sm:$0xf]
    %v165 = vld [vmem:[%s120 + $0xb0] sm:$0xf]
    %v166 = vld [vmem:[%s120 + $0xb4] sm:$0xf]
    %v167 = vld [vmem:[%s120 + $0xb8] sm:$0xf]
    %v168 = vld [vmem:[%s120 + $0xbc] sm:$0xf]
    %v169 = vld [vmem:[%s120 + $0xc0] sm:$0xf]
    %v170 = vld [vmem:[%s120 + $0xc4] sm:$0xf]
    %v171 = vld [vmem:[%s120 + $0xc8] sm:$0xf]
    %v172 = vld [vmem:[%s120 + $0xcc] sm:$0xf]
    %v173 = vld [vmem:[%s120 + $0xd0] sm:$0xf]
    %v174 = vld [vmem:[%s120 + $0xd4] sm:$0xf]
    %v175 = vld [vmem:[%s120 + $0xd8] sm:$0xf]
    %v176 = vld [vmem:[%s120 + $0xdc] sm:$0xf]
    %v177 = vld [vmem:[%s120 + $0xe0] sm:$0xf]
    %v178 = vld [vmem:[%s120 + $0xe4] sm:$0xf]
    %v179 = vld [vmem:[%s120 + $0xe8] sm:$0xf]
    %v180 = vld [vmem:[%s120 + $0xec] sm:$0xf]
    %v181 = vld [vmem:[%s120 + $0xf0] sm:$0xf]
    %v182 = vld [vmem:[%s120 + $0xf4] sm:$0xf]
    %v184 = vlaneseq
    %v185 = vshrl.u32 %v184, 7
    %v186 = vsub.s32 0, %v185
    %v187 = vrot.slane %v111, %v186
    %v251 = vunpack.c.l.b16 %v121
    %v252 = vunpack.c.l.b16 %v122
    %v253 = vunpack.c.l.b16 %v123
    %v254 = vunpack.c.l.b16 %v124
    %v255 = vunpack.c.l.b16 %v125
    %v256 = vunpack.c.l.b16 %v126
    %v257 = vunpack.c.l.b16 %v127
    %v258 = vunpack.c.l.b16 %v128
    %v259 = vunpack.c.l.b16 %v129
    %v260 = vunpack.c.l.b16 %v130
    %v261 = vunpack.c.l.b16 %v131
    %v262 = vunpack.c.l.b16 %v132
    %v263 = vunpack.c.l.b16 %v133
    %v264 = vunpack.c.l.b16 %v134
    %v265 = vunpack.c.l.b16 %v135
    %v266 = vunpack.c.l.b16 %v136
    %v267 = vunpack.c.l.b16 %v137
    %v268 = vunpack.c.l.b16 %v138
    %v269 = vunpack.c.l.b16 %v139
    %v270 = vunpack.c.l.b16 %v140
    %v271 = vunpack.c.l.b16 %v141
    %v272 = vunpack.c.l.b16 %v142
    %v273 = vunpack.c.l.b16 %v143
    %v274 = vunpack.c.l.b16 %v144
    %v275 = vunpack.c.l.b16 %v145
    %v276 = vunpack.c.l.b16 %v146
    %v277 = vunpack.c.l.b16 %v147
    %v278 = vunpack.c.l.b16 %v148
    %v279 = vunpack.c.l.b16 %v149
    %v280 = vunpack.c.l.b16 %v150
    %v281 = vunpack.c.l.b16 %v151
    %v282 = vunpack.c.l.b16 %v152
    %v283 = vunpack.c.l.b16 %v153
    %v284 = vunpack.c.l.b16 %v154
    %v285 = vunpack.c.l.b16 %v155
    %v286 = vunpack.c.l.b16 %v156
    %v287 = vunpack.c.l.b16 %v157
    %v288 = vunpack.c.l.b16 %v158
    %v289 = vunpack.c.l.b16 %v159
    %v290 = vunpack.c.l.b16 %v160
    %v291 = vunpack.c.l.b16 %v161
    %v292 = vunpack.c.l.b16 %v162
    %v293 = vunpack.c.l.b16 %v163
    %v294 = vunpack.c.l.b16 %v164
    %v295 = vunpack.c.l.b16 %v165
    %v296 = vunpack.c.l.b16 %v166
    %v297 = vunpack.c.l.b16 %v167
    %v298 = vunpack.c.l.b16 %v168
    %v299 = vunpack.c.l.b16 %v169
    %v300 = vunpack.c.l.b16 %v170
    %v301 = vunpack.c.l.b16 %v171
    %v302 = vunpack.c.l.b16 %v172
    %v303 = vunpack.c.l.b16 %v173
    %v304 = vunpack.c.l.b16 %v174
    %v305 = vunpack.c.l.b16 %v175
    %v306 = vunpack.c.l.b16 %v176
    %v307 = vunpack.c.l.b16 %v177
    %v308 = vunpack.c.l.b16 %v178
    %v309 = vunpack.c.l.b16 %v179
    %v310 = vunpack.c.l.b16 %v180
    %v311 = vunpack.c.l.b16 %v181
    %v312 = vunpack.c.l.b16 %v182
    %v313 = vpack.c.b16 %v252, %v251
    %v314 = vpack.c.b16 %v254, %v253
    %v315 = vpack.c.b16 %v256, %v255
    %v316 = vpack.c.b16 %v258, %v257
    %v317 = vpack.c.b16 %v260, %v259
    %v318 = vpack.c.b16 %v262, %v261
    %v319 = vpack.c.b16 %v264, %v263
    %v320 = vpack.c.b16 %v266, %v265
    %v321 = vpack.c.b16 %v268, %v267
    %v322 = vpack.c.b16 %v270, %v269
    %v323 = vpack.c.b16 %v272, %v271
    %v324 = vpack.c.b16 %v274, %v273
    %v325 = vpack.c.b16 %v276, %v275
    %v326 = vpack.c.b16 %v278, %v277
    %v327 = vpack.c.b16 %v280, %v279
    %v328 = vpack.c.b16 %v282, %v281
    %v329 = vpack.c.b16 %v284, %v283
    %v330 = vpack.c.b16 %v286, %v285
    %v331 = vpack.c.b16 %v288, %v287
    %v332 = vpack.c.b16 %v290, %v289
    %v333 = vpack.c.b16 %v292, %v291
    %v334 = vpack.c.b16 %v294, %v293
    %v335 = vpack.c.b16 %v296, %v295
    %v336 = vpack.c.b16 %v298, %v297
    %v337 = vpack.c.b16 %v300, %v299
    %v338 = vpack.c.b16 %v302, %v301
    %v339 = vpack.c.b16 %v304, %v303
    %v340 = vpack.c.b16 %v306, %v305
    %v341 = vpack.c.b16 %v308, %v307
    %v342 = vpack.c.b16 %v310, %v309
    %v343 = vpack.c.b16 %v312, %v311
    %v349 = vunpack.c.l.b16 %v106
    %v350 = vunpack.c.l.b16 %v107
    %v351 = vunpack.c.l.b16 %v108
    %v352 = vunpack.c.l.b16 %v109
    %v353 = vunpack.c.l.b16 %v110
    %v354 = vpack.c.b16 %v350, %v349
    %v355 = vpack.c.b16 %v352, %v351
    %v356 = vpack.c.b16 %v353, %v353
    %vm359 = vcmask 293888
    %v361 = vsel %vm359, %v313, 0
    %v364 = vsel %vm359, %v314, 0
    %v367 = vsel %vm359, %v315, 0
    %v370 = vsel %vm359, %v316, 0
    %v373 = vsel %vm359, %v317, 0
    %v376 = vsel %vm359, %v318, 0
    %v379 = vsel %vm359, %v319, 0
    %v382 = vsel %vm359, %v320, 0
    %v385 = vsel %vm359, %v321, 0
    %v388 = vsel %vm359, %v322, 0
    %v391 = vsel %vm359, %v323, 0
    %v394 = vsel %vm359, %v324, 0
    %v397 = vsel %vm359, %v325, 0
    %v400 = vsel %vm359, %v326, 0
    %v403 = vsel %vm359, %v327, 0
    %v406 = vsel %vm359, %v328, 0
    %v409 = vsel %vm359, %v329, 0
    %v412 = vsel %vm359, %v330, 0
    %v415 = vsel %vm359, %v331, 0
    %v418 = vsel %vm359, %v332, 0
    %v421 = vsel %vm359, %v333, 0
    %v424 = vsel %vm359, %v334, 0
    %v427 = vsel %vm359, %v335, 0
    %v430 = vsel %vm359, %v336, 0
    %v433 = vsel %vm359, %v337, 0
    %v436 = vsel %vm359, %v338, 0
    %v439 = vsel %vm359, %v339, 0
    %v442 = vsel %vm359, %v340, 0
    %v445 = vsel %vm359, %v341, 0
    %v448 = vsel %vm359, %v342, 0
    %v451 = vsel %vm359, %v343, 0
    %vm453 = vcmask 1041408
    %v455 = vsel %vm453, %v356, 0
    %457 = vmatprep.subr.bf16.mxu0 0
    %458 = vmatpush1.bf16.msra.mxu0 0
    %459 = vmatprep.subr.bf16.mxu0 0
    %460 = vmatpush1.bf16.msra.mxu0 0
    %461 = vmatprep.subr.bf16.mxu0 0
    %462 = vmatpush1.bf16.msra.mxu0 0
    %463 = vmatprep.subr.bf16.mxu0 0
    %464 = vmatpush1.bf16.msra.mxu0 0
    %465 = vmatprep.subr.bf16.mxu0 0
    %466 = vmatpush1.bf16.msra.mxu0 0
    %467 = vmatprep.subr.bf16.mxu0 0
    %468 = vmatpush1.bf16.msra.mxu0 %v455
    %469 = vmatprep.subr.bf16.mxu0 0
    %470 = vmatpush1.bf16.msra.mxu0 %v355
    %471 = vmatprep.subr.bf16.mxu0 0
    %472 = vmatpush1.bf16.msra.mxu0 %v354
    %473 = vmatprep.subr.bf16.mxu0 0
    %474 = vmatpush2.bf16.msra.mxu0 0
    %475 = vmatprep.subr.bf16.mxu0 0
    %476 = vmatpush2.bf16.msra.mxu0 0
    %477 = vmatprep.subr.bf16.mxu0 0
    %478 = vmatpush2.bf16.msra.mxu0 0
    %479 = vmatprep.subr.bf16.mxu0 0
    %480 = vmatpush2.bf16.msra.mxu0 0
    %481 = vmatprep.subr.bf16.mxu0 0
    %482 = vmatpush2.bf16.msra.mxu0 0
    %483 = vmatprep.subr.bf16.mxu0 0
    %484 = vmatpush2.bf16.msra.mxu0 0
    %485 = vmatprep.subr.bf16.mxu0 0
    %486 = vmatpush2.bf16.msra.mxu0 0
    %487 = vmatprep.subr.bf16.mxu0 0
    %488 = vmatpush2.bf16.msra.mxu0 0
    %489 = vmatprep.mubr.bf16.mxu0 0
    %490 = vmatmul.mubr.bf16.gmra.mxu0 %v361
    %v491 = vpop.f32.mrf.mxu0
    %v492 = vadd.f32 %v187, %v491
    %v493 = vpop.f32.mrf.mxu0
    %v494 = vpop.f32.mrf.mxu0
    %v495 = vadd.f32 %v187, %v494
    %v496 = vpop.f32.mrf.mxu0
    %497 = vmatprep.mubr.bf16.mxu0 0
    %498 = vmatmul.mubr.bf16.gmra.mxu0 %v364
    %v499 = vpop.f32.mrf.mxu0
    %v500 = vadd.f32 %v187, %v499
    %v501 = vpop.f32.mrf.mxu0
    %v502 = vpop.f32.mrf.mxu0
    %v503 = vadd.f32 %v187, %v502
    %v504 = vpop.f32.mrf.mxu0
    %505 = vmatprep.mubr.bf16.mxu0 0
    %506 = vmatmul.mubr.bf16.gmra.mxu0 %v367
    %v507 = vpop.f32.mrf.mxu0
    %v508 = vadd.f32 %v187, %v507
    %v509 = vpop.f32.mrf.mxu0
    %v510 = vpop.f32.mrf.mxu0
    %v511 = vadd.f32 %v187, %v510
    %v512 = vpop.f32.mrf.mxu0
    %513 = vmatprep.mubr.bf16.mxu0 0
    %514 = vmatmul.mubr.bf16.gmra.mxu0 %v370
    %v515 = vpop.f32.mrf.mxu0
    %v516 = vadd.f32 %v187, %v515
    %v517 = vpop.f32.mrf.mxu0
    %v518 = vpop.f32.mrf.mxu0
    %v519 = vadd.f32 %v187, %v518
    %v520 = vpop.f32.mrf.mxu0
    %521 = vmatprep.mubr.bf16.mxu0 0
    %522 = vmatmul.mubr.bf16.gmra.mxu0 %v373
    %v523 = vpop.f32.mrf.mxu0
    %v524 = vadd.f32 %v187, %v523
    %v525 = vpop.f32.mrf.mxu0
    %v526 = vpop.f32.mrf.mxu0
    %v527 = vadd.f32 %v187, %v526
    %v528 = vpop.f32.mrf.mxu0
    %529 = vmatprep.mubr.bf16.mxu0 0
    %530 = vmatmul.mubr.bf16.gmra.mxu0 %v376
    %v531 = vpop.f32.mrf.mxu0
    %v532 = vadd.f32 %v187, %v531
    %v533 = vpop.f32.mrf.mxu0
    %v534 = vpop.f32.mrf.mxu0
    %v535 = vadd.f32 %v187, %v534
    %v536 = vpop.f32.mrf.mxu0
    %537 = vmatprep.mubr.bf16.mxu0 0
    %538 = vmatmul.mubr.bf16.gmra.mxu0 %v379
    %v539 = vpop.f32.mrf.mxu0
    %v540 = vadd.f32 %v187, %v539
    %v541 = vpop.f32.mrf.mxu0
    %v542 = vpop.f32.mrf.mxu0
    %v543 = vadd.f32 %v187, %v542
    %v544 = vpop.f32.mrf.mxu0
    %545 = vmatprep.mubr.bf16.mxu0 0
    %546 = vmatmul.mubr.bf16.gmra.mxu0 %v382
    %v547 = vpop.f32.mrf.mxu0
    %v548 = vadd.f32 %v187, %v547
    %v549 = vpop.f32.mrf.mxu0
    %v550 = vpop.f32.mrf.mxu0
    %v551 = vadd.f32 %v187, %v550
    %v552 = vpop.f32.mrf.mxu0
    %553 = vmatprep.mubr.bf16.mxu0 0
    %554 = vmatmul.mubr.bf16.gmra.mxu0 %v385
    %v555 = vpop.f32.mrf.mxu0
    %v556 = vadd.f32 %v187, %v555
    %v557 = vpop.f32.mrf.mxu0
    %v558 = vpop.f32.mrf.mxu0
    %v559 = vadd.f32 %v187, %v558
    %v560 = vpop.f32.mrf.mxu0
    %561 = vmatprep.mubr.bf16.mxu0 0
    %562 = vmatmul.mubr.bf16.gmra.mxu0 %v388
    %v563 = vpop.f32.mrf.mxu0
    %v564 = vadd.f32 %v187, %v563
    %v565 = vpop.f32.mrf.mxu0
    %v566 = vpop.f32.mrf.mxu0
    %v567 = vadd.f32 %v187, %v566
    %v568 = vpop.f32.mrf.mxu0
    %569 = vmatprep.mubr.bf16.mxu0 0
    %570 = vmatmul.mubr.bf16.gmra.mxu0 %v391
    %v571 = vpop.f32.mrf.mxu0
    %v572 = vadd.f32 %v187, %v571
    %v573 = vpop.f32.mrf.mxu0
    %v574 = vpop.f32.mrf.mxu0
    %v575 = vadd.f32 %v187, %v574
    %v576 = vpop.f32.mrf.mxu0
    %577 = vmatprep.mubr.bf16.mxu0 0
    %578 = vmatmul.mubr.bf16.gmra.mxu0 %v394
    %v579 = vpop.f32.mrf.mxu0
    %v580 = vadd.f32 %v187, %v579
    %v581 = vpop.f32.mrf.mxu0
    %v582 = vpop.f32.mrf.mxu0
    %v583 = vadd.f32 %v187, %v582
    %v584 = vpop.f32.mrf.mxu0
    %585 = vmatprep.mubr.bf16.mxu0 0
    %586 = vmatmul.mubr.bf16.gmra.mxu0 %v397
    %v587 = vpop.f32.mrf.mxu0
    %v588 = vadd.f32 %v187, %v587
    %v589 = vpop.f32.mrf.mxu0
    %v590 = vpop.f32.mrf.mxu0
    %v591 = vadd.f32 %v187, %v590
    %v592 = vpop.f32.mrf.mxu0
    %593 = vmatprep.mubr.bf16.mxu0 0
    %594 = vmatmul.mubr.bf16.gmra.mxu0 %v400
    %v595 = vpop.f32.mrf.mxu0
    %v596 = vadd.f32 %v187, %v595
    %v597 = vpop.f32.mrf.mxu0
    %v598 = vpop.f32.mrf.mxu0
    %v599 = vadd.f32 %v187, %v598
    %v600 = vpop.f32.mrf.mxu0
    %601 = vmatprep.mubr.bf16.mxu0 0
    %602 = vmatmul.mubr.bf16.gmra.mxu0 %v403
    %v603 = vpop.f32.mrf.mxu0
    %v604 = vadd.f32 %v187, %v603
    %v605 = vpop.f32.mrf.mxu0
    %v606 = vpop.f32.mrf.mxu0
    %v607 = vadd.f32 %v187, %v606
    %v608 = vpop.f32.mrf.mxu0
    %609 = vmatprep.mubr.bf16.mxu0 0
    %610 = vmatmul.mubr.bf16.gmra.mxu0 %v406
    %v611 = vpop.f32.mrf.mxu0
    %v612 = vadd.f32 %v187, %v611
    %v613 = vpop.f32.mrf.mxu0
    %v614 = vpop.f32.mrf.mxu0
    %v615 = vadd.f32 %v187, %v614
    %v616 = vpop.f32.mrf.mxu0
    %617 = vmatprep.mubr.bf16.mxu0 0
    %618 = vmatmul.mubr.bf16.gmra.mxu0 %v409
    %v619 = vpop.f32.mrf.mxu0
    %v620 = vadd.f32 %v187, %v619
    %v621 = vpop.f32.mrf.mxu0
    %v622 = vpop.f32.mrf.mxu0
    %v623 = vadd.f32 %v187, %v622
    %v624 = vpop.f32.mrf.mxu0
    %625 = vmatprep.mubr.bf16.mxu0 0
    %626 = vmatmul.mubr.bf16.gmra.mxu0 %v412
    %v627 = vpop.f32.mrf.mxu0
    %v628 = vadd.f32 %v187, %v627
    %v629 = vpop.f32.mrf.mxu0
    %v630 = vpop.f32.mrf.mxu0
    %v631 = vadd.f32 %v187, %v630
    %v632 = vpop.f32.mrf.mxu0
    %633 = vmatprep.mubr.bf16.mxu0 0
    %634 = vmatmul.mubr.bf16.gmra.mxu0 %v415
    %v635 = vpop.f32.mrf.mxu0
    %v636 = vadd.f32 %v187, %v635
    %v637 = vpop.f32.mrf.mxu0
    %v638 = vpop.f32.mrf.mxu0
    %v639 = vadd.f32 %v187, %v638
    %v640 = vpop.f32.mrf.mxu0
    %641 = vmatprep.mubr.bf16.mxu0 0
    %642 = vmatmul.mubr.bf16.gmra.mxu0 %v418
    %v643 = vpop.f32.mrf.mxu0
    %v644 = vadd.f32 %v187, %v643
    %v645 = vpop.f32.mrf.mxu0
    %v646 = vpop.f32.mrf.mxu0
    %v647 = vadd.f32 %v187, %v646
    %v648 = vpop.f32.mrf.mxu0
    %649 = vmatprep.mubr.bf16.mxu0 0
    %650 = vmatmul.mubr.bf16.gmra.mxu0 %v421
    %v651 = vpop.f32.mrf.mxu0
    %v652 = vadd.f32 %v187, %v651
    %v653 = vpop.f32.mrf.mxu0
    %v654 = vpop.f32.mrf.mxu0
    %v655 = vadd.f32 %v187, %v654
    %v656 = vpop.f32.mrf.mxu0
    %657 = vmatprep.mubr.bf16.mxu0 0
    %658 = vmatmul.mubr.bf16.gmra.mxu0 %v424
    %v659 = vpop.f32.mrf.mxu0
    %v660 = vadd.f32 %v187, %v659
    %v661 = vpop.f32.mrf.mxu0
    %v662 = vpop.f32.mrf.mxu0
    %v663 = vadd.f32 %v187, %v662
    %v664 = vpop.f32.mrf.mxu0
    %665 = vmatprep.mubr.bf16.mxu0 0
    %666 = vmatmul.mubr.bf16.gmra.mxu0 %v427
    %v667 = vpop.f32.mrf.mxu0
    %v668 = vadd.f32 %v187, %v667
    %v669 = vpop.f32.mrf.mxu0
    %v670 = vpop.f32.mrf.mxu0
    %v671 = vadd.f32 %v187, %v670
    %v672 = vpop.f32.mrf.mxu0
    %673 = vmatprep.mubr.bf16.mxu0 0
    %674 = vmatmul.mubr.bf16.gmra.mxu0 %v430
    %v675 = vpop.f32.mrf.mxu0
    %v676 = vadd.f32 %v187, %v675
    %v677 = vpop.f32.mrf.mxu0
    %v678 = vpop.f32.mrf.mxu0
    %v679 = vadd.f32 %v187, %v678
    %v680 = vpop.f32.mrf.mxu0
    %681 = vmatprep.mubr.bf16.mxu0 0
    %682 = vmatmul.mubr.bf16.gmra.mxu0 %v433
    %v683 = vpop.f32.mrf.mxu0
    %v684 = vadd.f32 %v187, %v683
    %v685 = vpop.f32.mrf.mxu0
    %v686 = vpop.f32.mrf.mxu0
    %v687 = vadd.f32 %v187, %v686
    %v688 = vpop.f32.mrf.mxu0
    %689 = vmatprep.mubr.bf16.mxu0 0
    %690 = vmatmul.mubr.bf16.gmra.mxu0 %v436
    %v691 = vpop.f32.mrf.mxu0
    %v692 = vadd.f32 %v187, %v691
    %v693 = vpop.f32.mrf.mxu0
    %v694 = vpop.f32.mrf.mxu0
    %v695 = vadd.f32 %v187, %v694
    %v696 = vpop.f32.mrf.mxu0
    %697 = vmatprep.mubr.bf16.mxu0 0
    %698 = vmatmul.mubr.bf16.gmra.mxu0 %v439
    %v699 = vpop.f32.mrf.mxu0
    %v700 = vadd.f32 %v187, %v699
    %v701 = vpop.f32.mrf.mxu0
    %v702 = vpop.f32.mrf.mxu0
    %v703 = vadd.f32 %v187, %v702
    %v704 = vpop.f32.mrf.mxu0
    %705 = vmatprep.mubr.bf16.mxu0 0
    %706 = vmatmul.mubr.bf16.gmra.mxu0 %v442
    %v707 = vpop.f32.mrf.mxu0
    %v708 = vadd.f32 %v187, %v707
    %v709 = vpop.f32.mrf.mxu0
    %v710 = vpop.f32.mrf.mxu0
    %v711 = vadd.f32 %v187, %v710
    %v712 = vpop.f32.mrf.mxu0
    %713 = vmatprep.mubr.bf16.mxu0 0
    %714 = vmatmul.mubr.bf16.gmra.mxu0 %v445
    %v715 = vpop.f32.mrf.mxu0
    %v716 = vadd.f32 %v187, %v715
    %v717 = vpop.f32.mrf.mxu0
    %v718 = vpop.f32.mrf.mxu0
    %v719 = vadd.f32 %v187, %v718
    %v720 = vpop.f32.mrf.mxu0
    %721 = vmatprep.mubr.bf16.mxu0 0
    %722 = vmatmul.mubr.bf16.gmra.mxu0 %v448
    %v723 = vpop.f32.mrf.mxu0
    %v724 = vadd.f32 %v187, %v723
    %v725 = vpop.f32.mrf.mxu0
    %v726 = vpop.f32.mrf.mxu0
    %v727 = vadd.f32 %v187, %v726
    %v728 = vpop.f32.mrf.mxu0
    %729 = vmatprep.mubr.bf16.mxu0 0
    %730 = vmatmul.mubr.bf16.gmra.mxu0 %v451
    %v731 = vpop.f32.mrf.mxu0
    %v732 = vadd.f32 %v187, %v731
    %v733 = vpop.f32.mrf.mxu0
    %v734 = vpop.f32.mrf.mxu0
    %v735 = vadd.f32 %v187, %v734
    %v736 = vpop.f32.mrf.mxu0
    %737 = vdwg.mxu0
    %v738 = vadd.f32 %v492, %v100
    %v739 = vadd.f32 %v495, %v103
    %v740 = vadd.f32 %v500, %v100
    %v741 = vadd.f32 %v503, %v103
    %v742 = vadd.f32 %v508, %v100
    %v743 = vadd.f32 %v511, %v103
    %v744 = vadd.f32 %v516, %v100
    %v745 = vadd.f32 %v519, %v103
    %v746 = vadd.f32 %v524, %v100
    %v747 = vadd.f32 %v527, %v103
    %v748 = vadd.f32 %v532, %v100
    %v749 = vadd.f32 %v535, %v103
    %v750 = vadd.f32 %v540, %v100
    %v751 = vadd.f32 %v543, %v103
    %v752 = vadd.f32 %v548, %v100
    %v753 = vadd.f32 %v551, %v103
    %v754 = vadd.f32 %v556, %v100
    %v755 = vadd.f32 %v559, %v103
    %v756 = vadd.f32 %v564, %v100
    %v757 = vadd.f32 %v567, %v103
    %v758 = vadd.f32 %v572, %v100
    %v759 = vadd.f32 %v575, %v103
    %v760 = vadd.f32 %v580, %v100
    %v761 = vadd.f32 %v583, %v103
    %v762 = vadd.f32 %v588, %v100
    %v763 = vadd.f32 %v591, %v103
    %v764 = vadd.f32 %v596, %v100
    %v765 = vadd.f32 %v599, %v103
    %v766 = vadd.f32 %v604, %v100
    %v767 = vadd.f32 %v607, %v103
    %v768 = vadd.f32 %v612, %v100
    %v769 = vadd.f32 %v615, %v103
    %v770 = vadd.f32 %v620, %v100
    %v771 = vadd.f32 %v623, %v103
    %v772 = vadd.f32 %v628, %v100
    %v773 = vadd.f32 %v631, %v103
    %v774 = vadd.f32 %v636, %v100
    %v775 = vadd.f32 %v639, %v103
    %v776 = vadd.f32 %v644, %v100
    %v777 = vadd.f32 %v647, %v103
    %v778 = vadd.f32 %v652, %v100
    %v779 = vadd.f32 %v655, %v103
    %v780 = vadd.f32 %v660, %v100
    %v781 = vadd.f32 %v663, %v103
    %v782 = vadd.f32 %v668, %v100
    %v783 = vadd.f32 %v671, %v103
    %v784 = vadd.f32 %v676, %v100
    %v785 = vadd.f32 %v679, %v103
    %v786 = vadd.f32 %v684, %v100
    %v787 = vadd.f32 %v687, %v103
    %v788 = vadd.f32 %v692, %v100
    %v789 = vadd.f32 %v695, %v103
    %v790 = vadd.f32 %v700, %v100
    %v791 = vadd.f32 %v703, %v103
    %v792 = vadd.f32 %v708, %v100
    %v793 = vadd.f32 %v711, %v103
    %v794 = vadd.f32 %v716, %v100
    %v795 = vadd.f32 %v719, %v103
    %v796 = vadd.f32 %v724, %v100
    %v797 = vadd.f32 %v727, %v103
    %v798 = vadd.f32 %v732, %v100
    %v799 = vadd.f32 %v735, %v103
    %vm800 = vcmp.ge.f32.partialorder %v738, 0.0
    %vm801 = vcmp.ge.f32.partialorder %v739, 0.0
    %vm802 = vcmp.ge.f32.partialorder %v740, 0.0
    %vm803 = vcmp.ge.f32.partialorder %v741, 0.0
    %vm804 = vcmp.ge.f32.partialorder %v742, 0.0
    %vm805 = vcmp.ge.f32.partialorder %v743, 0.0
    %vm806 = vcmp.ge.f32.partialorder %v744, 0.0
    %vm807 = vcmp.ge.f32.partialorder %v745, 0.0
    %vm808 = vcmp.ge.f32.partialorder %v746, 0.0
    %vm809 = vcmp.ge.f32.partialorder %v747, 0.0
    %vm810 = vcmp.ge.f32.partialorder %v748, 0.0
    %vm811 = vcmp.ge.f32.partialorder %v749, 0.0
    %vm812 = vcmp.ge.f32.partialorder %v750, 0.0
    %vm813 = vcmp.ge.f32.partialorder %v751, 0.0
    %vm814 = vcmp.ge.f32.partialorder %v752, 0.0
    %vm815 = vcmp.ge.f32.partialorder %v753, 0.0
    %vm816 = vcmp.ge.f32.partialorder %v754, 0.0
    %vm817 = vcmp.ge.f32.partialorder %v755, 0.0
    %vm818 = vcmp.ge.f32.partialorder %v756, 0.0
    %vm819 = vcmp.ge.f32.partialorder %v757, 0.0
    %vm820 = vcmp.ge.f32.partialorder %v758, 0.0
    %vm821 = vcmp.ge.f32.partialorder %v759, 0.0
    %vm822 = vcmp.ge.f32.partialorder %v760, 0.0
    %vm823 = vcmp.ge.f32.partialorder %v761, 0.0
    %vm824 = vcmp.ge.f32.partialorder %v762, 0.0
    %vm825 = vcmp.ge.f32.partialorder %v763, 0.0
    %vm826 = vcmp.ge.f32.partialorder %v764, 0.0
    %vm827 = vcmp.ge.f32.partialorder %v765, 0.0
    %vm828 = vcmp.ge.f32.partialorder %v766, 0.0
    %vm829 = vcmp.ge.f32.partialorder %v767, 0.0
    %vm830 = vcmp.ge.f32.partialorder %v768, 0.0
    %vm831 = vcmp.ge.f32.partialorder %v769, 0.0
    %vm832 = vcmp.ge.f32.partialorder %v770, 0.0
    %vm833 = vcmp.ge.f32.partialorder %v771, 0.0
    %vm834 = vcmp.ge.f32.partialorder %v772, 0.0
    %vm835 = vcmp.ge.f32.partialorder %v773, 0.0
    %vm836 = vcmp.ge.f32.partialorder %v774, 0.0
    %vm837 = vcmp.ge.f32.partialorder %v775, 0.0
    %vm838 = vcmp.ge.f32.partialorder %v776, 0.0
    %vm839 = vcmp.ge.f32.partialorder %v777, 0.0
    %vm840 = vcmp.ge.f32.partialorder %v778, 0.0
    %vm841 = vcmp.ge.f32.partialorder %v779, 0.0
    %vm842 = vcmp.ge.f32.partialorder %v780, 0.0
    %vm843 = vcmp.ge.f32.partialorder %v781, 0.0
    %vm844 = vcmp.ge.f32.partialorder %v782, 0.0
    %vm845 = vcmp.ge.f32.partialorder %v783, 0.0
    %vm846 = vcmp.ge.f32.partialorder %v784, 0.0
    %vm847 = vcmp.ge.f32.partialorder %v785, 0.0
    %vm848 = vcmp.ge.f32.partialorder %v786, 0.0
    %vm849 = vcmp.ge.f32.partialorder %v787, 0.0
    %vm850 = vcmp.ge.f32.partialorder %v788, 0.0
    %vm851 = vcmp.ge.f32.partialorder %v789, 0.0
    %vm852 = vcmp.ge.f32.partialorder %v790, 0.0
    %vm853 = vcmp.ge.f32.partialorder %v791, 0.0
    %vm854 = vcmp.ge.f32.partialorder %v792, 0.0
    %vm855 = vcmp.ge.f32.partialorder %v793, 0.0
    %vm856 = vcmp.ge.f32.partialorder %v794, 0.0
    %vm857 = vcmp.ge.f32.partialorder %v795, 0.0
    %vm858 = vcmp.ge.f32.partialorder %v796, 0.0
    %vm859 = vcmp.ge.f32.partialorder %v797, 0.0
    %vm860 = vcmp.ge.f32.partialorder %v798, 0.0
    %vm861 = vcmp.ge.f32.partialorder %v799, 0.0
    %v862 = vmul.f32 %v738, 0.01
    %v863 = vmul.f32 %v739, 0.01
    %v864 = vmul.f32 %v740, 0.01
    %v865 = vmul.f32 %v741, 0.01
    %v866 = vmul.f32 %v742, 0.01
    %v867 = vmul.f32 %v743, 0.01
    %v868 = vmul.f32 %v744, 0.01
    %v869 = vmul.f32 %v745, 0.01
    %v870 = vmul.f32 %v746, 0.01
    %v871 = vmul.f32 %v747, 0.01
    %v872 = vmul.f32 %v748, 0.01
    %v873 = vmul.f32 %v749, 0.01
    %v874 = vmul.f32 %v750, 0.01
    %v875 = vmul.f32 %v751, 0.01
    %v876 = vmul.f32 %v752, 0.01
    %v877 = vmul.f32 %v753, 0.01
    %v878 = vmul.f32 %v754, 0.01
    %v879 = vmul.f32 %v755, 0.01
    %v880 = vmul.f32 %v756, 0.01
    %v881 = vmul.f32 %v757, 0.01
    %v882 = vmul.f32 %v758, 0.01
    %v883 = vmul.f32 %v759, 0.01
    %v884 = vmul.f32 %v760, 0.01
    %v885 = vmul.f32 %v761, 0.01
    %v886 = vmul.f32 %v762, 0.01
    %v887 = vmul.f32 %v763, 0.01
    %v888 = vmul.f32 %v764, 0.01
    %v889 = vmul.f32 %v765, 0.01
    %v890 = vmul.f32 %v766, 0.01
    %v891 = vmul.f32 %v767, 0.01
    %v892 = vmul.f32 %v768, 0.01
    %v893 = vmul.f32 %v769, 0.01
    %v894 = vmul.f32 %v770, 0.01
    %v895 = vmul.f32 %v771, 0.01
    %v896 = vmul.f32 %v772, 0.01
    %v897 = vmul.f32 %v773, 0.01
    %v898 = vmul.f32 %v774, 0.01
    %v899 = vmul.f32 %v775, 0.01
    %v900 = vmul.f32 %v776, 0.01
    %v901 = vmul.f32 %v777, 0.01
    %v902 = vmul.f32 %v778, 0.01
    %v903 = vmul.f32 %v779, 0.01
    %v904 = vmul.f32 %v780, 0.01
    %v905 = vmul.f32 %v781, 0.01
    %v906 = vmul.f32 %v782, 0.01
    %v907 = vmul.f32 %v783, 0.01
    %v908 = vmul.f32 %v784, 0.01
    %v909 = vmul.f32 %v785, 0.01
    %v910 = vmul.f32 %v786, 0.01
    %v911 = vmul.f32 %v787, 0.01
    %v912 = vmul.f32 %v788, 0.01
    %v913 = vmul.f32 %v789, 0.01
    %v914 = vmul.f32 %v790, 0.01
    %v915 = vmul.f32 %v791, 0.01
    %v916 = vmul.f32 %v792, 0.01
    %v917 = vmul.f32 %v793, 0.01
    %v918 = vmul.f32 %v794, 0.01
    %v919 = vmul.f32 %v795, 0.01
    %v920 = vmul.f32 %v796, 0.01
    %v921 = vmul.f32 %v797, 0.01
    %v922 = vmul.f32 %v798, 0.01
    %v923 = vmul.f32 %v799, 0.01
    %v924 = vsel %vm800, %v738, %v862
    %v925 = vsel %vm801, %v739, %v863
    %v926 = vsel %vm802, %v740, %v864
    %v927 = vsel %vm803, %v741, %v865
    %v928 = vsel %vm804, %v742, %v866
    %v929 = vsel %vm805, %v743, %v867
    %v930 = vsel %vm806, %v744, %v868
    %v931 = vsel %vm807, %v745, %v869
    %v932 = vsel %vm808, %v746, %v870
    %v933 = vsel %vm809, %v747, %v871
    %v934 = vsel %vm810, %v748, %v872
    %v935 = vsel %vm811, %v749, %v873
    %v936 = vsel %vm812, %v750, %v874
    %v937 = vsel %vm813, %v751, %v875
    %v938 = vsel %vm814, %v752, %v876
    %v939 = vsel %vm815, %v753, %v877
    %v940 = vsel %vm816, %v754, %v878
    %v941 = vsel %vm817, %v755, %v879
    %v942 = vsel %vm818, %v756, %v880
    %v943 = vsel %vm819, %v757, %v881
    %v944 = vsel %vm820, %v758, %v882
    %v945 = vsel %vm821, %v759, %v883
    %v946 = vsel %vm822, %v760, %v884
    %v947 = vsel %vm823, %v761, %v885
    %v948 = vsel %vm824, %v762, %v886
    %v949 = vsel %vm825, %v763, %v887
    %v950 = vsel %vm826, %v764, %v888
    %v951 = vsel %vm827, %v765, %v889
    %v952 = vsel %vm828, %v766, %v890
    %v953 = vsel %vm829, %v767, %v891
    %v954 = vsel %vm830, %v768, %v892
    %v955 = vsel %vm831, %v769, %v893
    %v956 = vsel %vm832, %v770, %v894
    %v957 = vsel %vm833, %v771, %v895
    %v958 = vsel %vm834, %v772, %v896
    %v959 = vsel %vm835, %v773, %v897
    %v960 = vsel %vm836, %v774, %v898
    %v961 = vsel %vm837, %v775, %v899
    %v962 = vsel %vm838, %v776, %v900
    %v963 = vsel %vm839, %v777, %v901
    %v964 = vsel %vm840, %v778, %v902
    %v965 = vsel %vm841, %v779, %v903
    %v966 = vsel %vm842, %v780, %v904
    %v967 = vsel %vm843, %v781, %v905
    %v968 = vsel %vm844, %v782, %v906
    %v969 = vsel %vm845, %v783, %v907
    %v970 = vsel %vm846, %v784, %v908
    %v971 = vsel %vm847, %v785, %v909
    %v972 = vsel %vm848, %v786, %v910
    %v973 = vsel %vm849, %v787, %v911
    %v974 = vsel %vm850, %v788, %v912
    %v975 = vsel %vm851, %v789, %v913
    %v976 = vsel %vm852, %v790, %v914
    %v977 = vsel %vm853, %v791, %v915
    %v978 = vsel %vm854, %v792, %v916
    %v979 = vsel %vm855, %v793, %v917
    %v980 = vsel %vm856, %v794, %v918
    %v981 = vsel %vm857, %v795, %v919
    %v982 = vsel %vm858, %v796, %v920
    %v983 = vsel %vm859, %v797, %v921
    %v984 = vsel %vm860, %v798, %v922
    %v985 = vsel %vm861, %v799, %v923
    %v986 = vpack.c.bf16 %v925, %v924
    %v987 = vpack.c.bf16 %v927, %v926
    %v988 = vpack.c.bf16 %v929, %v928
    %v989 = vpack.c.bf16 %v931, %v930
    %v990 = vpack.c.bf16 %v933, %v932
    %v991 = vpack.c.bf16 %v935, %v934
    %v992 = vpack.c.bf16 %v937, %v936
    %v993 = vpack.c.bf16 %v939, %v938
    %v994 = vpack.c.bf16 %v941, %v940
    %v995 = vpack.c.bf16 %v943, %v942
    %v996 = vpack.c.bf16 %v945, %v944
    %v997 = vpack.c.bf16 %v947, %v946
    %v998 = vpack.c.bf16 %v949, %v948
    %v999 = vpack.c.bf16 %v951, %v950
    %v1000 = vpack.c.bf16 %v953, %v952
    %v1001 = vpack.c.bf16 %v955, %v954
    %v1002 = vpack.c.bf16 %v957, %v956
    %v1003 = vpack.c.bf16 %v959, %v958
    %v1004 = vpack.c.bf16 %v961, %v960
    %v1005 = vpack.c.bf16 %v963, %v962
    %v1006 = vpack.c.bf16 %v965, %v964
    %v1007 = vpack.c.bf16 %v967, %v966
    %v1008 = vpack.c.bf16 %v969, %v968
    %v1009 = vpack.c.bf16 %v971, %v970
    %v1010 = vpack.c.bf16 %v973, %v972
    %v1011 = vpack.c.bf16 %v975, %v974
    %v1012 = vpack.c.bf16 %v977, %v976
    %v1013 = vpack.c.bf16 %v979, %v978
    %v1014 = vpack.c.bf16 %v981, %v980
    %v1015 = vpack.c.bf16 %v983, %v982
    %v1016 = vpack.c.bf16 %v985, %v984
    %v1048 = vunpack.c.l.b16 %v986
    %v1049 = vunpack.c.h.b16 %v986
    %v1050 = vunpack.c.l.b16 %v987
    %v1051 = vunpack.c.h.b16 %v987
    %v1052 = vunpack.c.l.b16 %v988
    %v1053 = vunpack.c.h.b16 %v988
    %v1054 = vunpack.c.l.b16 %v989
    %v1055 = vunpack.c.h.b16 %v989
    %v1056 = vunpack.c.l.b16 %v990
    %v1057 = vunpack.c.h.b16 %v990
    %v1058 = vunpack.c.l.b16 %v991
    %v1059 = vunpack.c.h.b16 %v991
    %v1060 = vunpack.c.l.b16 %v992
    %v1061 = vunpack.c.h.b16 %v992
    %v1062 = vunpack.c.l.b16 %v993
    %v1063 = vunpack.c.h.b16 %v993
    %v1064 = vunpack.c.l.b16 %v994
    %v1065 = vunpack.c.h.b16 %v994
    %v1066 = vunpack.c.l.b16 %v995
    %v1067 = vunpack.c.h.b16 %v995
    %v1068 = vunpack.c.l.b16 %v996
    %v1069 = vunpack.c.h.b16 %v996
    %v1070 = vunpack.c.l.b16 %v997
    %v1071 = vunpack.c.h.b16 %v997
    %v1072 = vunpack.c.l.b16 %v998
    %v1073 = vunpack.c.h.b16 %v998
    %v1074 = vunpack.c.l.b16 %v999
    %v1075 = vunpack.c.h.b16 %v999
    %v1076 = vunpack.c.l.b16 %v1000
    %v1077 = vunpack.c.h.b16 %v1000
    %v1078 = vunpack.c.l.b16 %v1001
    %v1079 = vunpack.c.h.b16 %v1001
    %v1080 = vunpack.c.l.b16 %v1002
    %v1081 = vunpack.c.h.b16 %v1002
    %v1082 = vunpack.c.l.b16 %v1003
    %v1083 = vunpack.c.h.b16 %v1003
    %v1084 = vunpack.c.l.b16 %v1004
    %v1085 = vunpack.c.h.b16 %v1004
    %v1086 = vunpack.c.l.b16 %v1005
    %v1087 = vunpack.c.h.b16 %v1005
    %v1088 = vunpack.c.l.b16 %v1006
    %v1089 = vunpack.c.h.b16 %v1006
    %v1090 = vunpack.c.l.b16 %v1007
    %v1091 = vunpack.c.h.b16 %v1007
    %v1092 = vunpack.c.l.b16 %v1008
    %v1093 = vunpack.c.h.b16 %v1008
    %v1094 = vunpack.c.l.b16 %v1009
    %v1095 = vunpack.c.h.b16 %v1009
    %v1096 = vunpack.c.l.b16 %v1010
    %v1097 = vunpack.c.h.b16 %v1010
    %v1098 = vunpack.c.l.b16 %v1011
    %v1099 = vunpack.c.h.b16 %v1011
    %v1100 = vunpack.c.l.b16 %v1012
    %v1101 = vunpack.c.h.b16 %v1012
    %v1102 = vunpack.c.l.b16 %v1013
    %v1103 = vunpack.c.h.b16 %v1013
    %v1104 = vunpack.c.l.b16 %v1014
    %v1105 = vunpack.c.h.b16 %v1014
    %v1106 = vunpack.c.l.b16 %v1015
    %v1107 = vunpack.c.h.b16 %v1015
    %v1108 = vunpack.c.l.b16 %v1016
    %v1109 = vunpack.c.h.b16 %v1016
    %v1110 = vpack.c.b16 %v1048, %v1048
    %v1111 = vpack.c.b16 %v1049, %v1049
    %v1112 = vpack.c.b16 %v1050, %v1050
    %v1113 = vpack.c.b16 %v1051, %v1051
    %v1114 = vpack.c.b16 %v1052, %v1052
    %v1115 = vpack.c.b16 %v1053, %v1053
    %v1116 = vpack.c.b16 %v1054, %v1054
    %v1117 = vpack.c.b16 %v1055, %v1055
    %v1118 = vpack.c.b16 %v1056, %v1056
    %v1119 = vpack.c.b16 %v1057, %v1057
    %v1120 = vpack.c.b16 %v1058, %v1058
    %v1121 = vpack.c.b16 %v1059, %v1059
    %v1122 = vpack.c.b16 %v1060, %v1060
    %v1123 = vpack.c.b16 %v1061, %v1061
    %v1124 = vpack.c.b16 %v1062, %v1062
    %v1125 = vpack.c.b16 %v1063, %v1063
    %v1126 = vpack.c.b16 %v1064, %v1064
    %v1127 = vpack.c.b16 %v1065, %v1065
    %v1128 = vpack.c.b16 %v1066, %v1066
    %v1129 = vpack.c.b16 %v1067, %v1067
    %v1130 = vpack.c.b16 %v1068, %v1068
    %v1131 = vpack.c.b16 %v1069, %v1069
    %v1132 = vpack.c.b16 %v1070, %v1070
    %v1133 = vpack.c.b16 %v1071, %v1071
    %v1134 = vpack.c.b16 %v1072, %v1072
    %v1135 = vpack.c.b16 %v1073, %v1073
    %v1136 = vpack.c.b16 %v1074, %v1074
    %v1137 = vpack.c.b16 %v1075, %v1075
    %v1138 = vpack.c.b16 %v1076, %v1076
    %v1139 = vpack.c.b16 %v1077, %v1077
    %v1140 = vpack.c.b16 %v1078, %v1078
    %v1141 = vpack.c.b16 %v1079, %v1079
    %v1142 = vpack.c.b16 %v1080, %v1080
    %v1143 = vpack.c.b16 %v1081, %v1081
    %v1144 = vpack.c.b16 %v1082, %v1082
    %v1145 = vpack.c.b16 %v1083, %v1083
    %v1146 = vpack.c.b16 %v1084, %v1084
    %v1147 = vpack.c.b16 %v1085, %v1085
    %v1148 = vpack.c.b16 %v1086, %v1086
    %v1149 = vpack.c.b16 %v1087, %v1087
    %v1150 = vpack.c.b16 %v1088, %v1088
    %v1151 = vpack.c.b16 %v1089, %v1089
    %v1152 = vpack.c.b16 %v1090, %v1090
    %v1153 = vpack.c.b16 %v1091, %v1091
    %v1154 = vpack.c.b16 %v1092, %v1092
    %v1155 = vpack.c.b16 %v1093, %v1093
    %v1156 = vpack.c.b16 %v1094, %v1094
    %v1157 = vpack.c.b16 %v1095, %v1095
    %v1158 = vpack.c.b16 %v1096, %v1096
    %v1159 = vpack.c.b16 %v1097, %v1097
    %v1160 = vpack.c.b16 %v1098, %v1098
    %v1161 = vpack.c.b16 %v1099, %v1099
    %v1162 = vpack.c.b16 %v1100, %v1100
    %v1163 = vpack.c.b16 %v1101, %v1101
    %v1164 = vpack.c.b16 %v1102, %v1102
    %v1165 = vpack.c.b16 %v1103, %v1103
    %v1166 = vpack.c.b16 %v1104, %v1104
    %v1167 = vpack.c.b16 %v1105, %v1105
    %v1168 = vpack.c.b16 %v1106, %v1106
    %v1169 = vpack.c.b16 %v1107, %v1107
    %v1170 = vpack.c.b16 %v1108, %v1108
    %v1171 = vpack.c.b16 %v1109, %v1109
    %s1234 = smul.addr %s118, 4
    %s1235 = scalar_lea.vmem [#allocation2], %s1234
    %vm1236 = vcmask 519168
    %1237 = vst.msk [vmem:[%s1235] sm:$0xf] %vm1236, %v1110
    %1238 = vst.msk [vmem:[%s1235 + $0x4] sm:$0xf] %vm1236, %v1111
    %1239 = vst.msk [vmem:[%s1235 + $0x8] sm:$0xf] %vm1236, %v1112
    %1240 = vst.msk [vmem:[%s1235 + $0xc] sm:$0xf] %vm1236, %v1113
    %1241 = vst.msk [vmem:[%s1235 + $0x10] sm:$0xf] %vm1236, %v1114
    %1242 = vst.msk [vmem:[%s1235 + $0x14] sm:$0xf] %vm1236, %v1115
    %1243 = vst.msk [vmem:[%s1235 + $0x18] sm:$0xf] %vm1236, %v1116
    %1244 = vst.msk [vmem:[%s1235 + $0x1c] sm:$0xf] %vm1236, %v1117
    %1245 = vst.msk [vmem:[%s1235 + $0x20] sm:$0xf] %vm1236, %v1118
    %1246 = vst.msk [vmem:[%s1235 + $0x24] sm:$0xf] %vm1236, %v1119
    %1247 = vst.msk [vmem:[%s1235 + $0x28] sm:$0xf] %vm1236, %v1120
    %1248 = vst.msk [vmem:[%s1235 + $0x2c] sm:$0xf] %vm1236, %v1121
    %1249 = vst.msk [vmem:[%s1235 + $0x30] sm:$0xf] %vm1236, %v1122
    %1250 = vst.msk [vmem:[%s1235 + $0x34] sm:$0xf] %vm1236, %v1123
    %1251 = vst.msk [vmem:[%s1235 + $0x38] sm:$0xf] %vm1236, %v1124
    %1252 = vst.msk [vmem:[%s1235 + $0x3c] sm:$0xf] %vm1236, %v1125
    %1253 = vst.msk [vmem:[%s1235 + $0x40] sm:$0xf] %vm1236, %v1126
    %1254 = vst.msk [vmem:[%s1235 + $0x44] sm:$0xf] %vm1236, %v1127
    %1255 = vst.msk [vmem:[%s1235 + $0x48] sm:$0xf] %vm1236, %v1128
    %1256 = vst.msk [vmem:[%s1235 + $0x4c] sm:$0xf] %vm1236, %v1129
    %1257 = vst.msk [vmem:[%s1235 + $0x50] sm:$0xf] %vm1236, %v1130
    %1258 = vst.msk [vmem:[%s1235 + $0x54] sm:$0xf] %vm1236, %v1131
    %1259 = vst.msk [vmem:[%s1235 + $0x58] sm:$0xf] %vm1236, %v1132
    %1260 = vst.msk [vmem:[%s1235 + $0x5c] sm:$0xf] %vm1236, %v1133
    %1261 = vst.msk [vmem:[%s1235 + $0x60] sm:$0xf] %vm1236, %v1134
    %1262 = vst.msk [vmem:[%s1235 + $0x64] sm:$0xf] %vm1236, %v1135
    %1263 = vst.msk [vmem:[%s1235 + $0x68] sm:$0xf] %vm1236, %v1136
    %1264 = vst.msk [vmem:[%s1235 + $0x6c] sm:$0xf] %vm1236, %v1137
    %1265 = vst.msk [vmem:[%s1235 + $0x70] sm:$0xf] %vm1236, %v1138
    %1266 = vst.msk [vmem:[%s1235 + $0x74] sm:$0xf] %vm1236, %v1139
    %1267 = vst.msk [vmem:[%s1235 + $0x78] sm:$0xf] %vm1236, %v1140
    %1268 = vst.msk [vmem:[%s1235 + $0x7c] sm:$0xf] %vm1236, %v1141
    %1269 = vst.msk [vmem:[%s1235 + $0x80] sm:$0xf] %vm1236, %v1142
    %1270 = vst.msk [vmem:[%s1235 + $0x84] sm:$0xf] %vm1236, %v1143
    %1271 = vst.msk [vmem:[%s1235 + $0x88] sm:$0xf] %vm1236, %v1144
    %1272 = vst.msk [vmem:[%s1235 + $0x8c] sm:$0xf] %vm1236, %v1145
    %1273 = vst.msk [vmem:[%s1235 + $0x90] sm:$0xf] %vm1236, %v1146
    %1274 = vst.msk [vmem:[%s1235 + $0x94] sm:$0xf] %vm1236, %v1147
    %1275 = vst.msk [vmem:[%s1235 + $0x98] sm:$0xf] %vm1236, %v1148
    %1276 = vst.msk [vmem:[%s1235 + $0x9c] sm:$0xf] %vm1236, %v1149
    %1277 = vst.msk [vmem:[%s1235 + $0xa0] sm:$0xf] %vm1236, %v1150
    %1278 = vst.msk [vmem:[%s1235 + $0xa4] sm:$0xf] %vm1236, %v1151
    %1279 = vst.msk [vmem:[%s1235 + $0xa8] sm:$0xf] %vm1236, %v1152
    %1280 = vst.msk [vmem:[%s1235 + $0xac] sm:$0xf] %vm1236, %v1153
    %1281 = vst.msk [vmem:[%s1235 + $0xb0] sm:$0xf] %vm1236, %v1154
    %1282 = vst.msk [vmem:[%s1235 + $0xb4] sm:$0xf] %vm1236, %v1155
    %1283 = vst.msk [vmem:[%s1235 + $0xb8] sm:$0xf] %vm1236, %v1156
    %1284 = vst.msk [vmem:[%s1235 + $0xbc] sm:$0xf] %vm1236, %v1157
    %1285 = vst.msk [vmem:[%s1235 + $0xc0] sm:$0xf] %vm1236, %v1158
    %1286 = vst.msk [vmem:[%s1235 + $0xc4] sm:$0xf] %vm1236, %v1159
    %1287 = vst.msk [vmem:[%s1235 + $0xc8] sm:$0xf] %vm1236, %v1160
    %1288 = vst.msk [vmem:[%s1235 + $0xcc] sm:$0xf] %vm1236, %v1161
    %1289 = vst.msk [vmem:[%s1235 + $0xd0] sm:$0xf] %vm1236, %v1162
    %1290 = vst.msk [vmem:[%s1235 + $0xd4] sm:$0xf] %vm1236, %v1163
    %1291 = vst.msk [vmem:[%s1235 + $0xd8] sm:$0xf] %vm1236, %v1164
    %1292 = vst.msk [vmem:[%s1235 + $0xdc] sm:$0xf] %vm1236, %v1165
    %1293 = vst.msk [vmem:[%s1235 + $0xe0] sm:$0xf] %vm1236, %v1166
    %1294 = vst.msk [vmem:[%s1235 + $0xe4] sm:$0xf] %vm1236, %v1167
    %1295 = vst.msk [vmem:[%s1235 + $0xe8] sm:$0xf] %vm1236, %v1168
    %1296 = vst.msk [vmem:[%s1235 + $0xec] sm:$0xf] %vm1236, %v1169
    %1297 = vst.msk [vmem:[%s1235 + $0xf0] sm:$0xf] %vm1236, %v1170
    %1298 = vst.msk [vmem:[%s1235 + $0xf4] sm:$0xf] %vm1236, %v1171
  $region54: #{discriminator_forward.2} parent=0 // loop_footer
    %s117 = sadd.s32 1, %s113
  $region55: #{discriminator_forward.2} parent=0 // loop_footer_branch
    %112 = sbr.rel target = $region51
  $region56: #{discriminator_forward.2} parent=0 // loop_exit
    _
  %v1299 = vld [vmem:[%s7] sm:$0x1]
  loop: start=0, step=1, limit=15
  $region57: #{discriminator_forward.2} parent=0 // loop_pre_header
    _
  $region58: #{discriminator_forward.2} parent=0 // loop_header
    %s1301 = sphi 0, %s1305
    %p1302 = scmp.ge.s32.totalorder %s1301, 15
  $region59: #{discriminator_forward.2} parent=0 // loop_header_branch
    %1304 = sbr.rel (%p1302) target = $region63
  $region60: #{discriminator_forward.2} parent=0 // loop_body
    %s1306 = smul.u32 %s1301, 2
    %s1307 = smul.u32 %s1306, 62
    %s1308 = smul.addr %s1307, 4
    %s1309 = scalar_lea.vmem [#allocation2], %s1308
    %v1310 = vld [vmem:[%s1309] sm:$0xf]
    %v1311 = vld [vmem:[%s1309 + $0x4] sm:$0xf]
    %v1312 = vld [vmem:[%s1309 + $0x8] sm:$0xf]
    %v1313 = vld [vmem:[%s1309 + $0xc] sm:$0xf]
    %v1314 = vld [vmem:[%s1309 + $0x10] sm:$0xf]
    %v1315 = vld [vmem:[%s1309 + $0x14] sm:$0xf]
    %v1316 = vld [vmem:[%s1309 + $0x18] sm:$0xf]
    %v1317 = vld [vmem:[%s1309 + $0x1c] sm:$0xf]
    %v1318 = vld [vmem:[%s1309 + $0x20] sm:$0xf]
    %v1319 = vld [vmem:[%s1309 + $0x24] sm:$0xf]
    %v1320 = vld [vmem:[%s1309 + $0x28] sm:$0xf]
    %v1321 = vld [vmem:[%s1309 + $0x2c] sm:$0xf]
    %v1322 = vld [vmem:[%s1309 + $0x30] sm:$0xf]
    %v1323 = vld [vmem:[%s1309 + $0x34] sm:$0xf]
    %v1324 = vld [vmem:[%s1309 + $0x38] sm:$0xf]
    %v1325 = vld [vmem:[%s1309 + $0x3c] sm:$0xf]
    %v1326 = vld [vmem:[%s1309 + $0x40] sm:$0xf]
    %v1327 = vld [vmem:[%s1309 + $0x44] sm:$0xf]
    %v1328 = vld [vmem:[%s1309 + $0x48] sm:$0xf]
    %v1329 = vld [vmem:[%s1309 + $0x4c] sm:$0xf]
    %v1330 = vld [vmem:[%s1309 + $0x50] sm:$0xf]
    %v1331 = vld [vmem:[%s1309 + $0x54] sm:$0xf]
    %v1332 = vld [vmem:[%s1309 + $0x58] sm:$0xf]
    %v1333 = vld [vmem:[%s1309 + $0x5c] sm:$0xf]
    %v1334 = vld [vmem:[%s1309 + $0x60] sm:$0xf]
    %v1335 = vld [vmem:[%s1309 + $0x64] sm:$0xf]
    %v1336 = vld [vmem:[%s1309 + $0x68] sm:$0xf]
    %v1337 = vld [vmem:[%s1309 + $0x6c] sm:$0xf]
    %v1338 = vld [vmem:[%s1309 + $0x70] sm:$0xf]
    %v1339 = vld [vmem:[%s1309 + $0x74] sm:$0xf]
    %v1340 = vld [vmem:[%s1309 + $0x78] sm:$0xf]
    %v1341 = vld [vmem:[%s1309 + $0x7c] sm:$0xf]
    %v1342 = vld [vmem:[%s1309 + $0x80] sm:$0xf]
    %v1343 = vld [vmem:[%s1309 + $0x84] sm:$0xf]
    %v1344 = vld [vmem:[%s1309 + $0x88] sm:$0xf]
    %v1345 = vld [vmem:[%s1309 + $0x8c] sm:$0xf]
    %v1346 = vld [vmem:[%s1309 + $0x90] sm:$0xf]
    %v1347 = vld [vmem:[%s1309 + $0x94] sm:$0xf]
    %v1348 = vld [vmem:[%s1309 + $0x98] sm:$0xf]
    %v1349 = vld [vmem:[%s1309 + $0x9c] sm:$0xf]
    %v1350 = vld [vmem:[%s1309 + $0xa0] sm:$0xf]
    %v1351 = vld [vmem:[%s1309 + $0xa4] sm:$0xf]
    %v1352 = vld [vmem:[%s1309 + $0xa8] sm:$0xf]
    %v1353 = vld [vmem:[%s1309 + $0xac] sm:$0xf]
    %v1354 = vld [vmem:[%s1309 + $0xb0] sm:$0xf]
    %v1355 = vld [vmem:[%s1309 + $0xb4] sm:$0xf]
    %v1356 = vld [vmem:[%s1309 + $0xb8] sm:$0xf]
    %v1357 = vld [vmem:[%s1309 + $0xbc] sm:$0xf]
    %v1358 = vld [vmem:[%s1309 + $0xc0] sm:$0xf]
    %v1359 = vld [vmem:[%s1309 + $0xc4] sm:$0xf]
    %v1360 = vld [vmem:[%s1309 + $0xc8] sm:$0xf]
    %v1361 = vld [vmem:[%s1309 + $0xcc] sm:$0xf]
    %v1362 = vld [vmem:[%s1309 + $0xd0] sm:$0xf]
    %v1363 = vld [vmem:[%s1309 + $0xd4] sm:$0xf]
    %v1364 = vld [vmem:[%s1309 + $0xd8] sm:$0xf]
    %v1365 = vld [vmem:[%s1309 + $0xdc] sm:$0xf]
    %v1366 = vld [vmem:[%s1309 + $0xe0] sm:$0xf]
    %v1367 = vld [vmem:[%s1309 + $0xe4] sm:$0xf]
    %v1368 = vld [vmem:[%s1309 + $0xe8] sm:$0xf]
    %v1369 = vld [vmem:[%s1309 + $0xec] sm:$0xf]
    %v1370 = vld [vmem:[%s1309 + $0xf0] sm:$0xf]
    %v1371 = vld [vmem:[%s1309 + $0xf4] sm:$0xf]
    %v1372 = vld [vmem:[%s6] sm:$0xf]
    %v1373 = vld [vmem:[%s6 + $0x4] sm:$0xf]
    %v1374 = vld [vmem:[%s6 + $0x8] sm:$0xf]
    %v1375 = vld [vmem:[%s6 + $0xc] sm:$0xf]
    %v1376 = vld [vmem:[%s6 + $0x10] sm:$0xf]
    %v1377 = vld [vmem:[%s6 + $0x14] sm:$0xf]
    %v1378 = vld [vmem:[%s6 + $0x18] sm:$0xf]
    %v1379 = vld [vmem:[%s6 + $0x1c] sm:$0xf]
    %s1380 = scalar_lea.vmem %s6, 32
    %v1381 = vld [vmem:[%s1380] sm:$0xf]
    %v1382 = vld [vmem:[%s1380 + $0x4] sm:$0xf]
    %v1383 = vld [vmem:[%s1380 + $0x8] sm:$0xf]
    %v1384 = vld [vmem:[%s1380 + $0xc] sm:$0xf]
    %v1385 = vld [vmem:[%s1380 + $0x10] sm:$0xf]
    %v1386 = vld [vmem:[%s1380 + $0x14] sm:$0xf]
    %v1387 = vld [vmem:[%s1380 + $0x18] sm:$0xf]
    %v1388 = vld [vmem:[%s1380 + $0x1c] sm:$0xf]
    %v1419 = vunpack.c.l.b16 %v1312
    %v1420 = vunpack.c.l.b16 %v1313
    %v1421 = vunpack.c.l.b16 %v1316
    %v1422 = vunpack.c.l.b16 %v1317
    %v1423 = vunpack.c.l.b16 %v1320
    %v1424 = vunpack.c.l.b16 %v1321
    %v1425 = vunpack.c.l.b16 %v1324
    %v1426 = vunpack.c.l.b16 %v1325
    %v1427 = vunpack.c.l.b16 %v1328
    %v1428 = vunpack.c.l.b16 %v1329
    %v1429 = vunpack.c.l.b16 %v1332
    %v1430 = vunpack.c.l.b16 %v1333
    %v1431 = vunpack.c.l.b16 %v1336
    %v1432 = vunpack.c.l.b16 %v1337
    %v1433 = vunpack.c.l.b16 %v1340
    %v1434 = vunpack.c.l.b16 %v1341
    %v1435 = vunpack.c.l.b16 %v1344
    %v1436 = vunpack.c.l.b16 %v1345
    %v1437 = vunpack.c.l.b16 %v1348
    %v1438 = vunpack.c.l.b16 %v1349
    %v1439 = vunpack.c.l.b16 %v1352
    %v1440 = vunpack.c.l.b16 %v1353
    %v1441 = vunpack.c.l.b16 %v1356
    %v1442 = vunpack.c.l.b16 %v1357
    %v1443 = vunpack.c.l.b16 %v1360
    %v1444 = vunpack.c.l.b16 %v1361
    %v1445 = vunpack.c.l.b16 %v1364
    %v1446 = vunpack.c.l.b16 %v1365
    %v1447 = vunpack.c.l.b16 %v1368
    %v1448 = vunpack.c.l.b16 %v1369
    %v1449 = vpack.c.b16 %v1420, %v1419
    %v1450 = vpack.c.b16 %v1422, %v1421
    %v1451 = vpack.c.b16 %v1424, %v1423
    %v1452 = vpack.c.b16 %v1426, %v1425
    %v1453 = vpack.c.b16 %v1428, %v1427
    %v1454 = vpack.c.b16 %v1430, %v1429
    %v1455 = vpack.c.b16 %v1432, %v1431
    %v1456 = vpack.c.b16 %v1434, %v1433
    %v1457 = vpack.c.b16 %v1436, %v1435
    %v1458 = vpack.c.b16 %v1438, %v1437
    %v1459 = vpack.c.b16 %v1440, %v1439
    %v1460 = vpack.c.b16 %v1442, %v1441
    %v1461 = vpack.c.b16 %v1444, %v1443
    %v1462 = vpack.c.b16 %v1446, %v1445
    %v1463 = vpack.c.b16 %v1448, %v1447
    %v1472 = vunpack.c.l.b16 %v1381
    %v1473 = vunpack.c.l.b16 %v1382
    %v1474 = vunpack.c.l.b16 %v1383
    %v1475 = vunpack.c.l.b16 %v1384
    %v1476 = vunpack.c.l.b16 %v1385
    %v1477 = vunpack.c.l.b16 %v1386
    %v1478 = vunpack.c.l.b16 %v1387
    %v1479 = vunpack.c.l.b16 %v1388
    %v1480 = vpack.c.b16 %v1473, %v1472
    %v1481 = vpack.c.b16 %v1475, %v1474
    %v1482 = vpack.c.b16 %v1477, %v1476
    %v1483 = vpack.c.b16 %v1479, %v1478
    %vm1488 = vcmask 523264
    %v1490 = vsel %vm1488, %v1449, 0
    %v1493 = vsel %vm1488, %v1450, 0
    %v1496 = vsel %vm1488, %v1451, 0
    %v1499 = vsel %vm1488, %v1452, 0
    %v1502 = vsel %vm1488, %v1453, 0
    %v1505 = vsel %vm1488, %v1454, 0
    %v1508 = vsel %vm1488, %v1455, 0
    %v1511 = vsel %vm1488, %v1456, 0
    %v1514 = vsel %vm1488, %v1457, 0
    %v1517 = vsel %vm1488, %v1458, 0
    %v1520 = vsel %vm1488, %v1459, 0
    %v1523 = vsel %vm1488, %v1460, 0
    %v1526 = vsel %vm1488, %v1461, 0
    %v1529 = vsel %vm1488, %v1462, 0
    %v1532 = vsel %vm1488, %v1463, 0
    %1534 = vmatprep.subr.bf16.mxu0 0
    %1535 = vmatpush1.bf16.msra.mxu0 0
    %1536 = vmatprep.subr.bf16.mxu0 0
    %1537 = vmatpush1.bf16.msra.mxu0 0
    %1538 = vmatprep.subr.bf16.mxu0 0
    %1539 = vmatpush1.bf16.msra.mxu0 0
    %1540 = vmatprep.subr.bf16.mxu0 0
    %1541 = vmatpush1.bf16.msra.mxu0 0
    %1542 = vmatprep.subr.bf16.mxu0 0
    %1543 = vmatpush1.bf16.msra.mxu0 %v1483
    %1544 = vmatprep.subr.bf16.mxu0 0
    %1545 = vmatpush1.bf16.msra.mxu0 %v1482
    %1546 = vmatprep.subr.bf16.mxu0 0
    %1547 = vmatpush1.bf16.msra.mxu0 %v1481
    %1548 = vmatprep.subr.bf16.mxu0 0
    %1549 = vmatpush1.bf16.msra.mxu0 %v1480
    %1550 = vmatprep.subr.bf16.mxu0 0
    %1551 = vmatpush2.bf16.msra.mxu0 0
    %1552 = vmatprep.subr.bf16.mxu0 0
    %1553 = vmatpush2.bf16.msra.mxu0 0
    %1554 = vmatprep.subr.bf16.mxu0 0
    %1555 = vmatpush2.bf16.msra.mxu0 0
    %1556 = vmatprep.subr.bf16.mxu0 0
    %1557 = vmatpush2.bf16.msra.mxu0 0
    %1558 = vmatprep.subr.bf16.mxu0 0
    %1559 = vmatpush2.bf16.msra.mxu0 0
    %1560 = vmatprep.subr.bf16.mxu0 0
    %1561 = vmatpush2.bf16.msra.mxu0 0
    %1562 = vmatprep.subr.bf16.mxu0 0
    %1563 = vmatpush2.bf16.msra.mxu0 0
    %1564 = vmatprep.subr.bf16.mxu0 0
    %1565 = vmatpush2.bf16.msra.mxu0 0
    %1566 = vmatprep.mubr.bf16.mxu0 0
    %1567 = vmatmul.mubr.bf16.gmra.mxu0 %v1490
    %v1568 = vpop.f32.mrf.mxu0
    %v1569 = vadd.f32 0.0, %v1568
    %v1570 = vpop.f32.mrf.mxu0
    %v1571 = vpop.f32.mrf.mxu0
    %v1572 = vadd.f32 0.0, %v1571
    %v1573 = vpop.f32.mrf.mxu0
    %1574 = vmatprep.mubr.bf16.mxu0 0
    %1575 = vmatmul.mubr.bf16.gmra.mxu0 %v1493
    %v1576 = vpop.f32.mrf.mxu0
    %v1577 = vadd.f32 0.0, %v1576
    %v1578 = vpop.f32.mrf.mxu0
    %v1579 = vpop.f32.mrf.mxu0
    %v1580 = vadd.f32 0.0, %v1579
    %v1581 = vpop.f32.mrf.mxu0
    %1582 = vmatprep.mubr.bf16.mxu0 0
    %1583 = vmatmul.mubr.bf16.gmra.mxu0 %v1496
    %v1584 = vpop.f32.mrf.mxu0
    %v1585 = vadd.f32 0.0, %v1584
    %v1586 = vpop.f32.mrf.mxu0
    %v1587 = vpop.f32.mrf.mxu0
    %v1588 = vadd.f32 0.0, %v1587
    %v1589 = vpop.f32.mrf.mxu0
    %1590 = vmatprep.mubr.bf16.mxu0 0
    %1591 = vmatmul.mubr.bf16.gmra.mxu0 %v1499
    %v1592 = vpop.f32.mrf.mxu0
    %v1593 = vadd.f32 0.0, %v1592
    %v1594 = vpop.f32.mrf.mxu0
    %v1595 = vpop.f32.mrf.mxu0
    %v1596 = vadd.f32 0.0, %v1595
    %v1597 = vpop.f32.mrf.mxu0
    %1598 = vmatprep.mubr.bf16.mxu0 0
    %1599 = vmatmul.mubr.bf16.gmra.mxu0 %v1502
    %v1600 = vpop.f32.mrf.mxu0
    %v1601 = vadd.f32 0.0, %v1600
    %v1602 = vpop.f32.mrf.mxu0
    %v1603 = vpop.f32.mrf.mxu0
    %v1604 = vadd.f32 0.0, %v1603
    %v1605 = vpop.f32.mrf.mxu0
    %1606 = vmatprep.mubr.bf16.mxu0 0
    %1607 = vmatmul.mubr.bf16.gmra.mxu0 %v1505
    %v1608 = vpop.f32.mrf.mxu0
    %v1609 = vadd.f32 0.0, %v1608
    %v1610 = vpop.f32.mrf.mxu0
    %v1611 = vpop.f32.mrf.mxu0
    %v1612 = vadd.f32 0.0, %v1611
    %v1613 = vpop.f32.mrf.mxu0
    %1614 = vmatprep.mubr.bf16.mxu0 0
    %1615 = vmatmul.mubr.bf16.gmra.mxu0 %v1508
    %v1616 = vpop.f32.mrf.mxu0
    %v1617 = vadd.f32 0.0, %v1616
    %v1618 = vpop.f32.mrf.mxu0
    %v1619 = vpop.f32.mrf.mxu0
    %v1620 = vadd.f32 0.0, %v1619
    %v1621 = vpop.f32.mrf.mxu0
    %1622 = vmatprep.mubr.bf16.mxu0 0
    %1623 = vmatmul.mubr.bf16.gmra.mxu0 %v1511
    %v1624 = vpop.f32.mrf.mxu0
    %v1625 = vadd.f32 0.0, %v1624
    %v1626 = vpop.f32.mrf.mxu0
    %v1627 = vpop.f32.mrf.mxu0
    %v1628 = vadd.f32 0.0, %v1627
    %v1629 = vpop.f32.mrf.mxu0
    %1630 = vmatprep.mubr.bf16.mxu0 0
    %1631 = vmatmul.mubr.bf16.gmra.mxu0 %v1514
    %v1632 = vpop.f32.mrf.mxu0
    %v1633 = vadd.f32 0.0, %v1632
    %v1634 = vpop.f32.mrf.mxu0
    %v1635 = vpop.f32.mrf.mxu0
    %v1636 = vadd.f32 0.0, %v1635
    %v1637 = vpop.f32.mrf.mxu0
    %1638 = vmatprep.mubr.bf16.mxu0 0
    %1639 = vmatmul.mubr.bf16.gmra.mxu0 %v1517
    %v1640 = vpop.f32.mrf.mxu0
    %v1641 = vadd.f32 0.0, %v1640
    %v1642 = vpop.f32.mrf.mxu0
    %v1643 = vpop.f32.mrf.mxu0
    %v1644 = vadd.f32 0.0, %v1643
    %v1645 = vpop.f32.mrf.mxu0
    %1646 = vmatprep.mubr.bf16.mxu0 0
    %1647 = vmatmul.mubr.bf16.gmra.mxu0 %v1520
    %v1648 = vpop.f32.mrf.mxu0
    %v1649 = vadd.f32 0.0, %v1648
    %v1650 = vpop.f32.mrf.mxu0
    %v1651 = vpop.f32.mrf.mxu0
    %v1652 = vadd.f32 0.0, %v1651
    %v1653 = vpop.f32.mrf.mxu0
    %1654 = vmatprep.mubr.bf16.mxu0 0
    %1655 = vmatmul.mubr.bf16.gmra.mxu0 %v1523
    %v1656 = vpop.f32.mrf.mxu0
    %v1657 = vadd.f32 0.0, %v1656
    %v1658 = vpop.f32.mrf.mxu0
    %v1659 = vpop.f32.mrf.mxu0
    %v1660 = vadd.f32 0.0, %v1659
    %v1661 = vpop.f32.mrf.mxu0
    %1662 = vmatprep.mubr.bf16.mxu0 0
    %1663 = vmatmul.mubr.bf16.gmra.mxu0 %v1526
    %v1664 = vpop.f32.mrf.mxu0
    %v1665 = vadd.f32 0.0, %v1664
    %v1666 = vpop.f32.mrf.mxu0
    %v1667 = vpop.f32.mrf.mxu0
    %v1668 = vadd.f32 0.0, %v1667
    %v1669 = vpop.f32.mrf.mxu0
    %1670 = vmatprep.mubr.bf16.mxu0 0
    %1671 = vmatmul.mubr.bf16.gmra.mxu0 %v1529
    %v1672 = vpop.f32.mrf.mxu0
    %v1673 = vadd.f32 0.0, %v1672
    %v1674 = vpop.f32.mrf.mxu0
    %v1675 = vpop.f32.mrf.mxu0
    %v1676 = vadd.f32 0.0, %v1675
    %v1677 = vpop.f32.mrf.mxu0
    %1678 = vmatprep.mubr.bf16.mxu0 0
    %1679 = vmatmul.mubr.bf16.gmra.mxu0 %v1532
    %v1680 = vpop.f32.mrf.mxu0
    %v1681 = vadd.f32 0.0, %v1680
    %v1682 = vpop.f32.mrf.mxu0
    %v1683 = vpop.f32.mrf.mxu0
    %v1684 = vadd.f32 0.0, %v1683
    %v1685 = vpop.f32.mrf.mxu0
    %1686 = vdwg.mxu0
    %v1717 = vunpack.c.l.b16 %v1310
    %v1718 = vunpack.c.l.b16 %v1311
    %v1719 = vunpack.c.l.b16 %v1314
    %v1720 = vunpack.c.l.b16 %v1315
    %v1721 = vunpack.c.l.b16 %v1318
    %v1722 = vunpack.c.l.b16 %v1319
    %v1723 = vunpack.c.l.b16 %v1322
    %v1724 = vunpack.c.l.b16 %v1323
    %v1725 = vunpack.c.l.b16 %v1326
    %v1726 = vunpack.c.l.b16 %v1327
    %v1727 = vunpack.c.l.b16 %v1330
    %v1728 = vunpack.c.l.b16 %v1331
    %v1729 = vunpack.c.l.b16 %v1334
    %v1730 = vunpack.c.l.b16 %v1335
    %v1731 = vunpack.c.l.b16 %v1338
    %v1732 = vunpack.c.l.b16 %v1339
    %v1733 = vunpack.c.l.b16 %v1342
    %v1734 = vunpack.c.l.b16 %v1343
    %v1735 = vunpack.c.l.b16 %v1346
    %v1736 = vunpack.c.l.b16 %v1347
    %v1737 = vunpack.c.l.b16 %v1350
    %v1738 = vunpack.c.l.b16 %v1351
    %v1739 = vunpack.c.l.b16 %v1354
    %v1740 = vunpack.c.l.b16 %v1355
    %v1741 = vunpack.c.l.b16 %v1358
    %v1742 = vunpack.c.l.b16 %v1359
    %v1743 = vunpack.c.l.b16 %v1362
    %v1744 = vunpack.c.l.b16 %v1363
    %v1745 = vunpack.c.l.b16 %v1366
    %v1746 = vunpack.c.l.b16 %v1367
    %v1747 = vpack.c.b16 %v1718, %v1717
    %v1748 = vpack.c.b16 %v1720, %v1719
    %v1749 = vpack.c.b16 %v1722, %v1721
    %v1750 = vpack.c.b16 %v1724, %v1723
    %v1751 = vpack.c.b16 %v1726, %v1725
    %v1752 = vpack.c.b16 %v1728, %v1727
    %v1753 = vpack.c.b16 %v1730, %v1729
    %v1754 = vpack.c.b16 %v1732, %v1731
    %v1755 = vpack.c.b16 %v1734, %v1733
    %v1756 = vpack.c.b16 %v1736, %v1735
    %v1757 = vpack.c.b16 %v1738, %v1737
    %v1758 = vpack.c.b16 %v1740, %v1739
    %v1759 = vpack.c.b16 %v1742, %v1741
    %v1760 = vpack.c.b16 %v1744, %v1743
    %v1761 = vpack.c.b16 %v1746, %v1745
    %v1770 = vunpack.c.l.b16 %v1372
    %v1771 = vunpack.c.l.b16 %v1373
    %v1772 = vunpack.c.l.b16 %v1374
    %v1773 = vunpack.c.l.b16 %v1375
    %v1774 = vunpack.c.l.b16 %v1376
    %v1775 = vunpack.c.l.b16 %v1377
    %v1776 = vunpack.c.l.b16 %v1378
    %v1777 = vunpack.c.l.b16 %v1379
    %v1778 = vpack.c.b16 %v1771, %v1770
    %v1779 = vpack.c.b16 %v1773, %v1772
    %v1780 = vpack.c.b16 %v1775, %v1774
    %v1781 = vpack.c.b16 %v1777, %v1776
    %v1787 = vsel %vm1488, %v1747, 0
    %v1790 = vsel %vm1488, %v1748, 0
    %v1793 = vsel %vm1488, %v1749, 0
    %v1796 = vsel %vm1488, %v1750, 0
    %v1799 = vsel %vm1488, %v1751, 0
    %v1802 = vsel %vm1488, %v1752, 0
    %v1805 = vsel %vm1488, %v1753, 0
    %v1808 = vsel %vm1488, %v1754, 0
    %v1811 = vsel %vm1488, %v1755, 0
    %v1814 = vsel %vm1488, %v1756, 0
    %v1817 = vsel %vm1488, %v1757, 0
    %v1820 = vsel %vm1488, %v1758, 0
    %v1823 = vsel %vm1488, %v1759, 0
    %v1826 = vsel %vm1488, %v1760, 0
    %v1829 = vsel %vm1488, %v1761, 0
    %1831 = vmatprep.subr.bf16.mxu0 0
    %1832 = vmatpush1.bf16.msra.mxu0 0
    %1833 = vmatprep.subr.bf16.mxu0 0
    %1834 = vmatpush1.bf16.msra.mxu0 0
    %1835 = vmatprep.subr.bf16.mxu0 0
    %1836 = vmatpush1.bf16.msra.mxu0 0
    %1837 = vmatprep.subr.bf16.mxu0 0
    %1838 = vmatpush1.bf16.msra.mxu0 0
    %1839 = vmatprep.subr.bf16.mxu0 0
    %1840 = vmatpush1.bf16.msra.mxu0 %v1781
    %1841 = vmatprep.subr.bf16.mxu0 0
    %1842 = vmatpush1.bf16.msra.mxu0 %v1780
    %1843 = vmatprep.subr.bf16.mxu0 0
    %1844 = vmatpush1.bf16.msra.mxu0 %v1779
    %1845 = vmatprep.subr.bf16.mxu0 0
    %1846 = vmatpush1.bf16.msra.mxu0 %v1778
    %1847 = vmatprep.subr.bf16.mxu0 0
    %1848 = vmatpush2.bf16.msra.mxu0 0
    %1849 = vmatprep.subr.bf16.mxu0 0
    %1850 = vmatpush2.bf16.msra.mxu0 0
    %1851 = vmatprep.subr.bf16.mxu0 0
    %1852 = vmatpush2.bf16.msra.mxu0 0
    %1853 = vmatprep.subr.bf16.mxu0 0
    %1854 = vmatpush2.bf16.msra.mxu0 0
    %1855 = vmatprep.subr.bf16.mxu0 0
    %1856 = vmatpush2.bf16.msra.mxu0 0
    %1857 = vmatprep.subr.bf16.mxu0 0
    %1858 = vmatpush2.bf16.msra.mxu0 0
    %1859 = vmatprep.subr.bf16.mxu0 0
    %1860 = vmatpush2.bf16.msra.mxu0 0
    %1861 = vmatprep.subr.bf16.mxu0 0
    %1862 = vmatpush2.bf16.msra.mxu0 0
    %1863 = vmatprep.mubr.bf16.mxu0 0
    %1864 = vmatmul.mubr.bf16.gmra.mxu0 %v1787
    %v1865 = vpop.f32.mrf.mxu0
    %v1866 = vadd.f32 %v1569, %v1865
    %v1867 = vpop.f32.mrf.mxu0
    %v1868 = vpop.f32.mrf.mxu0
    %v1869 = vadd.f32 %v1572, %v1868
    %v1870 = vpop.f32.mrf.mxu0
    %1871 = vmatprep.mubr.bf16.mxu0 0
    %1872 = vmatmul.mubr.bf16.gmra.mxu0 %v1790
    %v1873 = vpop.f32.mrf.mxu0
    %v1874 = vadd.f32 %v1577, %v1873
    %v1875 = vpop.f32.mrf.mxu0
    %v1876 = vpop.f32.mrf.mxu0
    %v1877 = vadd.f32 %v1580, %v1876
    %v1878 = vpop.f32.mrf.mxu0
    %1879 = vmatprep.mubr.bf16.mxu0 0
    %1880 = vmatmul.mubr.bf16.gmra.mxu0 %v1793
    %v1881 = vpop.f32.mrf.mxu0
    %v1882 = vadd.f32 %v1585, %v1881
    %v1883 = vpop.f32.mrf.mxu0
    %v1884 = vpop.f32.mrf.mxu0
    %v1885 = vadd.f32 %v1588, %v1884
    %v1886 = vpop.f32.mrf.mxu0
    %1887 = vmatprep.mubr.bf16.mxu0 0
    %1888 = vmatmul.mubr.bf16.gmra.mxu0 %v1796
    %v1889 = vpop.f32.mrf.mxu0
    %v1890 = vadd.f32 %v1593, %v1889
    %v1891 = vpop.f32.mrf.mxu0
    %v1892 = vpop.f32.mrf.mxu0
    %v1893 = vadd.f32 %v1596, %v1892
    %v1894 = vpop.f32.mrf.mxu0
    %1895 = vmatprep.mubr.bf16.mxu0 0
    %1896 = vmatmul.mubr.bf16.gmra.mxu0 %v1799
    %v1897 = vpop.f32.mrf.mxu0
    %v1898 = vadd.f32 %v1601, %v1897
    %v1899 = vpop.f32.mrf.mxu0
    %v1900 = vpop.f32.mrf.mxu0
    %v1901 = vadd.f32 %v1604, %v1900
    %v1902 = vpop.f32.mrf.mxu0
    %1903 = vmatprep.mubr.bf16.mxu0 0
    %1904 = vmatmul.mubr.bf16.gmra.mxu0 %v1802
    %v1905 = vpop.f32.mrf.mxu0
    %v1906 = vadd.f32 %v1609, %v1905
    %v1907 = vpop.f32.mrf.mxu0
    %v1908 = vpop.f32.mrf.mxu0
    %v1909 = vadd.f32 %v1612, %v1908
    %v1910 = vpop.f32.mrf.mxu0
    %1911 = vmatprep.mubr.bf16.mxu0 0
    %1912 = vmatmul.mubr.bf16.gmra.mxu0 %v1805
    %v1913 = vpop.f32.mrf.mxu0
    %v1914 = vadd.f32 %v1617, %v1913
    %v1915 = vpop.f32.mrf.mxu0
    %v1916 = vpop.f32.mrf.mxu0
    %v1917 = vadd.f32 %v1620, %v1916
    %v1918 = vpop.f32.mrf.mxu0
    %1919 = vmatprep.mubr.bf16.mxu0 0
    %1920 = vmatmul.mubr.bf16.gmra.mxu0 %v1808
    %v1921 = vpop.f32.mrf.mxu0
    %v1922 = vadd.f32 %v1625, %v1921
    %v1923 = vpop.f32.mrf.mxu0
    %v1924 = vpop.f32.mrf.mxu0
    %v1925 = vadd.f32 %v1628, %v1924
    %v1926 = vpop.f32.mrf.mxu0
    %1927 = vmatprep.mubr.bf16.mxu0 0
    %1928 = vmatmul.mubr.bf16.gmra.mxu0 %v1811
    %v1929 = vpop.f32.mrf.mxu0
    %v1930 = vadd.f32 %v1633, %v1929
    %v1931 = vpop.f32.mrf.mxu0
    %v1932 = vpop.f32.mrf.mxu0
    %v1933 = vadd.f32 %v1636, %v1932
    %v1934 = vpop.f32.mrf.mxu0
    %1935 = vmatprep.mubr.bf16.mxu0 0
    %1936 = vmatmul.mubr.bf16.gmra.mxu0 %v1814
    %v1937 = vpop.f32.mrf.mxu0
    %v1938 = vadd.f32 %v1641, %v1937
    %v1939 = vpop.f32.mrf.mxu0
    %v1940 = vpop.f32.mrf.mxu0
    %v1941 = vadd.f32 %v1644, %v1940
    %v1942 = vpop.f32.mrf.mxu0
    %1943 = vmatprep.mubr.bf16.mxu0 0
    %1944 = vmatmul.mubr.bf16.gmra.mxu0 %v1817
    %v1945 = vpop.f32.mrf.mxu0
    %v1946 = vadd.f32 %v1649, %v1945
    %v1947 = vpop.f32.mrf.mxu0
    %v1948 = vpop.f32.mrf.mxu0
    %v1949 = vadd.f32 %v1652, %v1948
    %v1950 = vpop.f32.mrf.mxu0
    %1951 = vmatprep.mubr.bf16.mxu0 0
    %1952 = vmatmul.mubr.bf16.gmra.mxu0 %v1820
    %v1953 = vpop.f32.mrf.mxu0
    %v1954 = vadd.f32 %v1657, %v1953
    %v1955 = vpop.f32.mrf.mxu0
    %v1956 = vpop.f32.mrf.mxu0
    %v1957 = vadd.f32 %v1660, %v1956
    %v1958 = vpop.f32.mrf.mxu0
    %1959 = vmatprep.mubr.bf16.mxu0 0
    %1960 = vmatmul.mubr.bf16.gmra.mxu0 %v1823
    %v1961 = vpop.f32.mrf.mxu0
    %v1962 = vadd.f32 %v1665, %v1961
    %v1963 = vpop.f32.mrf.mxu0
    %v1964 = vpop.f32.mrf.mxu0
    %v1965 = vadd.f32 %v1668, %v1964
    %v1966 = vpop.f32.mrf.mxu0
    %1967 = vmatprep.mubr.bf16.mxu0 0
    %1968 = vmatmul.mubr.bf16.gmra.mxu0 %v1826
    %v1969 = vpop.f32.mrf.mxu0
    %v1970 = vadd.f32 %v1673, %v1969
    %v1971 = vpop.f32.mrf.mxu0
    %v1972 = vpop.f32.mrf.mxu0
    %v1973 = vadd.f32 %v1676, %v1972
    %v1974 = vpop.f32.mrf.mxu0
    %1975 = vmatprep.mubr.bf16.mxu0 0
    %1976 = vmatmul.mubr.bf16.gmra.mxu0 %v1829
    %v1977 = vpop.f32.mrf.mxu0
    %v1978 = vadd.f32 %v1681, %v1977
    %v1979 = vpop.f32.mrf.mxu0
    %v1980 = vpop.f32.mrf.mxu0
    %v1981 = vadd.f32 %v1684, %v1980
    %v1982 = vpop.f32.mrf.mxu0
    %1983 = vdwg.mxu0
    %s1984 = scalar_lea.vmem %s6, 64
    %v1985 = vld [vmem:[%s1984] sm:$0xf]
    %v1986 = vld [vmem:[%s1984 + $0x4] sm:$0xf]
    %v1987 = vld [vmem:[%s1984 + $0x8] sm:$0xf]
    %v1988 = vld [vmem:[%s1984 + $0xc] sm:$0xf]
    %v1989 = vld [vmem:[%s1984 + $0x10] sm:$0xf]
    %v1990 = vld [vmem:[%s1984 + $0x14] sm:$0xf]
    %v1991 = vld [vmem:[%s1984 + $0x18] sm:$0xf]
    %v1992 = vld [vmem:[%s1984 + $0x1c] sm:$0xf]
    %v1995 = vunpack.c.l.b16 %v1370
    %v1996 = vunpack.c.l.b16 %v1371
    %v1997 = vpack.c.b16 %v1996, %v1995
    %v2006 = vunpack.c.l.b16 %v1985
    %v2007 = vunpack.c.l.b16 %v1986
    %v2008 = vunpack.c.l.b16 %v1987
    %v2009 = vunpack.c.l.b16 %v1988
    %v2010 = vunpack.c.l.b16 %v1989
    %v2011 = vunpack.c.l.b16 %v1990
    %v2012 = vunpack.c.l.b16 %v1991
    %v2013 = vunpack.c.l.b16 %v1992
    %v2014 = vpack.c.b16 %v2007, %v2006
    %v2015 = vpack.c.b16 %v2009, %v2008
    %v2016 = vpack.c.b16 %v2011, %v2010
    %v2017 = vpack.c.b16 %v2013, %v2012
    %v2023 = vsel %vm1488, %v1997, 0
    %2025 = vmatprep.subr.bf16.mxu0 0
    %2026 = vmatpush1.bf16.msra.mxu0 0
    %2027 = vmatprep.subr.bf16.mxu0 0
    %2028 = vmatpush1.bf16.msra.mxu0 0
    %2029 = vmatprep.subr.bf16.mxu0 0
    %2030 = vmatpush1.bf16.msra.mxu0 0
    %2031 = vmatprep.subr.bf16.mxu0 0
    %2032 = vmatpush1.bf16.msra.mxu0 0
    %2033 = vmatprep.subr.bf16.mxu0 0
    %2034 = vmatpush1.bf16.msra.mxu0 %v2017
    %2035 = vmatprep.subr.bf16.mxu0 0
    %2036 = vmatpush1.bf16.msra.mxu0 %v2016
    %2037 = vmatprep.subr.bf16.mxu0 0
    %2038 = vmatpush1.bf16.msra.mxu0 %v2015
    %2039 = vmatprep.subr.bf16.mxu0 0
    %2040 = vmatpush1.bf16.msra.mxu0 %v2014
    %2041 = vmatprep.subr.bf16.mxu0 0
    %2042 = vmatpush2.bf16.msra.mxu0 0
    %2043 = vmatprep.subr.bf16.mxu0 0
    %2044 = vmatpush2.bf16.msra.mxu0 0
    %2045 = vmatprep.subr.bf16.mxu0 0
    %2046 = vmatpush2.bf16.msra.mxu0 0
    %2047 = vmatprep.subr.bf16.mxu0 0
    %2048 = vmatpush2.bf16.msra.mxu0 0
    %2049 = vmatprep.subr.bf16.mxu0 0
    %2050 = vmatpush2.bf16.msra.mxu0 0
    %2051 = vmatprep.subr.bf16.mxu0 0
    %2052 = vmatpush2.bf16.msra.mxu0 0
    %2053 = vmatprep.subr.bf16.mxu0 0
    %2054 = vmatpush2.bf16.msra.mxu0 0
    %2055 = vmatprep.subr.bf16.mxu0 0
    %2056 = vmatpush2.bf16.msra.mxu0 0
    %2057 = vmatprep.mubr.bf16.mxu0 0
    %2058 = vmatmul.mubr.bf16.gmra.mxu0 %v1790
    %v2059 = vpop.f32.mrf.mxu0
    %v2060 = vadd.f32 0.0, %v2059
    %v2061 = vpop.f32.mrf.mxu0
    %v2062 = vpop.f32.mrf.mxu0
    %v2063 = vadd.f32 0.0, %v2062
    %v2064 = vpop.f32.mrf.mxu0
    %2065 = vmatprep.mubr.bf16.mxu0 0
    %2066 = vmatmul.mubr.bf16.gmra.mxu0 %v1793
    %v2067 = vpop.f32.mrf.mxu0
    %v2068 = vadd.f32 0.0, %v2067
    %v2069 = vpop.f32.mrf.mxu0
    %v2070 = vpop.f32.mrf.mxu0
    %v2071 = vadd.f32 0.0, %v2070
    %v2072 = vpop.f32.mrf.mxu0
    %2073 = vmatprep.mubr.bf16.mxu0 0
    %2074 = vmatmul.mubr.bf16.gmra.mxu0 %v1796
    %v2075 = vpop.f32.mrf.mxu0
    %v2076 = vadd.f32 0.0, %v2075
    %v2077 = vpop.f32.mrf.mxu0
    %v2078 = vpop.f32.mrf.mxu0
    %v2079 = vadd.f32 0.0, %v2078
    %v2080 = vpop.f32.mrf.mxu0
    %2081 = vmatprep.mubr.bf16.mxu0 0
    %2082 = vmatmul.mubr.bf16.gmra.mxu0 %v1799
    %v2083 = vpop.f32.mrf.mxu0
    %v2084 = vadd.f32 0.0, %v2083
    %v2085 = vpop.f32.mrf.mxu0
    %v2086 = vpop.f32.mrf.mxu0
    %v2087 = vadd.f32 0.0, %v2086
    %v2088 = vpop.f32.mrf.mxu0
    %2089 = vmatprep.mubr.bf16.mxu0 0
    %2090 = vmatmul.mubr.bf16.gmra.mxu0 %v1802
    %v2091 = vpop.f32.mrf.mxu0
    %v2092 = vadd.f32 0.0, %v2091
    %v2093 = vpop.f32.mrf.mxu0
    %v2094 = vpop.f32.mrf.mxu0
    %v2095 = vadd.f32 0.0, %v2094
    %v2096 = vpop.f32.mrf.mxu0
    %2097 = vmatprep.mubr.bf16.mxu0 0
    %2098 = vmatmul.mubr.bf16.gmra.mxu0 %v1805
    %v2099 = vpop.f32.mrf.mxu0
    %v2100 = vadd.f32 0.0, %v2099
    %v2101 = vpop.f32.mrf.mxu0
    %v2102 = vpop.f32.mrf.mxu0
    %v2103 = vadd.f32 0.0, %v2102
    %v2104 = vpop.f32.mrf.mxu0
    %2105 = vmatprep.mubr.bf16.mxu0 0
    %2106 = vmatmul.mubr.bf16.gmra.mxu0 %v1808
    %v2107 = vpop.f32.mrf.mxu0
    %v2108 = vadd.f32 0.0, %v2107
    %v2109 = vpop.f32.mrf.mxu0
    %v2110 = vpop.f32.mrf.mxu0
    %v2111 = vadd.f32 0.0, %v2110
    %v2112 = vpop.f32.mrf.mxu0
    %2113 = vmatprep.mubr.bf16.mxu0 0
    %2114 = vmatmul.mubr.bf16.gmra.mxu0 %v1811
    %v2115 = vpop.f32.mrf.mxu0
    %v2116 = vadd.f32 0.0, %v2115
    %v2117 = vpop.f32.mrf.mxu0
    %v2118 = vpop.f32.mrf.mxu0
    %v2119 = vadd.f32 0.0, %v2118
    %v2120 = vpop.f32.mrf.mxu0
    %2121 = vmatprep.mubr.bf16.mxu0 0
    %2122 = vmatmul.mubr.bf16.gmra.mxu0 %v1814
    %v2123 = vpop.f32.mrf.mxu0
    %v2124 = vadd.f32 0.0, %v2123
    %v2125 = vpop.f32.mrf.mxu0
    %v2126 = vpop.f32.mrf.mxu0
    %v2127 = vadd.f32 0.0, %v2126
    %v2128 = vpop.f32.mrf.mxu0
    %2129 = vmatprep.mubr.bf16.mxu0 0
    %2130 = vmatmul.mubr.bf16.gmra.mxu0 %v1817
    %v2131 = vpop.f32.mrf.mxu0
    %v2132 = vadd.f32 0.0, %v2131
    %v2133 = vpop.f32.mrf.mxu0
    %v2134 = vpop.f32.mrf.mxu0
    %v2135 = vadd.f32 0.0, %v2134
    %v2136 = vpop.f32.mrf.mxu0
    %2137 = vmatprep.mubr.bf16.mxu0 0
    %2138 = vmatmul.mubr.bf16.gmra.mxu0 %v1820
    %v2139 = vpop.f32.mrf.mxu0
    %v2140 = vadd.f32 0.0, %v2139
    %v2141 = vpop.f32.mrf.mxu0
    %v2142 = vpop.f32.mrf.mxu0
    %v2143 = vadd.f32 0.0, %v2142
    %v2144 = vpop.f32.mrf.mxu0
    %2145 = vmatprep.mubr.bf16.mxu0 0
    %2146 = vmatmul.mubr.bf16.gmra.mxu0 %v1823
    %v2147 = vpop.f32.mrf.mxu0
    %v2148 = vadd.f32 0.0, %v2147
    %v2149 = vpop.f32.mrf.mxu0
    %v2150 = vpop.f32.mrf.mxu0
    %v2151 = vadd.f32 0.0, %v2150
    %v2152 = vpop.f32.mrf.mxu0
    %2153 = vmatprep.mubr.bf16.mxu0 0
    %2154 = vmatmul.mubr.bf16.gmra.mxu0 %v1826
    %v2155 = vpop.f32.mrf.mxu0
    %v2156 = vadd.f32 0.0, %v2155
    %v2157 = vpop.f32.mrf.mxu0
    %v2158 = vpop.f32.mrf.mxu0
    %v2159 = vadd.f32 0.0, %v2158
    %v2160 = vpop.f32.mrf.mxu0
    %2161 = vmatprep.mubr.bf16.mxu0 0
    %2162 = vmatmul.mubr.bf16.gmra.mxu0 %v1829
    %v2163 = vpop.f32.mrf.mxu0
    %v2164 = vadd.f32 0.0, %v2163
    %v2165 = vpop.f32.mrf.mxu0
    %v2166 = vpop.f32.mrf.mxu0
    %v2167 = vadd.f32 0.0, %v2166
    %v2168 = vpop.f32.mrf.mxu0
    %2169 = vmatprep.mubr.bf16.mxu0 0
    %2170 = vmatmul.mubr.bf16.gmra.mxu0 %v2023
    %v2171 = vpop.f32.mrf.mxu0
    %v2172 = vadd.f32 0.0, %v2171
    %v2173 = vpop.f32.mrf.mxu0
    %v2174 = vpop.f32.mrf.mxu0
    %v2175 = vadd.f32 0.0, %v2174
    %v2176 = vpop.f32.mrf.mxu0
    %2177 = vdwg.mxu0
    %v2178 = vadd.f32 %v1866, %v2060
    %v2179 = vadd.f32 %v1869, %v2063
    %v2180 = vadd.f32 %v1874, %v2068
    %v2181 = vadd.f32 %v1877, %v2071
    %v2182 = vadd.f32 %v1882, %v2076
    %v2183 = vadd.f32 %v1885, %v2079
    %v2184 = vadd.f32 %v1890, %v2084
    %v2185 = vadd.f32 %v1893, %v2087
    %v2186 = vadd.f32 %v1898, %v2092
    %v2187 = vadd.f32 %v1901, %v2095
    %v2188 = vadd.f32 %v1906, %v2100
    %v2189 = vadd.f32 %v1909, %v2103
    %v2190 = vadd.f32 %v1914, %v2108
    %v2191 = vadd.f32 %v1917, %v2111
    %v2192 = vadd.f32 %v1922, %v2116
    %v2193 = vadd.f32 %v1925, %v2119
    %v2194 = vadd.f32 %v1930, %v2124
    %v2195 = vadd.f32 %v1933, %v2127
    %v2196 = vadd.f32 %v1938, %v2132
    %v2197 = vadd.f32 %v1941, %v2135
    %v2198 = vadd.f32 %v1946, %v2140
    %v2199 = vadd.f32 %v1949, %v2143
    %v2200 = vadd.f32 %v1954, %v2148
    %v2201 = vadd.f32 %v1957, %v2151
    %v2202 = vadd.f32 %v1962, %v2156
    %v2203 = vadd.f32 %v1965, %v2159
    %v2204 = vadd.f32 %v1970, %v2164
    %v2205 = vadd.f32 %v1973, %v2167
    %v2206 = vadd.f32 %v1978, %v2172
    %v2207 = vadd.f32 %v1981, %v2175
    %s2208 = sadd.s32 %s1306, 1
    %s2209 = smul.u32 %s2208, 62
    %s2210 = smul.addr %s2209, 4
    %s2211 = scalar_lea.vmem [#allocation2], %s2210
    %v2212 = vld [vmem:[%s2211] sm:$0xf]
    %v2213 = vld [vmem:[%s2211 + $0x4] sm:$0xf]
    %v2214 = vld [vmem:[%s2211 + $0x8] sm:$0xf]
    %v2215 = vld [vmem:[%s2211 + $0xc] sm:$0xf]
    %v2216 = vld [vmem:[%s2211 + $0x10] sm:$0xf]
    %v2217 = vld [vmem:[%s2211 + $0x14] sm:$0xf]
    %v2218 = vld [vmem:[%s2211 + $0x18] sm:$0xf]
    %v2219 = vld [vmem:[%s2211 + $0x1c] sm:$0xf]
    %v2220 = vld [vmem:[%s2211 + $0x20] sm:$0xf]
    %v2221 = vld [vmem:[%s2211 + $0x24] sm:$0xf]
    %v2222 = vld [vmem:[%s2211 + $0x28] sm:$0xf]
    %v2223 = vld [vmem:[%s2211 + $0x2c] sm:$0xf]
    %v2224 = vld [vmem:[%s2211 + $0x30] sm:$0xf]
    %v2225 = vld [vmem:[%s2211 + $0x34] sm:$0xf]
    %v2226 = vld [vmem:[%s2211 + $0x38] sm:$0xf]
    %v2227 = vld [vmem:[%s2211 + $0x3c] sm:$0xf]
    %v2228 = vld [vmem:[%s2211 + $0x40] sm:$0xf]
    %v2229 = vld [vmem:[%s2211 + $0x44] sm:$0xf]
    %v2230 = vld [vmem:[%s2211 + $0x48] sm:$0xf]
    %v2231 = vld [vmem:[%s2211 + $0x4c] sm:$0xf]
    %v2232 = vld [vmem:[%s2211 + $0x50] sm:$0xf]
    %v2233 = vld [vmem:[%s2211 + $0x54] sm:$0xf]
    %v2234 = vld [vmem:[%s2211 + $0x58] sm:$0xf]
    %v2235 = vld [vmem:[%s2211 + $0x5c] sm:$0xf]
    %v2236 = vld [vmem:[%s2211 + $0x60] sm:$0xf]
    %v2237 = vld [vmem:[%s2211 + $0x64] sm:$0xf]
    %v2238 = vld [vmem:[%s2211 + $0x68] sm:$0xf]
    %v2239 = vld [vmem:[%s2211 + $0x6c] sm:$0xf]
    %v2240 = vld [vmem:[%s2211 + $0x70] sm:$0xf]
    %v2241 = vld [vmem:[%s2211 + $0x74] sm:$0xf]
    %v2242 = vld [vmem:[%s2211 + $0x78] sm:$0xf]
    %v2243 = vld [vmem:[%s2211 + $0x7c] sm:$0xf]
    %v2244 = vld [vmem:[%s2211 + $0x80] sm:$0xf]
    %v2245 = vld [vmem:[%s2211 + $0x84] sm:$0xf]
    %v2246 = vld [vmem:[%s2211 + $0x88] sm:$0xf]
    %v2247 = vld [vmem:[%s2211 + $0x8c] sm:$0xf]
    %v2248 = vld [vmem:[%s2211 + $0x90] sm:$0xf]
    %v2249 = vld [vmem:[%s2211 + $0x94] sm:$0xf]
    %v2250 = vld [vmem:[%s2211 + $0x98] sm:$0xf]
    %v2251 = vld [vmem:[%s2211 + $0x9c] sm:$0xf]
    %v2252 = vld [vmem:[%s2211 + $0xa0] sm:$0xf]
    %v2253 = vld [vmem:[%s2211 + $0xa4] sm:$0xf]
    %v2254 = vld [vmem:[%s2211 + $0xa8] sm:$0xf]
    %v2255 = vld [vmem:[%s2211 + $0xac] sm:$0xf]
    %v2256 = vld [vmem:[%s2211 + $0xb0] sm:$0xf]
    %v2257 = vld [vmem:[%s2211 + $0xb4] sm:$0xf]
    %v2258 = vld [vmem:[%s2211 + $0xb8] sm:$0xf]
    %v2259 = vld [vmem:[%s2211 + $0xbc] sm:$0xf]
    %v2260 = vld [vmem:[%s2211 + $0xc0] sm:$0xf]
    %v2261 = vld [vmem:[%s2211 + $0xc4] sm:$0xf]
    %v2262 = vld [vmem:[%s2211 + $0xc8] sm:$0xf]
    %v2263 = vld [vmem:[%s2211 + $0xcc] sm:$0xf]
    %v2264 = vld [vmem:[%s2211 + $0xd0] sm:$0xf]
    %v2265 = vld [vmem:[%s2211 + $0xd4] sm:$0xf]
    %v2266 = vld [vmem:[%s2211 + $0xd8] sm:$0xf]
    %v2267 = vld [vmem:[%s2211 + $0xdc] sm:$0xf]
    %v2268 = vld [vmem:[%s2211 + $0xe0] sm:$0xf]
    %v2269 = vld [vmem:[%s2211 + $0xe4] sm:$0xf]
    %v2270 = vld [vmem:[%s2211 + $0xe8] sm:$0xf]
    %v2271 = vld [vmem:[%s2211 + $0xec] sm:$0xf]
    %v2272 = vld [vmem:[%s2211 + $0xf0] sm:$0xf]
    %v2273 = vld [vmem:[%s2211 + $0xf4] sm:$0xf]
    %s2274 = scalar_lea.vmem %s6, 96
    %v2275 = vld [vmem:[%s2274] sm:$0xf]
    %v2276 = vld [vmem:[%s2274 + $0x4] sm:$0xf]
    %v2277 = vld [vmem:[%s2274 + $0x8] sm:$0xf]
    %v2278 = vld [vmem:[%s2274 + $0xc] sm:$0xf]
    %v2279 = vld [vmem:[%s2274 + $0x10] sm:$0xf]
    %v2280 = vld [vmem:[%s2274 + $0x14] sm:$0xf]
    %v2281 = vld [vmem:[%s2274 + $0x18] sm:$0xf]
    %v2282 = vld [vmem:[%s2274 + $0x1c] sm:$0xf]
    %v2313 = vunpack.c.l.b16 %v2212
    %v2314 = vunpack.c.l.b16 %v2213
    %v2315 = vunpack.c.l.b16 %v2216
    %v2316 = vunpack.c.l.b16 %v2217
    %v2317 = vunpack.c.l.b16 %v2220
    %v2318 = vunpack.c.l.b16 %v2221
    %v2319 = vunpack.c.l.b16 %v2224
    %v2320 = vunpack.c.l.b16 %v2225
    %v2321 = vunpack.c.l.b16 %v2228
    %v2322 = vunpack.c.l.b16 %v2229
    %v2323 = vunpack.c.l.b16 %v2232
    %v2324 = vunpack.c.l.b16 %v2233
    %v2325 = vunpack.c.l.b16 %v2236
    %v2326 = vunpack.c.l.b16 %v2237
    %v2327 = vunpack.c.l.b16 %v2240
    %v2328 = vunpack.c.l.b16 %v2241
    %v2329 = vunpack.c.l.b16 %v2244
    %v2330 = vunpack.c.l.b16 %v2245
    %v2331 = vunpack.c.l.b16 %v2248
    %v2332 = vunpack.c.l.b16 %v2249
    %v2333 = vunpack.c.l.b16 %v2252
    %v2334 = vunpack.c.l.b16 %v2253
    %v2335 = vunpack.c.l.b16 %v2256
    %v2336 = vunpack.c.l.b16 %v2257
    %v2337 = vunpack.c.l.b16 %v2260
    %v2338 = vunpack.c.l.b16 %v2261
    %v2339 = vunpack.c.l.b16 %v2264
    %v2340 = vunpack.c.l.b16 %v2265
    %v2341 = vunpack.c.l.b16 %v2268
    %v2342 = vunpack.c.l.b16 %v2269
    %v2343 = vpack.c.b16 %v2314, %v2313
    %v2344 = vpack.c.b16 %v2316, %v2315
    %v2345 = vpack.c.b16 %v2318, %v2317
    %v2346 = vpack.c.b16 %v2320, %v2319
    %v2347 = vpack.c.b16 %v2322, %v2321
    %v2348 = vpack.c.b16 %v2324, %v2323
    %v2349 = vpack.c.b16 %v2326, %v2325
    %v2350 = vpack.c.b16 %v2328, %v2327
    %v2351 = vpack.c.b16 %v2330, %v2329
    %v2352 = vpack.c.b16 %v2332, %v2331
    %v2353 = vpack.c.b16 %v2334, %v2333
    %v2354 = vpack.c.b16 %v2336, %v2335
    %v2355 = vpack.c.b16 %v2338, %v2337
    %v2356 = vpack.c.b16 %v2340, %v2339
    %v2357 = vpack.c.b16 %v2342, %v2341
    %v2366 = vunpack.c.l.b16 %v2275
    %v2367 = vunpack.c.l.b16 %v2276
    %v2368 = vunpack.c.l.b16 %v2277
    %v2369 = vunpack.c.l.b16 %v2278
    %v2370 = vunpack.c.l.b16 %v2279
    %v2371 = vunpack.c.l.b16 %v2280
    %v2372 = vunpack.c.l.b16 %v2281
    %v2373 = vunpack.c.l.b16 %v2282
    %v2374 = vpack.c.b16 %v2367, %v2366
    %v2375 = vpack.c.b16 %v2369, %v2368
    %v2376 = vpack.c.b16 %v2371, %v2370
    %v2377 = vpack.c.b16 %v2373, %v2372
    %v2383 = vsel %vm1488, %v2343, 0
    %v2386 = vsel %vm1488, %v2344, 0
    %v2389 = vsel %vm1488, %v2345, 0
    %v2392 = vsel %vm1488, %v2346, 0
    %v2395 = vsel %vm1488, %v2347, 0
    %v2398 = vsel %vm1488, %v2348, 0
    %v2401 = vsel %vm1488, %v2349, 0
    %v2404 = vsel %vm1488, %v2350, 0
    %v2407 = vsel %vm1488, %v2351, 0
    %v2410 = vsel %vm1488, %v2352, 0
    %v2413 = vsel %vm1488, %v2353, 0
    %v2416 = vsel %vm1488, %v2354, 0
    %v2419 = vsel %vm1488, %v2355, 0
    %v2422 = vsel %vm1488, %v2356, 0
    %v2425 = vsel %vm1488, %v2357, 0
    %2427 = vmatprep.subr.bf16.mxu0 0
    %2428 = vmatpush1.bf16.msra.mxu0 0
    %2429 = vmatprep.subr.bf16.mxu0 0
    %2430 = vmatpush1.bf16.msra.mxu0 0
    %2431 = vmatprep.subr.bf16.mxu0 0
    %2432 = vmatpush1.bf16.msra.mxu0 0
    %2433 = vmatprep.subr.bf16.mxu0 0
    %2434 = vmatpush1.bf16.msra.mxu0 0
    %2435 = vmatprep.subr.bf16.mxu0 0
    %2436 = vmatpush1.bf16.msra.mxu0 %v2377
    %2437 = vmatprep.subr.bf16.mxu0 0
    %2438 = vmatpush1.bf16.msra.mxu0 %v2376
    %2439 = vmatprep.subr.bf16.mxu0 0
    %2440 = vmatpush1.bf16.msra.mxu0 %v2375
    %2441 = vmatprep.subr.bf16.mxu0 0
    %2442 = vmatpush1.bf16.msra.mxu0 %v2374
    %2443 = vmatprep.subr.bf16.mxu0 0
    %2444 = vmatpush2.bf16.msra.mxu0 0
    %2445 = vmatprep.subr.bf16.mxu0 0
    %2446 = vmatpush2.bf16.msra.mxu0 0
    %2447 = vmatprep.subr.bf16.mxu0 0
    %2448 = vmatpush2.bf16.msra.mxu0 0
    %2449 = vmatprep.subr.bf16.mxu0 0
    %2450 = vmatpush2.bf16.msra.mxu0 0
    %2451 = vmatprep.subr.bf16.mxu0 0
    %2452 = vmatpush2.bf16.msra.mxu0 0
    %2453 = vmatprep.subr.bf16.mxu0 0
    %2454 = vmatpush2.bf16.msra.mxu0 0
    %2455 = vmatprep.subr.bf16.mxu0 0
    %2456 = vmatpush2.bf16.msra.mxu0 0
    %2457 = vmatprep.subr.bf16.mxu0 0
    %2458 = vmatpush2.bf16.msra.mxu0 0
    %2459 = vmatprep.mubr.bf16.mxu0 0
    %2460 = vmatmul.mubr.bf16.gmra.mxu0 %v2383
    %v2461 = vpop.f32.mrf.mxu0
    %v2462 = vadd.f32 0.0, %v2461
    %v2463 = vpop.f32.mrf.mxu0
    %v2464 = vpop.f32.mrf.mxu0
    %v2465 = vadd.f32 0.0, %v2464
    %v2466 = vpop.f32.mrf.mxu0
    %2467 = vmatprep.mubr.bf16.mxu0 0
    %2468 = vmatmul.mubr.bf16.gmra.mxu0 %v2386
    %v2469 = vpop.f32.mrf.mxu0
    %v2470 = vadd.f32 0.0, %v2469
    %v2471 = vpop.f32.mrf.mxu0
    %v2472 = vpop.f32.mrf.mxu0
    %v2473 = vadd.f32 0.0, %v2472
    %v2474 = vpop.f32.mrf.mxu0
    %2475 = vmatprep.mubr.bf16.mxu0 0
    %2476 = vmatmul.mubr.bf16.gmra.mxu0 %v2389
    %v2477 = vpop.f32.mrf.mxu0
    %v2478 = vadd.f32 0.0, %v2477
    %v2479 = vpop.f32.mrf.mxu0
    %v2480 = vpop.f32.mrf.mxu0
    %v2481 = vadd.f32 0.0, %v2480
    %v2482 = vpop.f32.mrf.mxu0
    %2483 = vmatprep.mubr.bf16.mxu0 0
    %2484 = vmatmul.mubr.bf16.gmra.mxu0 %v2392
    %v2485 = vpop.f32.mrf.mxu0
    %v2486 = vadd.f32 0.0, %v2485
    %v2487 = vpop.f32.mrf.mxu0
    %v2488 = vpop.f32.mrf.mxu0
    %v2489 = vadd.f32 0.0, %v2488
    %v2490 = vpop.f32.mrf.mxu0
    %2491 = vmatprep.mubr.bf16.mxu0 0
    %2492 = vmatmul.mubr.bf16.gmra.mxu0 %v2395
    %v2493 = vpop.f32.mrf.mxu0
    %v2494 = vadd.f32 0.0, %v2493
    %v2495 = vpop.f32.mrf.mxu0
    %v2496 = vpop.f32.mrf.mxu0
    %v2497 = vadd.f32 0.0, %v2496
    %v2498 = vpop.f32.mrf.mxu0
    %2499 = vmatprep.mubr.bf16.mxu0 0
    %2500 = vmatmul.mubr.bf16.gmra.mxu0 %v2398
    %v2501 = vpop.f32.mrf.mxu0
    %v2502 = vadd.f32 0.0, %v2501
    %v2503 = vpop.f32.mrf.mxu0
    %v2504 = vpop.f32.mrf.mxu0
    %v2505 = vadd.f32 0.0, %v2504
    %v2506 = vpop.f32.mrf.mxu0
    %2507 = vmatprep.mubr.bf16.mxu0 0
    %2508 = vmatmul.mubr.bf16.gmra.mxu0 %v2401
    %v2509 = vpop.f32.mrf.mxu0
    %v2510 = vadd.f32 0.0, %v2509
    %v2511 = vpop.f32.mrf.mxu0
    %v2512 = vpop.f32.mrf.mxu0
    %v2513 = vadd.f32 0.0, %v2512
    %v2514 = vpop.f32.mrf.mxu0
    %2515 = vmatprep.mubr.bf16.mxu0 0
    %2516 = vmatmul.mubr.bf16.gmra.mxu0 %v2404
    %v2517 = vpop.f32.mrf.mxu0
    %v2518 = vadd.f32 0.0, %v2517
    %v2519 = vpop.f32.mrf.mxu0
    %v2520 = vpop.f32.mrf.mxu0
    %v2521 = vadd.f32 0.0, %v2520
    %v2522 = vpop.f32.mrf.mxu0
    %2523 = vmatprep.mubr.bf16.mxu0 0
    %2524 = vmatmul.mubr.bf16.gmra.mxu0 %v2407
    %v2525 = vpop.f32.mrf.mxu0
    %v2526 = vadd.f32 0.0, %v2525
    %v2527 = vpop.f32.mrf.mxu0
    %v2528 = vpop.f32.mrf.mxu0
    %v2529 = vadd.f32 0.0, %v2528
    %v2530 = vpop.f32.mrf.mxu0
    %2531 = vmatprep.mubr.bf16.mxu0 0
    %2532 = vmatmul.mubr.bf16.gmra.mxu0 %v2410
    %v2533 = vpop.f32.mrf.mxu0
    %v2534 = vadd.f32 0.0, %v2533
    %v2535 = vpop.f32.mrf.mxu0
    %v2536 = vpop.f32.mrf.mxu0
    %v2537 = vadd.f32 0.0, %v2536
    %v2538 = vpop.f32.mrf.mxu0
    %2539 = vmatprep.mubr.bf16.mxu0 0
    %2540 = vmatmul.mubr.bf16.gmra.mxu0 %v2413
    %v2541 = vpop.f32.mrf.mxu0
    %v2542 = vadd.f32 0.0, %v2541
    %v2543 = vpop.f32.mrf.mxu0
    %v2544 = vpop.f32.mrf.mxu0
    %v2545 = vadd.f32 0.0, %v2544
    %v2546 = vpop.f32.mrf.mxu0
    %2547 = vmatprep.mubr.bf16.mxu0 0
    %2548 = vmatmul.mubr.bf16.gmra.mxu0 %v2416
    %v2549 = vpop.f32.mrf.mxu0
    %v2550 = vadd.f32 0.0, %v2549
    %v2551 = vpop.f32.mrf.mxu0
    %v2552 = vpop.f32.mrf.mxu0
    %v2553 = vadd.f32 0.0, %v2552
    %v2554 = vpop.f32.mrf.mxu0
    %2555 = vmatprep.mubr.bf16.mxu0 0
    %2556 = vmatmul.mubr.bf16.gmra.mxu0 %v2419
    %v2557 = vpop.f32.mrf.mxu0
    %v2558 = vadd.f32 0.0, %v2557
    %v2559 = vpop.f32.mrf.mxu0
    %v2560 = vpop.f32.mrf.mxu0
    %v2561 = vadd.f32 0.0, %v2560
    %v2562 = vpop.f32.mrf.mxu0
    %2563 = vmatprep.mubr.bf16.mxu0 0
    %2564 = vmatmul.mubr.bf16.gmra.mxu0 %v2422
    %v2565 = vpop.f32.mrf.mxu0
    %v2566 = vadd.f32 0.0, %v2565
    %v2567 = vpop.f32.mrf.mxu0
    %v2568 = vpop.f32.mrf.mxu0
    %v2569 = vadd.f32 0.0, %v2568
    %v2570 = vpop.f32.mrf.mxu0
    %2571 = vmatprep.mubr.bf16.mxu0 0
    %2572 = vmatmul.mubr.bf16.gmra.mxu0 %v2425
    %v2573 = vpop.f32.mrf.mxu0
    %v2574 = vadd.f32 0.0, %v2573
    %v2575 = vpop.f32.mrf.mxu0
    %v2576 = vpop.f32.mrf.mxu0
    %v2577 = vadd.f32 0.0, %v2576
    %v2578 = vpop.f32.mrf.mxu0
    %2579 = vdwg.mxu0
    %v2580 = vadd.f32 %v2178, %v2462
    %v2581 = vadd.f32 %v2179, %v2465
    %v2582 = vadd.f32 %v2180, %v2470
    %v2583 = vadd.f32 %v2181, %v2473
    %v2584 = vadd.f32 %v2182, %v2478
    %v2585 = vadd.f32 %v2183, %v2481
    %v2586 = vadd.f32 %v2184, %v2486
    %v2587 = vadd.f32 %v2185, %v2489
    %v2588 = vadd.f32 %v2186, %v2494
    %v2589 = vadd.f32 %v2187, %v2497
    %v2590 = vadd.f32 %v2188, %v2502
    %v2591 = vadd.f32 %v2189, %v2505
    %v2592 = vadd.f32 %v2190, %v2510
    %v2593 = vadd.f32 %v2191, %v2513
    %v2594 = vadd.f32 %v2192, %v2518
    %v2595 = vadd.f32 %v2193, %v2521
    %v2596 = vadd.f32 %v2194, %v2526
    %v2597 = vadd.f32 %v2195, %v2529
    %v2598 = vadd.f32 %v2196, %v2534
    %v2599 = vadd.f32 %v2197, %v2537
    %v2600 = vadd.f32 %v2198, %v2542
    %v2601 = vadd.f32 %v2199, %v2545
    %v2602 = vadd.f32 %v2200, %v2550
    %v2603 = vadd.f32 %v2201, %v2553
    %v2604 = vadd.f32 %v2202, %v2558
    %v2605 = vadd.f32 %v2203, %v2561
    %v2606 = vadd.f32 %v2204, %v2566
    %v2607 = vadd.f32 %v2205, %v2569
    %v2608 = vadd.f32 %v2206, %v2574
    %v2609 = vadd.f32 %v2207, %v2577
    %s2610 = scalar_lea.vmem %s6, 128
    %v2611 = vld [vmem:[%s2610] sm:$0xf]
    %v2612 = vld [vmem:[%s2610 + $0x4] sm:$0xf]
    %v2613 = vld [vmem:[%s2610 + $0x8] sm:$0xf]
    %v2614 = vld [vmem:[%s2610 + $0xc] sm:$0xf]
    %v2615 = vld [vmem:[%s2610 + $0x10] sm:$0xf]
    %v2616 = vld [vmem:[%s2610 + $0x14] sm:$0xf]
    %v2617 = vld [vmem:[%s2610 + $0x18] sm:$0xf]
    %v2618 = vld [vmem:[%s2610 + $0x1c] sm:$0xf]
    %v2649 = vunpack.c.l.b16 %v2214
    %v2650 = vunpack.c.l.b16 %v2215
    %v2651 = vunpack.c.l.b16 %v2218
    %v2652 = vunpack.c.l.b16 %v2219
    %v2653 = vunpack.c.l.b16 %v2222
    %v2654 = vunpack.c.l.b16 %v2223
    %v2655 = vunpack.c.l.b16 %v2226
    %v2656 = vunpack.c.l.b16 %v2227
    %v2657 = vunpack.c.l.b16 %v2230
    %v2658 = vunpack.c.l.b16 %v2231
    %v2659 = vunpack.c.l.b16 %v2234
    %v2660 = vunpack.c.l.b16 %v2235
    %v2661 = vunpack.c.l.b16 %v2238
    %v2662 = vunpack.c.l.b16 %v2239
    %v2663 = vunpack.c.l.b16 %v2242
    %v2664 = vunpack.c.l.b16 %v2243
    %v2665 = vunpack.c.l.b16 %v2246
    %v2666 = vunpack.c.l.b16 %v2247
    %v2667 = vunpack.c.l.b16 %v2250
    %v2668 = vunpack.c.l.b16 %v2251
    %v2669 = vunpack.c.l.b16 %v2254
    %v2670 = vunpack.c.l.b16 %v2255
    %v2671 = vunpack.c.l.b16 %v2258
    %v2672 = vunpack.c.l.b16 %v2259
    %v2673 = vunpack.c.l.b16 %v2262
    %v2674 = vunpack.c.l.b16 %v2263
    %v2675 = vunpack.c.l.b16 %v2266
    %v2676 = vunpack.c.l.b16 %v2267
    %v2677 = vunpack.c.l.b16 %v2270
    %v2678 = vunpack.c.l.b16 %v2271
    %v2679 = vpack.c.b16 %v2650, %v2649
    %v2680 = vpack.c.b16 %v2652, %v2651
    %v2681 = vpack.c.b16 %v2654, %v2653
    %v2682 = vpack.c.b16 %v2656, %v2655
    %v2683 = vpack.c.b16 %v2658, %v2657
    %v2684 = vpack.c.b16 %v2660, %v2659
    %v2685 = vpack.c.b16 %v2662, %v2661
    %v2686 = vpack.c.b16 %v2664, %v2663
    %v2687 = vpack.c.b16 %v2666, %v2665
    %v2688 = vpack.c.b16 %v2668, %v2667
    %v2689 = vpack.c.b16 %v2670, %v2669
    %v2690 = vpack.c.b16 %v2672, %v2671
    %v2691 = vpack.c.b16 %v2674, %v2673
    %v2692 = vpack.c.b16 %v2676, %v2675
    %v2693 = vpack.c.b16 %v2678, %v2677
    %v2702 = vunpack.c.l.b16 %v2611
    %v2703 = vunpack.c.l.b16 %v2612
    %v2704 = vunpack.c.l.b16 %v2613
    %v2705 = vunpack.c.l.b16 %v2614
    %v2706 = vunpack.c.l.b16 %v2615
    %v2707 = vunpack.c.l.b16 %v2616
    %v2708 = vunpack.c.l.b16 %v2617
    %v2709 = vunpack.c.l.b16 %v2618
    %v2710 = vpack.c.b16 %v2703, %v2702
    %v2711 = vpack.c.b16 %v2705, %v2704
    %v2712 = vpack.c.b16 %v2707, %v2706
    %v2713 = vpack.c.b16 %v2709, %v2708
    %v2719 = vsel %vm1488, %v2679, 0
    %v2722 = vsel %vm1488, %v2680, 0
    %v2725 = vsel %vm1488, %v2681, 0
    %v2728 = vsel %vm1488, %v2682, 0
    %v2731 = vsel %vm1488, %v2683, 0
    %v2734 = vsel %vm1488, %v2684, 0
    %v2737 = vsel %vm1488, %v2685, 0
    %v2740 = vsel %vm1488, %v2686, 0
    %v2743 = vsel %vm1488, %v2687, 0
    %v2746 = vsel %vm1488, %v2688, 0
    %v2749 = vsel %vm1488, %v2689, 0
    %v2752 = vsel %vm1488, %v2690, 0
    %v2755 = vsel %vm1488, %v2691, 0
    %v2758 = vsel %vm1488, %v2692, 0
    %v2761 = vsel %vm1488, %v2693, 0
    %2763 = vmatprep.subr.bf16.mxu0 0
    %2764 = vmatpush1.bf16.msra.mxu0 0
    %2765 = vmatprep.subr.bf16.mxu0 0
    %2766 = vmatpush1.bf16.msra.mxu0 0
    %2767 = vmatprep.subr.bf16.mxu0 0
    %2768 = vmatpush1.bf16.msra.mxu0 0
    %2769 = vmatprep.subr.bf16.mxu0 0
    %2770 = vmatpush1.bf16.msra.mxu0 0
    %2771 = vmatprep.subr.bf16.mxu0 0
    %2772 = vmatpush1.bf16.msra.mxu0 %v2713
    %2773 = vmatprep.subr.bf16.mxu0 0
    %2774 = vmatpush1.bf16.msra.mxu0 %v2712
    %2775 = vmatprep.subr.bf16.mxu0 0
    %2776 = vmatpush1.bf16.msra.mxu0 %v2711
    %2777 = vmatprep.subr.bf16.mxu0 0
    %2778 = vmatpush1.bf16.msra.mxu0 %v2710
    %2779 = vmatprep.subr.bf16.mxu0 0
    %2780 = vmatpush2.bf16.msra.mxu0 0
    %2781 = vmatprep.subr.bf16.mxu0 0
    %2782 = vmatpush2.bf16.msra.mxu0 0
    %2783 = vmatprep.subr.bf16.mxu0 0
    %2784 = vmatpush2.bf16.msra.mxu0 0
    %2785 = vmatprep.subr.bf16.mxu0 0
    %2786 = vmatpush2.bf16.msra.mxu0 0
    %2787 = vmatprep.subr.bf16.mxu0 0
    %2788 = vmatpush2.bf16.msra.mxu0 0
    %2789 = vmatprep.subr.bf16.mxu0 0
    %2790 = vmatpush2.bf16.msra.mxu0 0
    %2791 = vmatprep.subr.bf16.mxu0 0
    %2792 = vmatpush2.bf16.msra.mxu0 0
    %2793 = vmatprep.subr.bf16.mxu0 0
    %2794 = vmatpush2.bf16.msra.mxu0 0
    %2795 = vmatprep.mubr.bf16.mxu0 0
    %2796 = vmatmul.mubr.bf16.gmra.mxu0 %v2719
    %v2797 = vpop.f32.mrf.mxu0
    %v2798 = vadd.f32 0.0, %v2797
    %v2799 = vpop.f32.mrf.mxu0
    %v2800 = vpop.f32.mrf.mxu0
    %v2801 = vadd.f32 0.0, %v2800
    %v2802 = vpop.f32.mrf.mxu0
    %2803 = vmatprep.mubr.bf16.mxu0 0
    %2804 = vmatmul.mubr.bf16.gmra.mxu0 %v2722
    %v2805 = vpop.f32.mrf.mxu0
    %v2806 = vadd.f32 0.0, %v2805
    %v2807 = vpop.f32.mrf.mxu0
    %v2808 = vpop.f32.mrf.mxu0
    %v2809 = vadd.f32 0.0, %v2808
    %v2810 = vpop.f32.mrf.mxu0
    %2811 = vmatprep.mubr.bf16.mxu0 0
    %2812 = vmatmul.mubr.bf16.gmra.mxu0 %v2725
    %v2813 = vpop.f32.mrf.mxu0
    %v2814 = vadd.f32 0.0, %v2813
    %v2815 = vpop.f32.mrf.mxu0
    %v2816 = vpop.f32.mrf.mxu0
    %v2817 = vadd.f32 0.0, %v2816
    %v2818 = vpop.f32.mrf.mxu0
    %2819 = vmatprep.mubr.bf16.mxu0 0
    %2820 = vmatmul.mubr.bf16.gmra.mxu0 %v2728
    %v2821 = vpop.f32.mrf.mxu0
    %v2822 = vadd.f32 0.0, %v2821
    %v2823 = vpop.f32.mrf.mxu0
    %v2824 = vpop.f32.mrf.mxu0
    %v2825 = vadd.f32 0.0, %v2824
    %v2826 = vpop.f32.mrf.mxu0
    %2827 = vmatprep.mubr.bf16.mxu0 0
    %2828 = vmatmul.mubr.bf16.gmra.mxu0 %v2731
    %v2829 = vpop.f32.mrf.mxu0
    %v2830 = vadd.f32 0.0, %v2829
    %v2831 = vpop.f32.mrf.mxu0
    %v2832 = vpop.f32.mrf.mxu0
    %v2833 = vadd.f32 0.0, %v2832
    %v2834 = vpop.f32.mrf.mxu0
    %2835 = vmatprep.mubr.bf16.mxu0 0
    %2836 = vmatmul.mubr.bf16.gmra.mxu0 %v2734
    %v2837 = vpop.f32.mrf.mxu0
    %v2838 = vadd.f32 0.0, %v2837
    %v2839 = vpop.f32.mrf.mxu0
    %v2840 = vpop.f32.mrf.mxu0
    %v2841 = vadd.f32 0.0, %v2840
    %v2842 = vpop.f32.mrf.mxu0
    %2843 = vmatprep.mubr.bf16.mxu0 0
    %2844 = vmatmul.mubr.bf16.gmra.mxu0 %v2737
    %v2845 = vpop.f32.mrf.mxu0
    %v2846 = vadd.f32 0.0, %v2845
    %v2847 = vpop.f32.mrf.mxu0
    %v2848 = vpop.f32.mrf.mxu0
    %v2849 = vadd.f32 0.0, %v2848
    %v2850 = vpop.f32.mrf.mxu0
    %2851 = vmatprep.mubr.bf16.mxu0 0
    %2852 = vmatmul.mubr.bf16.gmra.mxu0 %v2740
    %v2853 = vpop.f32.mrf.mxu0
    %v2854 = vadd.f32 0.0, %v2853
    %v2855 = vpop.f32.mrf.mxu0
    %v2856 = vpop.f32.mrf.mxu0
    %v2857 = vadd.f32 0.0, %v2856
    %v2858 = vpop.f32.mrf.mxu0
    %2859 = vmatprep.mubr.bf16.mxu0 0
    %2860 = vmatmul.mubr.bf16.gmra.mxu0 %v2743
    %v2861 = vpop.f32.mrf.mxu0
    %v2862 = vadd.f32 0.0, %v2861
    %v2863 = vpop.f32.mrf.mxu0
    %v2864 = vpop.f32.mrf.mxu0
    %v2865 = vadd.f32 0.0, %v2864
    %v2866 = vpop.f32.mrf.mxu0
    %2867 = vmatprep.mubr.bf16.mxu0 0
    %2868 = vmatmul.mubr.bf16.gmra.mxu0 %v2746
    %v2869 = vpop.f32.mrf.mxu0
    %v2870 = vadd.f32 0.0, %v2869
    %v2871 = vpop.f32.mrf.mxu0
    %v2872 = vpop.f32.mrf.mxu0
    %v2873 = vadd.f32 0.0, %v2872
    %v2874 = vpop.f32.mrf.mxu0
    %2875 = vmatprep.mubr.bf16.mxu0 0
    %2876 = vmatmul.mubr.bf16.gmra.mxu0 %v2749
    %v2877 = vpop.f32.mrf.mxu0
    %v2878 = vadd.f32 0.0, %v2877
    %v2879 = vpop.f32.mrf.mxu0
    %v2880 = vpop.f32.mrf.mxu0
    %v2881 = vadd.f32 0.0, %v2880
    %v2882 = vpop.f32.mrf.mxu0
    %2883 = vmatprep.mubr.bf16.mxu0 0
    %2884 = vmatmul.mubr.bf16.gmra.mxu0 %v2752
    %v2885 = vpop.f32.mrf.mxu0
    %v2886 = vadd.f32 0.0, %v2885
    %v2887 = vpop.f32.mrf.mxu0
    %v2888 = vpop.f32.mrf.mxu0
    %v2889 = vadd.f32 0.0, %v2888
    %v2890 = vpop.f32.mrf.mxu0
    %2891 = vmatprep.mubr.bf16.mxu0 0
    %2892 = vmatmul.mubr.bf16.gmra.mxu0 %v2755
    %v2893 = vpop.f32.mrf.mxu0
    %v2894 = vadd.f32 0.0, %v2893
    %v2895 = vpop.f32.mrf.mxu0
    %v2896 = vpop.f32.mrf.mxu0
    %v2897 = vadd.f32 0.0, %v2896
    %v2898 = vpop.f32.mrf.mxu0
    %2899 = vmatprep.mubr.bf16.mxu0 0
    %2900 = vmatmul.mubr.bf16.gmra.mxu0 %v2758
    %v2901 = vpop.f32.mrf.mxu0
    %v2902 = vadd.f32 0.0, %v2901
    %v2903 = vpop.f32.mrf.mxu0
    %v2904 = vpop.f32.mrf.mxu0
    %v2905 = vadd.f32 0.0, %v2904
    %v2906 = vpop.f32.mrf.mxu0
    %2907 = vmatprep.mubr.bf16.mxu0 0
    %2908 = vmatmul.mubr.bf16.gmra.mxu0 %v2761
    %v2909 = vpop.f32.mrf.mxu0
    %v2910 = vadd.f32 0.0, %v2909
    %v2911 = vpop.f32.mrf.mxu0
    %v2912 = vpop.f32.mrf.mxu0
    %v2913 = vadd.f32 0.0, %v2912
    %v2914 = vpop.f32.mrf.mxu0
    %2915 = vdwg.mxu0
    %v2916 = vadd.f32 %v2580, %v2798
    %v2917 = vadd.f32 %v2581, %v2801
    %v2918 = vadd.f32 %v2582, %v2806
    %v2919 = vadd.f32 %v2583, %v2809
    %v2920 = vadd.f32 %v2584, %v2814
    %v2921 = vadd.f32 %v2585, %v2817
    %v2922 = vadd.f32 %v2586, %v2822
    %v2923 = vadd.f32 %v2587, %v2825
    %v2924 = vadd.f32 %v2588, %v2830
    %v2925 = vadd.f32 %v2589, %v2833
    %v2926 = vadd.f32 %v2590, %v2838
    %v2927 = vadd.f32 %v2591, %v2841
    %v2928 = vadd.f32 %v2592, %v2846
    %v2929 = vadd.f32 %v2593, %v2849
    %v2930 = vadd.f32 %v2594, %v2854
    %v2931 = vadd.f32 %v2595, %v2857
    %v2932 = vadd.f32 %v2596, %v2862
    %v2933 = vadd.f32 %v2597, %v2865
    %v2934 = vadd.f32 %v2598, %v2870
    %v2935 = vadd.f32 %v2599, %v2873
    %v2936 = vadd.f32 %v2600, %v2878
    %v2937 = vadd.f32 %v2601, %v2881
    %v2938 = vadd.f32 %v2602, %v2886
    %v2939 = vadd.f32 %v2603, %v2889
    %v2940 = vadd.f32 %v2604, %v2894
    %v2941 = vadd.f32 %v2605, %v2897
    %v2942 = vadd.f32 %v2606, %v2902
    %v2943 = vadd.f32 %v2607, %v2905
    %v2944 = vadd.f32 %v2608, %v2910
    %v2945 = vadd.f32 %v2609, %v2913
    %s2946 = scalar_lea.vmem %s6, 160
    %v2947 = vld [vmem:[%s2946] sm:$0xf]
    %v2948 = vld [vmem:[%s2946 + $0x4] sm:$0xf]
    %v2949 = vld [vmem:[%s2946 + $0x8] sm:$0xf]
    %v2950 = vld [vmem:[%s2946 + $0xc] sm:$0xf]
    %v2951 = vld [vmem:[%s2946 + $0x10] sm:$0xf]
    %v2952 = vld [vmem:[%s2946 + $0x14] sm:$0xf]
    %v2953 = vld [vmem:[%s2946 + $0x18] sm:$0xf]
    %v2954 = vld [vmem:[%s2946 + $0x1c] sm:$0xf]
    %v2957 = vunpack.c.l.b16 %v2272
    %v2958 = vunpack.c.l.b16 %v2273
    %v2959 = vpack.c.b16 %v2958, %v2957
    %v2968 = vunpack.c.l.b16 %v2947
    %v2969 = vunpack.c.l.b16 %v2948
    %v2970 = vunpack.c.l.b16 %v2949
    %v2971 = vunpack.c.l.b16 %v2950
    %v2972 = vunpack.c.l.b16 %v2951
    %v2973 = vunpack.c.l.b16 %v2952
    %v2974 = vunpack.c.l.b16 %v2953
    %v2975 = vunpack.c.l.b16 %v2954
    %v2976 = vpack.c.b16 %v2969, %v2968
    %v2977 = vpack.c.b16 %v2971, %v2970
    %v2978 = vpack.c.b16 %v2973, %v2972
    %v2979 = vpack.c.b16 %v2975, %v2974
    %v2985 = vsel %vm1488, %v2959, 0
    %2987 = vmatprep.subr.bf16.mxu0 0
    %2988 = vmatpush1.bf16.msra.mxu0 0
    %2989 = vmatprep.subr.bf16.mxu0 0
    %2990 = vmatpush1.bf16.msra.mxu0 0
    %2991 = vmatprep.subr.bf16.mxu0 0
    %2992 = vmatpush1.bf16.msra.mxu0 0
    %2993 = vmatprep.subr.bf16.mxu0 0
    %2994 = vmatpush1.bf16.msra.mxu0 0
    %2995 = vmatprep.subr.bf16.mxu0 0
    %2996 = vmatpush1.bf16.msra.mxu0 %v2979
    %2997 = vmatprep.subr.bf16.mxu0 0
    %2998 = vmatpush1.bf16.msra.mxu0 %v2978
    %2999 = vmatprep.subr.bf16.mxu0 0
    %3000 = vmatpush1.bf16.msra.mxu0 %v2977
    %3001 = vmatprep.subr.bf16.mxu0 0
    %3002 = vmatpush1.bf16.msra.mxu0 %v2976
    %3003 = vmatprep.subr.bf16.mxu0 0
    %3004 = vmatpush2.bf16.msra.mxu0 0
    %3005 = vmatprep.subr.bf16.mxu0 0
    %3006 = vmatpush2.bf16.msra.mxu0 0
    %3007 = vmatprep.subr.bf16.mxu0 0
    %3008 = vmatpush2.bf16.msra.mxu0 0
    %3009 = vmatprep.subr.bf16.mxu0 0
    %3010 = vmatpush2.bf16.msra.mxu0 0
    %3011 = vmatprep.subr.bf16.mxu0 0
    %3012 = vmatpush2.bf16.msra.mxu0 0
    %3013 = vmatprep.subr.bf16.mxu0 0
    %3014 = vmatpush2.bf16.msra.mxu0 0
    %3015 = vmatprep.subr.bf16.mxu0 0
    %3016 = vmatpush2.bf16.msra.mxu0 0
    %3017 = vmatprep.subr.bf16.mxu0 0
    %3018 = vmatpush2.bf16.msra.mxu0 0
    %3019 = vmatprep.mubr.bf16.mxu0 0
    %3020 = vmatmul.mubr.bf16.gmra.mxu0 %v2386
    %v3021 = vpop.f32.mrf.mxu0
    %v3022 = vadd.f32 0.0, %v3021
    %v3023 = vpop.f32.mrf.mxu0
    %v3024 = vpop.f32.mrf.mxu0
    %v3025 = vadd.f32 0.0, %v3024
    %v3026 = vpop.f32.mrf.mxu0
    %3027 = vmatprep.mubr.bf16.mxu0 0
    %3028 = vmatmul.mubr.bf16.gmra.mxu0 %v2389
    %v3029 = vpop.f32.mrf.mxu0
    %v3030 = vadd.f32 0.0, %v3029
    %v3031 = vpop.f32.mrf.mxu0
    %v3032 = vpop.f32.mrf.mxu0
    %v3033 = vadd.f32 0.0, %v3032
    %v3034 = vpop.f32.mrf.mxu0
    %3035 = vmatprep.mubr.bf16.mxu0 0
    %3036 = vmatmul.mubr.bf16.gmra.mxu0 %v2392
    %v3037 = vpop.f32.mrf.mxu0
    %v3038 = vadd.f32 0.0, %v3037
    %v3039 = vpop.f32.mrf.mxu0
    %v3040 = vpop.f32.mrf.mxu0
    %v3041 = vadd.f32 0.0, %v3040
    %v3042 = vpop.f32.mrf.mxu0
    %3043 = vmatprep.mubr.bf16.mxu0 0
    %3044 = vmatmul.mubr.bf16.gmra.mxu0 %v2395
    %v3045 = vpop.f32.mrf.mxu0
    %v3046 = vadd.f32 0.0, %v3045
    %v3047 = vpop.f32.mrf.mxu0
    %v3048 = vpop.f32.mrf.mxu0
    %v3049 = vadd.f32 0.0, %v3048
    %v3050 = vpop.f32.mrf.mxu0
    %3051 = vmatprep.mubr.bf16.mxu0 0
    %3052 = vmatmul.mubr.bf16.gmra.mxu0 %v2398
    %v3053 = vpop.f32.mrf.mxu0
    %v3054 = vadd.f32 0.0, %v3053
    %v3055 = vpop.f32.mrf.mxu0
    %v3056 = vpop.f32.mrf.mxu0
    %v3057 = vadd.f32 0.0, %v3056
    %v3058 = vpop.f32.mrf.mxu0
    %3059 = vmatprep.mubr.bf16.mxu0 0
    %3060 = vmatmul.mubr.bf16.gmra.mxu0 %v2401
    %v3061 = vpop.f32.mrf.mxu0
    %v3062 = vadd.f32 0.0, %v3061
    %v3063 = vpop.f32.mrf.mxu0
    %v3064 = vpop.f32.mrf.mxu0
    %v3065 = vadd.f32 0.0, %v3064
    %v3066 = vpop.f32.mrf.mxu0
    %3067 = vmatprep.mubr.bf16.mxu0 0
    %3068 = vmatmul.mubr.bf16.gmra.mxu0 %v2404
    %v3069 = vpop.f32.mrf.mxu0
    %v3070 = vadd.f32 0.0, %v3069
    %v3071 = vpop.f32.mrf.mxu0
    %v3072 = vpop.f32.mrf.mxu0
    %v3073 = vadd.f32 0.0, %v3072
    %v3074 = vpop.f32.mrf.mxu0
    %3075 = vmatprep.mubr.bf16.mxu0 0
    %3076 = vmatmul.mubr.bf16.gmra.mxu0 %v2407
    %v3077 = vpop.f32.mrf.mxu0
    %v3078 = vadd.f32 0.0, %v3077
    %v3079 = vpop.f32.mrf.mxu0
    %v3080 = vpop.f32.mrf.mxu0
    %v3081 = vadd.f32 0.0, %v3080
    %v3082 = vpop.f32.mrf.mxu0
    %3083 = vmatprep.mubr.bf16.mxu0 0
    %3084 = vmatmul.mubr.bf16.gmra.mxu0 %v2410
    %v3085 = vpop.f32.mrf.mxu0
    %v3086 = vadd.f32 0.0, %v3085
    %v3087 = vpop.f32.mrf.mxu0
    %v3088 = vpop.f32.mrf.mxu0
    %v3089 = vadd.f32 0.0, %v3088
    %v3090 = vpop.f32.mrf.mxu0
    %3091 = vmatprep.mubr.bf16.mxu0 0
    %3092 = vmatmul.mubr.bf16.gmra.mxu0 %v2413
    %v3093 = vpop.f32.mrf.mxu0
    %v3094 = vadd.f32 0.0, %v3093
    %v3095 = vpop.f32.mrf.mxu0
    %v3096 = vpop.f32.mrf.mxu0
    %v3097 = vadd.f32 0.0, %v3096
    %v3098 = vpop.f32.mrf.mxu0
    %3099 = vmatprep.mubr.bf16.mxu0 0
    %3100 = vmatmul.mubr.bf16.gmra.mxu0 %v2416
    %v3101 = vpop.f32.mrf.mxu0
    %v3102 = vadd.f32 0.0, %v3101
    %v3103 = vpop.f32.mrf.mxu0
    %v3104 = vpop.f32.mrf.mxu0
    %v3105 = vadd.f32 0.0, %v3104
    %v3106 = vpop.f32.mrf.mxu0
    %3107 = vmatprep.mubr.bf16.mxu0 0
    %3108 = vmatmul.mubr.bf16.gmra.mxu0 %v2419
    %v3109 = vpop.f32.mrf.mxu0
    %v3110 = vadd.f32 0.0, %v3109
    %v3111 = vpop.f32.mrf.mxu0
    %v3112 = vpop.f32.mrf.mxu0
    %v3113 = vadd.f32 0.0, %v3112
    %v3114 = vpop.f32.mrf.mxu0
    %3115 = vmatprep.mubr.bf16.mxu0 0
    %3116 = vmatmul.mubr.bf16.gmra.mxu0 %v2422
    %v3117 = vpop.f32.mrf.mxu0
    %v3118 = vadd.f32 0.0, %v3117
    %v3119 = vpop.f32.mrf.mxu0
    %v3120 = vpop.f32.mrf.mxu0
    %v3121 = vadd.f32 0.0, %v3120
    %v3122 = vpop.f32.mrf.mxu0
    %3123 = vmatprep.mubr.bf16.mxu0 0
    %3124 = vmatmul.mubr.bf16.gmra.mxu0 %v2425
    %v3125 = vpop.f32.mrf.mxu0
    %v3126 = vadd.f32 0.0, %v3125
    %v3127 = vpop.f32.mrf.mxu0
    %v3128 = vpop.f32.mrf.mxu0
    %v3129 = vadd.f32 0.0, %v3128
    %v3130 = vpop.f32.mrf.mxu0
    %3131 = vmatprep.mubr.bf16.mxu0 0
    %3132 = vmatmul.mubr.bf16.gmra.mxu0 %v2985
    %v3133 = vpop.f32.mrf.mxu0
    %v3134 = vadd.f32 0.0, %v3133
    %v3135 = vpop.f32.mrf.mxu0
    %v3136 = vpop.f32.mrf.mxu0
    %v3137 = vadd.f32 0.0, %v3136
    %v3138 = vpop.f32.mrf.mxu0
    %3139 = vdwg.mxu0
    %v3140 = vadd.f32 %v2916, %v3022
    %v3141 = vadd.f32 %v2917, %v3025
    %v3142 = vadd.f32 %v2918, %v3030
    %v3143 = vadd.f32 %v2919, %v3033
    %v3144 = vadd.f32 %v2920, %v3038
    %v3145 = vadd.f32 %v2921, %v3041
    %v3146 = vadd.f32 %v2922, %v3046
    %v3147 = vadd.f32 %v2923, %v3049
    %v3148 = vadd.f32 %v2924, %v3054
    %v3149 = vadd.f32 %v2925, %v3057
    %v3150 = vadd.f32 %v2926, %v3062
    %v3151 = vadd.f32 %v2927, %v3065
    %v3152 = vadd.f32 %v2928, %v3070
    %v3153 = vadd.f32 %v2929, %v3073
    %v3154 = vadd.f32 %v2930, %v3078
    %v3155 = vadd.f32 %v2931, %v3081
    %v3156 = vadd.f32 %v2932, %v3086
    %v3157 = vadd.f32 %v2933, %v3089
    %v3158 = vadd.f32 %v2934, %v3094
    %v3159 = vadd.f32 %v2935, %v3097
    %v3160 = vadd.f32 %v2936, %v3102
    %v3161 = vadd.f32 %v2937, %v3105
    %v3162 = vadd.f32 %v2938, %v3110
    %v3163 = vadd.f32 %v2939, %v3113
    %v3164 = vadd.f32 %v2940, %v3118
    %v3165 = vadd.f32 %v2941, %v3121
    %v3166 = vadd.f32 %v2942, %v3126
    %v3167 = vadd.f32 %v2943, %v3129
    %v3168 = vadd.f32 %v2944, %v3134
    %v3169 = vadd.f32 %v2945, %v3137
    %s3170 = sadd.s32 %s1306, 2
    %s3171 = smul.u32 %s3170, 62
    %s3172 = smul.addr %s3171, 4
    %s3173 = scalar_lea.vmem [#allocation2], %s3172
    %v3174 = vld [vmem:[%s3173] sm:$0xf]
    %v3175 = vld [vmem:[%s3173 + $0x4] sm:$0xf]
    %v3176 = vld [vmem:[%s3173 + $0x8] sm:$0xf]
    %v3177 = vld [vmem:[%s3173 + $0xc] sm:$0xf]
    %v3178 = vld [vmem:[%s3173 + $0x10] sm:$0xf]
    %v3179 = vld [vmem:[%s3173 + $0x14] sm:$0xf]
    %v3180 = vld [vmem:[%s3173 + $0x18] sm:$0xf]
    %v3181 = vld [vmem:[%s3173 + $0x1c] sm:$0xf]
    %v3182 = vld [vmem:[%s3173 + $0x20] sm:$0xf]
    %v3183 = vld [vmem:[%s3173 + $0x24] sm:$0xf]
    %v3184 = vld [vmem:[%s3173 + $0x28] sm:$0xf]
    %v3185 = vld [vmem:[%s3173 + $0x2c] sm:$0xf]
    %v3186 = vld [vmem:[%s3173 + $0x30] sm:$0xf]
    %v3187 = vld [vmem:[%s3173 + $0x34] sm:$0xf]
    %v3188 = vld [vmem:[%s3173 + $0x38] sm:$0xf]
    %v3189 = vld [vmem:[%s3173 + $0x3c] sm:$0xf]
    %v3190 = vld [vmem:[%s3173 + $0x40] sm:$0xf]
    %v3191 = vld [vmem:[%s3173 + $0x44] sm:$0xf]
    %v3192 = vld [vmem:[%s3173 + $0x48] sm:$0xf]
    %v3193 = vld [vmem:[%s3173 + $0x4c] sm:$0xf]
    %v3194 = vld [vmem:[%s3173 + $0x50] sm:$0xf]
    %v3195 = vld [vmem:[%s3173 + $0x54] sm:$0xf]
    %v3196 = vld [vmem:[%s3173 + $0x58] sm:$0xf]
    %v3197 = vld [vmem:[%s3173 + $0x5c] sm:$0xf]
    %v3198 = vld [vmem:[%s3173 + $0x60] sm:$0xf]
    %v3199 = vld [vmem:[%s3173 + $0x64] sm:$0xf]
    %v3200 = vld [vmem:[%s3173 + $0x68] sm:$0xf]
    %v3201 = vld [vmem:[%s3173 + $0x6c] sm:$0xf]
    %v3202 = vld [vmem:[%s3173 + $0x70] sm:$0xf]
    %v3203 = vld [vmem:[%s3173 + $0x74] sm:$0xf]
    %v3204 = vld [vmem:[%s3173 + $0x78] sm:$0xf]
    %v3205 = vld [vmem:[%s3173 + $0x7c] sm:$0xf]
    %v3206 = vld [vmem:[%s3173 + $0x80] sm:$0xf]
    %v3207 = vld [vmem:[%s3173 + $0x84] sm:$0xf]
    %v3208 = vld [vmem:[%s3173 + $0x88] sm:$0xf]
    %v3209 = vld [vmem:[%s3173 + $0x8c] sm:$0xf]
    %v3210 = vld [vmem:[%s3173 + $0x90] sm:$0xf]
    %v3211 = vld [vmem:[%s3173 + $0x94] sm:$0xf]
    %v3212 = vld [vmem:[%s3173 + $0x98] sm:$0xf]
    %v3213 = vld [vmem:[%s3173 + $0x9c] sm:$0xf]
    %v3214 = vld [vmem:[%s3173 + $0xa0] sm:$0xf]
    %v3215 = vld [vmem:[%s3173 + $0xa4] sm:$0xf]
    %v3216 = vld [vmem:[%s3173 + $0xa8] sm:$0xf]
    %v3217 = vld [vmem:[%s3173 + $0xac] sm:$0xf]
    %v3218 = vld [vmem:[%s3173 + $0xb0] sm:$0xf]
    %v3219 = vld [vmem:[%s3173 + $0xb4] sm:$0xf]
    %v3220 = vld [vmem:[%s3173 + $0xb8] sm:$0xf]
    %v3221 = vld [vmem:[%s3173 + $0xbc] sm:$0xf]
    %v3222 = vld [vmem:[%s3173 + $0xc0] sm:$0xf]
    %v3223 = vld [vmem:[%s3173 + $0xc4] sm:$0xf]
    %v3224 = vld [vmem:[%s3173 + $0xc8] sm:$0xf]
    %v3225 = vld [vmem:[%s3173 + $0xcc] sm:$0xf]
    %v3226 = vld [vmem:[%s3173 + $0xd0] sm:$0xf]
    %v3227 = vld [vmem:[%s3173 + $0xd4] sm:$0xf]
    %v3228 = vld [vmem:[%s3173 + $0xd8] sm:$0xf]
    %v3229 = vld [vmem:[%s3173 + $0xdc] sm:$0xf]
    %v3230 = vld [vmem:[%s3173 + $0xe0] sm:$0xf]
    %v3231 = vld [vmem:[%s3173 + $0xe4] sm:$0xf]
    %v3232 = vld [vmem:[%s3173 + $0xe8] sm:$0xf]
    %v3233 = vld [vmem:[%s3173 + $0xec] sm:$0xf]
    %v3234 = vld [vmem:[%s3173 + $0xf0] sm:$0xf]
    %v3235 = vld [vmem:[%s3173 + $0xf4] sm:$0xf]
    %s3236 = scalar_lea.vmem %s6, 192
    %v3237 = vld [vmem:[%s3236] sm:$0xf]
    %v3238 = vld [vmem:[%s3236 + $0x4] sm:$0xf]
    %v3239 = vld [vmem:[%s3236 + $0x8] sm:$0xf]
    %v3240 = vld [vmem:[%s3236 + $0xc] sm:$0xf]
    %v3241 = vld [vmem:[%s3236 + $0x10] sm:$0xf]
    %v3242 = vld [vmem:[%s3236 + $0x14] sm:$0xf]
    %v3243 = vld [vmem:[%s3236 + $0x18] sm:$0xf]
    %v3244 = vld [vmem:[%s3236 + $0x1c] sm:$0xf]
    %v3275 = vunpack.c.l.b16 %v3174
    %v3276 = vunpack.c.l.b16 %v3175
    %v3277 = vunpack.c.l.b16 %v3178
    %v3278 = vunpack.c.l.b16 %v3179
    %v3279 = vunpack.c.l.b16 %v3182
    %v3280 = vunpack.c.l.b16 %v3183
    %v3281 = vunpack.c.l.b16 %v3186
    %v3282 = vunpack.c.l.b16 %v3187
    %v3283 = vunpack.c.l.b16 %v3190
    %v3284 = vunpack.c.l.b16 %v3191
    %v3285 = vunpack.c.l.b16 %v3194
    %v3286 = vunpack.c.l.b16 %v3195
    %v3287 = vunpack.c.l.b16 %v3198
    %v3288 = vunpack.c.l.b16 %v3199
    %v3289 = vunpack.c.l.b16 %v3202
    %v3290 = vunpack.c.l.b16 %v3203
    %v3291 = vunpack.c.l.b16 %v3206
    %v3292 = vunpack.c.l.b16 %v3207
    %v3293 = vunpack.c.l.b16 %v3210
    %v3294 = vunpack.c.l.b16 %v3211
    %v3295 = vunpack.c.l.b16 %v3214
    %v3296 = vunpack.c.l.b16 %v3215
    %v3297 = vunpack.c.l.b16 %v3218
    %v3298 = vunpack.c.l.b16 %v3219
    %v3299 = vunpack.c.l.b16 %v3222
    %v3300 = vunpack.c.l.b16 %v3223
    %v3301 = vunpack.c.l.b16 %v3226
    %v3302 = vunpack.c.l.b16 %v3227
    %v3303 = vunpack.c.l.b16 %v3230
    %v3304 = vunpack.c.l.b16 %v3231
    %v3305 = vpack.c.b16 %v3276, %v3275
    %v3306 = vpack.c.b16 %v3278, %v3277
    %v3307 = vpack.c.b16 %v3280, %v3279
    %v3308 = vpack.c.b16 %v3282, %v3281
    %v3309 = vpack.c.b16 %v3284, %v3283
    %v3310 = vpack.c.b16 %v3286, %v3285
    %v3311 = vpack.c.b16 %v3288, %v3287
    %v3312 = vpack.c.b16 %v3290, %v3289
    %v3313 = vpack.c.b16 %v3292, %v3291
    %v3314 = vpack.c.b16 %v3294, %v3293
    %v3315 = vpack.c.b16 %v3296, %v3295
    %v3316 = vpack.c.b16 %v3298, %v3297
    %v3317 = vpack.c.b16 %v3300, %v3299
    %v3318 = vpack.c.b16 %v3302, %v3301
    %v3319 = vpack.c.b16 %v3304, %v3303
    %v3328 = vunpack.c.l.b16 %v3237
    %v3329 = vunpack.c.l.b16 %v3238
    %v3330 = vunpack.c.l.b16 %v3239
    %v3331 = vunpack.c.l.b16 %v3240
    %v3332 = vunpack.c.l.b16 %v3241
    %v3333 = vunpack.c.l.b16 %v3242
    %v3334 = vunpack.c.l.b16 %v3243
    %v3335 = vunpack.c.l.b16 %v3244
    %v3336 = vpack.c.b16 %v3329, %v3328
    %v3337 = vpack.c.b16 %v3331, %v3330
    %v3338 = vpack.c.b16 %v3333, %v3332
    %v3339 = vpack.c.b16 %v3335, %v3334
    %v3345 = vsel %vm1488, %v3305, 0
    %v3348 = vsel %vm1488, %v3306, 0
    %v3351 = vsel %vm1488, %v3307, 0
    %v3354 = vsel %vm1488, %v3308, 0
    %v3357 = vsel %vm1488, %v3309, 0
    %v3360 = vsel %vm1488, %v3310, 0
    %v3363 = vsel %vm1488, %v3311, 0
    %v3366 = vsel %vm1488, %v3312, 0
    %v3369 = vsel %vm1488, %v3313, 0
    %v3372 = vsel %vm1488, %v3314, 0
    %v3375 = vsel %vm1488, %v3315, 0
    %v3378 = vsel %vm1488, %v3316, 0
    %v3381 = vsel %vm1488, %v3317, 0
    %v3384 = vsel %vm1488, %v3318, 0
    %v3387 = vsel %vm1488, %v3319, 0
    %3389 = vmatprep.subr.bf16.mxu0 0
    %3390 = vmatpush1.bf16.msra.mxu0 0
    %3391 = vmatprep.subr.bf16.mxu0 0
    %3392 = vmatpush1.bf16.msra.mxu0 0
    %3393 = vmatprep.subr.bf16.mxu0 0
    %3394 = vmatpush1.bf16.msra.mxu0 0
    %3395 = vmatprep.subr.bf16.mxu0 0
    %3396 = vmatpush1.bf16.msra.mxu0 0
    %3397 = vmatprep.subr.bf16.mxu0 0
    %3398 = vmatpush1.bf16.msra.mxu0 %v3339
    %3399 = vmatprep.subr.bf16.mxu0 0
    %3400 = vmatpush1.bf16.msra.mxu0 %v3338
    %3401 = vmatprep.subr.bf16.mxu0 0
    %3402 = vmatpush1.bf16.msra.mxu0 %v3337
    %3403 = vmatprep.subr.bf16.mxu0 0
    %3404 = vmatpush1.bf16.msra.mxu0 %v3336
    %3405 = vmatprep.subr.bf16.mxu0 0
    %3406 = vmatpush2.bf16.msra.mxu0 0
    %3407 = vmatprep.subr.bf16.mxu0 0
    %3408 = vmatpush2.bf16.msra.mxu0 0
    %3409 = vmatprep.subr.bf16.mxu0 0
    %3410 = vmatpush2.bf16.msra.mxu0 0
    %3411 = vmatprep.subr.bf16.mxu0 0
    %3412 = vmatpush2.bf16.msra.mxu0 0
    %3413 = vmatprep.subr.bf16.mxu0 0
    %3414 = vmatpush2.bf16.msra.mxu0 0
    %3415 = vmatprep.subr.bf16.mxu0 0
    %3416 = vmatpush2.bf16.msra.mxu0 0
    %3417 = vmatprep.subr.bf16.mxu0 0
    %3418 = vmatpush2.bf16.msra.mxu0 0
    %3419 = vmatprep.subr.bf16.mxu0 0
    %3420 = vmatpush2.bf16.msra.mxu0 0
    %3421 = vmatprep.mubr.bf16.mxu0 0
    %3422 = vmatmul.mubr.bf16.gmra.mxu0 %v3345
    %v3423 = vpop.f32.mrf.mxu0
    %v3424 = vadd.f32 0.0, %v3423
    %v3425 = vpop.f32.mrf.mxu0
    %v3426 = vpop.f32.mrf.mxu0
    %v3427 = vadd.f32 0.0, %v3426
    %v3428 = vpop.f32.mrf.mxu0
    %3429 = vmatprep.mubr.bf16.mxu0 0
    %3430 = vmatmul.mubr.bf16.gmra.mxu0 %v3348
    %v3431 = vpop.f32.mrf.mxu0
    %v3432 = vadd.f32 0.0, %v3431
    %v3433 = vpop.f32.mrf.mxu0
    %v3434 = vpop.f32.mrf.mxu0
    %v3435 = vadd.f32 0.0, %v3434
    %v3436 = vpop.f32.mrf.mxu0
    %3437 = vmatprep.mubr.bf16.mxu0 0
    %3438 = vmatmul.mubr.bf16.gmra.mxu0 %v3351
    %v3439 = vpop.f32.mrf.mxu0
    %v3440 = vadd.f32 0.0, %v3439
    %v3441 = vpop.f32.mrf.mxu0
    %v3442 = vpop.f32.mrf.mxu0
    %v3443 = vadd.f32 0.0, %v3442
    %v3444 = vpop.f32.mrf.mxu0
    %3445 = vmatprep.mubr.bf16.mxu0 0
    %3446 = vmatmul.mubr.bf16.gmra.mxu0 %v3354
    %v3447 = vpop.f32.mrf.mxu0
    %v3448 = vadd.f32 0.0, %v3447
    %v3449 = vpop.f32.mrf.mxu0
    %v3450 = vpop.f32.mrf.mxu0
    %v3451 = vadd.f32 0.0, %v3450
    %v3452 = vpop.f32.mrf.mxu0
    %3453 = vmatprep.mubr.bf16.mxu0 0
    %3454 = vmatmul.mubr.bf16.gmra.mxu0 %v3357
    %v3455 = vpop.f32.mrf.mxu0
    %v3456 = vadd.f32 0.0, %v3455
    %v3457 = vpop.f32.mrf.mxu0
    %v3458 = vpop.f32.mrf.mxu0
    %v3459 = vadd.f32 0.0, %v3458
    %v3460 = vpop.f32.mrf.mxu0
    %3461 = vmatprep.mubr.bf16.mxu0 0
    %3462 = vmatmul.mubr.bf16.gmra.mxu0 %v3360
    %v3463 = vpop.f32.mrf.mxu0
    %v3464 = vadd.f32 0.0, %v3463
    %v3465 = vpop.f32.mrf.mxu0
    %v3466 = vpop.f32.mrf.mxu0
    %v3467 = vadd.f32 0.0, %v3466
    %v3468 = vpop.f32.mrf.mxu0
    %3469 = vmatprep.mubr.bf16.mxu0 0
    %3470 = vmatmul.mubr.bf16.gmra.mxu0 %v3363
    %v3471 = vpop.f32.mrf.mxu0
    %v3472 = vadd.f32 0.0, %v3471
    %v3473 = vpop.f32.mrf.mxu0
    %v3474 = vpop.f32.mrf.mxu0
    %v3475 = vadd.f32 0.0, %v3474
    %v3476 = vpop.f32.mrf.mxu0
    %3477 = vmatprep.mubr.bf16.mxu0 0
    %3478 = vmatmul.mubr.bf16.gmra.mxu0 %v3366
    %v3479 = vpop.f32.mrf.mxu0
    %v3480 = vadd.f32 0.0, %v3479
    %v3481 = vpop.f32.mrf.mxu0
    %v3482 = vpop.f32.mrf.mxu0
    %v3483 = vadd.f32 0.0, %v3482
    %v3484 = vpop.f32.mrf.mxu0
    %3485 = vmatprep.mubr.bf16.mxu0 0
    %3486 = vmatmul.mubr.bf16.gmra.mxu0 %v3369
    %v3487 = vpop.f32.mrf.mxu0
    %v3488 = vadd.f32 0.0, %v3487
    %v3489 = vpop.f32.mrf.mxu0
    %v3490 = vpop.f32.mrf.mxu0
    %v3491 = vadd.f32 0.0, %v3490
    %v3492 = vpop.f32.mrf.mxu0
    %3493 = vmatprep.mubr.bf16.mxu0 0
    %3494 = vmatmul.mubr.bf16.gmra.mxu0 %v3372
    %v3495 = vpop.f32.mrf.mxu0
    %v3496 = vadd.f32 0.0, %v3495
    %v3497 = vpop.f32.mrf.mxu0
    %v3498 = vpop.f32.mrf.mxu0
    %v3499 = vadd.f32 0.0, %v3498
    %v3500 = vpop.f32.mrf.mxu0
    %3501 = vmatprep.mubr.bf16.mxu0 0
    %3502 = vmatmul.mubr.bf16.gmra.mxu0 %v3375
    %v3503 = vpop.f32.mrf.mxu0
    %v3504 = vadd.f32 0.0, %v3503
    %v3505 = vpop.f32.mrf.mxu0
    %v3506 = vpop.f32.mrf.mxu0
    %v3507 = vadd.f32 0.0, %v3506
    %v3508 = vpop.f32.mrf.mxu0
    %3509 = vmatprep.mubr.bf16.mxu0 0
    %3510 = vmatmul.mubr.bf16.gmra.mxu0 %v3378
    %v3511 = vpop.f32.mrf.mxu0
    %v3512 = vadd.f32 0.0, %v3511
    %v3513 = vpop.f32.mrf.mxu0
    %v3514 = vpop.f32.mrf.mxu0
    %v3515 = vadd.f32 0.0, %v3514
    %v3516 = vpop.f32.mrf.mxu0
    %3517 = vmatprep.mubr.bf16.mxu0 0
    %3518 = vmatmul.mubr.bf16.gmra.mxu0 %v3381
    %v3519 = vpop.f32.mrf.mxu0
    %v3520 = vadd.f32 0.0, %v3519
    %v3521 = vpop.f32.mrf.mxu0
    %v3522 = vpop.f32.mrf.mxu0
    %v3523 = vadd.f32 0.0, %v3522
    %v3524 = vpop.f32.mrf.mxu0
    %3525 = vmatprep.mubr.bf16.mxu0 0
    %3526 = vmatmul.mubr.bf16.gmra.mxu0 %v3384
    %v3527 = vpop.f32.mrf.mxu0
    %v3528 = vadd.f32 0.0, %v3527
    %v3529 = vpop.f32.mrf.mxu0
    %v3530 = vpop.f32.mrf.mxu0
    %v3531 = vadd.f32 0.0, %v3530
    %v3532 = vpop.f32.mrf.mxu0
    %3533 = vmatprep.mubr.bf16.mxu0 0
    %3534 = vmatmul.mubr.bf16.gmra.mxu0 %v3387
    %v3535 = vpop.f32.mrf.mxu0
    %v3536 = vadd.f32 0.0, %v3535
    %v3537 = vpop.f32.mrf.mxu0
    %v3538 = vpop.f32.mrf.mxu0
    %v3539 = vadd.f32 0.0, %v3538
    %v3540 = vpop.f32.mrf.mxu0
    %3541 = vdwg.mxu0
    %v3542 = vadd.f32 %v3140, %v3424
    %v3543 = vadd.f32 %v3141, %v3427
    %v3544 = vadd.f32 %v3142, %v3432
    %v3545 = vadd.f32 %v3143, %v3435
    %v3546 = vadd.f32 %v3144, %v3440
    %v3547 = vadd.f32 %v3145, %v3443
    %v3548 = vadd.f32 %v3146, %v3448
    %v3549 = vadd.f32 %v3147, %v3451
    %v3550 = vadd.f32 %v3148, %v3456
    %v3551 = vadd.f32 %v3149, %v3459
    %v3552 = vadd.f32 %v3150, %v3464
    %v3553 = vadd.f32 %v3151, %v3467
    %v3554 = vadd.f32 %v3152, %v3472
    %v3555 = vadd.f32 %v3153, %v3475
    %v3556 = vadd.f32 %v3154, %v3480
    %v3557 = vadd.f32 %v3155, %v3483
    %v3558 = vadd.f32 %v3156, %v3488
    %v3559 = vadd.f32 %v3157, %v3491
    %v3560 = vadd.f32 %v3158, %v3496
    %v3561 = vadd.f32 %v3159, %v3499
    %v3562 = vadd.f32 %v3160, %v3504
    %v3563 = vadd.f32 %v3161, %v3507
    %v3564 = vadd.f32 %v3162, %v3512
    %v3565 = vadd.f32 %v3163, %v3515
    %v3566 = vadd.f32 %v3164, %v3520
    %v3567 = vadd.f32 %v3165, %v3523
    %v3568 = vadd.f32 %v3166, %v3528
    %v3569 = vadd.f32 %v3167, %v3531
    %v3570 = vadd.f32 %v3168, %v3536
    %v3571 = vadd.f32 %v3169, %v3539
    %s3572 = scalar_lea.vmem %s6, 224
    %v3573 = vld [vmem:[%s3572] sm:$0xf]
    %v3574 = vld [vmem:[%s3572 + $0x4] sm:$0xf]
    %v3575 = vld [vmem:[%s3572 + $0x8] sm:$0xf]
    %v3576 = vld [vmem:[%s3572 + $0xc] sm:$0xf]
    %v3577 = vld [vmem:[%s3572 + $0x10] sm:$0xf]
    %v3578 = vld [vmem:[%s3572 + $0x14] sm:$0xf]
    %v3579 = vld [vmem:[%s3572 + $0x18] sm:$0xf]
    %v3580 = vld [vmem:[%s3572 + $0x1c] sm:$0xf]
    %v3611 = vunpack.c.l.b16 %v3176
    %v3612 = vunpack.c.l.b16 %v3177
    %v3613 = vunpack.c.l.b16 %v3180
    %v3614 = vunpack.c.l.b16 %v3181
    %v3615 = vunpack.c.l.b16 %v3184
    %v3616 = vunpack.c.l.b16 %v3185
    %v3617 = vunpack.c.l.b16 %v3188
    %v3618 = vunpack.c.l.b16 %v3189
    %v3619 = vunpack.c.l.b16 %v3192
    %v3620 = vunpack.c.l.b16 %v3193
    %v3621 = vunpack.c.l.b16 %v3196
    %v3622 = vunpack.c.l.b16 %v3197
    %v3623 = vunpack.c.l.b16 %v3200
    %v3624 = vunpack.c.l.b16 %v3201
    %v3625 = vunpack.c.l.b16 %v3204
    %v3626 = vunpack.c.l.b16 %v3205
    %v3627 = vunpack.c.l.b16 %v3208
    %v3628 = vunpack.c.l.b16 %v3209
    %v3629 = vunpack.c.l.b16 %v3212
    %v3630 = vunpack.c.l.b16 %v3213
    %v3631 = vunpack.c.l.b16 %v3216
    %v3632 = vunpack.c.l.b16 %v3217
    %v3633 = vunpack.c.l.b16 %v3220
    %v3634 = vunpack.c.l.b16 %v3221
    %v3635 = vunpack.c.l.b16 %v3224
    %v3636 = vunpack.c.l.b16 %v3225
    %v3637 = vunpack.c.l.b16 %v3228
    %v3638 = vunpack.c.l.b16 %v3229
    %v3639 = vunpack.c.l.b16 %v3232
    %v3640 = vunpack.c.l.b16 %v3233
    %v3641 = vpack.c.b16 %v3612, %v3611
    %v3642 = vpack.c.b16 %v3614, %v3613
    %v3643 = vpack.c.b16 %v3616, %v3615
    %v3644 = vpack.c.b16 %v3618, %v3617
    %v3645 = vpack.c.b16 %v3620, %v3619
    %v3646 = vpack.c.b16 %v3622, %v3621
    %v3647 = vpack.c.b16 %v3624, %v3623
    %v3648 = vpack.c.b16 %v3626, %v3625
    %v3649 = vpack.c.b16 %v3628, %v3627
    %v3650 = vpack.c.b16 %v3630, %v3629
    %v3651 = vpack.c.b16 %v3632, %v3631
    %v3652 = vpack.c.b16 %v3634, %v3633
    %v3653 = vpack.c.b16 %v3636, %v3635
    %v3654 = vpack.c.b16 %v3638, %v3637
    %v3655 = vpack.c.b16 %v3640, %v3639
    %v3664 = vunpack.c.l.b16 %v3573
    %v3665 = vunpack.c.l.b16 %v3574
    %v3666 = vunpack.c.l.b16 %v3575
    %v3667 = vunpack.c.l.b16 %v3576
    %v3668 = vunpack.c.l.b16 %v3577
    %v3669 = vunpack.c.l.b16 %v3578
    %v3670 = vunpack.c.l.b16 %v3579
    %v3671 = vunpack.c.l.b16 %v3580
    %v3672 = vpack.c.b16 %v3665, %v3664
    %v3673 = vpack.c.b16 %v3667, %v3666
    %v3674 = vpack.c.b16 %v3669, %v3668
    %v3675 = vpack.c.b16 %v3671, %v3670
    %v3681 = vsel %vm1488, %v3641, 0
    %v3684 = vsel %vm1488, %v3642, 0
    %v3687 = vsel %vm1488, %v3643, 0
    %v3690 = vsel %vm1488, %v3644, 0
    %v3693 = vsel %vm1488, %v3645, 0
    %v3696 = vsel %vm1488, %v3646, 0
    %v3699 = vsel %vm1488, %v3647, 0
    %v3702 = vsel %vm1488, %v3648, 0
    %v3705 = vsel %vm1488, %v3649, 0
    %v3708 = vsel %vm1488, %v3650, 0
    %v3711 = vsel %vm1488, %v3651, 0
    %v3714 = vsel %vm1488, %v3652, 0
    %v3717 = vsel %vm1488, %v3653, 0
    %v3720 = vsel %vm1488, %v3654, 0
    %v3723 = vsel %vm1488, %v3655, 0
    %3725 = vmatprep.subr.bf16.mxu0 0
    %3726 = vmatpush1.bf16.msra.mxu0 0
    %3727 = vmatprep.subr.bf16.mxu0 0
    %3728 = vmatpush1.bf16.msra.mxu0 0
    %3729 = vmatprep.subr.bf16.mxu0 0
    %3730 = vmatpush1.bf16.msra.mxu0 0
    %3731 = vmatprep.subr.bf16.mxu0 0
    %3732 = vmatpush1.bf16.msra.mxu0 0
    %3733 = vmatprep.subr.bf16.mxu0 0
    %3734 = vmatpush1.bf16.msra.mxu0 %v3675
    %3735 = vmatprep.subr.bf16.mxu0 0
    %3736 = vmatpush1.bf16.msra.mxu0 %v3674
    %3737 = vmatprep.subr.bf16.mxu0 0
    %3738 = vmatpush1.bf16.msra.mxu0 %v3673
    %3739 = vmatprep.subr.bf16.mxu0 0
    %3740 = vmatpush1.bf16.msra.mxu0 %v3672
    %3741 = vmatprep.subr.bf16.mxu0 0
    %3742 = vmatpush2.bf16.msra.mxu0 0
    %3743 = vmatprep.subr.bf16.mxu0 0
    %3744 = vmatpush2.bf16.msra.mxu0 0
    %3745 = vmatprep.subr.bf16.mxu0 0
    %3746 = vmatpush2.bf16.msra.mxu0 0
    %3747 = vmatprep.subr.bf16.mxu0 0
    %3748 = vmatpush2.bf16.msra.mxu0 0
    %3749 = vmatprep.subr.bf16.mxu0 0
    %3750 = vmatpush2.bf16.msra.mxu0 0
    %3751 = vmatprep.subr.bf16.mxu0 0
    %3752 = vmatpush2.bf16.msra.mxu0 0
    %3753 = vmatprep.subr.bf16.mxu0 0
    %3754 = vmatpush2.bf16.msra.mxu0 0
    %3755 = vmatprep.subr.bf16.mxu0 0
    %3756 = vmatpush2.bf16.msra.mxu0 0
    %3757 = vmatprep.mubr.bf16.mxu0 0
    %3758 = vmatmul.mubr.bf16.gmra.mxu0 %v3681
    %v3759 = vpop.f32.mrf.mxu0
    %v3760 = vadd.f32 0.0, %v3759
    %v3761 = vpop.f32.mrf.mxu0
    %v3762 = vpop.f32.mrf.mxu0
    %v3763 = vadd.f32 0.0, %v3762
    %v3764 = vpop.f32.mrf.mxu0
    %3765 = vmatprep.mubr.bf16.mxu0 0
    %3766 = vmatmul.mubr.bf16.gmra.mxu0 %v3684
    %v3767 = vpop.f32.mrf.mxu0
    %v3768 = vadd.f32 0.0, %v3767
    %v3769 = vpop.f32.mrf.mxu0
    %v3770 = vpop.f32.mrf.mxu0
    %v3771 = vadd.f32 0.0, %v3770
    %v3772 = vpop.f32.mrf.mxu0
    %3773 = vmatprep.mubr.bf16.mxu0 0
    %3774 = vmatmul.mubr.bf16.gmra.mxu0 %v3687
    %v3775 = vpop.f32.mrf.mxu0
    %v3776 = vadd.f32 0.0, %v3775
    %v3777 = vpop.f32.mrf.mxu0
    %v3778 = vpop.f32.mrf.mxu0
    %v3779 = vadd.f32 0.0, %v3778
    %v3780 = vpop.f32.mrf.mxu0
    %3781 = vmatprep.mubr.bf16.mxu0 0
    %3782 = vmatmul.mubr.bf16.gmra.mxu0 %v3690
    %v3783 = vpop.f32.mrf.mxu0
    %v3784 = vadd.f32 0.0, %v3783
    %v3785 = vpop.f32.mrf.mxu0
    %v3786 = vpop.f32.mrf.mxu0
    %v3787 = vadd.f32 0.0, %v3786
    %v3788 = vpop.f32.mrf.mxu0
    %3789 = vmatprep.mubr.bf16.mxu0 0
    %3790 = vmatmul.mubr.bf16.gmra.mxu0 %v3693
    %v3791 = vpop.f32.mrf.mxu0
    %v3792 = vadd.f32 0.0, %v3791
    %v3793 = vpop.f32.mrf.mxu0
    %v3794 = vpop.f32.mrf.mxu0
    %v3795 = vadd.f32 0.0, %v3794
    %v3796 = vpop.f32.mrf.mxu0
    %3797 = vmatprep.mubr.bf16.mxu0 0
    %3798 = vmatmul.mubr.bf16.gmra.mxu0 %v3696
    %v3799 = vpop.f32.mrf.mxu0
    %v3800 = vadd.f32 0.0, %v3799
    %v3801 = vpop.f32.mrf.mxu0
    %v3802 = vpop.f32.mrf.mxu0
    %v3803 = vadd.f32 0.0, %v3802
    %v3804 = vpop.f32.mrf.mxu0
    %3805 = vmatprep.mubr.bf16.mxu0 0
    %3806 = vmatmul.mubr.bf16.gmra.mxu0 %v3699
    %v3807 = vpop.f32.mrf.mxu0
    %v3808 = vadd.f32 0.0, %v3807
    %v3809 = vpop.f32.mrf.mxu0
    %v3810 = vpop.f32.mrf.mxu0
    %v3811 = vadd.f32 0.0, %v3810
    %v3812 = vpop.f32.mrf.mxu0
    %3813 = vmatprep.mubr.bf16.mxu0 0
    %3814 = vmatmul.mubr.bf16.gmra.mxu0 %v3702
    %v3815 = vpop.f32.mrf.mxu0
    %v3816 = vadd.f32 0.0, %v3815
    %v3817 = vpop.f32.mrf.mxu0
    %v3818 = vpop.f32.mrf.mxu0
    %v3819 = vadd.f32 0.0, %v3818
    %v3820 = vpop.f32.mrf.mxu0
    %3821 = vmatprep.mubr.bf16.mxu0 0
    %3822 = vmatmul.mubr.bf16.gmra.mxu0 %v3705
    %v3823 = vpop.f32.mrf.mxu0
    %v3824 = vadd.f32 0.0, %v3823
    %v3825 = vpop.f32.mrf.mxu0
    %v3826 = vpop.f32.mrf.mxu0
    %v3827 = vadd.f32 0.0, %v3826
    %v3828 = vpop.f32.mrf.mxu0
    %3829 = vmatprep.mubr.bf16.mxu0 0
    %3830 = vmatmul.mubr.bf16.gmra.mxu0 %v3708
    %v3831 = vpop.f32.mrf.mxu0
    %v3832 = vadd.f32 0.0, %v3831
    %v3833 = vpop.f32.mrf.mxu0
    %v3834 = vpop.f32.mrf.mxu0
    %v3835 = vadd.f32 0.0, %v3834
    %v3836 = vpop.f32.mrf.mxu0
    %3837 = vmatprep.mubr.bf16.mxu0 0
    %3838 = vmatmul.mubr.bf16.gmra.mxu0 %v3711
    %v3839 = vpop.f32.mrf.mxu0
    %v3840 = vadd.f32 0.0, %v3839
    %v3841 = vpop.f32.mrf.mxu0
    %v3842 = vpop.f32.mrf.mxu0
    %v3843 = vadd.f32 0.0, %v3842
    %v3844 = vpop.f32.mrf.mxu0
    %3845 = vmatprep.mubr.bf16.mxu0 0
    %3846 = vmatmul.mubr.bf16.gmra.mxu0 %v3714
    %v3847 = vpop.f32.mrf.mxu0
    %v3848 = vadd.f32 0.0, %v3847
    %v3849 = vpop.f32.mrf.mxu0
    %v3850 = vpop.f32.mrf.mxu0
    %v3851 = vadd.f32 0.0, %v3850
    %v3852 = vpop.f32.mrf.mxu0
    %3853 = vmatprep.mubr.bf16.mxu0 0
    %3854 = vmatmul.mubr.bf16.gmra.mxu0 %v3717
    %v3855 = vpop.f32.mrf.mxu0
    %v3856 = vadd.f32 0.0, %v3855
    %v3857 = vpop.f32.mrf.mxu0
    %v3858 = vpop.f32.mrf.mxu0
    %v3859 = vadd.f32 0.0, %v3858
    %v3860 = vpop.f32.mrf.mxu0
    %3861 = vmatprep.mubr.bf16.mxu0 0
    %3862 = vmatmul.mubr.bf16.gmra.mxu0 %v3720
    %v3863 = vpop.f32.mrf.mxu0
    %v3864 = vadd.f32 0.0, %v3863
    %v3865 = vpop.f32.mrf.mxu0
    %v3866 = vpop.f32.mrf.mxu0
    %v3867 = vadd.f32 0.0, %v3866
    %v3868 = vpop.f32.mrf.mxu0
    %3869 = vmatprep.mubr.bf16.mxu0 0
    %3870 = vmatmul.mubr.bf16.gmra.mxu0 %v3723
    %v3871 = vpop.f32.mrf.mxu0
    %v3872 = vadd.f32 0.0, %v3871
    %v3873 = vpop.f32.mrf.mxu0
    %v3874 = vpop.f32.mrf.mxu0
    %v3875 = vadd.f32 0.0, %v3874
    %v3876 = vpop.f32.mrf.mxu0
    %3877 = vdwg.mxu0
    %v3878 = vadd.f32 %v3542, %v3760
    %v3879 = vadd.f32 %v3543, %v3763
    %v3880 = vadd.f32 %v3544, %v3768
    %v3881 = vadd.f32 %v3545, %v3771
    %v3882 = vadd.f32 %v3546, %v3776
    %v3883 = vadd.f32 %v3547, %v3779
    %v3884 = vadd.f32 %v3548, %v3784
    %v3885 = vadd.f32 %v3549, %v3787
    %v3886 = vadd.f32 %v3550, %v3792
    %v3887 = vadd.f32 %v3551, %v3795
    %v3888 = vadd.f32 %v3552, %v3800
    %v3889 = vadd.f32 %v3553, %v3803
    %v3890 = vadd.f32 %v3554, %v3808
    %v3891 = vadd.f32 %v3555, %v3811
    %v3892 = vadd.f32 %v3556, %v3816
    %v3893 = vadd.f32 %v3557, %v3819
    %v3894 = vadd.f32 %v3558, %v3824
    %v3895 = vadd.f32 %v3559, %v3827
    %v3896 = vadd.f32 %v3560, %v3832
    %v3897 = vadd.f32 %v3561, %v3835
    %v3898 = vadd.f32 %v3562, %v3840
    %v3899 = vadd.f32 %v3563, %v3843
    %v3900 = vadd.f32 %v3564, %v3848
    %v3901 = vadd.f32 %v3565, %v3851
    %v3902 = vadd.f32 %v3566, %v3856
    %v3903 = vadd.f32 %v3567, %v3859
    %v3904 = vadd.f32 %v3568, %v3864
    %v3905 = vadd.f32 %v3569, %v3867
    %v3906 = vadd.f32 %v3570, %v3872
    %v3907 = vadd.f32 %v3571, %v3875
    %s3908 = scalar_lea.vmem %s6, 256
    %v3909 = vld [vmem:[%s3908] sm:$0xf]
    %v3910 = vld [vmem:[%s3908 + $0x4] sm:$0xf]
    %v3911 = vld [vmem:[%s3908 + $0x8] sm:$0xf]
    %v3912 = vld [vmem:[%s3908 + $0xc] sm:$0xf]
    %v3913 = vld [vmem:[%s3908 + $0x10] sm:$0xf]
    %v3914 = vld [vmem:[%s3908 + $0x14] sm:$0xf]
    %v3915 = vld [vmem:[%s3908 + $0x18] sm:$0xf]
    %v3916 = vld [vmem:[%s3908 + $0x1c] sm:$0xf]
    %v3919 = vunpack.c.l.b16 %v3234
    %v3920 = vunpack.c.l.b16 %v3235
    %v3921 = vpack.c.b16 %v3920, %v3919
    %v3930 = vunpack.c.l.b16 %v3909
    %v3931 = vunpack.c.l.b16 %v3910
    %v3932 = vunpack.c.l.b16 %v3911
    %v3933 = vunpack.c.l.b16 %v3912
    %v3934 = vunpack.c.l.b16 %v3913
    %v3935 = vunpack.c.l.b16 %v3914
    %v3936 = vunpack.c.l.b16 %v3915
    %v3937 = vunpack.c.l.b16 %v3916
    %v3938 = vpack.c.b16 %v3931, %v3930
    %v3939 = vpack.c.b16 %v3933, %v3932
    %v3940 = vpack.c.b16 %v3935, %v3934
    %v3941 = vpack.c.b16 %v3937, %v3936
    %v3947 = vsel %vm1488, %v3921, 0
    %3949 = vmatprep.subr.bf16.mxu0 0
    %3950 = vmatpush1.bf16.msra.mxu0 0
    %3951 = vmatprep.subr.bf16.mxu0 0
    %3952 = vmatpush1.bf16.msra.mxu0 0
    %3953 = vmatprep.subr.bf16.mxu0 0
    %3954 = vmatpush1.bf16.msra.mxu0 0
    %3955 = vmatprep.subr.bf16.mxu0 0
    %3956 = vmatpush1.bf16.msra.mxu0 0
    %3957 = vmatprep.subr.bf16.mxu0 0
    %3958 = vmatpush1.bf16.msra.mxu0 %v3941
    %3959 = vmatprep.subr.bf16.mxu0 0
    %3960 = vmatpush1.bf16.msra.mxu0 %v3940
    %3961 = vmatprep.subr.bf16.mxu0 0
    %3962 = vmatpush1.bf16.msra.mxu0 %v3939
    %3963 = vmatprep.subr.bf16.mxu0 0
    %3964 = vmatpush1.bf16.msra.mxu0 %v3938
    %3965 = vmatprep.subr.bf16.mxu0 0
    %3966 = vmatpush2.bf16.msra.mxu0 0
    %3967 = vmatprep.subr.bf16.mxu0 0
    %3968 = vmatpush2.bf16.msra.mxu0 0
    %3969 = vmatprep.subr.bf16.mxu0 0
    %3970 = vmatpush2.bf16.msra.mxu0 0
    %3971 = vmatprep.subr.bf16.mxu0 0
    %3972 = vmatpush2.bf16.msra.mxu0 0
    %3973 = vmatprep.subr.bf16.mxu0 0
    %3974 = vmatpush2.bf16.msra.mxu0 0
    %3975 = vmatprep.subr.bf16.mxu0 0
    %3976 = vmatpush2.bf16.msra.mxu0 0
    %3977 = vmatprep.subr.bf16.mxu0 0
    %3978 = vmatpush2.bf16.msra.mxu0 0
    %3979 = vmatprep.subr.bf16.mxu0 0
    %3980 = vmatpush2.bf16.msra.mxu0 0
    %3981 = vmatprep.mubr.bf16.mxu0 0
    %3982 = vmatmul.mubr.bf16.gmra.mxu0 %v3348
    %v3983 = vpop.f32.mrf.mxu0
    %v3984 = vadd.f32 0.0, %v3983
    %v3985 = vpop.f32.mrf.mxu0
    %v3986 = vpop.f32.mrf.mxu0
    %v3987 = vadd.f32 0.0, %v3986
    %v3988 = vpop.f32.mrf.mxu0
    %3989 = vmatprep.mubr.bf16.mxu0 0
    %3990 = vmatmul.mubr.bf16.gmra.mxu0 %v3351
    %v3991 = vpop.f32.mrf.mxu0
    %v3992 = vadd.f32 0.0, %v3991
    %v3993 = vpop.f32.mrf.mxu0
    %v3994 = vpop.f32.mrf.mxu0
    %v3995 = vadd.f32 0.0, %v3994
    %v3996 = vpop.f32.mrf.mxu0
    %3997 = vmatprep.mubr.bf16.mxu0 0
    %3998 = vmatmul.mubr.bf16.gmra.mxu0 %v3354
    %v3999 = vpop.f32.mrf.mxu0
    %v4000 = vadd.f32 0.0, %v3999
    %v4001 = vpop.f32.mrf.mxu0
    %v4002 = vpop.f32.mrf.mxu0
    %v4003 = vadd.f32 0.0, %v4002
    %v4004 = vpop.f32.mrf.mxu0
    %4005 = vmatprep.mubr.bf16.mxu0 0
    %4006 = vmatmul.mubr.bf16.gmra.mxu0 %v3357
    %v4007 = vpop.f32.mrf.mxu0
    %v4008 = vadd.f32 0.0, %v4007
    %v4009 = vpop.f32.mrf.mxu0
    %v4010 = vpop.f32.mrf.mxu0
    %v4011 = vadd.f32 0.0, %v4010
    %v4012 = vpop.f32.mrf.mxu0
    %4013 = vmatprep.mubr.bf16.mxu0 0
    %4014 = vmatmul.mubr.bf16.gmra.mxu0 %v3360
    %v4015 = vpop.f32.mrf.mxu0
    %v4016 = vadd.f32 0.0, %v4015
    %v4017 = vpop.f32.mrf.mxu0
    %v4018 = vpop.f32.mrf.mxu0
    %v4019 = vadd.f32 0.0, %v4018
    %v4020 = vpop.f32.mrf.mxu0
    %4021 = vmatprep.mubr.bf16.mxu0 0
    %4022 = vmatmul.mubr.bf16.gmra.mxu0 %v3363
    %v4023 = vpop.f32.mrf.mxu0
    %v4024 = vadd.f32 0.0, %v4023
    %v4025 = vpop.f32.mrf.mxu0
    %v4026 = vpop.f32.mrf.mxu0
    %v4027 = vadd.f32 0.0, %v4026
    %v4028 = vpop.f32.mrf.mxu0
    %4029 = vmatprep.mubr.bf16.mxu0 0
    %4030 = vmatmul.mubr.bf16.gmra.mxu0 %v3366
    %v4031 = vpop.f32.mrf.mxu0
    %v4032 = vadd.f32 0.0, %v4031
    %v4033 = vpop.f32.mrf.mxu0
    %v4034 = vpop.f32.mrf.mxu0
    %v4035 = vadd.f32 0.0, %v4034
    %v4036 = vpop.f32.mrf.mxu0
    %4037 = vmatprep.mubr.bf16.mxu0 0
    %4038 = vmatmul.mubr.bf16.gmra.mxu0 %v3369
    %v4039 = vpop.f32.mrf.mxu0
    %v4040 = vadd.f32 0.0, %v4039
    %v4041 = vpop.f32.mrf.mxu0
    %v4042 = vpop.f32.mrf.mxu0
    %v4043 = vadd.f32 0.0, %v4042
    %v4044 = vpop.f32.mrf.mxu0
    %4045 = vmatprep.mubr.bf16.mxu0 0
    %4046 = vmatmul.mubr.bf16.gmra.mxu0 %v3372
    %v4047 = vpop.f32.mrf.mxu0
    %v4048 = vadd.f32 0.0, %v4047
    %v4049 = vpop.f32.mrf.mxu0
    %v4050 = vpop.f32.mrf.mxu0
    %v4051 = vadd.f32 0.0, %v4050
    %v4052 = vpop.f32.mrf.mxu0
    %4053 = vmatprep.mubr.bf16.mxu0 0
    %4054 = vmatmul.mubr.bf16.gmra.mxu0 %v3375
    %v4055 = vpop.f32.mrf.mxu0
    %v4056 = vadd.f32 0.0, %v4055
    %v4057 = vpop.f32.mrf.mxu0
    %v4058 = vpop.f32.mrf.mxu0
    %v4059 = vadd.f32 0.0, %v4058
    %v4060 = vpop.f32.mrf.mxu0
    %4061 = vmatprep.mubr.bf16.mxu0 0
    %4062 = vmatmul.mubr.bf16.gmra.mxu0 %v3378
    %v4063 = vpop.f32.mrf.mxu0
    %v4064 = vadd.f32 0.0, %v4063
    %v4065 = vpop.f32.mrf.mxu0
    %v4066 = vpop.f32.mrf.mxu0
    %v4067 = vadd.f32 0.0, %v4066
    %v4068 = vpop.f32.mrf.mxu0
    %4069 = vmatprep.mubr.bf16.mxu0 0
    %4070 = vmatmul.mubr.bf16.gmra.mxu0 %v3381
    %v4071 = vpop.f32.mrf.mxu0
    %v4072 = vadd.f32 0.0, %v4071
    %v4073 = vpop.f32.mrf.mxu0
    %v4074 = vpop.f32.mrf.mxu0
    %v4075 = vadd.f32 0.0, %v4074
    %v4076 = vpop.f32.mrf.mxu0
    %4077 = vmatprep.mubr.bf16.mxu0 0
    %4078 = vmatmul.mubr.bf16.gmra.mxu0 %v3384
    %v4079 = vpop.f32.mrf.mxu0
    %v4080 = vadd.f32 0.0, %v4079
    %v4081 = vpop.f32.mrf.mxu0
    %v4082 = vpop.f32.mrf.mxu0
    %v4083 = vadd.f32 0.0, %v4082
    %v4084 = vpop.f32.mrf.mxu0
    %4085 = vmatprep.mubr.bf16.mxu0 0
    %4086 = vmatmul.mubr.bf16.gmra.mxu0 %v3387
    %v4087 = vpop.f32.mrf.mxu0
    %v4088 = vadd.f32 0.0, %v4087
    %v4089 = vpop.f32.mrf.mxu0
    %v4090 = vpop.f32.mrf.mxu0
    %v4091 = vadd.f32 0.0, %v4090
    %v4092 = vpop.f32.mrf.mxu0
    %4093 = vmatprep.mubr.bf16.mxu0 0
    %4094 = vmatmul.mubr.bf16.gmra.mxu0 %v3947
    %v4095 = vpop.f32.mrf.mxu0
    %v4096 = vadd.f32 0.0, %v4095
    %v4097 = vpop.f32.mrf.mxu0
    %v4098 = vpop.f32.mrf.mxu0
    %v4099 = vadd.f32 0.0, %v4098
    %v4100 = vpop.f32.mrf.mxu0
    %4101 = vdwg.mxu0
    %v4102 = vadd.f32 %v3878, %v3984
    %v4103 = vadd.f32 %v3879, %v3987
    %v4104 = vadd.f32 %v3880, %v3992
    %v4105 = vadd.f32 %v3881, %v3995
    %v4106 = vadd.f32 %v3882, %v4000
    %v4107 = vadd.f32 %v3883, %v4003
    %v4108 = vadd.f32 %v3884, %v4008
    %v4109 = vadd.f32 %v3885, %v4011
    %v4110 = vadd.f32 %v3886, %v4016
    %v4111 = vadd.f32 %v3887, %v4019
    %v4112 = vadd.f32 %v3888, %v4024
    %v4113 = vadd.f32 %v3889, %v4027
    %v4114 = vadd.f32 %v3890, %v4032
    %v4115 = vadd.f32 %v3891, %v4035
    %v4116 = vadd.f32 %v3892, %v4040
    %v4117 = vadd.f32 %v3893, %v4043
    %v4118 = vadd.f32 %v3894, %v4048
    %v4119 = vadd.f32 %v3895, %v4051
    %v4120 = vadd.f32 %v3896, %v4056
    %v4121 = vadd.f32 %v3897, %v4059
    %v4122 = vadd.f32 %v3898, %v4064
    %v4123 = vadd.f32 %v3899, %v4067
    %v4124 = vadd.f32 %v3900, %v4072
    %v4125 = vadd.f32 %v3901, %v4075
    %v4126 = vadd.f32 %v3902, %v4080
    %v4127 = vadd.f32 %v3903, %v4083
    %v4128 = vadd.f32 %v3904, %v4088
    %v4129 = vadd.f32 %v3905, %v4091
    %v4130 = vadd.f32 %v3906, %v4096
    %v4131 = vadd.f32 %v3907, %v4099
    %v4133 = vlaneseq
    %v4134 = vshrl.u32 %v4133, 7
    %v4135 = vsub.s32 0, %v4134
    %v4136 = vrot.slane %v1299, %v4135
    %v4138 = vadd.f32 %v4102, %v4136
    %v4139 = vadd.f32 %v4103, %v4136
    %v4140 = vadd.f32 %v4104, %v4136
    %v4141 = vadd.f32 %v4105, %v4136
    %v4142 = vadd.f32 %v4106, %v4136
    %v4143 = vadd.f32 %v4107, %v4136
    %v4144 = vadd.f32 %v4108, %v4136
    %v4145 = vadd.f32 %v4109, %v4136
    %v4146 = vadd.f32 %v4110, %v4136
    %v4147 = vadd.f32 %v4111, %v4136
    %v4148 = vadd.f32 %v4112, %v4136
    %v4149 = vadd.f32 %v4113, %v4136
    %v4150 = vadd.f32 %v4114, %v4136
    %v4151 = vadd.f32 %v4115, %v4136
    %v4152 = vadd.f32 %v4116, %v4136
    %v4153 = vadd.f32 %v4117, %v4136
    %v4154 = vadd.f32 %v4118, %v4136
    %v4155 = vadd.f32 %v4119, %v4136
    %v4156 = vadd.f32 %v4120, %v4136
    %v4157 = vadd.f32 %v4121, %v4136
    %v4158 = vadd.f32 %v4122, %v4136
    %v4159 = vadd.f32 %v4123, %v4136
    %v4160 = vadd.f32 %v4124, %v4136
    %v4161 = vadd.f32 %v4125, %v4136
    %v4162 = vadd.f32 %v4126, %v4136
    %v4163 = vadd.f32 %v4127, %v4136
    %v4164 = vadd.f32 %v4128, %v4136
    %v4165 = vadd.f32 %v4129, %v4136
    %v4166 = vadd.f32 %v4130, %v4136
    %v4167 = vadd.f32 %v4131, %v4136
    %vm4168 = vcmp.ge.f32.partialorder %v4138, 0.0
    %vm4169 = vcmp.ge.f32.partialorder %v4139, 0.0
    %vm4170 = vcmp.ge.f32.partialorder %v4140, 0.0
    %vm4171 = vcmp.ge.f32.partialorder %v4141, 0.0
    %vm4172 = vcmp.ge.f32.partialorder %v4142, 0.0
    %vm4173 = vcmp.ge.f32.partialorder %v4143, 0.0
    %vm4174 = vcmp.ge.f32.partialorder %v4144, 0.0
    %vm4175 = vcmp.ge.f32.partialorder %v4145, 0.0
    %vm4176 = vcmp.ge.f32.partialorder %v4146, 0.0
    %vm4177 = vcmp.ge.f32.partialorder %v4147, 0.0
    %vm4178 = vcmp.ge.f32.partialorder %v4148, 0.0
    %vm4179 = vcmp.ge.f32.partialorder %v4149, 0.0
    %vm4180 = vcmp.ge.f32.partialorder %v4150, 0.0
    %vm4181 = vcmp.ge.f32.partialorder %v4151, 0.0
    %vm4182 = vcmp.ge.f32.partialorder %v4152, 0.0
    %vm4183 = vcmp.ge.f32.partialorder %v4153, 0.0
    %vm4184 = vcmp.ge.f32.partialorder %v4154, 0.0
    %vm4185 = vcmp.ge.f32.partialorder %v4155, 0.0
    %vm4186 = vcmp.ge.f32.partialorder %v4156, 0.0
    %vm4187 = vcmp.ge.f32.partialorder %v4157, 0.0
    %vm4188 = vcmp.ge.f32.partialorder %v4158, 0.0
    %vm4189 = vcmp.ge.f32.partialorder %v4159, 0.0
    %vm4190 = vcmp.ge.f32.partialorder %v4160, 0.0
    %vm4191 = vcmp.ge.f32.partialorder %v4161, 0.0
    %vm4192 = vcmp.ge.f32.partialorder %v4162, 0.0
    %vm4193 = vcmp.ge.f32.partialorder %v4163, 0.0
    %vm4194 = vcmp.ge.f32.partialorder %v4164, 0.0
    %vm4195 = vcmp.ge.f32.partialorder %v4165, 0.0
    %vm4196 = vcmp.ge.f32.partialorder %v4166, 0.0
    %vm4197 = vcmp.ge.f32.partialorder %v4167, 0.0
    %v4198 = vmul.f32 %v4138, 0.01
    %v4199 = vmul.f32 %v4139, 0.01
    %v4200 = vmul.f32 %v4140, 0.01
    %v4201 = vmul.f32 %v4141, 0.01
    %v4202 = vmul.f32 %v4142, 0.01
    %v4203 = vmul.f32 %v4143, 0.01
    %v4204 = vmul.f32 %v4144, 0.01
    %v4205 = vmul.f32 %v4145, 0.01
    %v4206 = vmul.f32 %v4146, 0.01
    %v4207 = vmul.f32 %v4147, 0.01
    %v4208 = vmul.f32 %v4148, 0.01
    %v4209 = vmul.f32 %v4149, 0.01
    %v4210 = vmul.f32 %v4150, 0.01
    %v4211 = vmul.f32 %v4151, 0.01
    %v4212 = vmul.f32 %v4152, 0.01
    %v4213 = vmul.f32 %v4153, 0.01
    %v4214 = vmul.f32 %v4154, 0.01
    %v4215 = vmul.f32 %v4155, 0.01
    %v4216 = vmul.f32 %v4156, 0.01
    %v4217 = vmul.f32 %v4157, 0.01
    %v4218 = vmul.f32 %v4158, 0.01
    %v4219 = vmul.f32 %v4159, 0.01
    %v4220 = vmul.f32 %v4160, 0.01
    %v4221 = vmul.f32 %v4161, 0.01
    %v4222 = vmul.f32 %v4162, 0.01
    %v4223 = vmul.f32 %v4163, 0.01
    %v4224 = vmul.f32 %v4164, 0.01
    %v4225 = vmul.f32 %v4165, 0.01
    %v4226 = vmul.f32 %v4166, 0.01
    %v4227 = vmul.f32 %v4167, 0.01
    %v4228 = vsel %vm4168, %v4138, %v4198
    %v4229 = vsel %vm4169, %v4139, %v4199
    %v4230 = vsel %vm4170, %v4140, %v4200
    %v4231 = vsel %vm4171, %v4141, %v4201
    %v4232 = vsel %vm4172, %v4142, %v4202
    %v4233 = vsel %vm4173, %v4143, %v4203
    %v4234 = vsel %vm4174, %v4144, %v4204
    %v4235 = vsel %vm4175, %v4145, %v4205
    %v4236 = vsel %vm4176, %v4146, %v4206
    %v4237 = vsel %vm4177, %v4147, %v4207
    %v4238 = vsel %vm4178, %v4148, %v4208
    %v4239 = vsel %vm4179, %v4149, %v4209
    %v4240 = vsel %vm4180, %v4150, %v4210
    %v4241 = vsel %vm4181, %v4151, %v4211
    %v4242 = vsel %vm4182, %v4152, %v4212
    %v4243 = vsel %vm4183, %v4153, %v4213
    %v4244 = vsel %vm4184, %v4154, %v4214
    %v4245 = vsel %vm4185, %v4155, %v4215
    %v4246 = vsel %vm4186, %v4156, %v4216
    %v4247 = vsel %vm4187, %v4157, %v4217
    %v4248 = vsel %vm4188, %v4158, %v4218
    %v4249 = vsel %vm4189, %v4159, %v4219
    %v4250 = vsel %vm4190, %v4160, %v4220
    %v4251 = vsel %vm4191, %v4161, %v4221
    %v4252 = vsel %vm4192, %v4162, %v4222
    %v4253 = vsel %vm4193, %v4163, %v4223
    %v4254 = vsel %vm4194, %v4164, %v4224
    %v4255 = vsel %vm4195, %v4165, %v4225
    %v4256 = vsel %vm4196, %v4166, %v4226
    %v4257 = vsel %vm4197, %v4167, %v4227
    %v4258 = vpack.c.bf16 %v4229, %v4228
    %v4259 = vpack.c.bf16 %v4231, %v4230
    %v4260 = vpack.c.bf16 %v4233, %v4232
    %v4261 = vpack.c.bf16 %v4235, %v4234
    %v4262 = vpack.c.bf16 %v4237, %v4236
    %v4263 = vpack.c.bf16 %v4239, %v4238
    %v4264 = vpack.c.bf16 %v4241, %v4240
    %v4265 = vpack.c.bf16 %v4243, %v4242
    %v4266 = vpack.c.bf16 %v4245, %v4244
    %v4267 = vpack.c.bf16 %v4247, %v4246
    %v4268 = vpack.c.bf16 %v4249, %v4248
    %v4269 = vpack.c.bf16 %v4251, %v4250
    %v4270 = vpack.c.bf16 %v4253, %v4252
    %v4271 = vpack.c.bf16 %v4255, %v4254
    %v4272 = vpack.c.bf16 %v4257, %v4256
    %v4288 = vunpack.c.l.b16 %v4258
    %v4289 = vunpack.c.h.b16 %v4258
    %v4290 = vunpack.c.l.b16 %v4259
    %v4291 = vunpack.c.h.b16 %v4259
    %v4292 = vunpack.c.l.b16 %v4260
    %v4293 = vunpack.c.h.b16 %v4260
    %v4294 = vunpack.c.l.b16 %v4261
    %v4295 = vunpack.c.h.b16 %v4261
    %v4296 = vunpack.c.l.b16 %v4262
    %v4297 = vunpack.c.h.b16 %v4262
    %v4298 = vunpack.c.l.b16 %v4263
    %v4299 = vunpack.c.h.b16 %v4263
    %v4300 = vunpack.c.l.b16 %v4264
    %v4301 = vunpack.c.h.b16 %v4264
    %v4302 = vunpack.c.l.b16 %v4265
    %v4303 = vunpack.c.h.b16 %v4265
    %v4304 = vunpack.c.l.b16 %v4266
    %v4305 = vunpack.c.h.b16 %v4266
    %v4306 = vunpack.c.l.b16 %v4267
    %v4307 = vunpack.c.h.b16 %v4267
    %v4308 = vunpack.c.l.b16 %v4268
    %v4309 = vunpack.c.h.b16 %v4268
    %v4310 = vunpack.c.l.b16 %v4269
    %v4311 = vunpack.c.h.b16 %v4269
    %v4312 = vunpack.c.l.b16 %v4270
    %v4313 = vunpack.c.h.b16 %v4270
    %v4314 = vunpack.c.l.b16 %v4271
    %v4315 = vunpack.c.h.b16 %v4271
    %v4316 = vunpack.c.l.b16 %v4272
    %v4317 = vunpack.c.h.b16 %v4272
    %v4318 = vpack.c.b16 %v4288, %v4288
    %v4319 = vpack.c.b16 %v4289, %v4289
    %v4320 = vpack.c.b16 %v4290, %v4290
    %v4321 = vpack.c.b16 %v4291, %v4291
    %v4322 = vpack.c.b16 %v4292, %v4292
    %v4323 = vpack.c.b16 %v4293, %v4293
    %v4324 = vpack.c.b16 %v4294, %v4294
    %v4325 = vpack.c.b16 %v4295, %v4295
    %v4326 = vpack.c.b16 %v4296, %v4296
    %v4327 = vpack.c.b16 %v4297, %v4297
    %v4328 = vpack.c.b16 %v4298, %v4298
    %v4329 = vpack.c.b16 %v4299, %v4299
    %v4330 = vpack.c.b16 %v4300, %v4300
    %v4331 = vpack.c.b16 %v4301, %v4301
    %v4332 = vpack.c.b16 %v4302, %v4302
    %v4333 = vpack.c.b16 %v4303, %v4303
    %v4334 = vpack.c.b16 %v4304, %v4304
    %v4335 = vpack.c.b16 %v4305, %v4305
    %v4336 = vpack.c.b16 %v4306, %v4306
    %v4337 = vpack.c.b16 %v4307, %v4307
    %v4338 = vpack.c.b16 %v4308, %v4308
    %v4339 = vpack.c.b16 %v4309, %v4309
    %v4340 = vpack.c.b16 %v4310, %v4310
    %v4341 = vpack.c.b16 %v4311, %v4311
    %v4342 = vpack.c.b16 %v4312, %v4312
    %v4343 = vpack.c.b16 %v4313, %v4313
    %v4344 = vpack.c.b16 %v4314, %v4314
    %v4345 = vpack.c.b16 %v4315, %v4315
    %v4346 = vpack.c.b16 %v4316, %v4316
    %v4347 = vpack.c.b16 %v4317, %v4317
    %s4378 = smul.u32 %s1301, 30
    %s4379 = smul.addr %s4378, 4
    %s4380 = scalar_lea.vmem [#allocation3], %s4379
    %vm4381 = vcmask 519168
    %4382 = vst.msk [vmem:[%s4380] sm:$0xf] %vm4381, %v4318
    %4383 = vst.msk [vmem:[%s4380 + $0x4] sm:$0xf] %vm4381, %v4319
    %4384 = vst.msk [vmem:[%s4380 + $0x8] sm:$0xf] %vm4381, %v4320
    %4385 = vst.msk [vmem:[%s4380 + $0xc] sm:$0xf] %vm4381, %v4321
    %4386 = vst.msk [vmem:[%s4380 + $0x10] sm:$0xf] %vm4381, %v4322
    %4387 = vst.msk [vmem:[%s4380 + $0x14] sm:$0xf] %vm4381, %v4323
    %4388 = vst.msk [vmem:[%s4380 + $0x18] sm:$0xf] %vm4381, %v4324
    %4389 = vst.msk [vmem:[%s4380 + $0x1c] sm:$0xf] %vm4381, %v4325
    %4390 = vst.msk [vmem:[%s4380 + $0x20] sm:$0xf] %vm4381, %v4326
    %4391 = vst.msk [vmem:[%s4380 + $0x24] sm:$0xf] %vm4381, %v4327
    %4392 = vst.msk [vmem:[%s4380 + $0x28] sm:$0xf] %vm4381, %v4328
    %4393 = vst.msk [vmem:[%s4380 + $0x2c] sm:$0xf] %vm4381, %v4329
    %4394 = vst.msk [vmem:[%s4380 + $0x30] sm:$0xf] %vm4381, %v4330
    %4395 = vst.msk [vmem:[%s4380 + $0x34] sm:$0xf] %vm4381, %v4331
    %4396 = vst.msk [vmem:[%s4380 + $0x38] sm:$0xf] %vm4381, %v4332
    %4397 = vst.msk [vmem:[%s4380 + $0x3c] sm:$0xf] %vm4381, %v4333
    %4398 = vst.msk [vmem:[%s4380 + $0x40] sm:$0xf] %vm4381, %v4334
    %4399 = vst.msk [vmem:[%s4380 + $0x44] sm:$0xf] %vm4381, %v4335
    %4400 = vst.msk [vmem:[%s4380 + $0x48] sm:$0xf] %vm4381, %v4336
    %4401 = vst.msk [vmem:[%s4380 + $0x4c] sm:$0xf] %vm4381, %v4337
    %4402 = vst.msk [vmem:[%s4380 + $0x50] sm:$0xf] %vm4381, %v4338
    %4403 = vst.msk [vmem:[%s4380 + $0x54] sm:$0xf] %vm4381, %v4339
    %4404 = vst.msk [vmem:[%s4380 + $0x58] sm:$0xf] %vm4381, %v4340
    %4405 = vst.msk [vmem:[%s4380 + $0x5c] sm:$0xf] %vm4381, %v4341
    %4406 = vst.msk [vmem:[%s4380 + $0x60] sm:$0xf] %vm4381, %v4342
    %4407 = vst.msk [vmem:[%s4380 + $0x64] sm:$0xf] %vm4381, %v4343
    %4408 = vst.msk [vmem:[%s4380 + $0x68] sm:$0xf] %vm4381, %v4344
    %4409 = vst.msk [vmem:[%s4380 + $0x6c] sm:$0xf] %vm4381, %v4345
    %4410 = vst.msk [vmem:[%s4380 + $0x70] sm:$0xf] %vm4381, %v4346
    %4411 = vst.msk [vmem:[%s4380 + $0x74] sm:$0xf] %vm4381, %v4347
  $region61: #{discriminator_forward.2} parent=0 // loop_footer
    %s1305 = sadd.s32 1, %s1301
  $region62: #{discriminator_forward.2} parent=0 // loop_footer_branch
    %1300 = sbr.rel target = $region58
  $region63: #{discriminator_forward.2} parent=0 // loop_exit
    _
  %v4412 = vld [vmem:[%s9] sm:$0x1]
  loop: start=0, step=1, limit=7
  $region64: #{discriminator_forward.2} parent=0 // loop_pre_header
    _
  $region65: #{discriminator_forward.2} parent=0 // loop_header
    %s4414 = sphi 0, %s4418
    %p4415 = scmp.ge.s32.totalorder %s4414, 7
  $region66: #{discriminator_forward.2} parent=0 // loop_header_branch
    %4417 = sbr.rel (%p4415) target = $region70
  $region67: #{discriminator_forward.2} parent=0 // loop_body
    %s4419 = smul.u32 %s4414, 2
    %s4420 = smul.u32 %s4419, 30
    %s4421 = smul.addr %s4420, 4
    %s4422 = scalar_lea.vmem [#allocation3], %s4421
    %v4423 = vld [vmem:[%s4422] sm:$0xf]
    %v4424 = vld [vmem:[%s4422 + $0x4] sm:$0xf]
    %v4425 = vld [vmem:[%s4422 + $0x8] sm:$0xf]
    %v4426 = vld [vmem:[%s4422 + $0xc] sm:$0xf]
    %v4427 = vld [vmem:[%s4422 + $0x10] sm:$0xf]
    %v4428 = vld [vmem:[%s4422 + $0x14] sm:$0xf]
    %v4429 = vld [vmem:[%s4422 + $0x18] sm:$0xf]
    %v4430 = vld [vmem:[%s4422 + $0x1c] sm:$0xf]
    %v4431 = vld [vmem:[%s4422 + $0x20] sm:$0xf]
    %v4432 = vld [vmem:[%s4422 + $0x24] sm:$0xf]
    %v4433 = vld [vmem:[%s4422 + $0x28] sm:$0xf]
    %v4434 = vld [vmem:[%s4422 + $0x2c] sm:$0xf]
    %v4435 = vld [vmem:[%s4422 + $0x30] sm:$0xf]
    %v4436 = vld [vmem:[%s4422 + $0x34] sm:$0xf]
    %v4437 = vld [vmem:[%s4422 + $0x38] sm:$0xf]
    %v4438 = vld [vmem:[%s4422 + $0x3c] sm:$0xf]
    %v4439 = vld [vmem:[%s4422 + $0x40] sm:$0xf]
    %v4440 = vld [vmem:[%s4422 + $0x44] sm:$0xf]
    %v4441 = vld [vmem:[%s4422 + $0x48] sm:$0xf]
    %v4442 = vld [vmem:[%s4422 + $0x4c] sm:$0xf]
    %v4443 = vld [vmem:[%s4422 + $0x50] sm:$0xf]
    %v4444 = vld [vmem:[%s4422 + $0x54] sm:$0xf]
    %v4445 = vld [vmem:[%s4422 + $0x58] sm:$0xf]
    %v4446 = vld [vmem:[%s4422 + $0x5c] sm:$0xf]
    %v4447 = vld [vmem:[%s4422 + $0x60] sm:$0xf]
    %v4448 = vld [vmem:[%s4422 + $0x64] sm:$0xf]
    %v4449 = vld [vmem:[%s4422 + $0x68] sm:$0xf]
    %v4450 = vld [vmem:[%s4422 + $0x6c] sm:$0xf]
    %v4451 = vld [vmem:[%s4422 + $0x70] sm:$0xf]
    %v4452 = vld [vmem:[%s4422 + $0x74] sm:$0xf]
    %v4453 = vld [vmem:[%s8] sm:$0xf]
    %v4454 = vld [vmem:[%s8 + $0x4] sm:$0xf]
    %v4455 = vld [vmem:[%s8 + $0x8] sm:$0xf]
    %v4456 = vld [vmem:[%s8 + $0xc] sm:$0xf]
    %v4457 = vld [vmem:[%s8 + $0x10] sm:$0xf]
    %v4458 = vld [vmem:[%s8 + $0x14] sm:$0xf]
    %v4459 = vld [vmem:[%s8 + $0x18] sm:$0xf]
    %v4460 = vld [vmem:[%s8 + $0x1c] sm:$0xf]
    %s4461 = scalar_lea.vmem %s8, 32
    %v4462 = vld [vmem:[%s4461] sm:$0xf]
    %v4463 = vld [vmem:[%s4461 + $0x4] sm:$0xf]
    %v4464 = vld [vmem:[%s4461 + $0x8] sm:$0xf]
    %v4465 = vld [vmem:[%s4461 + $0xc] sm:$0xf]
    %v4466 = vld [vmem:[%s4461 + $0x10] sm:$0xf]
    %v4467 = vld [vmem:[%s4461 + $0x14] sm:$0xf]
    %v4468 = vld [vmem:[%s4461 + $0x18] sm:$0xf]
    %v4469 = vld [vmem:[%s4461 + $0x1c] sm:$0xf]
    %v4484 = vunpack.c.l.b16 %v4425
    %v4485 = vunpack.c.l.b16 %v4426
    %v4486 = vunpack.c.l.b16 %v4429
    %v4487 = vunpack.c.l.b16 %v4430
    %v4488 = vunpack.c.l.b16 %v4433
    %v4489 = vunpack.c.l.b16 %v4434
    %v4490 = vunpack.c.l.b16 %v4437
    %v4491 = vunpack.c.l.b16 %v4438
    %v4492 = vunpack.c.l.b16 %v4441
    %v4493 = vunpack.c.l.b16 %v4442
    %v4494 = vunpack.c.l.b16 %v4445
    %v4495 = vunpack.c.l.b16 %v4446
    %v4496 = vunpack.c.l.b16 %v4449
    %v4497 = vunpack.c.l.b16 %v4450
    %v4498 = vpack.c.b16 %v4485, %v4484
    %v4499 = vpack.c.b16 %v4487, %v4486
    %v4500 = vpack.c.b16 %v4489, %v4488
    %v4501 = vpack.c.b16 %v4491, %v4490
    %v4502 = vpack.c.b16 %v4493, %v4492
    %v4503 = vpack.c.b16 %v4495, %v4494
    %v4504 = vpack.c.b16 %v4497, %v4496
    %v4513 = vunpack.c.l.b16 %v4462
    %v4514 = vunpack.c.l.b16 %v4463
    %v4515 = vunpack.c.l.b16 %v4464
    %v4516 = vunpack.c.l.b16 %v4465
    %v4517 = vunpack.c.l.b16 %v4466
    %v4518 = vunpack.c.l.b16 %v4467
    %v4519 = vunpack.c.l.b16 %v4468
    %v4520 = vunpack.c.l.b16 %v4469
    %v4521 = vpack.c.b16 %v4514, %v4513
    %v4522 = vpack.c.b16 %v4516, %v4515
    %v4523 = vpack.c.b16 %v4518, %v4517
    %v4524 = vpack.c.b16 %v4520, %v4519
    %vm4529 = vcmask 523264
    %v4531 = vsel %vm4529, %v4498, 0
    %v4534 = vsel %vm4529, %v4499, 0
    %v4537 = vsel %vm4529, %v4500, 0
    %v4540 = vsel %vm4529, %v4501, 0
    %v4543 = vsel %vm4529, %v4502, 0
    %v4546 = vsel %vm4529, %v4503, 0
    %v4549 = vsel %vm4529, %v4504, 0
    %4551 = vmatprep.subr.bf16.mxu0 0
    %4552 = vmatpush1.bf16.msra.mxu0 0
    %4553 = vmatprep.subr.bf16.mxu0 0
    %4554 = vmatpush1.bf16.msra.mxu0 0
    %4555 = vmatprep.subr.bf16.mxu0 0
    %4556 = vmatpush1.bf16.msra.mxu0 0
    %4557 = vmatprep.subr.bf16.mxu0 0
    %4558 = vmatpush1.bf16.msra.mxu0 0
    %4559 = vmatprep.subr.bf16.mxu0 0
    %4560 = vmatpush1.bf16.msra.mxu0 %v4524
    %4561 = vmatprep.subr.bf16.mxu0 0
    %4562 = vmatpush1.bf16.msra.mxu0 %v4523
    %4563 = vmatprep.subr.bf16.mxu0 0
    %4564 = vmatpush1.bf16.msra.mxu0 %v4522
    %4565 = vmatprep.subr.bf16.mxu0 0
    %4566 = vmatpush1.bf16.msra.mxu0 %v4521
    %4567 = vmatprep.subr.bf16.mxu0 0
    %4568 = vmatpush2.bf16.msra.mxu0 0
    %4569 = vmatprep.subr.bf16.mxu0 0
    %4570 = vmatpush2.bf16.msra.mxu0 0
    %4571 = vmatprep.subr.bf16.mxu0 0
    %4572 = vmatpush2.bf16.msra.mxu0 0
    %4573 = vmatprep.subr.bf16.mxu0 0
    %4574 = vmatpush2.bf16.msra.mxu0 0
    %4575 = vmatprep.subr.bf16.mxu0 0
    %4576 = vmatpush2.bf16.msra.mxu0 0
    %4577 = vmatprep.subr.bf16.mxu0 0
    %4578 = vmatpush2.bf16.msra.mxu0 0
    %4579 = vmatprep.subr.bf16.mxu0 0
    %4580 = vmatpush2.bf16.msra.mxu0 0
    %4581 = vmatprep.subr.bf16.mxu0 0
    %4582 = vmatpush2.bf16.msra.mxu0 0
    %4583 = vmatprep.mubr.bf16.mxu0 0
    %4584 = vmatmul.mubr.bf16.gmra.mxu0 %v4531
    %v4585 = vpop.f32.mrf.mxu0
    %v4586 = vadd.f32 0.0, %v4585
    %v4587 = vpop.f32.mrf.mxu0
    %v4588 = vpop.f32.mrf.mxu0
    %v4589 = vadd.f32 0.0, %v4588
    %v4590 = vpop.f32.mrf.mxu0
    %4591 = vmatprep.mubr.bf16.mxu0 0
    %4592 = vmatmul.mubr.bf16.gmra.mxu0 %v4534
    %v4593 = vpop.f32.mrf.mxu0
    %v4594 = vadd.f32 0.0, %v4593
    %v4595 = vpop.f32.mrf.mxu0
    %v4596 = vpop.f32.mrf.mxu0
    %v4597 = vadd.f32 0.0, %v4596
    %v4598 = vpop.f32.mrf.mxu0
    %4599 = vmatprep.mubr.bf16.mxu0 0
    %4600 = vmatmul.mubr.bf16.gmra.mxu0 %v4537
    %v4601 = vpop.f32.mrf.mxu0
    %v4602 = vadd.f32 0.0, %v4601
    %v4603 = vpop.f32.mrf.mxu0
    %v4604 = vpop.f32.mrf.mxu0
    %v4605 = vadd.f32 0.0, %v4604
    %v4606 = vpop.f32.mrf.mxu0
    %4607 = vmatprep.mubr.bf16.mxu0 0
    %4608 = vmatmul.mubr.bf16.gmra.mxu0 %v4540
    %v4609 = vpop.f32.mrf.mxu0
    %v4610 = vadd.f32 0.0, %v4609
    %v4611 = vpop.f32.mrf.mxu0
    %v4612 = vpop.f32.mrf.mxu0
    %v4613 = vadd.f32 0.0, %v4612
    %v4614 = vpop.f32.mrf.mxu0
    %4615 = vmatprep.mubr.bf16.mxu0 0
    %4616 = vmatmul.mubr.bf16.gmra.mxu0 %v4543
    %v4617 = vpop.f32.mrf.mxu0
    %v4618 = vadd.f32 0.0, %v4617
    %v4619 = vpop.f32.mrf.mxu0
    %v4620 = vpop.f32.mrf.mxu0
    %v4621 = vadd.f32 0.0, %v4620
    %v4622 = vpop.f32.mrf.mxu0
    %4623 = vmatprep.mubr.bf16.mxu0 0
    %4624 = vmatmul.mubr.bf16.gmra.mxu0 %v4546
    %v4625 = vpop.f32.mrf.mxu0
    %v4626 = vadd.f32 0.0, %v4625
    %v4627 = vpop.f32.mrf.mxu0
    %v4628 = vpop.f32.mrf.mxu0
    %v4629 = vadd.f32 0.0, %v4628
    %v4630 = vpop.f32.mrf.mxu0
    %4631 = vmatprep.mubr.bf16.mxu0 0
    %4632 = vmatmul.mubr.bf16.gmra.mxu0 %v4549
    %v4633 = vpop.f32.mrf.mxu0
    %v4634 = vadd.f32 0.0, %v4633
    %v4635 = vpop.f32.mrf.mxu0
    %v4636 = vpop.f32.mrf.mxu0
    %v4637 = vadd.f32 0.0, %v4636
    %v4638 = vpop.f32.mrf.mxu0
    %4639 = vdwg.mxu0
    %v4654 = vunpack.c.l.b16 %v4423
    %v4655 = vunpack.c.l.b16 %v4424
    %v4656 = vunpack.c.l.b16 %v4427
    %v4657 = vunpack.c.l.b16 %v4428
    %v4658 = vunpack.c.l.b16 %v4431
    %v4659 = vunpack.c.l.b16 %v4432
    %v4660 = vunpack.c.l.b16 %v4435
    %v4661 = vunpack.c.l.b16 %v4436
    %v4662 = vunpack.c.l.b16 %v4439
    %v4663 = vunpack.c.l.b16 %v4440
    %v4664 = vunpack.c.l.b16 %v4443
    %v4665 = vunpack.c.l.b16 %v4444
    %v4666 = vunpack.c.l.b16 %v4447
    %v4667 = vunpack.c.l.b16 %v4448
    %v4668 = vpack.c.b16 %v4655, %v4654
    %v4669 = vpack.c.b16 %v4657, %v4656
    %v4670 = vpack.c.b16 %v4659, %v4658
    %v4671 = vpack.c.b16 %v4661, %v4660
    %v4672 = vpack.c.b16 %v4663, %v4662
    %v4673 = vpack.c.b16 %v4665, %v4664
    %v4674 = vpack.c.b16 %v4667, %v4666
    %v4683 = vunpack.c.l.b16 %v4453
    %v4684 = vunpack.c.l.b16 %v4454
    %v4685 = vunpack.c.l.b16 %v4455
    %v4686 = vunpack.c.l.b16 %v4456
    %v4687 = vunpack.c.l.b16 %v4457
    %v4688 = vunpack.c.l.b16 %v4458
    %v4689 = vunpack.c.l.b16 %v4459
    %v4690 = vunpack.c.l.b16 %v4460
    %v4691 = vpack.c.b16 %v4684, %v4683
    %v4692 = vpack.c.b16 %v4686, %v4685
    %v4693 = vpack.c.b16 %v4688, %v4687
    %v4694 = vpack.c.b16 %v4690, %v4689
    %v4700 = vsel %vm4529, %v4668, 0
    %v4703 = vsel %vm4529, %v4669, 0
    %v4706 = vsel %vm4529, %v4670, 0
    %v4709 = vsel %vm4529, %v4671, 0
    %v4712 = vsel %vm4529, %v4672, 0
    %v4715 = vsel %vm4529, %v4673, 0
    %v4718 = vsel %vm4529, %v4674, 0
    %4720 = vmatprep.subr.bf16.mxu0 0
    %4721 = vmatpush1.bf16.msra.mxu0 0
    %4722 = vmatprep.subr.bf16.mxu0 0
    %4723 = vmatpush1.bf16.msra.mxu0 0
    %4724 = vmatprep.subr.bf16.mxu0 0
    %4725 = vmatpush1.bf16.msra.mxu0 0
    %4726 = vmatprep.subr.bf16.mxu0 0
    %4727 = vmatpush1.bf16.msra.mxu0 0
    %4728 = vmatprep.subr.bf16.mxu0 0
    %4729 = vmatpush1.bf16.msra.mxu0 %v4694
    %4730 = vmatprep.subr.bf16.mxu0 0
    %4731 = vmatpush1.bf16.msra.mxu0 %v4693
    %4732 = vmatprep.subr.bf16.mxu0 0
    %4733 = vmatpush1.bf16.msra.mxu0 %v4692
    %4734 = vmatprep.subr.bf16.mxu0 0
    %4735 = vmatpush1.bf16.msra.mxu0 %v4691
    %4736 = vmatprep.subr.bf16.mxu0 0
    %4737 = vmatpush2.bf16.msra.mxu0 0
    %4738 = vmatprep.subr.bf16.mxu0 0
    %4739 = vmatpush2.bf16.msra.mxu0 0
    %4740 = vmatprep.subr.bf16.mxu0 0
    %4741 = vmatpush2.bf16.msra.mxu0 0
    %4742 = vmatprep.subr.bf16.mxu0 0
    %4743 = vmatpush2.bf16.msra.mxu0 0
    %4744 = vmatprep.subr.bf16.mxu0 0
    %4745 = vmatpush2.bf16.msra.mxu0 0
    %4746 = vmatprep.subr.bf16.mxu0 0
    %4747 = vmatpush2.bf16.msra.mxu0 0
    %4748 = vmatprep.subr.bf16.mxu0 0
    %4749 = vmatpush2.bf16.msra.mxu0 0
    %4750 = vmatprep.subr.bf16.mxu0 0
    %4751 = vmatpush2.bf16.msra.mxu0 0
    %4752 = vmatprep.mubr.bf16.mxu0 0
    %4753 = vmatmul.mubr.bf16.gmra.mxu0 %v4700
    %v4754 = vpop.f32.mrf.mxu0
    %v4755 = vadd.f32 %v4586, %v4754
    %v4756 = vpop.f32.mrf.mxu0
    %v4757 = vpop.f32.mrf.mxu0
    %v4758 = vadd.f32 %v4589, %v4757
    %v4759 = vpop.f32.mrf.mxu0
    %4760 = vmatprep.mubr.bf16.mxu0 0
    %4761 = vmatmul.mubr.bf16.gmra.mxu0 %v4703
    %v4762 = vpop.f32.mrf.mxu0
    %v4763 = vadd.f32 %v4594, %v4762
    %v4764 = vpop.f32.mrf.mxu0
    %v4765 = vpop.f32.mrf.mxu0
    %v4766 = vadd.f32 %v4597, %v4765
    %v4767 = vpop.f32.mrf.mxu0
    %4768 = vmatprep.mubr.bf16.mxu0 0
    %4769 = vmatmul.mubr.bf16.gmra.mxu0 %v4706
    %v4770 = vpop.f32.mrf.mxu0
    %v4771 = vadd.f32 %v4602, %v4770
    %v4772 = vpop.f32.mrf.mxu0
    %v4773 = vpop.f32.mrf.mxu0
    %v4774 = vadd.f32 %v4605, %v4773
    %v4775 = vpop.f32.mrf.mxu0
    %4776 = vmatprep.mubr.bf16.mxu0 0
    %4777 = vmatmul.mubr.bf16.gmra.mxu0 %v4709
    %v4778 = vpop.f32.mrf.mxu0
    %v4779 = vadd.f32 %v4610, %v4778
    %v4780 = vpop.f32.mrf.mxu0
    %v4781 = vpop.f32.mrf.mxu0
    %v4782 = vadd.f32 %v4613, %v4781
    %v4783 = vpop.f32.mrf.mxu0
    %4784 = vmatprep.mubr.bf16.mxu0 0
    %4785 = vmatmul.mubr.bf16.gmra.mxu0 %v4712
    %v4786 = vpop.f32.mrf.mxu0
    %v4787 = vadd.f32 %v4618, %v4786
    %v4788 = vpop.f32.mrf.mxu0
    %v4789 = vpop.f32.mrf.mxu0
    %v4790 = vadd.f32 %v4621, %v4789
    %v4791 = vpop.f32.mrf.mxu0
    %4792 = vmatprep.mubr.bf16.mxu0 0
    %4793 = vmatmul.mubr.bf16.gmra.mxu0 %v4715
    %v4794 = vpop.f32.mrf.mxu0
    %v4795 = vadd.f32 %v4626, %v4794
    %v4796 = vpop.f32.mrf.mxu0
    %v4797 = vpop.f32.mrf.mxu0
    %v4798 = vadd.f32 %v4629, %v4797
    %v4799 = vpop.f32.mrf.mxu0
    %4800 = vmatprep.mubr.bf16.mxu0 0
    %4801 = vmatmul.mubr.bf16.gmra.mxu0 %v4718
    %v4802 = vpop.f32.mrf.mxu0
    %v4803 = vadd.f32 %v4634, %v4802
    %v4804 = vpop.f32.mrf.mxu0
    %v4805 = vpop.f32.mrf.mxu0
    %v4806 = vadd.f32 %v4637, %v4805
    %v4807 = vpop.f32.mrf.mxu0
    %4808 = vdwg.mxu0
    %s4809 = scalar_lea.vmem %s8, 64
    %v4810 = vld [vmem:[%s4809] sm:$0xf]
    %v4811 = vld [vmem:[%s4809 + $0x4] sm:$0xf]
    %v4812 = vld [vmem:[%s4809 + $0x8] sm:$0xf]
    %v4813 = vld [vmem:[%s4809 + $0xc] sm:$0xf]
    %v4814 = vld [vmem:[%s4809 + $0x10] sm:$0xf]
    %v4815 = vld [vmem:[%s4809 + $0x14] sm:$0xf]
    %v4816 = vld [vmem:[%s4809 + $0x18] sm:$0xf]
    %v4817 = vld [vmem:[%s4809 + $0x1c] sm:$0xf]
    %v4820 = vunpack.c.l.b16 %v4451
    %v4821 = vunpack.c.l.b16 %v4452
    %v4822 = vpack.c.b16 %v4821, %v4820
    %v4831 = vunpack.c.l.b16 %v4810
    %v4832 = vunpack.c.l.b16 %v4811
    %v4833 = vunpack.c.l.b16 %v4812
    %v4834 = vunpack.c.l.b16 %v4813
    %v4835 = vunpack.c.l.b16 %v4814
    %v4836 = vunpack.c.l.b16 %v4815
    %v4837 = vunpack.c.l.b16 %v4816
    %v4838 = vunpack.c.l.b16 %v4817
    %v4839 = vpack.c.b16 %v4832, %v4831
    %v4840 = vpack.c.b16 %v4834, %v4833
    %v4841 = vpack.c.b16 %v4836, %v4835
    %v4842 = vpack.c.b16 %v4838, %v4837
    %v4848 = vsel %vm4529, %v4822, 0
    %4850 = vmatprep.subr.bf16.mxu0 0
    %4851 = vmatpush1.bf16.msra.mxu0 0
    %4852 = vmatprep.subr.bf16.mxu0 0
    %4853 = vmatpush1.bf16.msra.mxu0 0
    %4854 = vmatprep.subr.bf16.mxu0 0
    %4855 = vmatpush1.bf16.msra.mxu0 0
    %4856 = vmatprep.subr.bf16.mxu0 0
    %4857 = vmatpush1.bf16.msra.mxu0 0
    %4858 = vmatprep.subr.bf16.mxu0 0
    %4859 = vmatpush1.bf16.msra.mxu0 %v4842
    %4860 = vmatprep.subr.bf16.mxu0 0
    %4861 = vmatpush1.bf16.msra.mxu0 %v4841
    %4862 = vmatprep.subr.bf16.mxu0 0
    %4863 = vmatpush1.bf16.msra.mxu0 %v4840
    %4864 = vmatprep.subr.bf16.mxu0 0
    %4865 = vmatpush1.bf16.msra.mxu0 %v4839
    %4866 = vmatprep.subr.bf16.mxu0 0
    %4867 = vmatpush2.bf16.msra.mxu0 0
    %4868 = vmatprep.subr.bf16.mxu0 0
    %4869 = vmatpush2.bf16.msra.mxu0 0
    %4870 = vmatprep.subr.bf16.mxu0 0
    %4871 = vmatpush2.bf16.msra.mxu0 0
    %4872 = vmatprep.subr.bf16.mxu0 0
    %4873 = vmatpush2.bf16.msra.mxu0 0
    %4874 = vmatprep.subr.bf16.mxu0 0
    %4875 = vmatpush2.bf16.msra.mxu0 0
    %4876 = vmatprep.subr.bf16.mxu0 0
    %4877 = vmatpush2.bf16.msra.mxu0 0
    %4878 = vmatprep.subr.bf16.mxu0 0
    %4879 = vmatpush2.bf16.msra.mxu0 0
    %4880 = vmatprep.subr.bf16.mxu0 0
    %4881 = vmatpush2.bf16.msra.mxu0 0
    %4882 = vmatprep.mubr.bf16.mxu0 0
    %4883 = vmatmul.mubr.bf16.gmra.mxu0 %v4703
    %v4884 = vpop.f32.mrf.mxu0
    %v4885 = vadd.f32 0.0, %v4884
    %v4886 = vpop.f32.mrf.mxu0
    %v4887 = vpop.f32.mrf.mxu0
    %v4888 = vadd.f32 0.0, %v4887
    %v4889 = vpop.f32.mrf.mxu0
    %4890 = vmatprep.mubr.bf16.mxu0 0
    %4891 = vmatmul.mubr.bf16.gmra.mxu0 %v4706
    %v4892 = vpop.f32.mrf.mxu0
    %v4893 = vadd.f32 0.0, %v4892
    %v4894 = vpop.f32.mrf.mxu0
    %v4895 = vpop.f32.mrf.mxu0
    %v4896 = vadd.f32 0.0, %v4895
    %v4897 = vpop.f32.mrf.mxu0
    %4898 = vmatprep.mubr.bf16.mxu0 0
    %4899 = vmatmul.mubr.bf16.gmra.mxu0 %v4709
    %v4900 = vpop.f32.mrf.mxu0
    %v4901 = vadd.f32 0.0, %v4900
    %v4902 = vpop.f32.mrf.mxu0
    %v4903 = vpop.f32.mrf.mxu0
    %v4904 = vadd.f32 0.0, %v4903
    %v4905 = vpop.f32.mrf.mxu0
    %4906 = vmatprep.mubr.bf16.mxu0 0
    %4907 = vmatmul.mubr.bf16.gmra.mxu0 %v4712
    %v4908 = vpop.f32.mrf.mxu0
    %v4909 = vadd.f32 0.0, %v4908
    %v4910 = vpop.f32.mrf.mxu0
    %v4911 = vpop.f32.mrf.mxu0
    %v4912 = vadd.f32 0.0, %v4911
    %v4913 = vpop.f32.mrf.mxu0
    %4914 = vmatprep.mubr.bf16.mxu0 0
    %4915 = vmatmul.mubr.bf16.gmra.mxu0 %v4715
    %v4916 = vpop.f32.mrf.mxu0
    %v4917 = vadd.f32 0.0, %v4916
    %v4918 = vpop.f32.mrf.mxu0
    %v4919 = vpop.f32.mrf.mxu0
    %v4920 = vadd.f32 0.0, %v4919
    %v4921 = vpop.f32.mrf.mxu0
    %4922 = vmatprep.mubr.bf16.mxu0 0
    %4923 = vmatmul.mubr.bf16.gmra.mxu0 %v4718
    %v4924 = vpop.f32.mrf.mxu0
    %v4925 = vadd.f32 0.0, %v4924
    %v4926 = vpop.f32.mrf.mxu0
    %v4927 = vpop.f32.mrf.mxu0
    %v4928 = vadd.f32 0.0, %v4927
    %v4929 = vpop.f32.mrf.mxu0
    %4930 = vmatprep.mubr.bf16.mxu0 0
    %4931 = vmatmul.mubr.bf16.gmra.mxu0 %v4848
    %v4932 = vpop.f32.mrf.mxu0
    %v4933 = vadd.f32 0.0, %v4932
    %v4934 = vpop.f32.mrf.mxu0
    %v4935 = vpop.f32.mrf.mxu0
    %v4936 = vadd.f32 0.0, %v4935
    %v4937 = vpop.f32.mrf.mxu0
    %4938 = vdwg.mxu0
    %v4939 = vadd.f32 %v4755, %v4885
    %v4940 = vadd.f32 %v4758, %v4888
    %v4941 = vadd.f32 %v4763, %v4893
    %v4942 = vadd.f32 %v4766, %v4896
    %v4943 = vadd.f32 %v4771, %v4901
    %v4944 = vadd.f32 %v4774, %v4904
    %v4945 = vadd.f32 %v4779, %v4909
    %v4946 = vadd.f32 %v4782, %v4912
    %v4947 = vadd.f32 %v4787, %v4917
    %v4948 = vadd.f32 %v4790, %v4920
    %v4949 = vadd.f32 %v4795, %v4925
    %v4950 = vadd.f32 %v4798, %v4928
    %v4951 = vadd.f32 %v4803, %v4933
    %v4952 = vadd.f32 %v4806, %v4936
    %s4953 = sadd.s32 %s4419, 1
    %s4954 = smul.u32 %s4953, 30
    %s4955 = smul.addr %s4954, 4
    %s4956 = scalar_lea.vmem [#allocation3], %s4955
    %v4957 = vld [vmem:[%s4956] sm:$0xf]
    %v4958 = vld [vmem:[%s4956 + $0x4] sm:$0xf]
    %v4959 = vld [vmem:[%s4956 + $0x8] sm:$0xf]
    %v4960 = vld [vmem:[%s4956 + $0xc] sm:$0xf]
    %v4961 = vld [vmem:[%s4956 + $0x10] sm:$0xf]
    %v4962 = vld [vmem:[%s4956 + $0x14] sm:$0xf]
    %v4963 = vld [vmem:[%s4956 + $0x18] sm:$0xf]
    %v4964 = vld [vmem:[%s4956 + $0x1c] sm:$0xf]
    %v4965 = vld [vmem:[%s4956 + $0x20] sm:$0xf]
    %v4966 = vld [vmem:[%s4956 + $0x24] sm:$0xf]
    %v4967 = vld [vmem:[%s4956 + $0x28] sm:$0xf]
    %v4968 = vld [vmem:[%s4956 + $0x2c] sm:$0xf]
    %v4969 = vld [vmem:[%s4956 + $0x30] sm:$0xf]
    %v4970 = vld [vmem:[%s4956 + $0x34] sm:$0xf]
    %v4971 = vld [vmem:[%s4956 + $0x38] sm:$0xf]
    %v4972 = vld [vmem:[%s4956 + $0x3c] sm:$0xf]
    %v4973 = vld [vmem:[%s4956 + $0x40] sm:$0xf]
    %v4974 = vld [vmem:[%s4956 + $0x44] sm:$0xf]
    %v4975 = vld [vmem:[%s4956 + $0x48] sm:$0xf]
    %v4976 = vld [vmem:[%s4956 + $0x4c] sm:$0xf]
    %v4977 = vld [vmem:[%s4956 + $0x50] sm:$0xf]
    %v4978 = vld [vmem:[%s4956 + $0x54] sm:$0xf]
    %v4979 = vld [vmem:[%s4956 + $0x58] sm:$0xf]
    %v4980 = vld [vmem:[%s4956 + $0x5c] sm:$0xf]
    %v4981 = vld [vmem:[%s4956 + $0x60] sm:$0xf]
    %v4982 = vld [vmem:[%s4956 + $0x64] sm:$0xf]
    %v4983 = vld [vmem:[%s4956 + $0x68] sm:$0xf]
    %v4984 = vld [vmem:[%s4956 + $0x6c] sm:$0xf]
    %v4985 = vld [vmem:[%s4956 + $0x70] sm:$0xf]
    %v4986 = vld [vmem:[%s4956 + $0x74] sm:$0xf]
    %s4987 = scalar_lea.vmem %s8, 96
    %v4988 = vld [vmem:[%s4987] sm:$0xf]
    %v4989 = vld [vmem:[%s4987 + $0x4] sm:$0xf]
    %v4990 = vld [vmem:[%s4987 + $0x8] sm:$0xf]
    %v4991 = vld [vmem:[%s4987 + $0xc] sm:$0xf]
    %v4992 = vld [vmem:[%s4987 + $0x10] sm:$0xf]
    %v4993 = vld [vmem:[%s4987 + $0x14] sm:$0xf]
    %v4994 = vld [vmem:[%s4987 + $0x18] sm:$0xf]
    %v4995 = vld [vmem:[%s4987 + $0x1c] sm:$0xf]
    %v5010 = vunpack.c.l.b16 %v4957
    %v5011 = vunpack.c.l.b16 %v4958
    %v5012 = vunpack.c.l.b16 %v4961
    %v5013 = vunpack.c.l.b16 %v4962
    %v5014 = vunpack.c.l.b16 %v4965
    %v5015 = vunpack.c.l.b16 %v4966
    %v5016 = vunpack.c.l.b16 %v4969
    %v5017 = vunpack.c.l.b16 %v4970
    %v5018 = vunpack.c.l.b16 %v4973
    %v5019 = vunpack.c.l.b16 %v4974
    %v5020 = vunpack.c.l.b16 %v4977
    %v5021 = vunpack.c.l.b16 %v4978
    %v5022 = vunpack.c.l.b16 %v4981
    %v5023 = vunpack.c.l.b16 %v4982
    %v5024 = vpack.c.b16 %v5011, %v5010
    %v5025 = vpack.c.b16 %v5013, %v5012
    %v5026 = vpack.c.b16 %v5015, %v5014
    %v5027 = vpack.c.b16 %v5017, %v5016
    %v5028 = vpack.c.b16 %v5019, %v5018
    %v5029 = vpack.c.b16 %v5021, %v5020
    %v5030 = vpack.c.b16 %v5023, %v5022
    %v5039 = vunpack.c.l.b16 %v4988
    %v5040 = vunpack.c.l.b16 %v4989
    %v5041 = vunpack.c.l.b16 %v4990
    %v5042 = vunpack.c.l.b16 %v4991
    %v5043 = vunpack.c.l.b16 %v4992
    %v5044 = vunpack.c.l.b16 %v4993
    %v5045 = vunpack.c.l.b16 %v4994
    %v5046 = vunpack.c.l.b16 %v4995
    %v5047 = vpack.c.b16 %v5040, %v5039
    %v5048 = vpack.c.b16 %v5042, %v5041
    %v5049 = vpack.c.b16 %v5044, %v5043
    %v5050 = vpack.c.b16 %v5046, %v5045
    %v5056 = vsel %vm4529, %v5024, 0
    %v5059 = vsel %vm4529, %v5025, 0
    %v5062 = vsel %vm4529, %v5026, 0
    %v5065 = vsel %vm4529, %v5027, 0
    %v5068 = vsel %vm4529, %v5028, 0
    %v5071 = vsel %vm4529, %v5029, 0
    %v5074 = vsel %vm4529, %v5030, 0
    %5076 = vmatprep.subr.bf16.mxu0 0
    %5077 = vmatpush1.bf16.msra.mxu0 0
    %5078 = vmatprep.subr.bf16.mxu0 0
    %5079 = vmatpush1.bf16.msra.mxu0 0
    %5080 = vmatprep.subr.bf16.mxu0 0
    %5081 = vmatpush1.bf16.msra.mxu0 0
    %5082 = vmatprep.subr.bf16.mxu0 0
    %5083 = vmatpush1.bf16.msra.mxu0 0
    %5084 = vmatprep.subr.bf16.mxu0 0
    %5085 = vmatpush1.bf16.msra.mxu0 %v5050
    %5086 = vmatprep.subr.bf16.mxu0 0
    %5087 = vmatpush1.bf16.msra.mxu0 %v5049
    %5088 = vmatprep.subr.bf16.mxu0 0
    %5089 = vmatpush1.bf16.msra.mxu0 %v5048
    %5090 = vmatprep.subr.bf16.mxu0 0
    %5091 = vmatpush1.bf16.msra.mxu0 %v5047
    %5092 = vmatprep.subr.bf16.mxu0 0
    %5093 = vmatpush2.bf16.msra.mxu0 0
    %5094 = vmatprep.subr.bf16.mxu0 0
    %5095 = vmatpush2.bf16.msra.mxu0 0
    %5096 = vmatprep.subr.bf16.mxu0 0
    %5097 = vmatpush2.bf16.msra.mxu0 0
    %5098 = vmatprep.subr.bf16.mxu0 0
    %5099 = vmatpush2.bf16.msra.mxu0 0
    %5100 = vmatprep.subr.bf16.mxu0 0
    %5101 = vmatpush2.bf16.msra.mxu0 0
    %5102 = vmatprep.subr.bf16.mxu0 0
    %5103 = vmatpush2.bf16.msra.mxu0 0
    %5104 = vmatprep.subr.bf16.mxu0 0
    %5105 = vmatpush2.bf16.msra.mxu0 0
    %5106 = vmatprep.subr.bf16.mxu0 0
    %5107 = vmatpush2.bf16.msra.mxu0 0
    %5108 = vmatprep.mubr.bf16.mxu0 0
    %5109 = vmatmul.mubr.bf16.gmra.mxu0 %v5056
    %v5110 = vpop.f32.mrf.mxu0
    %v5111 = vadd.f32 0.0, %v5110
    %v5112 = vpop.f32.mrf.mxu0
    %v5113 = vpop.f32.mrf.mxu0
    %v5114 = vadd.f32 0.0, %v5113
    %v5115 = vpop.f32.mrf.mxu0
    %5116 = vmatprep.mubr.bf16.mxu0 0
    %5117 = vmatmul.mubr.bf16.gmra.mxu0 %v5059
    %v5118 = vpop.f32.mrf.mxu0
    %v5119 = vadd.f32 0.0, %v5118
    %v5120 = vpop.f32.mrf.mxu0
    %v5121 = vpop.f32.mrf.mxu0
    %v5122 = vadd.f32 0.0, %v5121
    %v5123 = vpop.f32.mrf.mxu0
    %5124 = vmatprep.mubr.bf16.mxu0 0
    %5125 = vmatmul.mubr.bf16.gmra.mxu0 %v5062
    %v5126 = vpop.f32.mrf.mxu0
    %v5127 = vadd.f32 0.0, %v5126
    %v5128 = vpop.f32.mrf.mxu0
    %v5129 = vpop.f32.mrf.mxu0
    %v5130 = vadd.f32 0.0, %v5129
    %v5131 = vpop.f32.mrf.mxu0
    %5132 = vmatprep.mubr.bf16.mxu0 0
    %5133 = vmatmul.mubr.bf16.gmra.mxu0 %v5065
    %v5134 = vpop.f32.mrf.mxu0
    %v5135 = vadd.f32 0.0, %v5134
    %v5136 = vpop.f32.mrf.mxu0
    %v5137 = vpop.f32.mrf.mxu0
    %v5138 = vadd.f32 0.0, %v5137
    %v5139 = vpop.f32.mrf.mxu0
    %5140 = vmatprep.mubr.bf16.mxu0 0
    %5141 = vmatmul.mubr.bf16.gmra.mxu0 %v5068
    %v5142 = vpop.f32.mrf.mxu0
    %v5143 = vadd.f32 0.0, %v5142
    %v5144 = vpop.f32.mrf.mxu0
    %v5145 = vpop.f32.mrf.mxu0
    %v5146 = vadd.f32 0.0, %v5145
    %v5147 = vpop.f32.mrf.mxu0
    %5148 = vmatprep.mubr.bf16.mxu0 0
    %5149 = vmatmul.mubr.bf16.gmra.mxu0 %v5071
    %v5150 = vpop.f32.mrf.mxu0
    %v5151 = vadd.f32 0.0, %v5150
    %v5152 = vpop.f32.mrf.mxu0
    %v5153 = vpop.f32.mrf.mxu0
    %v5154 = vadd.f32 0.0, %v5153
    %v5155 = vpop.f32.mrf.mxu0
    %5156 = vmatprep.mubr.bf16.mxu0 0
    %5157 = vmatmul.mubr.bf16.gmra.mxu0 %v5074
    %v5158 = vpop.f32.mrf.mxu0
    %v5159 = vadd.f32 0.0, %v5158
    %v5160 = vpop.f32.mrf.mxu0
    %v5161 = vpop.f32.mrf.mxu0
    %v5162 = vadd.f32 0.0, %v5161
    %v5163 = vpop.f32.mrf.mxu0
    %5164 = vdwg.mxu0
    %v5165 = vadd.f32 %v4939, %v5111
    %v5166 = vadd.f32 %v4940, %v5114
    %v5167 = vadd.f32 %v4941, %v5119
    %v5168 = vadd.f32 %v4942, %v5122
    %v5169 = vadd.f32 %v4943, %v5127
    %v5170 = vadd.f32 %v4944, %v5130
    %v5171 = vadd.f32 %v4945, %v5135
    %v5172 = vadd.f32 %v4946, %v5138
    %v5173 = vadd.f32 %v4947, %v5143
    %v5174 = vadd.f32 %v4948, %v5146
    %v5175 = vadd.f32 %v4949, %v5151
    %v5176 = vadd.f32 %v4950, %v5154
    %v5177 = vadd.f32 %v4951, %v5159
    %v5178 = vadd.f32 %v4952, %v5162
    %s5179 = scalar_lea.vmem %s8, 128
    %v5180 = vld [vmem:[%s5179] sm:$0xf]
    %v5181 = vld [vmem:[%s5179 + $0x4] sm:$0xf]
    %v5182 = vld [vmem:[%s5179 + $0x8] sm:$0xf]
    %v5183 = vld [vmem:[%s5179 + $0xc] sm:$0xf]
    %v5184 = vld [vmem:[%s5179 + $0x10] sm:$0xf]
    %v5185 = vld [vmem:[%s5179 + $0x14] sm:$0xf]
    %v5186 = vld [vmem:[%s5179 + $0x18] sm:$0xf]
    %v5187 = vld [vmem:[%s5179 + $0x1c] sm:$0xf]
    %v5202 = vunpack.c.l.b16 %v4959
    %v5203 = vunpack.c.l.b16 %v4960
    %v5204 = vunpack.c.l.b16 %v4963
    %v5205 = vunpack.c.l.b16 %v4964
    %v5206 = vunpack.c.l.b16 %v4967
    %v5207 = vunpack.c.l.b16 %v4968
    %v5208 = vunpack.c.l.b16 %v4971
    %v5209 = vunpack.c.l.b16 %v4972
    %v5210 = vunpack.c.l.b16 %v4975
    %v5211 = vunpack.c.l.b16 %v4976
    %v5212 = vunpack.c.l.b16 %v4979
    %v5213 = vunpack.c.l.b16 %v4980
    %v5214 = vunpack.c.l.b16 %v4983
    %v5215 = vunpack.c.l.b16 %v4984
    %v5216 = vpack.c.b16 %v5203, %v5202
    %v5217 = vpack.c.b16 %v5205, %v5204
    %v5218 = vpack.c.b16 %v5207, %v5206
    %v5219 = vpack.c.b16 %v5209, %v5208
    %v5220 = vpack.c.b16 %v5211, %v5210
    %v5221 = vpack.c.b16 %v5213, %v5212
    %v5222 = vpack.c.b16 %v5215, %v5214
    %v5231 = vunpack.c.l.b16 %v5180
    %v5232 = vunpack.c.l.b16 %v5181
    %v5233 = vunpack.c.l.b16 %v5182
    %v5234 = vunpack.c.l.b16 %v5183
    %v5235 = vunpack.c.l.b16 %v5184
    %v5236 = vunpack.c.l.b16 %v5185
    %v5237 = vunpack.c.l.b16 %v5186
    %v5238 = vunpack.c.l.b16 %v5187
    %v5239 = vpack.c.b16 %v5232, %v5231
    %v5240 = vpack.c.b16 %v5234, %v5233
    %v5241 = vpack.c.b16 %v5236, %v5235
    %v5242 = vpack.c.b16 %v5238, %v5237
    %v5248 = vsel %vm4529, %v5216, 0
    %v5251 = vsel %vm4529, %v5217, 0
    %v5254 = vsel %vm4529, %v5218, 0
    %v5257 = vsel %vm4529, %v5219, 0
    %v5260 = vsel %vm4529, %v5220, 0
    %v5263 = vsel %vm4529, %v5221, 0
    %v5266 = vsel %vm4529, %v5222, 0
    %5268 = vmatprep.subr.bf16.mxu0 0
    %5269 = vmatpush1.bf16.msra.mxu0 0
    %5270 = vmatprep.subr.bf16.mxu0 0
    %5271 = vmatpush1.bf16.msra.mxu0 0
    %5272 = vmatprep.subr.bf16.mxu0 0
    %5273 = vmatpush1.bf16.msra.mxu0 0
    %5274 = vmatprep.subr.bf16.mxu0 0
    %5275 = vmatpush1.bf16.msra.mxu0 0
    %5276 = vmatprep.subr.bf16.mxu0 0
    %5277 = vmatpush1.bf16.msra.mxu0 %v5242
    %5278 = vmatprep.subr.bf16.mxu0 0
    %5279 = vmatpush1.bf16.msra.mxu0 %v5241
    %5280 = vmatprep.subr.bf16.mxu0 0
    %5281 = vmatpush1.bf16.msra.mxu0 %v5240
    %5282 = vmatprep.subr.bf16.mxu0 0
    %5283 = vmatpush1.bf16.msra.mxu0 %v5239
    %5284 = vmatprep.subr.bf16.mxu0 0
    %5285 = vmatpush2.bf16.msra.mxu0 0
    %5286 = vmatprep.subr.bf16.mxu0 0
    %5287 = vmatpush2.bf16.msra.mxu0 0
    %5288 = vmatprep.subr.bf16.mxu0 0
    %5289 = vmatpush2.bf16.msra.mxu0 0
    %5290 = vmatprep.subr.bf16.mxu0 0
    %5291 = vmatpush2.bf16.msra.mxu0 0
    %5292 = vmatprep.subr.bf16.mxu0 0
    %5293 = vmatpush2.bf16.msra.mxu0 0
    %5294 = vmatprep.subr.bf16.mxu0 0
    %5295 = vmatpush2.bf16.msra.mxu0 0
    %5296 = vmatprep.subr.bf16.mxu0 0
    %5297 = vmatpush2.bf16.msra.mxu0 0
    %5298 = vmatprep.subr.bf16.mxu0 0
    %5299 = vmatpush2.bf16.msra.mxu0 0
    %5300 = vmatprep.mubr.bf16.mxu0 0
    %5301 = vmatmul.mubr.bf16.gmra.mxu0 %v5248
    %v5302 = vpop.f32.mrf.mxu0
    %v5303 = vadd.f32 0.0, %v5302
    %v5304 = vpop.f32.mrf.mxu0
    %v5305 = vpop.f32.mrf.mxu0
    %v5306 = vadd.f32 0.0, %v5305
    %v5307 = vpop.f32.mrf.mxu0
    %5308 = vmatprep.mubr.bf16.mxu0 0
    %5309 = vmatmul.mubr.bf16.gmra.mxu0 %v5251
    %v5310 = vpop.f32.mrf.mxu0
    %v5311 = vadd.f32 0.0, %v5310
    %v5312 = vpop.f32.mrf.mxu0
    %v5313 = vpop.f32.mrf.mxu0
    %v5314 = vadd.f32 0.0, %v5313
    %v5315 = vpop.f32.mrf.mxu0
    %5316 = vmatprep.mubr.bf16.mxu0 0
    %5317 = vmatmul.mubr.bf16.gmra.mxu0 %v5254
    %v5318 = vpop.f32.mrf.mxu0
    %v5319 = vadd.f32 0.0, %v5318
    %v5320 = vpop.f32.mrf.mxu0
    %v5321 = vpop.f32.mrf.mxu0
    %v5322 = vadd.f32 0.0, %v5321
    %v5323 = vpop.f32.mrf.mxu0
    %5324 = vmatprep.mubr.bf16.mxu0 0
    %5325 = vmatmul.mubr.bf16.gmra.mxu0 %v5257
    %v5326 = vpop.f32.mrf.mxu0
    %v5327 = vadd.f32 0.0, %v5326
    %v5328 = vpop.f32.mrf.mxu0
    %v5329 = vpop.f32.mrf.mxu0
    %v5330 = vadd.f32 0.0, %v5329
    %v5331 = vpop.f32.mrf.mxu0
    %5332 = vmatprep.mubr.bf16.mxu0 0
    %5333 = vmatmul.mubr.bf16.gmra.mxu0 %v5260
    %v5334 = vpop.f32.mrf.mxu0
    %v5335 = vadd.f32 0.0, %v5334
    %v5336 = vpop.f32.mrf.mxu0
    %v5337 = vpop.f32.mrf.mxu0
    %v5338 = vadd.f32 0.0, %v5337
    %v5339 = vpop.f32.mrf.mxu0
    %5340 = vmatprep.mubr.bf16.mxu0 0
    %5341 = vmatmul.mubr.bf16.gmra.mxu0 %v5263
    %v5342 = vpop.f32.mrf.mxu0
    %v5343 = vadd.f32 0.0, %v5342
    %v5344 = vpop.f32.mrf.mxu0
    %v5345 = vpop.f32.mrf.mxu0
    %v5346 = vadd.f32 0.0, %v5345
    %v5347 = vpop.f32.mrf.mxu0
    %5348 = vmatprep.mubr.bf16.mxu0 0
    %5349 = vmatmul.mubr.bf16.gmra.mxu0 %v5266
    %v5350 = vpop.f32.mrf.mxu0
    %v5351 = vadd.f32 0.0, %v5350
    %v5352 = vpop.f32.mrf.mxu0
    %v5353 = vpop.f32.mrf.mxu0
    %v5354 = vadd.f32 0.0, %v5353
    %v5355 = vpop.f32.mrf.mxu0
    %5356 = vdwg.mxu0
    %v5357 = vadd.f32 %v5165, %v5303
    %v5358 = vadd.f32 %v5166, %v5306
    %v5359 = vadd.f32 %v5167, %v5311
    %v5360 = vadd.f32 %v5168, %v5314
    %v5361 = vadd.f32 %v5169, %v5319
    %v5362 = vadd.f32 %v5170, %v5322
    %v5363 = vadd.f32 %v5171, %v5327
    %v5364 = vadd.f32 %v5172, %v5330
    %v5365 = vadd.f32 %v5173, %v5335
    %v5366 = vadd.f32 %v5174, %v5338
    %v5367 = vadd.f32 %v5175, %v5343
    %v5368 = vadd.f32 %v5176, %v5346
    %v5369 = vadd.f32 %v5177, %v5351
    %v5370 = vadd.f32 %v5178, %v5354
    %s5371 = scalar_lea.vmem %s8, 160
    %v5372 = vld [vmem:[%s5371] sm:$0xf]
    %v5373 = vld [vmem:[%s5371 + $0x4] sm:$0xf]
    %v5374 = vld [vmem:[%s5371 + $0x8] sm:$0xf]
    %v5375 = vld [vmem:[%s5371 + $0xc] sm:$0xf]
    %v5376 = vld [vmem:[%s5371 + $0x10] sm:$0xf]
    %v5377 = vld [vmem:[%s5371 + $0x14] sm:$0xf]
    %v5378 = vld [vmem:[%s5371 + $0x18] sm:$0xf]
    %v5379 = vld [vmem:[%s5371 + $0x1c] sm:$0xf]
    %v5382 = vunpack.c.l.b16 %v4985
    %v5383 = vunpack.c.l.b16 %v4986
    %v5384 = vpack.c.b16 %v5383, %v5382
    %v5393 = vunpack.c.l.b16 %v5372
    %v5394 = vunpack.c.l.b16 %v5373
    %v5395 = vunpack.c.l.b16 %v5374
    %v5396 = vunpack.c.l.b16 %v5375
    %v5397 = vunpack.c.l.b16 %v5376
    %v5398 = vunpack.c.l.b16 %v5377
    %v5399 = vunpack.c.l.b16 %v5378
    %v5400 = vunpack.c.l.b16 %v5379
    %v5401 = vpack.c.b16 %v5394, %v5393
    %v5402 = vpack.c.b16 %v5396, %v5395
    %v5403 = vpack.c.b16 %v5398, %v5397
    %v5404 = vpack.c.b16 %v5400, %v5399
    %v5410 = vsel %vm4529, %v5384, 0
    %5412 = vmatprep.subr.bf16.mxu0 0
    %5413 = vmatpush1.bf16.msra.mxu0 0
    %5414 = vmatprep.subr.bf16.mxu0 0
    %5415 = vmatpush1.bf16.msra.mxu0 0
    %5416 = vmatprep.subr.bf16.mxu0 0
    %5417 = vmatpush1.bf16.msra.mxu0 0
    %5418 = vmatprep.subr.bf16.mxu0 0
    %5419 = vmatpush1.bf16.msra.mxu0 0
    %5420 = vmatprep.subr.bf16.mxu0 0
    %5421 = vmatpush1.bf16.msra.mxu0 %v5404
    %5422 = vmatprep.subr.bf16.mxu0 0
    %5423 = vmatpush1.bf16.msra.mxu0 %v5403
    %5424 = vmatprep.subr.bf16.mxu0 0
    %5425 = vmatpush1.bf16.msra.mxu0 %v5402
    %5426 = vmatprep.subr.bf16.mxu0 0
    %5427 = vmatpush1.bf16.msra.mxu0 %v5401
    %5428 = vmatprep.subr.bf16.mxu0 0
    %5429 = vmatpush2.bf16.msra.mxu0 0
    %5430 = vmatprep.subr.bf16.mxu0 0
    %5431 = vmatpush2.bf16.msra.mxu0 0
    %5432 = vmatprep.subr.bf16.mxu0 0
    %5433 = vmatpush2.bf16.msra.mxu0 0
    %5434 = vmatprep.subr.bf16.mxu0 0
    %5435 = vmatpush2.bf16.msra.mxu0 0
    %5436 = vmatprep.subr.bf16.mxu0 0
    %5437 = vmatpush2.bf16.msra.mxu0 0
    %5438 = vmatprep.subr.bf16.mxu0 0
    %5439 = vmatpush2.bf16.msra.mxu0 0
    %5440 = vmatprep.subr.bf16.mxu0 0
    %5441 = vmatpush2.bf16.msra.mxu0 0
    %5442 = vmatprep.subr.bf16.mxu0 0
    %5443 = vmatpush2.bf16.msra.mxu0 0
    %5444 = vmatprep.mubr.bf16.mxu0 0
    %5445 = vmatmul.mubr.bf16.gmra.mxu0 %v5059
    %v5446 = vpop.f32.mrf.mxu0
    %v5447 = vadd.f32 0.0, %v5446
    %v5448 = vpop.f32.mrf.mxu0
    %v5449 = vpop.f32.mrf.mxu0
    %v5450 = vadd.f32 0.0, %v5449
    %v5451 = vpop.f32.mrf.mxu0
    %5452 = vmatprep.mubr.bf16.mxu0 0
    %5453 = vmatmul.mubr.bf16.gmra.mxu0 %v5062
    %v5454 = vpop.f32.mrf.mxu0
    %v5455 = vadd.f32 0.0, %v5454
    %v5456 = vpop.f32.mrf.mxu0
    %v5457 = vpop.f32.mrf.mxu0
    %v5458 = vadd.f32 0.0, %v5457
    %v5459 = vpop.f32.mrf.mxu0
    %5460 = vmatprep.mubr.bf16.mxu0 0
    %5461 = vmatmul.mubr.bf16.gmra.mxu0 %v5065
    %v5462 = vpop.f32.mrf.mxu0
    %v5463 = vadd.f32 0.0, %v5462
    %v5464 = vpop.f32.mrf.mxu0
    %v5465 = vpop.f32.mrf.mxu0
    %v5466 = vadd.f32 0.0, %v5465
    %v5467 = vpop.f32.mrf.mxu0
    %5468 = vmatprep.mubr.bf16.mxu0 0
    %5469 = vmatmul.mubr.bf16.gmra.mxu0 %v5068
    %v5470 = vpop.f32.mrf.mxu0
    %v5471 = vadd.f32 0.0, %v5470
    %v5472 = vpop.f32.mrf.mxu0
    %v5473 = vpop.f32.mrf.mxu0
    %v5474 = vadd.f32 0.0, %v5473
    %v5475 = vpop.f32.mrf.mxu0
    %5476 = vmatprep.mubr.bf16.mxu0 0
    %5477 = vmatmul.mubr.bf16.gmra.mxu0 %v5071
    %v5478 = vpop.f32.mrf.mxu0
    %v5479 = vadd.f32 0.0, %v5478
    %v5480 = vpop.f32.mrf.mxu0
    %v5481 = vpop.f32.mrf.mxu0
    %v5482 = vadd.f32 0.0, %v5481
    %v5483 = vpop.f32.mrf.mxu0
    %5484 = vmatprep.mubr.bf16.mxu0 0
    %5485 = vmatmul.mubr.bf16.gmra.mxu0 %v5074
    %v5486 = vpop.f32.mrf.mxu0
    %v5487 = vadd.f32 0.0, %v5486
    %v5488 = vpop.f32.mrf.mxu0
    %v5489 = vpop.f32.mrf.mxu0
    %v5490 = vadd.f32 0.0, %v5489
    %v5491 = vpop.f32.mrf.mxu0
    %5492 = vmatprep.mubr.bf16.mxu0 0
    %5493 = vmatmul.mubr.bf16.gmra.mxu0 %v5410
    %v5494 = vpop.f32.mrf.mxu0
    %v5495 = vadd.f32 0.0, %v5494
    %v5496 = vpop.f32.mrf.mxu0
    %v5497 = vpop.f32.mrf.mxu0
    %v5498 = vadd.f32 0.0, %v5497
    %v5499 = vpop.f32.mrf.mxu0
    %5500 = vdwg.mxu0
    %v5501 = vadd.f32 %v5357, %v5447
    %v5502 = vadd.f32 %v5358, %v5450
    %v5503 = vadd.f32 %v5359, %v5455
    %v5504 = vadd.f32 %v5360, %v5458
    %v5505 = vadd.f32 %v5361, %v5463
    %v5506 = vadd.f32 %v5362, %v5466
    %v5507 = vadd.f32 %v5363, %v5471
    %v5508 = vadd.f32 %v5364, %v5474
    %v5509 = vadd.f32 %v5365, %v5479
    %v5510 = vadd.f32 %v5366, %v5482
    %v5511 = vadd.f32 %v5367, %v5487
    %v5512 = vadd.f32 %v5368, %v5490
    %v5513 = vadd.f32 %v5369, %v5495
    %v5514 = vadd.f32 %v5370, %v5498
    %s5515 = sadd.s32 %s4419, 2
    %s5516 = smul.u32 %s5515, 30
    %s5517 = smul.addr %s5516, 4
    %s5518 = scalar_lea.vmem [#allocation3], %s5517
    %v5519 = vld [vmem:[%s5518] sm:$0xf]
    %v5520 = vld [vmem:[%s5518 + $0x4] sm:$0xf]
    %v5521 = vld [vmem:[%s5518 + $0x8] sm:$0xf]
    %v5522 = vld [vmem:[%s5518 + $0xc] sm:$0xf]
    %v5523 = vld [vmem:[%s5518 + $0x10] sm:$0xf]
    %v5524 = vld [vmem:[%s5518 + $0x14] sm:$0xf]
    %v5525 = vld [vmem:[%s5518 + $0x18] sm:$0xf]
    %v5526 = vld [vmem:[%s5518 + $0x1c] sm:$0xf]
    %v5527 = vld [vmem:[%s5518 + $0x20] sm:$0xf]
    %v5528 = vld [vmem:[%s5518 + $0x24] sm:$0xf]
    %v5529 = vld [vmem:[%s5518 + $0x28] sm:$0xf]
    %v5530 = vld [vmem:[%s5518 + $0x2c] sm:$0xf]
    %v5531 = vld [vmem:[%s5518 + $0x30] sm:$0xf]
    %v5532 = vld [vmem:[%s5518 + $0x34] sm:$0xf]
    %v5533 = vld [vmem:[%s5518 + $0x38] sm:$0xf]
    %v5534 = vld [vmem:[%s5518 + $0x3c] sm:$0xf]
    %v5535 = vld [vmem:[%s5518 + $0x40] sm:$0xf]
    %v5536 = vld [vmem:[%s5518 + $0x44] sm:$0xf]
    %v5537 = vld [vmem:[%s5518 + $0x48] sm:$0xf]
    %v5538 = vld [vmem:[%s5518 + $0x4c] sm:$0xf]
    %v5539 = vld [vmem:[%s5518 + $0x50] sm:$0xf]
    %v5540 = vld [vmem:[%s5518 + $0x54] sm:$0xf]
    %v5541 = vld [vmem:[%s5518 + $0x58] sm:$0xf]
    %v5542 = vld [vmem:[%s5518 + $0x5c] sm:$0xf]
    %v5543 = vld [vmem:[%s5518 + $0x60] sm:$0xf]
    %v5544 = vld [vmem:[%s5518 + $0x64] sm:$0xf]
    %v5545 = vld [vmem:[%s5518 + $0x68] sm:$0xf]
    %v5546 = vld [vmem:[%s5518 + $0x6c] sm:$0xf]
    %v5547 = vld [vmem:[%s5518 + $0x70] sm:$0xf]
    %v5548 = vld [vmem:[%s5518 + $0x74] sm:$0xf]
    %s5549 = scalar_lea.vmem %s8, 192
    %v5550 = vld [vmem:[%s5549] sm:$0xf]
    %v5551 = vld [vmem:[%s5549 + $0x4] sm:$0xf]
    %v5552 = vld [vmem:[%s5549 + $0x8] sm:$0xf]
    %v5553 = vld [vmem:[%s5549 + $0xc] sm:$0xf]
    %v5554 = vld [vmem:[%s5549 + $0x10] sm:$0xf]
    %v5555 = vld [vmem:[%s5549 + $0x14] sm:$0xf]
    %v5556 = vld [vmem:[%s5549 + $0x18] sm:$0xf]
    %v5557 = vld [vmem:[%s5549 + $0x1c] sm:$0xf]
    %v5572 = vunpack.c.l.b16 %v5519
    %v5573 = vunpack.c.l.b16 %v5520
    %v5574 = vunpack.c.l.b16 %v5523
    %v5575 = vunpack.c.l.b16 %v5524
    %v5576 = vunpack.c.l.b16 %v5527
    %v5577 = vunpack.c.l.b16 %v5528
    %v5578 = vunpack.c.l.b16 %v5531
    %v5579 = vunpack.c.l.b16 %v5532
    %v5580 = vunpack.c.l.b16 %v5535
    %v5581 = vunpack.c.l.b16 %v5536
    %v5582 = vunpack.c.l.b16 %v5539
    %v5583 = vunpack.c.l.b16 %v5540
    %v5584 = vunpack.c.l.b16 %v5543
    %v5585 = vunpack.c.l.b16 %v5544
    %v5586 = vpack.c.b16 %v5573, %v5572
    %v5587 = vpack.c.b16 %v5575, %v5574
    %v5588 = vpack.c.b16 %v5577, %v5576
    %v5589 = vpack.c.b16 %v5579, %v5578
    %v5590 = vpack.c.b16 %v5581, %v5580
    %v5591 = vpack.c.b16 %v5583, %v5582
    %v5592 = vpack.c.b16 %v5585, %v5584
    %v5601 = vunpack.c.l.b16 %v5550
    %v5602 = vunpack.c.l.b16 %v5551
    %v5603 = vunpack.c.l.b16 %v5552
    %v5604 = vunpack.c.l.b16 %v5553
    %v5605 = vunpack.c.l.b16 %v5554
    %v5606 = vunpack.c.l.b16 %v5555
    %v5607 = vunpack.c.l.b16 %v5556
    %v5608 = vunpack.c.l.b16 %v5557
    %v5609 = vpack.c.b16 %v5602, %v5601
    %v5610 = vpack.c.b16 %v5604, %v5603
    %v5611 = vpack.c.b16 %v5606, %v5605
    %v5612 = vpack.c.b16 %v5608, %v5607
    %v5618 = vsel %vm4529, %v5586, 0
    %v5621 = vsel %vm4529, %v5587, 0
    %v5624 = vsel %vm4529, %v5588, 0
    %v5627 = vsel %vm4529, %v5589, 0
    %v5630 = vsel %vm4529, %v5590, 0
    %v5633 = vsel %vm4529, %v5591, 0
    %v5636 = vsel %vm4529, %v5592, 0
    %5638 = vmatprep.subr.bf16.mxu0 0
    %5639 = vmatpush1.bf16.msra.mxu0 0
    %5640 = vmatprep.subr.bf16.mxu0 0
    %5641 = vmatpush1.bf16.msra.mxu0 0
    %5642 = vmatprep.subr.bf16.mxu0 0
    %5643 = vmatpush1.bf16.msra.mxu0 0
    %5644 = vmatprep.subr.bf16.mxu0 0
    %5645 = vmatpush1.bf16.msra.mxu0 0
    %5646 = vmatprep.subr.bf16.mxu0 0
    %5647 = vmatpush1.bf16.msra.mxu0 %v5612
    %5648 = vmatprep.subr.bf16.mxu0 0
    %5649 = vmatpush1.bf16.msra.mxu0 %v5611
    %5650 = vmatprep.subr.bf16.mxu0 0
    %5651 = vmatpush1.bf16.msra.mxu0 %v5610
    %5652 = vmatprep.subr.bf16.mxu0 0
    %5653 = vmatpush1.bf16.msra.mxu0 %v5609
    %5654 = vmatprep.subr.bf16.mxu0 0
    %5655 = vmatpush2.bf16.msra.mxu0 0
    %5656 = vmatprep.subr.bf16.mxu0 0
    %5657 = vmatpush2.bf16.msra.mxu0 0
    %5658 = vmatprep.subr.bf16.mxu0 0
    %5659 = vmatpush2.bf16.msra.mxu0 0
    %5660 = vmatprep.subr.bf16.mxu0 0
    %5661 = vmatpush2.bf16.msra.mxu0 0
    %5662 = vmatprep.subr.bf16.mxu0 0
    %5663 = vmatpush2.bf16.msra.mxu0 0
    %5664 = vmatprep.subr.bf16.mxu0 0
    %5665 = vmatpush2.bf16.msra.mxu0 0
    %5666 = vmatprep.subr.bf16.mxu0 0
    %5667 = vmatpush2.bf16.msra.mxu0 0
    %5668 = vmatprep.subr.bf16.mxu0 0
    %5669 = vmatpush2.bf16.msra.mxu0 0
    %5670 = vmatprep.mubr.bf16.mxu0 0
    %5671 = vmatmul.mubr.bf16.gmra.mxu0 %v5618
    %v5672 = vpop.f32.mrf.mxu0
    %v5673 = vadd.f32 0.0, %v5672
    %v5674 = vpop.f32.mrf.mxu0
    %v5675 = vpop.f32.mrf.mxu0
    %v5676 = vadd.f32 0.0, %v5675
    %v5677 = vpop.f32.mrf.mxu0
    %5678 = vmatprep.mubr.bf16.mxu0 0
    %5679 = vmatmul.mubr.bf16.gmra.mxu0 %v5621
    %v5680 = vpop.f32.mrf.mxu0
    %v5681 = vadd.f32 0.0, %v5680
    %v5682 = vpop.f32.mrf.mxu0
    %v5683 = vpop.f32.mrf.mxu0
    %v5684 = vadd.f32 0.0, %v5683
    %v5685 = vpop.f32.mrf.mxu0
    %5686 = vmatprep.mubr.bf16.mxu0 0
    %5687 = vmatmul.mubr.bf16.gmra.mxu0 %v5624
    %v5688 = vpop.f32.mrf.mxu0
    %v5689 = vadd.f32 0.0, %v5688
    %v5690 = vpop.f32.mrf.mxu0
    %v5691 = vpop.f32.mrf.mxu0
    %v5692 = vadd.f32 0.0, %v5691
    %v5693 = vpop.f32.mrf.mxu0
    %5694 = vmatprep.mubr.bf16.mxu0 0
    %5695 = vmatmul.mubr.bf16.gmra.mxu0 %v5627
    %v5696 = vpop.f32.mrf.mxu0
    %v5697 = vadd.f32 0.0, %v5696
    %v5698 = vpop.f32.mrf.mxu0
    %v5699 = vpop.f32.mrf.mxu0
    %v5700 = vadd.f32 0.0, %v5699
    %v5701 = vpop.f32.mrf.mxu0
    %5702 = vmatprep.mubr.bf16.mxu0 0
    %5703 = vmatmul.mubr.bf16.gmra.mxu0 %v5630
    %v5704 = vpop.f32.mrf.mxu0
    %v5705 = vadd.f32 0.0, %v5704
    %v5706 = vpop.f32.mrf.mxu0
    %v5707 = vpop.f32.mrf.mxu0
    %v5708 = vadd.f32 0.0, %v5707
    %v5709 = vpop.f32.mrf.mxu0
    %5710 = vmatprep.mubr.bf16.mxu0 0
    %5711 = vmatmul.mubr.bf16.gmra.mxu0 %v5633
    %v5712 = vpop.f32.mrf.mxu0
    %v5713 = vadd.f32 0.0, %v5712
    %v5714 = vpop.f32.mrf.mxu0
    %v5715 = vpop.f32.mrf.mxu0
    %v5716 = vadd.f32 0.0, %v5715
    %v5717 = vpop.f32.mrf.mxu0
    %5718 = vmatprep.mubr.bf16.mxu0 0
    %5719 = vmatmul.mubr.bf16.gmra.mxu0 %v5636
    %v5720 = vpop.f32.mrf.mxu0
    %v5721 = vadd.f32 0.0, %v5720
    %v5722 = vpop.f32.mrf.mxu0
    %v5723 = vpop.f32.mrf.mxu0
    %v5724 = vadd.f32 0.0, %v5723
    %v5725 = vpop.f32.mrf.mxu0
    %5726 = vdwg.mxu0
    %v5727 = vadd.f32 %v5501, %v5673
    %v5728 = vadd.f32 %v5502, %v5676
    %v5729 = vadd.f32 %v5503, %v5681
    %v5730 = vadd.f32 %v5504, %v5684
    %v5731 = vadd.f32 %v5505, %v5689
    %v5732 = vadd.f32 %v5506, %v5692
    %v5733 = vadd.f32 %v5507, %v5697
    %v5734 = vadd.f32 %v5508, %v5700
    %v5735 = vadd.f32 %v5509, %v5705
    %v5736 = vadd.f32 %v5510, %v5708
    %v5737 = vadd.f32 %v5511, %v5713
    %v5738 = vadd.f32 %v5512, %v5716
    %v5739 = vadd.f32 %v5513, %v5721
    %v5740 = vadd.f32 %v5514, %v5724
    %s5741 = scalar_lea.vmem %s8, 224
    %v5742 = vld [vmem:[%s5741] sm:$0xf]
    %v5743 = vld [vmem:[%s5741 + $0x4] sm:$0xf]
    %v5744 = vld [vmem:[%s5741 + $0x8] sm:$0xf]
    %v5745 = vld [vmem:[%s5741 + $0xc] sm:$0xf]
    %v5746 = vld [vmem:[%s5741 + $0x10] sm:$0xf]
    %v5747 = vld [vmem:[%s5741 + $0x14] sm:$0xf]
    %v5748 = vld [vmem:[%s5741 + $0x18] sm:$0xf]
    %v5749 = vld [vmem:[%s5741 + $0x1c] sm:$0xf]
    %v5764 = vunpack.c.l.b16 %v5521
    %v5765 = vunpack.c.l.b16 %v5522
    %v5766 = vunpack.c.l.b16 %v5525
    %v5767 = vunpack.c.l.b16 %v5526
    %v5768 = vunpack.c.l.b16 %v5529
    %v5769 = vunpack.c.l.b16 %v5530
    %v5770 = vunpack.c.l.b16 %v5533
    %v5771 = vunpack.c.l.b16 %v5534
    %v5772 = vunpack.c.l.b16 %v5537
    %v5773 = vunpack.c.l.b16 %v5538
    %v5774 = vunpack.c.l.b16 %v5541
    %v5775 = vunpack.c.l.b16 %v5542
    %v5776 = vunpack.c.l.b16 %v5545
    %v5777 = vunpack.c.l.b16 %v5546
    %v5778 = vpack.c.b16 %v5765, %v5764
    %v5779 = vpack.c.b16 %v5767, %v5766
    %v5780 = vpack.c.b16 %v5769, %v5768
    %v5781 = vpack.c.b16 %v5771, %v5770
    %v5782 = vpack.c.b16 %v5773, %v5772
    %v5783 = vpack.c.b16 %v5775, %v5774
    %v5784 = vpack.c.b16 %v5777, %v5776
    %v5793 = vunpack.c.l.b16 %v5742
    %v5794 = vunpack.c.l.b16 %v5743
    %v5795 = vunpack.c.l.b16 %v5744
    %v5796 = vunpack.c.l.b16 %v5745
    %v5797 = vunpack.c.l.b16 %v5746
    %v5798 = vunpack.c.l.b16 %v5747
    %v5799 = vunpack.c.l.b16 %v5748
    %v5800 = vunpack.c.l.b16 %v5749
    %v5801 = vpack.c.b16 %v5794, %v5793
    %v5802 = vpack.c.b16 %v5796, %v5795
    %v5803 = vpack.c.b16 %v5798, %v5797
    %v5804 = vpack.c.b16 %v5800, %v5799
    %v5810 = vsel %vm4529, %v5778, 0
    %v5813 = vsel %vm4529, %v5779, 0
    %v5816 = vsel %vm4529, %v5780, 0
    %v5819 = vsel %vm4529, %v5781, 0
    %v5822 = vsel %vm4529, %v5782, 0
    %v5825 = vsel %vm4529, %v5783, 0
    %v5828 = vsel %vm4529, %v5784, 0
    %5830 = vmatprep.subr.bf16.mxu0 0
    %5831 = vmatpush1.bf16.msra.mxu0 0
    %5832 = vmatprep.subr.bf16.mxu0 0
    %5833 = vmatpush1.bf16.msra.mxu0 0
    %5834 = vmatprep.subr.bf16.mxu0 0
    %5835 = vmatpush1.bf16.msra.mxu0 0
    %5836 = vmatprep.subr.bf16.mxu0 0
    %5837 = vmatpush1.bf16.msra.mxu0 0
    %5838 = vmatprep.subr.bf16.mxu0 0
    %5839 = vmatpush1.bf16.msra.mxu0 %v5804
    %5840 = vmatprep.subr.bf16.mxu0 0
    %5841 = vmatpush1.bf16.msra.mxu0 %v5803
    %5842 = vmatprep.subr.bf16.mxu0 0
    %5843 = vmatpush1.bf16.msra.mxu0 %v5802
    %5844 = vmatprep.subr.bf16.mxu0 0
    %5845 = vmatpush1.bf16.msra.mxu0 %v5801
    %5846 = vmatprep.subr.bf16.mxu0 0
    %5847 = vmatpush2.bf16.msra.mxu0 0
    %5848 = vmatprep.subr.bf16.mxu0 0
    %5849 = vmatpush2.bf16.msra.mxu0 0
    %5850 = vmatprep.subr.bf16.mxu0 0
    %5851 = vmatpush2.bf16.msra.mxu0 0
    %5852 = vmatprep.subr.bf16.mxu0 0
    %5853 = vmatpush2.bf16.msra.mxu0 0
    %5854 = vmatprep.subr.bf16.mxu0 0
    %5855 = vmatpush2.bf16.msra.mxu0 0
    %5856 = vmatprep.subr.bf16.mxu0 0
    %5857 = vmatpush2.bf16.msra.mxu0 0
    %5858 = vmatprep.subr.bf16.mxu0 0
    %5859 = vmatpush2.bf16.msra.mxu0 0
    %5860 = vmatprep.subr.bf16.mxu0 0
    %5861 = vmatpush2.bf16.msra.mxu0 0
    %5862 = vmatprep.mubr.bf16.mxu0 0
    %5863 = vmatmul.mubr.bf16.gmra.mxu0 %v5810
    %v5864 = vpop.f32.mrf.mxu0
    %v5865 = vadd.f32 0.0, %v5864
    %v5866 = vpop.f32.mrf.mxu0
    %v5867 = vpop.f32.mrf.mxu0
    %v5868 = vadd.f32 0.0, %v5867
    %v5869 = vpop.f32.mrf.mxu0
    %5870 = vmatprep.mubr.bf16.mxu0 0
    %5871 = vmatmul.mubr.bf16.gmra.mxu0 %v5813
    %v5872 = vpop.f32.mrf.mxu0
    %v5873 = vadd.f32 0.0, %v5872
    %v5874 = vpop.f32.mrf.mxu0
    %v5875 = vpop.f32.mrf.mxu0
    %v5876 = vadd.f32 0.0, %v5875
    %v5877 = vpop.f32.mrf.mxu0
    %5878 = vmatprep.mubr.bf16.mxu0 0
    %5879 = vmatmul.mubr.bf16.gmra.mxu0 %v5816
    %v5880 = vpop.f32.mrf.mxu0
    %v5881 = vadd.f32 0.0, %v5880
    %v5882 = vpop.f32.mrf.mxu0
    %v5883 = vpop.f32.mrf.mxu0
    %v5884 = vadd.f32 0.0, %v5883
    %v5885 = vpop.f32.mrf.mxu0
    %5886 = vmatprep.mubr.bf16.mxu0 0
    %5887 = vmatmul.mubr.bf16.gmra.mxu0 %v5819
    %v5888 = vpop.f32.mrf.mxu0
    %v5889 = vadd.f32 0.0, %v5888
    %v5890 = vpop.f32.mrf.mxu0
    %v5891 = vpop.f32.mrf.mxu0
    %v5892 = vadd.f32 0.0, %v5891
    %v5893 = vpop.f32.mrf.mxu0
    %5894 = vmatprep.mubr.bf16.mxu0 0
    %5895 = vmatmul.mubr.bf16.gmra.mxu0 %v5822
    %v5896 = vpop.f32.mrf.mxu0
    %v5897 = vadd.f32 0.0, %v5896
    %v5898 = vpop.f32.mrf.mxu0
    %v5899 = vpop.f32.mrf.mxu0
    %v5900 = vadd.f32 0.0, %v5899
    %v5901 = vpop.f32.mrf.mxu0
    %5902 = vmatprep.mubr.bf16.mxu0 0
    %5903 = vmatmul.mubr.bf16.gmra.mxu0 %v5825
    %v5904 = vpop.f32.mrf.mxu0
    %v5905 = vadd.f32 0.0, %v5904
    %v5906 = vpop.f32.mrf.mxu0
    %v5907 = vpop.f32.mrf.mxu0
    %v5908 = vadd.f32 0.0, %v5907
    %v5909 = vpop.f32.mrf.mxu0
    %5910 = vmatprep.mubr.bf16.mxu0 0
    %5911 = vmatmul.mubr.bf16.gmra.mxu0 %v5828
    %v5912 = vpop.f32.mrf.mxu0
    %v5913 = vadd.f32 0.0, %v5912
    %v5914 = vpop.f32.mrf.mxu0
    %v5915 = vpop.f32.mrf.mxu0
    %v5916 = vadd.f32 0.0, %v5915
    %v5917 = vpop.f32.mrf.mxu0
    %5918 = vdwg.mxu0
    %v5919 = vadd.f32 %v5727, %v5865
    %v5920 = vadd.f32 %v5728, %v5868
    %v5921 = vadd.f32 %v5729, %v5873
    %v5922 = vadd.f32 %v5730, %v5876
    %v5923 = vadd.f32 %v5731, %v5881
    %v5924 = vadd.f32 %v5732, %v5884
    %v5925 = vadd.f32 %v5733, %v5889
    %v5926 = vadd.f32 %v5734, %v5892
    %v5927 = vadd.f32 %v5735, %v5897
    %v5928 = vadd.f32 %v5736, %v5900
    %v5929 = vadd.f32 %v5737, %v5905
    %v5930 = vadd.f32 %v5738, %v5908
    %v5931 = vadd.f32 %v5739, %v5913
    %v5932 = vadd.f32 %v5740, %v5916
    %s5933 = scalar_lea.vmem %s8, 256
    %v5934 = vld [vmem:[%s5933] sm:$0xf]
    %v5935 = vld [vmem:[%s5933 + $0x4] sm:$0xf]
    %v5936 = vld [vmem:[%s5933 + $0x8] sm:$0xf]
    %v5937 = vld [vmem:[%s5933 + $0xc] sm:$0xf]
    %v5938 = vld [vmem:[%s5933 + $0x10] sm:$0xf]
    %v5939 = vld [vmem:[%s5933 + $0x14] sm:$0xf]
    %v5940 = vld [vmem:[%s5933 + $0x18] sm:$0xf]
    %v5941 = vld [vmem:[%s5933 + $0x1c] sm:$0xf]
    %v5944 = vunpack.c.l.b16 %v5547
    %v5945 = vunpack.c.l.b16 %v5548
    %v5946 = vpack.c.b16 %v5945, %v5944
    %v5955 = vunpack.c.l.b16 %v5934
    %v5956 = vunpack.c.l.b16 %v5935
    %v5957 = vunpack.c.l.b16 %v5936
    %v5958 = vunpack.c.l.b16 %v5937
    %v5959 = vunpack.c.l.b16 %v5938
    %v5960 = vunpack.c.l.b16 %v5939
    %v5961 = vunpack.c.l.b16 %v5940
    %v5962 = vunpack.c.l.b16 %v5941
    %v5963 = vpack.c.b16 %v5956, %v5955
    %v5964 = vpack.c.b16 %v5958, %v5957
    %v5965 = vpack.c.b16 %v5960, %v5959
    %v5966 = vpack.c.b16 %v5962, %v5961
    %v5972 = vsel %vm4529, %v5946, 0
    %5974 = vmatprep.subr.bf16.mxu0 0
    %5975 = vmatpush1.bf16.msra.mxu0 0
    %5976 = vmatprep.subr.bf16.mxu0 0
    %5977 = vmatpush1.bf16.msra.mxu0 0
    %5978 = vmatprep.subr.bf16.mxu0 0
    %5979 = vmatpush1.bf16.msra.mxu0 0
    %5980 = vmatprep.subr.bf16.mxu0 0
    %5981 = vmatpush1.bf16.msra.mxu0 0
    %5982 = vmatprep.subr.bf16.mxu0 0
    %5983 = vmatpush1.bf16.msra.mxu0 %v5966
    %5984 = vmatprep.subr.bf16.mxu0 0
    %5985 = vmatpush1.bf16.msra.mxu0 %v5965
    %5986 = vmatprep.subr.bf16.mxu0 0
    %5987 = vmatpush1.bf16.msra.mxu0 %v5964
    %5988 = vmatprep.subr.bf16.mxu0 0
    %5989 = vmatpush1.bf16.msra.mxu0 %v5963
    %5990 = vmatprep.subr.bf16.mxu0 0
    %5991 = vmatpush2.bf16.msra.mxu0 0
    %5992 = vmatprep.subr.bf16.mxu0 0
    %5993 = vmatpush2.bf16.msra.mxu0 0
    %5994 = vmatprep.subr.bf16.mxu0 0
    %5995 = vmatpush2.bf16.msra.mxu0 0
    %5996 = vmatprep.subr.bf16.mxu0 0
    %5997 = vmatpush2.bf16.msra.mxu0 0
    %5998 = vmatprep.subr.bf16.mxu0 0
    %5999 = vmatpush2.bf16.msra.mxu0 0
    %6000 = vmatprep.subr.bf16.mxu0 0
    %6001 = vmatpush2.bf16.msra.mxu0 0
    %6002 = vmatprep.subr.bf16.mxu0 0
    %6003 = vmatpush2.bf16.msra.mxu0 0
    %6004 = vmatprep.subr.bf16.mxu0 0
    %6005 = vmatpush2.bf16.msra.mxu0 0
    %6006 = vmatprep.mubr.bf16.mxu0 0
    %6007 = vmatmul.mubr.bf16.gmra.mxu0 %v5621
    %v6008 = vpop.f32.mrf.mxu0
    %v6009 = vadd.f32 0.0, %v6008
    %v6010 = vpop.f32.mrf.mxu0
    %v6011 = vpop.f32.mrf.mxu0
    %v6012 = vadd.f32 0.0, %v6011
    %v6013 = vpop.f32.mrf.mxu0
    %6014 = vmatprep.mubr.bf16.mxu0 0
    %6015 = vmatmul.mubr.bf16.gmra.mxu0 %v5624
    %v6016 = vpop.f32.mrf.mxu0
    %v6017 = vadd.f32 0.0, %v6016
    %v6018 = vpop.f32.mrf.mxu0
    %v6019 = vpop.f32.mrf.mxu0
    %v6020 = vadd.f32 0.0, %v6019
    %v6021 = vpop.f32.mrf.mxu0
    %6022 = vmatprep.mubr.bf16.mxu0 0
    %6023 = vmatmul.mubr.bf16.gmra.mxu0 %v5627
    %v6024 = vpop.f32.mrf.mxu0
    %v6025 = vadd.f32 0.0, %v6024
    %v6026 = vpop.f32.mrf.mxu0
    %v6027 = vpop.f32.mrf.mxu0
    %v6028 = vadd.f32 0.0, %v6027
    %v6029 = vpop.f32.mrf.mxu0
    %6030 = vmatprep.mubr.bf16.mxu0 0
    %6031 = vmatmul.mubr.bf16.gmra.mxu0 %v5630
    %v6032 = vpop.f32.mrf.mxu0
    %v6033 = vadd.f32 0.0, %v6032
    %v6034 = vpop.f32.mrf.mxu0
    %v6035 = vpop.f32.mrf.mxu0
    %v6036 = vadd.f32 0.0, %v6035
    %v6037 = vpop.f32.mrf.mxu0
    %6038 = vmatprep.mubr.bf16.mxu0 0
    %6039 = vmatmul.mubr.bf16.gmra.mxu0 %v5633
    %v6040 = vpop.f32.mrf.mxu0
    %v6041 = vadd.f32 0.0, %v6040
    %v6042 = vpop.f32.mrf.mxu0
    %v6043 = vpop.f32.mrf.mxu0
    %v6044 = vadd.f32 0.0, %v6043
    %v6045 = vpop.f32.mrf.mxu0
    %6046 = vmatprep.mubr.bf16.mxu0 0
    %6047 = vmatmul.mubr.bf16.gmra.mxu0 %v5636
    %v6048 = vpop.f32.mrf.mxu0
    %v6049 = vadd.f32 0.0, %v6048
    %v6050 = vpop.f32.mrf.mxu0
    %v6051 = vpop.f32.mrf.mxu0
    %v6052 = vadd.f32 0.0, %v6051
    %v6053 = vpop.f32.mrf.mxu0
    %6054 = vmatprep.mubr.bf16.mxu0 0
    %6055 = vmatmul.mubr.bf16.gmra.mxu0 %v5972
    %v6056 = vpop.f32.mrf.mxu0
    %v6057 = vadd.f32 0.0, %v6056
    %v6058 = vpop.f32.mrf.mxu0
    %v6059 = vpop.f32.mrf.mxu0
    %v6060 = vadd.f32 0.0, %v6059
    %v6061 = vpop.f32.mrf.mxu0
    %6062 = vdwg.mxu0
    %v6063 = vadd.f32 %v5919, %v6009
    %v6064 = vadd.f32 %v5920, %v6012
    %v6065 = vadd.f32 %v5921, %v6017
    %v6066 = vadd.f32 %v5922, %v6020
    %v6067 = vadd.f32 %v5923, %v6025
    %v6068 = vadd.f32 %v5924, %v6028
    %v6069 = vadd.f32 %v5925, %v6033
    %v6070 = vadd.f32 %v5926, %v6036
    %v6071 = vadd.f32 %v5927, %v6041
    %v6072 = vadd.f32 %v5928, %v6044
    %v6073 = vadd.f32 %v5929, %v6049
    %v6074 = vadd.f32 %v5930, %v6052
    %v6075 = vadd.f32 %v5931, %v6057
    %v6076 = vadd.f32 %v5932, %v6060
    %v6078 = vlaneseq
    %v6079 = vshrl.u32 %v6078, 7
    %v6080 = vsub.s32 0, %v6079
    %v6081 = vrot.slane %v4412, %v6080
    %v6083 = vadd.f32 %v6063, %v6081
    %v6084 = vadd.f32 %v6064, %v6081
    %v6085 = vadd.f32 %v6065, %v6081
    %v6086 = vadd.f32 %v6066, %v6081
    %v6087 = vadd.f32 %v6067, %v6081
    %v6088 = vadd.f32 %v6068, %v6081
    %v6089 = vadd.f32 %v6069, %v6081
    %v6090 = vadd.f32 %v6070, %v6081
    %v6091 = vadd.f32 %v6071, %v6081
    %v6092 = vadd.f32 %v6072, %v6081
    %v6093 = vadd.f32 %v6073, %v6081
    %v6094 = vadd.f32 %v6074, %v6081
    %v6095 = vadd.f32 %v6075, %v6081
    %v6096 = vadd.f32 %v6076, %v6081
    %vm6097 = vcmp.ge.f32.partialorder %v6083, 0.0
    %vm6098 = vcmp.ge.f32.partialorder %v6084, 0.0
    %vm6099 = vcmp.ge.f32.partialorder %v6085, 0.0
    %vm6100 = vcmp.ge.f32.partialorder %v6086, 0.0
    %vm6101 = vcmp.ge.f32.partialorder %v6087, 0.0
    %vm6102 = vcmp.ge.f32.partialorder %v6088, 0.0
    %vm6103 = vcmp.ge.f32.partialorder %v6089, 0.0
    %vm6104 = vcmp.ge.f32.partialorder %v6090, 0.0
    %vm6105 = vcmp.ge.f32.partialorder %v6091, 0.0
    %vm6106 = vcmp.ge.f32.partialorder %v6092, 0.0
    %vm6107 = vcmp.ge.f32.partialorder %v6093, 0.0
    %vm6108 = vcmp.ge.f32.partialorder %v6094, 0.0
    %vm6109 = vcmp.ge.f32.partialorder %v6095, 0.0
    %vm6110 = vcmp.ge.f32.partialorder %v6096, 0.0
    %v6111 = vmul.f32 %v6083, 0.01
    %v6112 = vmul.f32 %v6084, 0.01
    %v6113 = vmul.f32 %v6085, 0.01
    %v6114 = vmul.f32 %v6086, 0.01
    %v6115 = vmul.f32 %v6087, 0.01
    %v6116 = vmul.f32 %v6088, 0.01
    %v6117 = vmul.f32 %v6089, 0.01
    %v6118 = vmul.f32 %v6090, 0.01
    %v6119 = vmul.f32 %v6091, 0.01
    %v6120 = vmul.f32 %v6092, 0.01
    %v6121 = vmul.f32 %v6093, 0.01
    %v6122 = vmul.f32 %v6094, 0.01
    %v6123 = vmul.f32 %v6095, 0.01
    %v6124 = vmul.f32 %v6096, 0.01
    %v6125 = vsel %vm6097, %v6083, %v6111
    %v6126 = vsel %vm6098, %v6084, %v6112
    %v6127 = vsel %vm6099, %v6085, %v6113
    %v6128 = vsel %vm6100, %v6086, %v6114
    %v6129 = vsel %vm6101, %v6087, %v6115
    %v6130 = vsel %vm6102, %v6088, %v6116
    %v6131 = vsel %vm6103, %v6089, %v6117
    %v6132 = vsel %vm6104, %v6090, %v6118
    %v6133 = vsel %vm6105, %v6091, %v6119
    %v6134 = vsel %vm6106, %v6092, %v6120
    %v6135 = vsel %vm6107, %v6093, %v6121
    %v6136 = vsel %vm6108, %v6094, %v6122
    %v6137 = vsel %vm6109, %v6095, %v6123
    %v6138 = vsel %vm6110, %v6096, %v6124
    %v6139 = vpack.c.bf16 %v6126, %v6125
    %v6140 = vpack.c.bf16 %v6128, %v6127
    %v6141 = vpack.c.bf16 %v6130, %v6129
    %v6142 = vpack.c.bf16 %v6132, %v6131
    %v6143 = vpack.c.bf16 %v6134, %v6133
    %v6144 = vpack.c.bf16 %v6136, %v6135
    %v6145 = vpack.c.bf16 %v6138, %v6137
    %v6153 = vunpack.c.l.b16 %v6139
    %v6154 = vunpack.c.h.b16 %v6139
    %v6155 = vunpack.c.l.b16 %v6140
    %v6156 = vunpack.c.h.b16 %v6140
    %v6157 = vunpack.c.l.b16 %v6141
    %v6158 = vunpack.c.h.b16 %v6141
    %v6159 = vunpack.c.l.b16 %v6142
    %v6160 = vunpack.c.h.b16 %v6142
    %v6161 = vunpack.c.l.b16 %v6143
    %v6162 = vunpack.c.h.b16 %v6143
    %v6163 = vunpack.c.l.b16 %v6144
    %v6164 = vunpack.c.h.b16 %v6144
    %v6165 = vunpack.c.l.b16 %v6145
    %v6166 = vunpack.c.h.b16 %v6145
    %v6167 = vpack.c.b16 %v6153, %v6153
    %v6168 = vpack.c.b16 %v6154, %v6154
    %v6169 = vpack.c.b16 %v6155, %v6155
    %v6170 = vpack.c.b16 %v6156, %v6156
    %v6171 = vpack.c.b16 %v6157, %v6157
    %v6172 = vpack.c.b16 %v6158, %v6158
    %v6173 = vpack.c.b16 %v6159, %v6159
    %v6174 = vpack.c.b16 %v6160, %v6160
    %v6175 = vpack.c.b16 %v6161, %v6161
    %v6176 = vpack.c.b16 %v6162, %v6162
    %v6177 = vpack.c.b16 %v6163, %v6163
    %v6178 = vpack.c.b16 %v6164, %v6164
    %v6179 = vpack.c.b16 %v6165, %v6165
    %v6180 = vpack.c.b16 %v6166, %v6166
    %s6195 = smul.u32 %s4414, 14
    %s6196 = smul.addr %s6195, 4
    %s6197 = scalar_lea.vmem [#allocation4], %s6196
    %6198 = vst [vmem:[%s6197] sm:$0xf] %v6167
    %6199 = vst [vmem:[%s6197 + $0x4] sm:$0xf] %v6168
    %6200 = vst [vmem:[%s6197 + $0x8] sm:$0xf] %v6169
    %6201 = vst [vmem:[%s6197 + $0xc] sm:$0xf] %v6170
    %6202 = vst [vmem:[%s6197 + $0x10] sm:$0xf] %v6171
    %6203 = vst [vmem:[%s6197 + $0x14] sm:$0xf] %v6172
    %6204 = vst [vmem:[%s6197 + $0x18] sm:$0xf] %v6173
    %6205 = vst [vmem:[%s6197 + $0x1c] sm:$0xf] %v6174
    %6206 = vst [vmem:[%s6197 + $0x20] sm:$0xf] %v6175
    %6207 = vst [vmem:[%s6197 + $0x24] sm:$0xf] %v6176
    %6208 = vst [vmem:[%s6197 + $0x28] sm:$0xf] %v6177
    %6209 = vst [vmem:[%s6197 + $0x2c] sm:$0xf] %v6178
    %6210 = vst [vmem:[%s6197 + $0x30] sm:$0xf] %v6179
    %6211 = vst [vmem:[%s6197 + $0x34] sm:$0xf] %v6180
  $region68: #{discriminator_forward.2} parent=0 // loop_footer
    %s4418 = sadd.s32 1, %s4414
  $region69: #{discriminator_forward.2} parent=0 // loop_footer_branch
    %4413 = sbr.rel target = $region65
  $region70: #{discriminator_forward.2} parent=0 // loop_exit
    _
  %v6212 = vld [vmem:[%s11] sm:$0x3]
  loop: start=0, step=1, limit=3
  $region71: #{discriminator_forward.2} parent=0 // loop_pre_header
    _
  $region72: #{discriminator_forward.2} parent=0 // loop_header
    %s6214 = sphi 0, %s6218
    %p6215 = scmp.ge.s32.totalorder %s6214, 3
  $region73: #{discriminator_forward.2} parent=0 // loop_header_branch
    %6217 = sbr.rel (%p6215) target = $region77
  $region74: #{discriminator_forward.2} parent=0 // loop_body
    %s6219 = smul.u32 %s6214, 2
    %s6220 = smul.u32 %s6219, 14
    %s6221 = smul.addr %s6220, 4
    %s6222 = scalar_lea.vmem [#allocation4], %s6221
    %v6223 = vld [vmem:[%s6222] sm:$0xf]
    %v6224 = vld [vmem:[%s6222 + $0x4] sm:$0xf]
    %v6225 = vld [vmem:[%s6222 + $0x8] sm:$0xf]
    %v6226 = vld [vmem:[%s6222 + $0xc] sm:$0xf]
    %v6227 = vld [vmem:[%s6222 + $0x10] sm:$0xf]
    %v6228 = vld [vmem:[%s6222 + $0x14] sm:$0xf]
    %v6229 = vld [vmem:[%s6222 + $0x18] sm:$0xf]
    %v6230 = vld [vmem:[%s6222 + $0x1c] sm:$0xf]
    %v6231 = vld [vmem:[%s6222 + $0x20] sm:$0xf]
    %v6232 = vld [vmem:[%s6222 + $0x24] sm:$0xf]
    %v6233 = vld [vmem:[%s6222 + $0x28] sm:$0xf]
    %v6234 = vld [vmem:[%s6222 + $0x2c] sm:$0xf]
    %v6235 = vld [vmem:[%s6222 + $0x30] sm:$0xf]
    %v6236 = vld [vmem:[%s6222 + $0x34] sm:$0xf]
    %v6237 = vld [vmem:[%s10] sm:$0xff]
    %v6238 = vld [vmem:[%s10 + $0x8] sm:$0xff]
    %v6239 = vld [vmem:[%s10 + $0x10] sm:$0xff]
    %v6240 = vld [vmem:[%s10 + $0x18] sm:$0xff]
    %v6241 = vld [vmem:[%s10 + $0x20] sm:$0xff]
    %v6242 = vld [vmem:[%s10 + $0x28] sm:$0xff]
    %v6243 = vld [vmem:[%s10 + $0x30] sm:$0xff]
    %v6244 = vld [vmem:[%s10 + $0x38] sm:$0xff]
    %v6245 = vld [vmem:[%s10 + $0x40] sm:$0xff]
    %v6246 = vld [vmem:[%s10 + $0x48] sm:$0xff]
    %v6247 = vld [vmem:[%s10 + $0x50] sm:$0xff]
    %v6248 = vld [vmem:[%s10 + $0x58] sm:$0xff]
    %v6249 = vld [vmem:[%s10 + $0x60] sm:$0xff]
    %v6250 = vld [vmem:[%s10 + $0x68] sm:$0xff]
    %v6251 = vld [vmem:[%s10 + $0x70] sm:$0xff]
    %v6252 = vld [vmem:[%s10 + $0x78] sm:$0xff]
    %s6253 = scalar_lea.vmem %s10, 128
    %v6254 = vld [vmem:[%s6253] sm:$0xff]
    %v6255 = vld [vmem:[%s6253 + $0x8] sm:$0xff]
    %v6256 = vld [vmem:[%s6253 + $0x10] sm:$0xff]
    %v6257 = vld [vmem:[%s6253 + $0x18] sm:$0xff]
    %v6258 = vld [vmem:[%s6253 + $0x20] sm:$0xff]
    %v6259 = vld [vmem:[%s6253 + $0x28] sm:$0xff]
    %v6260 = vld [vmem:[%s6253 + $0x30] sm:$0xff]
    %v6261 = vld [vmem:[%s6253 + $0x38] sm:$0xff]
    %v6262 = vld [vmem:[%s6253 + $0x40] sm:$0xff]
    %v6263 = vld [vmem:[%s6253 + $0x48] sm:$0xff]
    %v6264 = vld [vmem:[%s6253 + $0x50] sm:$0xff]
    %v6265 = vld [vmem:[%s6253 + $0x58] sm:$0xff]
    %v6266 = vld [vmem:[%s6253 + $0x60] sm:$0xff]
    %v6267 = vld [vmem:[%s6253 + $0x68] sm:$0xff]
    %v6268 = vld [vmem:[%s6253 + $0x70] sm:$0xff]
    %v6269 = vld [vmem:[%s6253 + $0x78] sm:$0xff]
    %v6276 = vunpack.c.l.b16 %v6225
    %v6277 = vunpack.c.l.b16 %v6226
    %v6278 = vunpack.c.l.b16 %v6229
    %v6279 = vunpack.c.l.b16 %v6230
    %v6280 = vunpack.c.l.b16 %v6233
    %v6281 = vunpack.c.l.b16 %v6234
    %v6282 = vpack.c.b16 %v6277, %v6276
    %v6283 = vpack.c.b16 %v6279, %v6278
    %v6284 = vpack.c.b16 %v6281, %v6280
    %v6304 = vunpack.c.l.b16 %v6254
    %v6305 = vunpack.c.h.b16 %v6254
    %v6306 = vunpack.c.l.b16 %v6255
    %v6307 = vunpack.c.h.b16 %v6255
    %v6308 = vunpack.c.l.b16 %v6256
    %v6309 = vunpack.c.h.b16 %v6256
    %v6310 = vunpack.c.l.b16 %v6257
    %v6311 = vunpack.c.h.b16 %v6257
    %v6312 = vunpack.c.l.b16 %v6258
    %v6313 = vunpack.c.h.b16 %v6258
    %v6314 = vunpack.c.l.b16 %v6259
    %v6315 = vunpack.c.h.b16 %v6259
    %v6316 = vunpack.c.l.b16 %v6260
    %v6317 = vunpack.c.h.b16 %v6260
    %v6318 = vunpack.c.l.b16 %v6261
    %v6319 = vunpack.c.h.b16 %v6261
    %v6320 = vunpack.c.l.b16 %v6262
    %v6321 = vunpack.c.h.b16 %v6262
    %v6322 = vunpack.c.l.b16 %v6263
    %v6323 = vunpack.c.h.b16 %v6263
    %v6324 = vunpack.c.l.b16 %v6264
    %v6325 = vunpack.c.h.b16 %v6264
    %v6326 = vunpack.c.l.b16 %v6265
    %v6327 = vunpack.c.h.b16 %v6265
    %v6328 = vunpack.c.l.b16 %v6266
    %v6329 = vunpack.c.h.b16 %v6266
    %v6330 = vunpack.c.l.b16 %v6267
    %v6331 = vunpack.c.h.b16 %v6267
    %v6332 = vunpack.c.l.b16 %v6268
    %v6333 = vunpack.c.h.b16 %v6268
    %v6334 = vunpack.c.l.b16 %v6269
    %v6335 = vunpack.c.h.b16 %v6269
    %v6336 = vpack.c.b16 %v6306, %v6304
    %v6337 = vpack.c.b16 %v6307, %v6305
    %v6338 = vpack.c.b16 %v6310, %v6308
    %v6339 = vpack.c.b16 %v6311, %v6309
    %v6340 = vpack.c.b16 %v6314, %v6312
    %v6341 = vpack.c.b16 %v6315, %v6313
    %v6342 = vpack.c.b16 %v6318, %v6316
    %v6343 = vpack.c.b16 %v6319, %v6317
    %v6344 = vpack.c.b16 %v6322, %v6320
    %v6345 = vpack.c.b16 %v6323, %v6321
    %v6346 = vpack.c.b16 %v6326, %v6324
    %v6347 = vpack.c.b16 %v6327, %v6325
    %v6348 = vpack.c.b16 %v6330, %v6328
    %v6349 = vpack.c.b16 %v6331, %v6329
    %v6350 = vpack.c.b16 %v6334, %v6332
    %v6351 = vpack.c.b16 %v6335, %v6333
    %6368 = vmatprep.subr.bf16.mxu0 %v6351
    %6369 = vmatpush1.bf16.msra.mxu0 %v6350
    %6370 = vmatprep.subr.bf16.mxu0 %v6349
    %6371 = vmatpush1.bf16.msra.mxu0 %v6348
    %6372 = vmatprep.subr.bf16.mxu0 %v6347
    %6373 = vmatpush1.bf16.msra.mxu0 %v6346
    %6374 = vmatprep.subr.bf16.mxu0 %v6345
    %6375 = vmatpush1.bf16.msra.mxu0 %v6344
    %6376 = vmatprep.subr.bf16.mxu0 %v6343
    %6377 = vmatpush1.bf16.msra.mxu0 %v6342
    %6378 = vmatprep.subr.bf16.mxu0 %v6341
    %6379 = vmatpush1.bf16.msra.mxu0 %v6340
    %6380 = vmatprep.subr.bf16.mxu0 %v6339
    %6381 = vmatpush1.bf16.msra.mxu0 %v6338
    %6382 = vmatprep.subr.bf16.mxu0 %v6337
    %6383 = vmatpush1.bf16.msra.mxu0 %v6336
    %6384 = vmatprep.subr.bf16.mxu0 0
    %6385 = vmatpush2.bf16.msra.mxu0 0
    %6386 = vmatprep.subr.bf16.mxu0 0
    %6387 = vmatpush2.bf16.msra.mxu0 0
    %6388 = vmatprep.subr.bf16.mxu0 0
    %6389 = vmatpush2.bf16.msra.mxu0 0
    %6390 = vmatprep.subr.bf16.mxu0 0
    %6391 = vmatpush2.bf16.msra.mxu0 0
    %6392 = vmatprep.subr.bf16.mxu0 0
    %6393 = vmatpush2.bf16.msra.mxu0 0
    %6394 = vmatprep.subr.bf16.mxu0 0
    %6395 = vmatpush2.bf16.msra.mxu0 0
    %6396 = vmatprep.subr.bf16.mxu0 0
    %6397 = vmatpush2.bf16.msra.mxu0 0
    %6398 = vmatprep.subr.bf16.mxu0 0
    %6399 = vmatpush2.bf16.msra.mxu0 0
    %6400 = vmatprep.mubr.bf16.mxu0 0
    %6401 = vmatmul.mubr.bf16.gmra.mxu0 %v6282
    %v6402 = vpop.f32.mrf.mxu0
    %v6403 = vadd.f32 0.0, %v6402
    %v6404 = vpop.f32.mrf.mxu0
    %v6405 = vadd.f32 0.0, %v6404
    %v6406 = vpop.f32.mrf.mxu0
    %v6407 = vadd.f32 0.0, %v6406
    %v6408 = vpop.f32.mrf.mxu0
    %v6409 = vadd.f32 0.0, %v6408
    %6410 = vmatprep.mubr.bf16.mxu0 0
    %6411 = vmatmul.mubr.bf16.gmra.mxu0 %v6283
    %v6412 = vpop.f32.mrf.mxu0
    %v6413 = vadd.f32 0.0, %v6412
    %v6414 = vpop.f32.mrf.mxu0
    %v6415 = vadd.f32 0.0, %v6414
    %v6416 = vpop.f32.mrf.mxu0
    %v6417 = vadd.f32 0.0, %v6416
    %v6418 = vpop.f32.mrf.mxu0
    %v6419 = vadd.f32 0.0, %v6418
    %6420 = vmatprep.mubr.bf16.mxu0 0
    %6421 = vmatmul.mubr.bf16.gmra.mxu0 %v6284
    %v6422 = vpop.f32.mrf.mxu0
    %v6423 = vadd.f32 0.0, %v6422
    %v6424 = vpop.f32.mrf.mxu0
    %v6425 = vadd.f32 0.0, %v6424
    %v6426 = vpop.f32.mrf.mxu0
    %v6427 = vadd.f32 0.0, %v6426
    %v6428 = vpop.f32.mrf.mxu0
    %v6429 = vadd.f32 0.0, %v6428
    %6430 = vdwg.mxu0
    %v6437 = vunpack.c.l.b16 %v6223
    %v6438 = vunpack.c.l.b16 %v6224
    %v6439 = vunpack.c.l.b16 %v6227
    %v6440 = vunpack.c.l.b16 %v6228
    %v6441 = vunpack.c.l.b16 %v6231
    %v6442 = vunpack.c.l.b16 %v6232
    %v6443 = vpack.c.b16 %v6438, %v6437
    %v6444 = vpack.c.b16 %v6440, %v6439
    %v6445 = vpack.c.b16 %v6442, %v6441
    %v6465 = vunpack.c.l.b16 %v6237
    %v6466 = vunpack.c.h.b16 %v6237
    %v6467 = vunpack.c.l.b16 %v6238
    %v6468 = vunpack.c.h.b16 %v6238
    %v6469 = vunpack.c.l.b16 %v6239
    %v6470 = vunpack.c.h.b16 %v6239
    %v6471 = vunpack.c.l.b16 %v6240
    %v6472 = vunpack.c.h.b16 %v6240
    %v6473 = vunpack.c.l.b16 %v6241
    %v6474 = vunpack.c.h.b16 %v6241
    %v6475 = vunpack.c.l.b16 %v6242
    %v6476 = vunpack.c.h.b16 %v6242
    %v6477 = vunpack.c.l.b16 %v6243
    %v6478 = vunpack.c.h.b16 %v6243
    %v6479 = vunpack.c.l.b16 %v6244
    %v6480 = vunpack.c.h.b16 %v6244
    %v6481 = vunpack.c.l.b16 %v6245
    %v6482 = vunpack.c.h.b16 %v6245
    %v6483 = vunpack.c.l.b16 %v6246
    %v6484 = vunpack.c.h.b16 %v6246
    %v6485 = vunpack.c.l.b16 %v6247
    %v6486 = vunpack.c.h.b16 %v6247
    %v6487 = vunpack.c.l.b16 %v6248
    %v6488 = vunpack.c.h.b16 %v6248
    %v6489 = vunpack.c.l.b16 %v6249
    %v6490 = vunpack.c.h.b16 %v6249
    %v6491 = vunpack.c.l.b16 %v6250
    %v6492 = vunpack.c.h.b16 %v6250
    %v6493 = vunpack.c.l.b16 %v6251
    %v6494 = vunpack.c.h.b16 %v6251
    %v6495 = vunpack.c.l.b16 %v6252
    %v6496 = vunpack.c.h.b16 %v6252
    %v6497 = vpack.c.b16 %v6467, %v6465
    %v6498 = vpack.c.b16 %v6468, %v6466
    %v6499 = vpack.c.b16 %v6471, %v6469
    %v6500 = vpack.c.b16 %v6472, %v6470
    %v6501 = vpack.c.b16 %v6475, %v6473
    %v6502 = vpack.c.b16 %v6476, %v6474
    %v6503 = vpack.c.b16 %v6479, %v6477
    %v6504 = vpack.c.b16 %v6480, %v6478
    %v6505 = vpack.c.b16 %v6483, %v6481
    %v6506 = vpack.c.b16 %v6484, %v6482
    %v6507 = vpack.c.b16 %v6487, %v6485
    %v6508 = vpack.c.b16 %v6488, %v6486
    %v6509 = vpack.c.b16 %v6491, %v6489
    %v6510 = vpack.c.b16 %v6492, %v6490
    %v6511 = vpack.c.b16 %v6495, %v6493
    %v6512 = vpack.c.b16 %v6496, %v6494
    %6529 = vmatprep.subr.bf16.mxu0 %v6512
    %6530 = vmatpush1.bf16.msra.mxu0 %v6511
    %6531 = vmatprep.subr.bf16.mxu0 %v6510
    %6532 = vmatpush1.bf16.msra.mxu0 %v6509
    %6533 = vmatprep.subr.bf16.mxu0 %v6508
    %6534 = vmatpush1.bf16.msra.mxu0 %v6507
    %6535 = vmatprep.subr.bf16.mxu0 %v6506
    %6536 = vmatpush1.bf16.msra.mxu0 %v6505
    %6537 = vmatprep.subr.bf16.mxu0 %v6504
    %6538 = vmatpush1.bf16.msra.mxu0 %v6503
    %6539 = vmatprep.subr.bf16.mxu0 %v6502
    %6540 = vmatpush1.bf16.msra.mxu0 %v6501
    %6541 = vmatprep.subr.bf16.mxu0 %v6500
    %6542 = vmatpush1.bf16.msra.mxu0 %v6499
    %6543 = vmatprep.subr.bf16.mxu0 %v6498
    %6544 = vmatpush1.bf16.msra.mxu0 %v6497
    %6545 = vmatprep.subr.bf16.mxu0 0
    %6546 = vmatpush2.bf16.msra.mxu0 0
    %6547 = vmatprep.subr.bf16.mxu0 0
    %6548 = vmatpush2.bf16.msra.mxu0 0
    %6549 = vmatprep.subr.bf16.mxu0 0
    %6550 = vmatpush2.bf16.msra.mxu0 0
    %6551 = vmatprep.subr.bf16.mxu0 0
    %6552 = vmatpush2.bf16.msra.mxu0 0
    %6553 = vmatprep.subr.bf16.mxu0 0
    %6554 = vmatpush2.bf16.msra.mxu0 0
    %6555 = vmatprep.subr.bf16.mxu0 0
    %6556 = vmatpush2.bf16.msra.mxu0 0
    %6557 = vmatprep.subr.bf16.mxu0 0
    %6558 = vmatpush2.bf16.msra.mxu0 0
    %6559 = vmatprep.subr.bf16.mxu0 0
    %6560 = vmatpush2.bf16.msra.mxu0 0
    %6561 = vmatprep.mubr.bf16.mxu0 0
    %6562 = vmatmul.mubr.bf16.gmra.mxu0 %v6443
    %v6563 = vpop.f32.mrf.mxu0
    %v6564 = vadd.f32 %v6403, %v6563
    %v6565 = vpop.f32.mrf.mxu0
    %v6566 = vadd.f32 %v6405, %v6565
    %v6567 = vpop.f32.mrf.mxu0
    %v6568 = vadd.f32 %v6407, %v6567
    %v6569 = vpop.f32.mrf.mxu0
    %v6570 = vadd.f32 %v6409, %v6569
    %6571 = vmatprep.mubr.bf16.mxu0 0
    %6572 = vmatmul.mubr.bf16.gmra.mxu0 %v6444
    %v6573 = vpop.f32.mrf.mxu0
    %v6574 = vadd.f32 %v6413, %v6573
    %v6575 = vpop.f32.mrf.mxu0
    %v6576 = vadd.f32 %v6415, %v6575
    %v6577 = vpop.f32.mrf.mxu0
    %v6578 = vadd.f32 %v6417, %v6577
    %v6579 = vpop.f32.mrf.mxu0
    %v6580 = vadd.f32 %v6419, %v6579
    %6581 = vmatprep.mubr.bf16.mxu0 0
    %6582 = vmatmul.mubr.bf16.gmra.mxu0 %v6445
    %v6583 = vpop.f32.mrf.mxu0
    %v6584 = vadd.f32 %v6423, %v6583
    %v6585 = vpop.f32.mrf.mxu0
    %v6586 = vadd.f32 %v6425, %v6585
    %v6587 = vpop.f32.mrf.mxu0
    %v6588 = vadd.f32 %v6427, %v6587
    %v6589 = vpop.f32.mrf.mxu0
    %v6590 = vadd.f32 %v6429, %v6589
    %6591 = vdwg.mxu0
    %s6592 = scalar_lea.vmem %s10, 256
    %v6593 = vld [vmem:[%s6592] sm:$0xff]
    %v6594 = vld [vmem:[%s6592 + $0x8] sm:$0xff]
    %v6595 = vld [vmem:[%s6592 + $0x10] sm:$0xff]
    %v6596 = vld [vmem:[%s6592 + $0x18] sm:$0xff]
    %v6597 = vld [vmem:[%s6592 + $0x20] sm:$0xff]
    %v6598 = vld [vmem:[%s6592 + $0x28] sm:$0xff]
    %v6599 = vld [vmem:[%s6592 + $0x30] sm:$0xff]
    %v6600 = vld [vmem:[%s6592 + $0x38] sm:$0xff]
    %v6601 = vld [vmem:[%s6592 + $0x40] sm:$0xff]
    %v6602 = vld [vmem:[%s6592 + $0x48] sm:$0xff]
    %v6603 = vld [vmem:[%s6592 + $0x50] sm:$0xff]
    %v6604 = vld [vmem:[%s6592 + $0x58] sm:$0xff]
    %v6605 = vld [vmem:[%s6592 + $0x60] sm:$0xff]
    %v6606 = vld [vmem:[%s6592 + $0x68] sm:$0xff]
    %v6607 = vld [vmem:[%s6592 + $0x70] sm:$0xff]
    %v6608 = vld [vmem:[%s6592 + $0x78] sm:$0xff]
    %v6611 = vunpack.c.l.b16 %v6235
    %v6612 = vunpack.c.l.b16 %v6236
    %v6613 = vpack.c.b16 %v6612, %v6611
    %v6631 = vunpack.c.l.b16 %v6593
    %v6632 = vunpack.c.h.b16 %v6593
    %v6633 = vunpack.c.l.b16 %v6594
    %v6634 = vunpack.c.h.b16 %v6594
    %v6635 = vunpack.c.l.b16 %v6595
    %v6636 = vunpack.c.h.b16 %v6595
    %v6637 = vunpack.c.l.b16 %v6596
    %v6638 = vunpack.c.h.b16 %v6596
    %v6639 = vunpack.c.l.b16 %v6597
    %v6640 = vunpack.c.h.b16 %v6597
    %v6641 = vunpack.c.l.b16 %v6598
    %v6642 = vunpack.c.h.b16 %v6598
    %v6643 = vunpack.c.l.b16 %v6599
    %v6644 = vunpack.c.h.b16 %v6599
    %v6645 = vunpack.c.l.b16 %v6600
    %v6646 = vunpack.c.h.b16 %v6600
    %v6647 = vunpack.c.l.b16 %v6601
    %v6648 = vunpack.c.h.b16 %v6601
    %v6649 = vunpack.c.l.b16 %v6602
    %v6650 = vunpack.c.h.b16 %v6602
    %v6651 = vunpack.c.l.b16 %v6603
    %v6652 = vunpack.c.h.b16 %v6603
    %v6653 = vunpack.c.l.b16 %v6604
    %v6654 = vunpack.c.h.b16 %v6604
    %v6655 = vunpack.c.l.b16 %v6605
    %v6656 = vunpack.c.h.b16 %v6605
    %v6657 = vunpack.c.l.b16 %v6606
    %v6658 = vunpack.c.h.b16 %v6606
    %v6659 = vunpack.c.l.b16 %v6607
    %v6660 = vunpack.c.h.b16 %v6607
    %v6661 = vunpack.c.l.b16 %v6608
    %v6662 = vunpack.c.h.b16 %v6608
    %v6663 = vpack.c.b16 %v6633, %v6631
    %v6664 = vpack.c.b16 %v6634, %v6632
    %v6665 = vpack.c.b16 %v6637, %v6635
    %v6666 = vpack.c.b16 %v6638, %v6636
    %v6667 = vpack.c.b16 %v6641, %v6639
    %v6668 = vpack.c.b16 %v6642, %v6640
    %v6669 = vpack.c.b16 %v6645, %v6643
    %v6670 = vpack.c.b16 %v6646, %v6644
    %v6671 = vpack.c.b16 %v6649, %v6647
    %v6672 = vpack.c.b16 %v6650, %v6648
    %v6673 = vpack.c.b16 %v6653, %v6651
    %v6674 = vpack.c.b16 %v6654, %v6652
    %v6675 = vpack.c.b16 %v6657, %v6655
    %v6676 = vpack.c.b16 %v6658, %v6656
    %v6677 = vpack.c.b16 %v6661, %v6659
    %v6678 = vpack.c.b16 %v6662, %v6660
    %6695 = vmatprep.subr.bf16.mxu0 %v6678
    %6696 = vmatpush1.bf16.msra.mxu0 %v6677
    %6697 = vmatprep.subr.bf16.mxu0 %v6676
    %6698 = vmatpush1.bf16.msra.mxu0 %v6675
    %6699 = vmatprep.subr.bf16.mxu0 %v6674
    %6700 = vmatpush1.bf16.msra.mxu0 %v6673
    %6701 = vmatprep.subr.bf16.mxu0 %v6672
    %6702 = vmatpush1.bf16.msra.mxu0 %v6671
    %6703 = vmatprep.subr.bf16.mxu0 %v6670
    %6704 = vmatpush1.bf16.msra.mxu0 %v6669
    %6705 = vmatprep.subr.bf16.mxu0 %v6668
    %6706 = vmatpush1.bf16.msra.mxu0 %v6667
    %6707 = vmatprep.subr.bf16.mxu0 %v6666
    %6708 = vmatpush1.bf16.msra.mxu0 %v6665
    %6709 = vmatprep.subr.bf16.mxu0 %v6664
    %6710 = vmatpush1.bf16.msra.mxu0 %v6663
    %6711 = vmatprep.subr.bf16.mxu0 0
    %6712 = vmatpush2.bf16.msra.mxu0 0
    %6713 = vmatprep.subr.bf16.mxu0 0
    %6714 = vmatpush2.bf16.msra.mxu0 0
    %6715 = vmatprep.subr.bf16.mxu0 0
    %6716 = vmatpush2.bf16.msra.mxu0 0
    %6717 = vmatprep.subr.bf16.mxu0 0
    %6718 = vmatpush2.bf16.msra.mxu0 0
    %6719 = vmatprep.subr.bf16.mxu0 0
    %6720 = vmatpush2.bf16.msra.mxu0 0
    %6721 = vmatprep.subr.bf16.mxu0 0
    %6722 = vmatpush2.bf16.msra.mxu0 0
    %6723 = vmatprep.subr.bf16.mxu0 0
    %6724 = vmatpush2.bf16.msra.mxu0 0
    %6725 = vmatprep.subr.bf16.mxu0 0
    %6726 = vmatpush2.bf16.msra.mxu0 0
    %6727 = vmatprep.mubr.bf16.mxu0 0
    %6728 = vmatmul.mubr.bf16.gmra.mxu0 %v6444
    %v6729 = vpop.f32.mrf.mxu0
    %v6730 = vadd.f32 0.0, %v6729
    %v6731 = vpop.f32.mrf.mxu0
    %v6732 = vadd.f32 0.0, %v6731
    %v6733 = vpop.f32.mrf.mxu0
    %v6734 = vadd.f32 0.0, %v6733
    %v6735 = vpop.f32.mrf.mxu0
    %v6736 = vadd.f32 0.0, %v6735
    %6737 = vmatprep.mubr.bf16.mxu0 0
    %6738 = vmatmul.mubr.bf16.gmra.mxu0 %v6445
    %v6739 = vpop.f32.mrf.mxu0
    %v6740 = vadd.f32 0.0, %v6739
    %v6741 = vpop.f32.mrf.mxu0
    %v6742 = vadd.f32 0.0, %v6741
    %v6743 = vpop.f32.mrf.mxu0
    %v6744 = vadd.f32 0.0, %v6743
    %v6745 = vpop.f32.mrf.mxu0
    %v6746 = vadd.f32 0.0, %v6745
    %6747 = vmatprep.mubr.bf16.mxu0 0
    %6748 = vmatmul.mubr.bf16.gmra.mxu0 %v6613
    %v6749 = vpop.f32.mrf.mxu0
    %v6750 = vadd.f32 0.0, %v6749
    %v6751 = vpop.f32.mrf.mxu0
    %v6752 = vadd.f32 0.0, %v6751
    %v6753 = vpop.f32.mrf.mxu0
    %v6754 = vadd.f32 0.0, %v6753
    %v6755 = vpop.f32.mrf.mxu0
    %v6756 = vadd.f32 0.0, %v6755
    %6757 = vdwg.mxu0
    %v6758 = vadd.f32 %v6564, %v6730
    %v6759 = vadd.f32 %v6566, %v6732
    %v6760 = vadd.f32 %v6568, %v6734
    %v6761 = vadd.f32 %v6570, %v6736
    %v6762 = vadd.f32 %v6574, %v6740
    %v6763 = vadd.f32 %v6576, %v6742
    %v6764 = vadd.f32 %v6578, %v6744
    %v6765 = vadd.f32 %v6580, %v6746
    %v6766 = vadd.f32 %v6584, %v6750
    %v6767 = vadd.f32 %v6586, %v6752
    %v6768 = vadd.f32 %v6588, %v6754
    %v6769 = vadd.f32 %v6590, %v6756
    %s6770 = sadd.s32 %s6219, 1
    %s6771 = smul.u32 %s6770, 14
    %s6772 = smul.addr %s6771, 4
    %s6773 = scalar_lea.vmem [#allocation4], %s6772
    %v6774 = vld [vmem:[%s6773] sm:$0xf]
    %v6775 = vld [vmem:[%s6773 + $0x4] sm:$0xf]
    %v6776 = vld [vmem:[%s6773 + $0x8] sm:$0xf]
    %v6777 = vld [vmem:[%s6773 + $0xc] sm:$0xf]
    %v6778 = vld [vmem:[%s6773 + $0x10] sm:$0xf]
    %v6779 = vld [vmem:[%s6773 + $0x14] sm:$0xf]
    %v6780 = vld [vmem:[%s6773 + $0x18] sm:$0xf]
    %v6781 = vld [vmem:[%s6773 + $0x1c] sm:$0xf]
    %v6782 = vld [vmem:[%s6773 + $0x20] sm:$0xf]
    %v6783 = vld [vmem:[%s6773 + $0x24] sm:$0xf]
    %v6784 = vld [vmem:[%s6773 + $0x28] sm:$0xf]
    %v6785 = vld [vmem:[%s6773 + $0x2c] sm:$0xf]
    %v6786 = vld [vmem:[%s6773 + $0x30] sm:$0xf]
    %v6787 = vld [vmem:[%s6773 + $0x34] sm:$0xf]
    %s6788 = scalar_lea.vmem %s10, 384
    %v6789 = vld [vmem:[%s6788] sm:$0xff]
    %v6790 = vld [vmem:[%s6788 + $0x8] sm:$0xff]
    %v6791 = vld [vmem:[%s6788 + $0x10] sm:$0xff]
    %v6792 = vld [vmem:[%s6788 + $0x18] sm:$0xff]
    %v6793 = vld [vmem:[%s6788 + $0x20] sm:$0xff]
    %v6794 = vld [vmem:[%s6788 + $0x28] sm:$0xff]
    %v6795 = vld [vmem:[%s6788 + $0x30] sm:$0xff]
    %v6796 = vld [vmem:[%s6788 + $0x38] sm:$0xff]
    %v6797 = vld [vmem:[%s6788 + $0x40] sm:$0xff]
    %v6798 = vld [vmem:[%s6788 + $0x48] sm:$0xff]
    %v6799 = vld [vmem:[%s6788 + $0x50] sm:$0xff]
    %v6800 = vld [vmem:[%s6788 + $0x58] sm:$0xff]
    %v6801 = vld [vmem:[%s6788 + $0x60] sm:$0xff]
    %v6802 = vld [vmem:[%s6788 + $0x68] sm:$0xff]
    %v6803 = vld [vmem:[%s6788 + $0x70] sm:$0xff]
    %v6804 = vld [vmem:[%s6788 + $0x78] sm:$0xff]
    %v6811 = vunpack.c.l.b16 %v6774
    %v6812 = vunpack.c.l.b16 %v6775
    %v6813 = vunpack.c.l.b16 %v6778
    %v6814 = vunpack.c.l.b16 %v6779
    %v6815 = vunpack.c.l.b16 %v6782
    %v6816 = vunpack.c.l.b16 %v6783
    %v6817 = vpack.c.b16 %v6812, %v6811
    %v6818 = vpack.c.b16 %v6814, %v6813
    %v6819 = vpack.c.b16 %v6816, %v6815
    %v6839 = vunpack.c.l.b16 %v6789
    %v6840 = vunpack.c.h.b16 %v6789
    %v6841 = vunpack.c.l.b16 %v6790
    %v6842 = vunpack.c.h.b16 %v6790
    %v6843 = vunpack.c.l.b16 %v6791
    %v6844 = vunpack.c.h.b16 %v6791
    %v6845 = vunpack.c.l.b16 %v6792
    %v6846 = vunpack.c.h.b16 %v6792
    %v6847 = vunpack.c.l.b16 %v6793
    %v6848 = vunpack.c.h.b16 %v6793
    %v6849 = vunpack.c.l.b16 %v6794
    %v6850 = vunpack.c.h.b16 %v6794
    %v6851 = vunpack.c.l.b16 %v6795
    %v6852 = vunpack.c.h.b16 %v6795
    %v6853 = vunpack.c.l.b16 %v6796
    %v6854 = vunpack.c.h.b16 %v6796
    %v6855 = vunpack.c.l.b16 %v6797
    %v6856 = vunpack.c.h.b16 %v6797
    %v6857 = vunpack.c.l.b16 %v6798
    %v6858 = vunpack.c.h.b16 %v6798
    %v6859 = vunpack.c.l.b16 %v6799
    %v6860 = vunpack.c.h.b16 %v6799
    %v6861 = vunpack.c.l.b16 %v6800
    %v6862 = vunpack.c.h.b16 %v6800
    %v6863 = vunpack.c.l.b16 %v6801
    %v6864 = vunpack.c.h.b16 %v6801
    %v6865 = vunpack.c.l.b16 %v6802
    %v6866 = vunpack.c.h.b16 %v6802
    %v6867 = vunpack.c.l.b16 %v6803
    %v6868 = vunpack.c.h.b16 %v6803
    %v6869 = vunpack.c.l.b16 %v6804
    %v6870 = vunpack.c.h.b16 %v6804
    %v6871 = vpack.c.b16 %v6841, %v6839
    %v6872 = vpack.c.b16 %v6842, %v6840
    %v6873 = vpack.c.b16 %v6845, %v6843
    %v6874 = vpack.c.b16 %v6846, %v6844
    %v6875 = vpack.c.b16 %v6849, %v6847
    %v6876 = vpack.c.b16 %v6850, %v6848
    %v6877 = vpack.c.b16 %v6853, %v6851
    %v6878 = vpack.c.b16 %v6854, %v6852
    %v6879 = vpack.c.b16 %v6857, %v6855
    %v6880 = vpack.c.b16 %v6858, %v6856
    %v6881 = vpack.c.b16 %v6861, %v6859
    %v6882 = vpack.c.b16 %v6862, %v6860
    %v6883 = vpack.c.b16 %v6865, %v6863
    %v6884 = vpack.c.b16 %v6866, %v6864
    %v6885 = vpack.c.b16 %v6869, %v6867
    %v6886 = vpack.c.b16 %v6870, %v6868
    %6903 = vmatprep.subr.bf16.mxu0 %v6886
    %6904 = vmatpush1.bf16.msra.mxu0 %v6885
    %6905 = vmatprep.subr.bf16.mxu0 %v6884
    %6906 = vmatpush1.bf16.msra.mxu0 %v6883
    %6907 = vmatprep.subr.bf16.mxu0 %v6882
    %6908 = vmatpush1.bf16.msra.mxu0 %v6881
    %6909 = vmatprep.subr.bf16.mxu0 %v6880
    %6910 = vmatpush1.bf16.msra.mxu0 %v6879
    %6911 = vmatprep.subr.bf16.mxu0 %v6878
    %6912 = vmatpush1.bf16.msra.mxu0 %v6877
    %6913 = vmatprep.subr.bf16.mxu0 %v6876
    %6914 = vmatpush1.bf16.msra.mxu0 %v6875
    %6915 = vmatprep.subr.bf16.mxu0 %v6874
    %6916 = vmatpush1.bf16.msra.mxu0 %v6873
    %6917 = vmatprep.subr.bf16.mxu0 %v6872
    %6918 = vmatpush1.bf16.msra.mxu0 %v6871
    %6919 = vmatprep.subr.bf16.mxu0 0
    %6920 = vmatpush2.bf16.msra.mxu0 0
    %6921 = vmatprep.subr.bf16.mxu0 0
    %6922 = vmatpush2.bf16.msra.mxu0 0
    %6923 = vmatprep.subr.bf16.mxu0 0
    %6924 = vmatpush2.bf16.msra.mxu0 0
    %6925 = vmatprep.subr.bf16.mxu0 0
    %6926 = vmatpush2.bf16.msra.mxu0 0
    %6927 = vmatprep.subr.bf16.mxu0 0
    %6928 = vmatpush2.bf16.msra.mxu0 0
    %6929 = vmatprep.subr.bf16.mxu0 0
    %6930 = vmatpush2.bf16.msra.mxu0 0
    %6931 = vmatprep.subr.bf16.mxu0 0
    %6932 = vmatpush2.bf16.msra.mxu0 0
    %6933 = vmatprep.subr.bf16.mxu0 0
    %6934 = vmatpush2.bf16.msra.mxu0 0
    %6935 = vmatprep.mubr.bf16.mxu0 0
    %6936 = vmatmul.mubr.bf16.gmra.mxu0 %v6817
    %v6937 = vpop.f32.mrf.mxu0
    %v6938 = vadd.f32 0.0, %v6937
    %v6939 = vpop.f32.mrf.mxu0
    %v6940 = vadd.f32 0.0, %v6939
    %v6941 = vpop.f32.mrf.mxu0
    %v6942 = vadd.f32 0.0, %v6941
    %v6943 = vpop.f32.mrf.mxu0
    %v6944 = vadd.f32 0.0, %v6943
    %6945 = vmatprep.mubr.bf16.mxu0 0
    %6946 = vmatmul.mubr.bf16.gmra.mxu0 %v6818
    %v6947 = vpop.f32.mrf.mxu0
    %v6948 = vadd.f32 0.0, %v6947
    %v6949 = vpop.f32.mrf.mxu0
    %v6950 = vadd.f32 0.0, %v6949
    %v6951 = vpop.f32.mrf.mxu0
    %v6952 = vadd.f32 0.0, %v6951
    %v6953 = vpop.f32.mrf.mxu0
    %v6954 = vadd.f32 0.0, %v6953
    %6955 = vmatprep.mubr.bf16.mxu0 0
    %6956 = vmatmul.mubr.bf16.gmra.mxu0 %v6819
    %v6957 = vpop.f32.mrf.mxu0
    %v6958 = vadd.f32 0.0, %v6957
    %v6959 = vpop.f32.mrf.mxu0
    %v6960 = vadd.f32 0.0, %v6959
    %v6961 = vpop.f32.mrf.mxu0
    %v6962 = vadd.f32 0.0, %v6961
    %v6963 = vpop.f32.mrf.mxu0
    %v6964 = vadd.f32 0.0, %v6963
    %6965 = vdwg.mxu0
    %v6966 = vadd.f32 %v6758, %v6938
    %v6967 = vadd.f32 %v6759, %v6940
    %v6968 = vadd.f32 %v6760, %v6942
    %v6969 = vadd.f32 %v6761, %v6944
    %v6970 = vadd.f32 %v6762, %v6948
    %v6971 = vadd.f32 %v6763, %v6950
    %v6972 = vadd.f32 %v6764, %v6952
    %v6973 = vadd.f32 %v6765, %v6954
    %v6974 = vadd.f32 %v6766, %v6958
    %v6975 = vadd.f32 %v6767, %v6960
    %v6976 = vadd.f32 %v6768, %v6962
    %v6977 = vadd.f32 %v6769, %v6964
    %s6978 = scalar_lea.vmem %s10, 512
    %v6979 = vld [vmem:[%s6978] sm:$0xff]
    %v6980 = vld [vmem:[%s6978 + $0x8] sm:$0xff]
    %v6981 = vld [vmem:[%s6978 + $0x10] sm:$0xff]
    %v6982 = vld [vmem:[%s6978 + $0x18] sm:$0xff]
    %v6983 = vld [vmem:[%s6978 + $0x20] sm:$0xff]
    %v6984 = vld [vmem:[%s6978 + $0x28] sm:$0xff]
    %v6985 = vld [vmem:[%s6978 + $0x30] sm:$0xff]
    %v6986 = vld [vmem:[%s6978 + $0x38] sm:$0xff]
    %v6987 = vld [vmem:[%s6978 + $0x40] sm:$0xff]
    %v6988 = vld [vmem:[%s6978 + $0x48] sm:$0xff]
    %v6989 = vld [vmem:[%s6978 + $0x50] sm:$0xff]
    %v6990 = vld [vmem:[%s6978 + $0x58] sm:$0xff]
    %v6991 = vld [vmem:[%s6978 + $0x60] sm:$0xff]
    %v6992 = vld [vmem:[%s6978 + $0x68] sm:$0xff]
    %v6993 = vld [vmem:[%s6978 + $0x70] sm:$0xff]
    %v6994 = vld [vmem:[%s6978 + $0x78] sm:$0xff]
    %v7001 = vunpack.c.l.b16 %v6776
    %v7002 = vunpack.c.l.b16 %v6777
    %v7003 = vunpack.c.l.b16 %v6780
    %v7004 = vunpack.c.l.b16 %v6781
    %v7005 = vunpack.c.l.b16 %v6784
    %v7006 = vunpack.c.l.b16 %v6785
    %v7007 = vpack.c.b16 %v7002, %v7001
    %v7008 = vpack.c.b16 %v7004, %v7003
    %v7009 = vpack.c.b16 %v7006, %v7005
    %v7029 = vunpack.c.l.b16 %v6979
    %v7030 = vunpack.c.h.b16 %v6979
    %v7031 = vunpack.c.l.b16 %v6980
    %v7032 = vunpack.c.h.b16 %v6980
    %v7033 = vunpack.c.l.b16 %v6981
    %v7034 = vunpack.c.h.b16 %v6981
    %v7035 = vunpack.c.l.b16 %v6982
    %v7036 = vunpack.c.h.b16 %v6982
    %v7037 = vunpack.c.l.b16 %v6983
    %v7038 = vunpack.c.h.b16 %v6983
    %v7039 = vunpack.c.l.b16 %v6984
    %v7040 = vunpack.c.h.b16 %v6984
    %v7041 = vunpack.c.l.b16 %v6985
    %v7042 = vunpack.c.h.b16 %v6985
    %v7043 = vunpack.c.l.b16 %v6986
    %v7044 = vunpack.c.h.b16 %v6986
    %v7045 = vunpack.c.l.b16 %v6987
    %v7046 = vunpack.c.h.b16 %v6987
    %v7047 = vunpack.c.l.b16 %v6988
    %v7048 = vunpack.c.h.b16 %v6988
    %v7049 = vunpack.c.l.b16 %v6989
    %v7050 = vunpack.c.h.b16 %v6989
    %v7051 = vunpack.c.l.b16 %v6990
    %v7052 = vunpack.c.h.b16 %v6990
    %v7053 = vunpack.c.l.b16 %v6991
    %v7054 = vunpack.c.h.b16 %v6991
    %v7055 = vunpack.c.l.b16 %v6992
    %v7056 = vunpack.c.h.b16 %v6992
    %v7057 = vunpack.c.l.b16 %v6993
    %v7058 = vunpack.c.h.b16 %v6993
    %v7059 = vunpack.c.l.b16 %v6994
    %v7060 = vunpack.c.h.b16 %v6994
    %v7061 = vpack.c.b16 %v7031, %v7029
    %v7062 = vpack.c.b16 %v7032, %v7030
    %v7063 = vpack.c.b16 %v7035, %v7033
    %v7064 = vpack.c.b16 %v7036, %v7034
    %v7065 = vpack.c.b16 %v7039, %v7037
    %v7066 = vpack.c.b16 %v7040, %v7038
    %v7067 = vpack.c.b16 %v7043, %v7041
    %v7068 = vpack.c.b16 %v7044, %v7042
    %v7069 = vpack.c.b16 %v7047, %v7045
    %v7070 = vpack.c.b16 %v7048, %v7046
    %v7071 = vpack.c.b16 %v7051, %v7049
    %v7072 = vpack.c.b16 %v7052, %v7050
    %v7073 = vpack.c.b16 %v7055, %v7053
    %v7074 = vpack.c.b16 %v7056, %v7054
    %v7075 = vpack.c.b16 %v7059, %v7057
    %v7076 = vpack.c.b16 %v7060, %v7058
    %7093 = vmatprep.subr.bf16.mxu0 %v7076
    %7094 = vmatpush1.bf16.msra.mxu0 %v7075
    %7095 = vmatprep.subr.bf16.mxu0 %v7074
    %7096 = vmatpush1.bf16.msra.mxu0 %v7073
    %7097 = vmatprep.subr.bf16.mxu0 %v7072
    %7098 = vmatpush1.bf16.msra.mxu0 %v7071
    %7099 = vmatprep.subr.bf16.mxu0 %v7070
    %7100 = vmatpush1.bf16.msra.mxu0 %v7069
    %7101 = vmatprep.subr.bf16.mxu0 %v7068
    %7102 = vmatpush1.bf16.msra.mxu0 %v7067
    %7103 = vmatprep.subr.bf16.mxu0 %v7066
    %7104 = vmatpush1.bf16.msra.mxu0 %v7065
    %7105 = vmatprep.subr.bf16.mxu0 %v7064
    %7106 = vmatpush1.bf16.msra.mxu0 %v7063
    %7107 = vmatprep.subr.bf16.mxu0 %v7062
    %7108 = vmatpush1.bf16.msra.mxu0 %v7061
    %7109 = vmatprep.subr.bf16.mxu0 0
    %7110 = vmatpush2.bf16.msra.mxu0 0
    %7111 = vmatprep.subr.bf16.mxu0 0
    %7112 = vmatpush2.bf16.msra.mxu0 0
    %7113 = vmatprep.subr.bf16.mxu0 0
    %7114 = vmatpush2.bf16.msra.mxu0 0
    %7115 = vmatprep.subr.bf16.mxu0 0
    %7116 = vmatpush2.bf16.msra.mxu0 0
    %7117 = vmatprep.subr.bf16.mxu0 0
    %7118 = vmatpush2.bf16.msra.mxu0 0
    %7119 = vmatprep.subr.bf16.mxu0 0
    %7120 = vmatpush2.bf16.msra.mxu0 0
    %7121 = vmatprep.subr.bf16.mxu0 0
    %7122 = vmatpush2.bf16.msra.mxu0 0
    %7123 = vmatprep.subr.bf16.mxu0 0
    %7124 = vmatpush2.bf16.msra.mxu0 0
    %7125 = vmatprep.mubr.bf16.mxu0 0
    %7126 = vmatmul.mubr.bf16.gmra.mxu0 %v7007
    %v7127 = vpop.f32.mrf.mxu0
    %v7128 = vadd.f32 0.0, %v7127
    %v7129 = vpop.f32.mrf.mxu0
    %v7130 = vadd.f32 0.0, %v7129
    %v7131 = vpop.f32.mrf.mxu0
    %v7132 = vadd.f32 0.0, %v7131
    %v7133 = vpop.f32.mrf.mxu0
    %v7134 = vadd.f32 0.0, %v7133
    %7135 = vmatprep.mubr.bf16.mxu0 0
    %7136 = vmatmul.mubr.bf16.gmra.mxu0 %v7008
    %v7137 = vpop.f32.mrf.mxu0
    %v7138 = vadd.f32 0.0, %v7137
    %v7139 = vpop.f32.mrf.mxu0
    %v7140 = vadd.f32 0.0, %v7139
    %v7141 = vpop.f32.mrf.mxu0
    %v7142 = vadd.f32 0.0, %v7141
    %v7143 = vpop.f32.mrf.mxu0
    %v7144 = vadd.f32 0.0, %v7143
    %7145 = vmatprep.mubr.bf16.mxu0 0
    %7146 = vmatmul.mubr.bf16.gmra.mxu0 %v7009
    %v7147 = vpop.f32.mrf.mxu0
    %v7148 = vadd.f32 0.0, %v7147
    %v7149 = vpop.f32.mrf.mxu0
    %v7150 = vadd.f32 0.0, %v7149
    %v7151 = vpop.f32.mrf.mxu0
    %v7152 = vadd.f32 0.0, %v7151
    %v7153 = vpop.f32.mrf.mxu0
    %v7154 = vadd.f32 0.0, %v7153
    %7155 = vdwg.mxu0
    %v7156 = vadd.f32 %v6966, %v7128
    %v7157 = vadd.f32 %v6967, %v7130
    %v7158 = vadd.f32 %v6968, %v7132
    %v7159 = vadd.f32 %v6969, %v7134
    %v7160 = vadd.f32 %v6970, %v7138
    %v7161 = vadd.f32 %v6971, %v7140
    %v7162 = vadd.f32 %v6972, %v7142
    %v7163 = vadd.f32 %v6973, %v7144
    %v7164 = vadd.f32 %v6974, %v7148
    %v7165 = vadd.f32 %v6975, %v7150
    %v7166 = vadd.f32 %v6976, %v7152
    %v7167 = vadd.f32 %v6977, %v7154
    %s7168 = scalar_lea.vmem %s10, 640
    %v7169 = vld [vmem:[%s7168] sm:$0xff]
    %v7170 = vld [vmem:[%s7168 + $0x8] sm:$0xff]
    %v7171 = vld [vmem:[%s7168 + $0x10] sm:$0xff]
    %v7172 = vld [vmem:[%s7168 + $0x18] sm:$0xff]
    %v7173 = vld [vmem:[%s7168 + $0x20] sm:$0xff]
    %v7174 = vld [vmem:[%s7168 + $0x28] sm:$0xff]
    %v7175 = vld [vmem:[%s7168 + $0x30] sm:$0xff]
    %v7176 = vld [vmem:[%s7168 + $0x38] sm:$0xff]
    %v7177 = vld [vmem:[%s7168 + $0x40] sm:$0xff]
    %v7178 = vld [vmem:[%s7168 + $0x48] sm:$0xff]
    %v7179 = vld [vmem:[%s7168 + $0x50] sm:$0xff]
    %v7180 = vld [vmem:[%s7168 + $0x58] sm:$0xff]
    %v7181 = vld [vmem:[%s7168 + $0x60] sm:$0xff]
    %v7182 = vld [vmem:[%s7168 + $0x68] sm:$0xff]
    %v7183 = vld [vmem:[%s7168 + $0x70] sm:$0xff]
    %v7184 = vld [vmem:[%s7168 + $0x78] sm:$0xff]
    %v7187 = vunpack.c.l.b16 %v6786
    %v7188 = vunpack.c.l.b16 %v6787
    %v7189 = vpack.c.b16 %v7188, %v7187
    %v7207 = vunpack.c.l.b16 %v7169
    %v7208 = vunpack.c.h.b16 %v7169
    %v7209 = vunpack.c.l.b16 %v7170
    %v7210 = vunpack.c.h.b16 %v7170
    %v7211 = vunpack.c.l.b16 %v7171
    %v7212 = vunpack.c.h.b16 %v7171
    %v7213 = vunpack.c.l.b16 %v7172
    %v7214 = vunpack.c.h.b16 %v7172
    %v7215 = vunpack.c.l.b16 %v7173
    %v7216 = vunpack.c.h.b16 %v7173
    %v7217 = vunpack.c.l.b16 %v7174
    %v7218 = vunpack.c.h.b16 %v7174
    %v7219 = vunpack.c.l.b16 %v7175
    %v7220 = vunpack.c.h.b16 %v7175
    %v7221 = vunpack.c.l.b16 %v7176
    %v7222 = vunpack.c.h.b16 %v7176
    %v7223 = vunpack.c.l.b16 %v7177
    %v7224 = vunpack.c.h.b16 %v7177
    %v7225 = vunpack.c.l.b16 %v7178
    %v7226 = vunpack.c.h.b16 %v7178
    %v7227 = vunpack.c.l.b16 %v7179
    %v7228 = vunpack.c.h.b16 %v7179
    %v7229 = vunpack.c.l.b16 %v7180
    %v7230 = vunpack.c.h.b16 %v7180
    %v7231 = vunpack.c.l.b16 %v7181
    %v7232 = vunpack.c.h.b16 %v7181
    %v7233 = vunpack.c.l.b16 %v7182
    %v7234 = vunpack.c.h.b16 %v7182
    %v7235 = vunpack.c.l.b16 %v7183
    %v7236 = vunpack.c.h.b16 %v7183
    %v7237 = vunpack.c.l.b16 %v7184
    %v7238 = vunpack.c.h.b16 %v7184
    %v7239 = vpack.c.b16 %v7209, %v7207
    %v7240 = vpack.c.b16 %v7210, %v7208
    %v7241 = vpack.c.b16 %v7213, %v7211
    %v7242 = vpack.c.b16 %v7214, %v7212
    %v7243 = vpack.c.b16 %v7217, %v7215
    %v7244 = vpack.c.b16 %v7218, %v7216
    %v7245 = vpack.c.b16 %v7221, %v7219
    %v7246 = vpack.c.b16 %v7222, %v7220
    %v7247 = vpack.c.b16 %v7225, %v7223
    %v7248 = vpack.c.b16 %v7226, %v7224
    %v7249 = vpack.c.b16 %v7229, %v7227
    %v7250 = vpack.c.b16 %v7230, %v7228
    %v7251 = vpack.c.b16 %v7233, %v7231
    %v7252 = vpack.c.b16 %v7234, %v7232
    %v7253 = vpack.c.b16 %v7237, %v7235
    %v7254 = vpack.c.b16 %v7238, %v7236
    %7271 = vmatprep.subr.bf16.mxu0 %v7254
    %7272 = vmatpush1.bf16.msra.mxu0 %v7253
    %7273 = vmatprep.subr.bf16.mxu0 %v7252
    %7274 = vmatpush1.bf16.msra.mxu0 %v7251
    %7275 = vmatprep.subr.bf16.mxu0 %v7250
    %7276 = vmatpush1.bf16.msra.mxu0 %v7249
    %7277 = vmatprep.subr.bf16.mxu0 %v7248
    %7278 = vmatpush1.bf16.msra.mxu0 %v7247
    %7279 = vmatprep.subr.bf16.mxu0 %v7246
    %7280 = vmatpush1.bf16.msra.mxu0 %v7245
    %7281 = vmatprep.subr.bf16.mxu0 %v7244
    %7282 = vmatpush1.bf16.msra.mxu0 %v7243
    %7283 = vmatprep.subr.bf16.mxu0 %v7242
    %7284 = vmatpush1.bf16.msra.mxu0 %v7241
    %7285 = vmatprep.subr.bf16.mxu0 %v7240
    %7286 = vmatpush1.bf16.msra.mxu0 %v7239
    %7287 = vmatprep.subr.bf16.mxu0 0
    %7288 = vmatpush2.bf16.msra.mxu0 0
    %7289 = vmatprep.subr.bf16.mxu0 0
    %7290 = vmatpush2.bf16.msra.mxu0 0
    %7291 = vmatprep.subr.bf16.mxu0 0
    %7292 = vmatpush2.bf16.msra.mxu0 0
    %7293 = vmatprep.subr.bf16.mxu0 0
    %7294 = vmatpush2.bf16.msra.mxu0 0
    %7295 = vmatprep.subr.bf16.mxu0 0
    %7296 = vmatpush2.bf16.msra.mxu0 0
    %7297 = vmatprep.subr.bf16.mxu0 0
    %7298 = vmatpush2.bf16.msra.mxu0 0
    %7299 = vmatprep.subr.bf16.mxu0 0
    %7300 = vmatpush2.bf16.msra.mxu0 0
    %7301 = vmatprep.subr.bf16.mxu0 0
    %7302 = vmatpush2.bf16.msra.mxu0 0
    %7303 = vmatprep.mubr.bf16.mxu0 0
    %7304 = vmatmul.mubr.bf16.gmra.mxu0 %v6818
    %v7305 = vpop.f32.mrf.mxu0
    %v7306 = vadd.f32 0.0, %v7305
    %v7307 = vpop.f32.mrf.mxu0
    %v7308 = vadd.f32 0.0, %v7307
    %v7309 = vpop.f32.mrf.mxu0
    %v7310 = vadd.f32 0.0, %v7309
    %v7311 = vpop.f32.mrf.mxu0
    %v7312 = vadd.f32 0.0, %v7311
    %7313 = vmatprep.mubr.bf16.mxu0 0
    %7314 = vmatmul.mubr.bf16.gmra.mxu0 %v6819
    %v7315 = vpop.f32.mrf.mxu0
    %v7316 = vadd.f32 0.0, %v7315
    %v7317 = vpop.f32.mrf.mxu0
    %v7318 = vadd.f32 0.0, %v7317
    %v7319 = vpop.f32.mrf.mxu0
    %v7320 = vadd.f32 0.0, %v7319
    %v7321 = vpop.f32.mrf.mxu0
    %v7322 = vadd.f32 0.0, %v7321
    %7323 = vmatprep.mubr.bf16.mxu0 0
    %7324 = vmatmul.mubr.bf16.gmra.mxu0 %v7189
    %v7325 = vpop.f32.mrf.mxu0
    %v7326 = vadd.f32 0.0, %v7325
    %v7327 = vpop.f32.mrf.mxu0
    %v7328 = vadd.f32 0.0, %v7327
    %v7329 = vpop.f32.mrf.mxu0
    %v7330 = vadd.f32 0.0, %v7329
    %v7331 = vpop.f32.mrf.mxu0
    %v7332 = vadd.f32 0.0, %v7331
    %7333 = vdwg.mxu0
    %v7334 = vadd.f32 %v7156, %v7306
    %v7335 = vadd.f32 %v7157, %v7308
    %v7336 = vadd.f32 %v7158, %v7310
    %v7337 = vadd.f32 %v7159, %v7312
    %v7338 = vadd.f32 %v7160, %v7316
    %v7339 = vadd.f32 %v7161, %v7318
    %v7340 = vadd.f32 %v7162, %v7320
    %v7341 = vadd.f32 %v7163, %v7322
    %v7342 = vadd.f32 %v7164, %v7326
    %v7343 = vadd.f32 %v7165, %v7328
    %v7344 = vadd.f32 %v7166, %v7330
    %v7345 = vadd.f32 %v7167, %v7332
    %s7346 = sadd.s32 %s6219, 2
    %s7347 = smul.u32 %s7346, 14
    %s7348 = smul.addr %s7347, 4
    %s7349 = scalar_lea.vmem [#allocation4], %s7348
    %v7350 = vld [vmem:[%s7349] sm:$0xf]
    %v7351 = vld [vmem:[%s7349 + $0x4] sm:$0xf]
    %v7352 = vld [vmem:[%s7349 + $0x8] sm:$0xf]
    %v7353 = vld [vmem:[%s7349 + $0xc] sm:$0xf]
    %v7354 = vld [vmem:[%s7349 + $0x10] sm:$0xf]
    %v7355 = vld [vmem:[%s7349 + $0x14] sm:$0xf]
    %v7356 = vld [vmem:[%s7349 + $0x18] sm:$0xf]
    %v7357 = vld [vmem:[%s7349 + $0x1c] sm:$0xf]
    %v7358 = vld [vmem:[%s7349 + $0x20] sm:$0xf]
    %v7359 = vld [vmem:[%s7349 + $0x24] sm:$0xf]
    %v7360 = vld [vmem:[%s7349 + $0x28] sm:$0xf]
    %v7361 = vld [vmem:[%s7349 + $0x2c] sm:$0xf]
    %v7362 = vld [vmem:[%s7349 + $0x30] sm:$0xf]
    %v7363 = vld [vmem:[%s7349 + $0x34] sm:$0xf]
    %s7364 = scalar_lea.vmem %s10, 768
    %v7365 = vld [vmem:[%s7364] sm:$0xff]
    %v7366 = vld [vmem:[%s7364 + $0x8] sm:$0xff]
    %v7367 = vld [vmem:[%s7364 + $0x10] sm:$0xff]
    %v7368 = vld [vmem:[%s7364 + $0x18] sm:$0xff]
    %v7369 = vld [vmem:[%s7364 + $0x20] sm:$0xff]
    %v7370 = vld [vmem:[%s7364 + $0x28] sm:$0xff]
    %v7371 = vld [vmem:[%s7364 + $0x30] sm:$0xff]
    %v7372 = vld [vmem:[%s7364 + $0x38] sm:$0xff]
    %v7373 = vld [vmem:[%s7364 + $0x40] sm:$0xff]
    %v7374 = vld [vmem:[%s7364 + $0x48] sm:$0xff]
    %v7375 = vld [vmem:[%s7364 + $0x50] sm:$0xff]
    %v7376 = vld [vmem:[%s7364 + $0x58] sm:$0xff]
    %v7377 = vld [vmem:[%s7364 + $0x60] sm:$0xff]
    %v7378 = vld [vmem:[%s7364 + $0x68] sm:$0xff]
    %v7379 = vld [vmem:[%s7364 + $0x70] sm:$0xff]
    %v7380 = vld [vmem:[%s7364 + $0x78] sm:$0xff]
    %v7387 = vunpack.c.l.b16 %v7350
    %v7388 = vunpack.c.l.b16 %v7351
    %v7389 = vunpack.c.l.b16 %v7354
    %v7390 = vunpack.c.l.b16 %v7355
    %v7391 = vunpack.c.l.b16 %v7358
    %v7392 = vunpack.c.l.b16 %v7359
    %v7393 = vpack.c.b16 %v7388, %v7387
    %v7394 = vpack.c.b16 %v7390, %v7389
    %v7395 = vpack.c.b16 %v7392, %v7391
    %v7415 = vunpack.c.l.b16 %v7365
    %v7416 = vunpack.c.h.b16 %v7365
    %v7417 = vunpack.c.l.b16 %v7366
    %v7418 = vunpack.c.h.b16 %v7366
    %v7419 = vunpack.c.l.b16 %v7367
    %v7420 = vunpack.c.h.b16 %v7367
    %v7421 = vunpack.c.l.b16 %v7368
    %v7422 = vunpack.c.h.b16 %v7368
    %v7423 = vunpack.c.l.b16 %v7369
    %v7424 = vunpack.c.h.b16 %v7369
    %v7425 = vunpack.c.l.b16 %v7370
    %v7426 = vunpack.c.h.b16 %v7370
    %v7427 = vunpack.c.l.b16 %v7371
    %v7428 = vunpack.c.h.b16 %v7371
    %v7429 = vunpack.c.l.b16 %v7372
    %v7430 = vunpack.c.h.b16 %v7372
    %v7431 = vunpack.c.l.b16 %v7373
    %v7432 = vunpack.c.h.b16 %v7373
    %v7433 = vunpack.c.l.b16 %v7374
    %v7434 = vunpack.c.h.b16 %v7374
    %v7435 = vunpack.c.l.b16 %v7375
    %v7436 = vunpack.c.h.b16 %v7375
    %v7437 = vunpack.c.l.b16 %v7376
    %v7438 = vunpack.c.h.b16 %v7376
    %v7439 = vunpack.c.l.b16 %v7377
    %v7440 = vunpack.c.h.b16 %v7377
    %v7441 = vunpack.c.l.b16 %v7378
    %v7442 = vunpack.c.h.b16 %v7378
    %v7443 = vunpack.c.l.b16 %v7379
    %v7444 = vunpack.c.h.b16 %v7379
    %v7445 = vunpack.c.l.b16 %v7380
    %v7446 = vunpack.c.h.b16 %v7380
    %v7447 = vpack.c.b16 %v7417, %v7415
    %v7448 = vpack.c.b16 %v7418, %v7416
    %v7449 = vpack.c.b16 %v7421, %v7419
    %v7450 = vpack.c.b16 %v7422, %v7420
    %v7451 = vpack.c.b16 %v7425, %v7423
    %v7452 = vpack.c.b16 %v7426, %v7424
    %v7453 = vpack.c.b16 %v7429, %v7427
    %v7454 = vpack.c.b16 %v7430, %v7428
    %v7455 = vpack.c.b16 %v7433, %v7431
    %v7456 = vpack.c.b16 %v7434, %v7432
    %v7457 = vpack.c.b16 %v7437, %v7435
    %v7458 = vpack.c.b16 %v7438, %v7436
    %v7459 = vpack.c.b16 %v7441, %v7439
    %v7460 = vpack.c.b16 %v7442, %v7440
    %v7461 = vpack.c.b16 %v7445, %v7443
    %v7462 = vpack.c.b16 %v7446, %v7444
    %7479 = vmatprep.subr.bf16.mxu0 %v7462
    %7480 = vmatpush1.bf16.msra.mxu0 %v7461
    %7481 = vmatprep.subr.bf16.mxu0 %v7460
    %7482 = vmatpush1.bf16.msra.mxu0 %v7459
    %7483 = vmatprep.subr.bf16.mxu0 %v7458
    %7484 = vmatpush1.bf16.msra.mxu0 %v7457
    %7485 = vmatprep.subr.bf16.mxu0 %v7456
    %7486 = vmatpush1.bf16.msra.mxu0 %v7455
    %7487 = vmatprep.subr.bf16.mxu0 %v7454
    %7488 = vmatpush1.bf16.msra.mxu0 %v7453
    %7489 = vmatprep.subr.bf16.mxu0 %v7452
    %7490 = vmatpush1.bf16.msra.mxu0 %v7451
    %7491 = vmatprep.subr.bf16.mxu0 %v7450
    %7492 = vmatpush1.bf16.msra.mxu0 %v7449
    %7493 = vmatprep.subr.bf16.mxu0 %v7448
    %7494 = vmatpush1.bf16.msra.mxu0 %v7447
    %7495 = vmatprep.subr.bf16.mxu0 0
    %7496 = vmatpush2.bf16.msra.mxu0 0
    %7497 = vmatprep.subr.bf16.mxu0 0
    %7498 = vmatpush2.bf16.msra.mxu0 0
    %7499 = vmatprep.subr.bf16.mxu0 0
    %7500 = vmatpush2.bf16.msra.mxu0 0
    %7501 = vmatprep.subr.bf16.mxu0 0
    %7502 = vmatpush2.bf16.msra.mxu0 0
    %7503 = vmatprep.subr.bf16.mxu0 0
    %7504 = vmatpush2.bf16.msra.mxu0 0
    %7505 = vmatprep.subr.bf16.mxu0 0
    %7506 = vmatpush2.bf16.msra.mxu0 0
    %7507 = vmatprep.subr.bf16.mxu0 0
    %7508 = vmatpush2.bf16.msra.mxu0 0
    %7509 = vmatprep.subr.bf16.mxu0 0
    %7510 = vmatpush2.bf16.msra.mxu0 0
    %7511 = vmatprep.mubr.bf16.mxu0 0
    %7512 = vmatmul.mubr.bf16.gmra.mxu0 %v7393
    %v7513 = vpop.f32.mrf.mxu0
    %v7514 = vadd.f32 0.0, %v7513
    %v7515 = vpop.f32.mrf.mxu0
    %v7516 = vadd.f32 0.0, %v7515
    %v7517 = vpop.f32.mrf.mxu0
    %v7518 = vadd.f32 0.0, %v7517
    %v7519 = vpop.f32.mrf.mxu0
    %v7520 = vadd.f32 0.0, %v7519
    %7521 = vmatprep.mubr.bf16.mxu0 0
    %7522 = vmatmul.mubr.bf16.gmra.mxu0 %v7394
    %v7523 = vpop.f32.mrf.mxu0
    %v7524 = vadd.f32 0.0, %v7523
    %v7525 = vpop.f32.mrf.mxu0
    %v7526 = vadd.f32 0.0, %v7525
    %v7527 = vpop.f32.mrf.mxu0
    %v7528 = vadd.f32 0.0, %v7527
    %v7529 = vpop.f32.mrf.mxu0
    %v7530 = vadd.f32 0.0, %v7529
    %7531 = vmatprep.mubr.bf16.mxu0 0
    %7532 = vmatmul.mubr.bf16.gmra.mxu0 %v7395
    %v7533 = vpop.f32.mrf.mxu0
    %v7534 = vadd.f32 0.0, %v7533
    %v7535 = vpop.f32.mrf.mxu0
    %v7536 = vadd.f32 0.0, %v7535
    %v7537 = vpop.f32.mrf.mxu0
    %v7538 = vadd.f32 0.0, %v7537
    %v7539 = vpop.f32.mrf.mxu0
    %v7540 = vadd.f32 0.0, %v7539
    %7541 = vdwg.mxu0
    %v7542 = vadd.f32 %v7334, %v7514
    %v7543 = vadd.f32 %v7335, %v7516
    %v7544 = vadd.f32 %v7336, %v7518
    %v7545 = vadd.f32 %v7337, %v7520
    %v7546 = vadd.f32 %v7338, %v7524
    %v7547 = vadd.f32 %v7339, %v7526
    %v7548 = vadd.f32 %v7340, %v7528
    %v7549 = vadd.f32 %v7341, %v7530
    %v7550 = vadd.f32 %v7342, %v7534
    %v7551 = vadd.f32 %v7343, %v7536
    %v7552 = vadd.f32 %v7344, %v7538
    %v7553 = vadd.f32 %v7345, %v7540
    %s7554 = scalar_lea.vmem %s10, 896
    %v7555 = vld [vmem:[%s7554] sm:$0xff]
    %v7556 = vld [vmem:[%s7554 + $0x8] sm:$0xff]
    %v7557 = vld [vmem:[%s7554 + $0x10] sm:$0xff]
    %v7558 = vld [vmem:[%s7554 + $0x18] sm:$0xff]
    %v7559 = vld [vmem:[%s7554 + $0x20] sm:$0xff]
    %v7560 = vld [vmem:[%s7554 + $0x28] sm:$0xff]
    %v7561 = vld [vmem:[%s7554 + $0x30] sm:$0xff]
    %v7562 = vld [vmem:[%s7554 + $0x38] sm:$0xff]
    %v7563 = vld [vmem:[%s7554 + $0x40] sm:$0xff]
    %v7564 = vld [vmem:[%s7554 + $0x48] sm:$0xff]
    %v7565 = vld [vmem:[%s7554 + $0x50] sm:$0xff]
    %v7566 = vld [vmem:[%s7554 + $0x58] sm:$0xff]
    %v7567 = vld [vmem:[%s7554 + $0x60] sm:$0xff]
    %v7568 = vld [vmem:[%s7554 + $0x68] sm:$0xff]
    %v7569 = vld [vmem:[%s7554 + $0x70] sm:$0xff]
    %v7570 = vld [vmem:[%s7554 + $0x78] sm:$0xff]
    %v7577 = vunpack.c.l.b16 %v7352
    %v7578 = vunpack.c.l.b16 %v7353
    %v7579 = vunpack.c.l.b16 %v7356
    %v7580 = vunpack.c.l.b16 %v7357
    %v7581 = vunpack.c.l.b16 %v7360
    %v7582 = vunpack.c.l.b16 %v7361
    %v7583 = vpack.c.b16 %v7578, %v7577
    %v7584 = vpack.c.b16 %v7580, %v7579
    %v7585 = vpack.c.b16 %v7582, %v7581
    %v7605 = vunpack.c.l.b16 %v7555
    %v7606 = vunpack.c.h.b16 %v7555
    %v7607 = vunpack.c.l.b16 %v7556
    %v7608 = vunpack.c.h.b16 %v7556
    %v7609 = vunpack.c.l.b16 %v7557
    %v7610 = vunpack.c.h.b16 %v7557
    %v7611 = vunpack.c.l.b16 %v7558
    %v7612 = vunpack.c.h.b16 %v7558
    %v7613 = vunpack.c.l.b16 %v7559
    %v7614 = vunpack.c.h.b16 %v7559
    %v7615 = vunpack.c.l.b16 %v7560
    %v7616 = vunpack.c.h.b16 %v7560
    %v7617 = vunpack.c.l.b16 %v7561
    %v7618 = vunpack.c.h.b16 %v7561
    %v7619 = vunpack.c.l.b16 %v7562
    %v7620 = vunpack.c.h.b16 %v7562
    %v7621 = vunpack.c.l.b16 %v7563
    %v7622 = vunpack.c.h.b16 %v7563
    %v7623 = vunpack.c.l.b16 %v7564
    %v7624 = vunpack.c.h.b16 %v7564
    %v7625 = vunpack.c.l.b16 %v7565
    %v7626 = vunpack.c.h.b16 %v7565
    %v7627 = vunpack.c.l.b16 %v7566
    %v7628 = vunpack.c.h.b16 %v7566
    %v7629 = vunpack.c.l.b16 %v7567
    %v7630 = vunpack.c.h.b16 %v7567
    %v7631 = vunpack.c.l.b16 %v7568
    %v7632 = vunpack.c.h.b16 %v7568
    %v7633 = vunpack.c.l.b16 %v7569
    %v7634 = vunpack.c.h.b16 %v7569
    %v7635 = vunpack.c.l.b16 %v7570
    %v7636 = vunpack.c.h.b16 %v7570
    %v7637 = vpack.c.b16 %v7607, %v7605
    %v7638 = vpack.c.b16 %v7608, %v7606
    %v7639 = vpack.c.b16 %v7611, %v7609
    %v7640 = vpack.c.b16 %v7612, %v7610
    %v7641 = vpack.c.b16 %v7615, %v7613
    %v7642 = vpack.c.b16 %v7616, %v7614
    %v7643 = vpack.c.b16 %v7619, %v7617
    %v7644 = vpack.c.b16 %v7620, %v7618
    %v7645 = vpack.c.b16 %v7623, %v7621
    %v7646 = vpack.c.b16 %v7624, %v7622
    %v7647 = vpack.c.b16 %v7627, %v7625
    %v7648 = vpack.c.b16 %v7628, %v7626
    %v7649 = vpack.c.b16 %v7631, %v7629
    %v7650 = vpack.c.b16 %v7632, %v7630
    %v7651 = vpack.c.b16 %v7635, %v7633
    %v7652 = vpack.c.b16 %v7636, %v7634
    %7669 = vmatprep.subr.bf16.mxu0 %v7652
    %7670 = vmatpush1.bf16.msra.mxu0 %v7651
    %7671 = vmatprep.subr.bf16.mxu0 %v7650
    %7672 = vmatpush1.bf16.msra.mxu0 %v7649
    %7673 = vmatprep.subr.bf16.mxu0 %v7648
    %7674 = vmatpush1.bf16.msra.mxu0 %v7647
    %7675 = vmatprep.subr.bf16.mxu0 %v7646
    %7676 = vmatpush1.bf16.msra.mxu0 %v7645
    %7677 = vmatprep.subr.bf16.mxu0 %v7644
    %7678 = vmatpush1.bf16.msra.mxu0 %v7643
    %7679 = vmatprep.subr.bf16.mxu0 %v7642
    %7680 = vmatpush1.bf16.msra.mxu0 %v7641
    %7681 = vmatprep.subr.bf16.mxu0 %v7640
    %7682 = vmatpush1.bf16.msra.mxu0 %v7639
    %7683 = vmatprep.subr.bf16.mxu0 %v7638
    %7684 = vmatpush1.bf16.msra.mxu0 %v7637
    %7685 = vmatprep.subr.bf16.mxu0 0
    %7686 = vmatpush2.bf16.msra.mxu0 0
    %7687 = vmatprep.subr.bf16.mxu0 0
    %7688 = vmatpush2.bf16.msra.mxu0 0
    %7689 = vmatprep.subr.bf16.mxu0 0
    %7690 = vmatpush2.bf16.msra.mxu0 0
    %7691 = vmatprep.subr.bf16.mxu0 0
    %7692 = vmatpush2.bf16.msra.mxu0 0
    %7693 = vmatprep.subr.bf16.mxu0 0
    %7694 = vmatpush2.bf16.msra.mxu0 0
    %7695 = vmatprep.subr.bf16.mxu0 0
    %7696 = vmatpush2.bf16.msra.mxu0 0
    %7697 = vmatprep.subr.bf16.mxu0 0
    %7698 = vmatpush2.bf16.msra.mxu0 0
    %7699 = vmatprep.subr.bf16.mxu0 0
    %7700 = vmatpush2.bf16.msra.mxu0 0
    %7701 = vmatprep.mubr.bf16.mxu0 0
    %7702 = vmatmul.mubr.bf16.gmra.mxu0 %v7583
    %v7703 = vpop.f32.mrf.mxu0
    %v7704 = vadd.f32 0.0, %v7703
    %v7705 = vpop.f32.mrf.mxu0
    %v7706 = vadd.f32 0.0, %v7705
    %v7707 = vpop.f32.mrf.mxu0
    %v7708 = vadd.f32 0.0, %v7707
    %v7709 = vpop.f32.mrf.mxu0
    %v7710 = vadd.f32 0.0, %v7709
    %7711 = vmatprep.mubr.bf16.mxu0 0
    %7712 = vmatmul.mubr.bf16.gmra.mxu0 %v7584
    %v7713 = vpop.f32.mrf.mxu0
    %v7714 = vadd.f32 0.0, %v7713
    %v7715 = vpop.f32.mrf.mxu0
    %v7716 = vadd.f32 0.0, %v7715
    %v7717 = vpop.f32.mrf.mxu0
    %v7718 = vadd.f32 0.0, %v7717
    %v7719 = vpop.f32.mrf.mxu0
    %v7720 = vadd.f32 0.0, %v7719
    %7721 = vmatprep.mubr.bf16.mxu0 0
    %7722 = vmatmul.mubr.bf16.gmra.mxu0 %v7585
    %v7723 = vpop.f32.mrf.mxu0
    %v7724 = vadd.f32 0.0, %v7723
    %v7725 = vpop.f32.mrf.mxu0
    %v7726 = vadd.f32 0.0, %v7725
    %v7727 = vpop.f32.mrf.mxu0
    %v7728 = vadd.f32 0.0, %v7727
    %v7729 = vpop.f32.mrf.mxu0
    %v7730 = vadd.f32 0.0, %v7729
    %7731 = vdwg.mxu0
    %v7732 = vadd.f32 %v7542, %v7704
    %v7733 = vadd.f32 %v7543, %v7706
    %v7734 = vadd.f32 %v7544, %v7708
    %v7735 = vadd.f32 %v7545, %v7710
    %v7736 = vadd.f32 %v7546, %v7714
    %v7737 = vadd.f32 %v7547, %v7716
    %v7738 = vadd.f32 %v7548, %v7718
    %v7739 = vadd.f32 %v7549, %v7720
    %v7740 = vadd.f32 %v7550, %v7724
    %v7741 = vadd.f32 %v7551, %v7726
    %v7742 = vadd.f32 %v7552, %v7728
    %v7743 = vadd.f32 %v7553, %v7730
    %s7744 = scalar_lea.vmem %s10, 1024
    %v7745 = vld [vmem:[%s7744] sm:$0xff]
    %v7746 = vld [vmem:[%s7744 + $0x8] sm:$0xff]
    %v7747 = vld [vmem:[%s7744 + $0x10] sm:$0xff]
    %v7748 = vld [vmem:[%s7744 + $0x18] sm:$0xff]
    %v7749 = vld [vmem:[%s7744 + $0x20] sm:$0xff]
    %v7750 = vld [vmem:[%s7744 + $0x28] sm:$0xff]
    %v7751 = vld [vmem:[%s7744 + $0x30] sm:$0xff]
    %v7752 = vld [vmem:[%s7744 + $0x38] sm:$0xff]
    %v7753 = vld [vmem:[%s7744 + $0x40] sm:$0xff]
    %v7754 = vld [vmem:[%s7744 + $0x48] sm:$0xff]
    %v7755 = vld [vmem:[%s7744 + $0x50] sm:$0xff]
    %v7756 = vld [vmem:[%s7744 + $0x58] sm:$0xff]
    %v7757 = vld [vmem:[%s7744 + $0x60] sm:$0xff]
    %v7758 = vld [vmem:[%s7744 + $0x68] sm:$0xff]
    %v7759 = vld [vmem:[%s7744 + $0x70] sm:$0xff]
    %v7760 = vld [vmem:[%s7744 + $0x78] sm:$0xff]
    %v7763 = vunpack.c.l.b16 %v7362
    %v7764 = vunpack.c.l.b16 %v7363
    %v7765 = vpack.c.b16 %v7764, %v7763
    %v7783 = vunpack.c.l.b16 %v7745
    %v7784 = vunpack.c.h.b16 %v7745
    %v7785 = vunpack.c.l.b16 %v7746
    %v7786 = vunpack.c.h.b16 %v7746
    %v7787 = vunpack.c.l.b16 %v7747
    %v7788 = vunpack.c.h.b16 %v7747
    %v7789 = vunpack.c.l.b16 %v7748
    %v7790 = vunpack.c.h.b16 %v7748
    %v7791 = vunpack.c.l.b16 %v7749
    %v7792 = vunpack.c.h.b16 %v7749
    %v7793 = vunpack.c.l.b16 %v7750
    %v7794 = vunpack.c.h.b16 %v7750
    %v7795 = vunpack.c.l.b16 %v7751
    %v7796 = vunpack.c.h.b16 %v7751
    %v7797 = vunpack.c.l.b16 %v7752
    %v7798 = vunpack.c.h.b16 %v7752
    %v7799 = vunpack.c.l.b16 %v7753
    %v7800 = vunpack.c.h.b16 %v7753
    %v7801 = vunpack.c.l.b16 %v7754
    %v7802 = vunpack.c.h.b16 %v7754
    %v7803 = vunpack.c.l.b16 %v7755
    %v7804 = vunpack.c.h.b16 %v7755
    %v7805 = vunpack.c.l.b16 %v7756
    %v7806 = vunpack.c.h.b16 %v7756
    %v7807 = vunpack.c.l.b16 %v7757
    %v7808 = vunpack.c.h.b16 %v7757
    %v7809 = vunpack.c.l.b16 %v7758
    %v7810 = vunpack.c.h.b16 %v7758
    %v7811 = vunpack.c.l.b16 %v7759
    %v7812 = vunpack.c.h.b16 %v7759
    %v7813 = vunpack.c.l.b16 %v7760
    %v7814 = vunpack.c.h.b16 %v7760
    %v7815 = vpack.c.b16 %v7785, %v7783
    %v7816 = vpack.c.b16 %v7786, %v7784
    %v7817 = vpack.c.b16 %v7789, %v7787
    %v7818 = vpack.c.b16 %v7790, %v7788
    %v7819 = vpack.c.b16 %v7793, %v7791
    %v7820 = vpack.c.b16 %v7794, %v7792
    %v7821 = vpack.c.b16 %v7797, %v7795
    %v7822 = vpack.c.b16 %v7798, %v7796
    %v7823 = vpack.c.b16 %v7801, %v7799
    %v7824 = vpack.c.b16 %v7802, %v7800
    %v7825 = vpack.c.b16 %v7805, %v7803
    %v7826 = vpack.c.b16 %v7806, %v7804
    %v7827 = vpack.c.b16 %v7809, %v7807
    %v7828 = vpack.c.b16 %v7810, %v7808
    %v7829 = vpack.c.b16 %v7813, %v7811
    %v7830 = vpack.c.b16 %v7814, %v7812
    %7847 = vmatprep.subr.bf16.mxu0 %v7830
    %7848 = vmatpush1.bf16.msra.mxu0 %v7829
    %7849 = vmatprep.subr.bf16.mxu0 %v7828
    %7850 = vmatpush1.bf16.msra.mxu0 %v7827
    %7851 = vmatprep.subr.bf16.mxu0 %v7826
    %7852 = vmatpush1.bf16.msra.mxu0 %v7825
    %7853 = vmatprep.subr.bf16.mxu0 %v7824
    %7854 = vmatpush1.bf16.msra.mxu0 %v7823
    %7855 = vmatprep.subr.bf16.mxu0 %v7822
    %7856 = vmatpush1.bf16.msra.mxu0 %v7821
    %7857 = vmatprep.subr.bf16.mxu0 %v7820
    %7858 = vmatpush1.bf16.msra.mxu0 %v7819
    %7859 = vmatprep.subr.bf16.mxu0 %v7818
    %7860 = vmatpush1.bf16.msra.mxu0 %v7817
    %7861 = vmatprep.subr.bf16.mxu0 %v7816
    %7862 = vmatpush1.bf16.msra.mxu0 %v7815
    %7863 = vmatprep.subr.bf16.mxu0 0
    %7864 = vmatpush2.bf16.msra.mxu0 0
    %7865 = vmatprep.subr.bf16.mxu0 0
    %7866 = vmatpush2.bf16.msra.mxu0 0
    %7867 = vmatprep.subr.bf16.mxu0 0
    %7868 = vmatpush2.bf16.msra.mxu0 0
    %7869 = vmatprep.subr.bf16.mxu0 0
    %7870 = vmatpush2.bf16.msra.mxu0 0
    %7871 = vmatprep.subr.bf16.mxu0 0
    %7872 = vmatpush2.bf16.msra.mxu0 0
    %7873 = vmatprep.subr.bf16.mxu0 0
    %7874 = vmatpush2.bf16.msra.mxu0 0
    %7875 = vmatprep.subr.bf16.mxu0 0
    %7876 = vmatpush2.bf16.msra.mxu0 0
    %7877 = vmatprep.subr.bf16.mxu0 0
    %7878 = vmatpush2.bf16.msra.mxu0 0
    %7879 = vmatprep.mubr.bf16.mxu0 0
    %7880 = vmatmul.mubr.bf16.gmra.mxu0 %v7394
    %v7881 = vpop.f32.mrf.mxu0
    %v7882 = vadd.f32 0.0, %v7881
    %v7883 = vpop.f32.mrf.mxu0
    %v7884 = vadd.f32 0.0, %v7883
    %v7885 = vpop.f32.mrf.mxu0
    %v7886 = vadd.f32 0.0, %v7885
    %v7887 = vpop.f32.mrf.mxu0
    %v7888 = vadd.f32 0.0, %v7887
    %7889 = vmatprep.mubr.bf16.mxu0 0
    %7890 = vmatmul.mubr.bf16.gmra.mxu0 %v7395
    %v7891 = vpop.f32.mrf.mxu0
    %v7892 = vadd.f32 0.0, %v7891
    %v7893 = vpop.f32.mrf.mxu0
    %v7894 = vadd.f32 0.0, %v7893
    %v7895 = vpop.f32.mrf.mxu0
    %v7896 = vadd.f32 0.0, %v7895
    %v7897 = vpop.f32.mrf.mxu0
    %v7898 = vadd.f32 0.0, %v7897
    %7899 = vmatprep.mubr.bf16.mxu0 0
    %7900 = vmatmul.mubr.bf16.gmra.mxu0 %v7765
    %v7901 = vpop.f32.mrf.mxu0
    %v7902 = vadd.f32 0.0, %v7901
    %v7903 = vpop.f32.mrf.mxu0
    %v7904 = vadd.f32 0.0, %v7903
    %v7905 = vpop.f32.mrf.mxu0
    %v7906 = vadd.f32 0.0, %v7905
    %v7907 = vpop.f32.mrf.mxu0
    %v7908 = vadd.f32 0.0, %v7907
    %7909 = vdwg.mxu0
    %v7910 = vadd.f32 %v7732, %v7882
    %v7911 = vadd.f32 %v7733, %v7884
    %v7912 = vadd.f32 %v7734, %v7886
    %v7913 = vadd.f32 %v7735, %v7888
    %v7914 = vadd.f32 %v7736, %v7892
    %v7915 = vadd.f32 %v7737, %v7894
    %v7916 = vadd.f32 %v7738, %v7896
    %v7917 = vadd.f32 %v7739, %v7898
    %v7918 = vadd.f32 %v7740, %v7902
    %v7919 = vadd.f32 %v7741, %v7904
    %v7920 = vadd.f32 %v7742, %v7906
    %v7921 = vadd.f32 %v7743, %v7908
    %v7923 = vlaneseq
    %v7924 = vshrl.u32 %v7923, 7
    %v7925 = vsub.s32 0, %v7924
    %v7926 = vrot.slane %v6212, %v7925
    %v7927 = vlaneseq
    %v7928 = vshrl.u32 %v7927, 7
    %v7929 = vsub.s32 1, %v7928
    %v7930 = vrot.slane %v6212, %v7929
    %v7933 = vadd.f32 %v7910, %v7926
    %v7934 = vadd.f32 %v7911, %v7930
    %v7935 = vadd.f32 %v7912, %v7926
    %v7936 = vadd.f32 %v7913, %v7930
    %v7937 = vadd.f32 %v7914, %v7926
    %v7938 = vadd.f32 %v7915, %v7930
    %v7939 = vadd.f32 %v7916, %v7926
    %v7940 = vadd.f32 %v7917, %v7930
    %v7941 = vadd.f32 %v7918, %v7926
    %v7942 = vadd.f32 %v7919, %v7930
    %v7943 = vadd.f32 %v7920, %v7926
    %v7944 = vadd.f32 %v7921, %v7930
    %vm7945 = vcmp.ge.f32.partialorder %v7933, 0.0
    %vm7946 = vcmp.ge.f32.partialorder %v7934, 0.0
    %vm7947 = vcmp.ge.f32.partialorder %v7935, 0.0
    %vm7948 = vcmp.ge.f32.partialorder %v7936, 0.0
    %vm7949 = vcmp.ge.f32.partialorder %v7937, 0.0
    %vm7950 = vcmp.ge.f32.partialorder %v7938, 0.0
    %vm7951 = vcmp.ge.f32.partialorder %v7939, 0.0
    %vm7952 = vcmp.ge.f32.partialorder %v7940, 0.0
    %vm7953 = vcmp.ge.f32.partialorder %v7941, 0.0
    %vm7954 = vcmp.ge.f32.partialorder %v7942, 0.0
    %vm7955 = vcmp.ge.f32.partialorder %v7943, 0.0
    %vm7956 = vcmp.ge.f32.partialorder %v7944, 0.0
    %v7957 = vmul.f32 %v7933, 0.01
    %v7958 = vmul.f32 %v7934, 0.01
    %v7959 = vmul.f32 %v7935, 0.01
    %v7960 = vmul.f32 %v7936, 0.01
    %v7961 = vmul.f32 %v7937, 0.01
    %v7962 = vmul.f32 %v7938, 0.01
    %v7963 = vmul.f32 %v7939, 0.01
    %v7964 = vmul.f32 %v7940, 0.01
    %v7965 = vmul.f32 %v7941, 0.01
    %v7966 = vmul.f32 %v7942, 0.01
    %v7967 = vmul.f32 %v7943, 0.01
    %v7968 = vmul.f32 %v7944, 0.01
    %v7969 = vsel %vm7945, %v7933, %v7957
    %v7970 = vsel %vm7946, %v7934, %v7958
    %v7971 = vsel %vm7947, %v7935, %v7959
    %v7972 = vsel %vm7948, %v7936, %v7960
    %v7973 = vsel %vm7949, %v7937, %v7961
    %v7974 = vsel %vm7950, %v7938, %v7962
    %v7975 = vsel %vm7951, %v7939, %v7963
    %v7976 = vsel %vm7952, %v7940, %v7964
    %v7977 = vsel %vm7953, %v7941, %v7965
    %v7978 = vsel %vm7954, %v7942, %v7966
    %v7979 = vsel %vm7955, %v7943, %v7967
    %v7980 = vsel %vm7956, %v7944, %v7968
    %v7981 = vpack.c.bf16 %v7971, %v7969
    %v7982 = vpack.c.bf16 %v7972, %v7970
    %v7983 = vpack.c.bf16 %v7975, %v7973
    %v7984 = vpack.c.bf16 %v7976, %v7974
    %v7985 = vpack.c.bf16 %v7979, %v7977
    %v7986 = vpack.c.bf16 %v7980, %v7978
    %v7993 = vunpack.c.l.b16 %v7981
    %v7994 = vunpack.c.l.b16 %v7982
    %v7995 = vunpack.c.h.b16 %v7981
    %v7996 = vunpack.c.h.b16 %v7982
    %v7997 = vunpack.c.l.b16 %v7983
    %v7998 = vunpack.c.l.b16 %v7984
    %v7999 = vunpack.c.h.b16 %v7983
    %v8000 = vunpack.c.h.b16 %v7984
    %v8001 = vunpack.c.l.b16 %v7985
    %v8002 = vunpack.c.l.b16 %v7986
    %v8003 = vunpack.c.h.b16 %v7985
    %v8004 = vunpack.c.h.b16 %v7986
    %v8005 = vpack.c.b16 %v7994, %v7993
    %v8006 = vpack.c.b16 %v7996, %v7995
    %v8007 = vpack.c.b16 %v7998, %v7997
    %v8008 = vpack.c.b16 %v8000, %v7999
    %v8009 = vpack.c.b16 %v8002, %v8001
    %v8010 = vpack.c.b16 %v8004, %v8003
    %s8017 = smul.u32 %s6214, 12
    %s8018 = smul.addr %s8017, 4
    %s8019 = scalar_lea.vmem %s12, %s8018
    %8020 = vst [vmem:[%s8019] sm:$0xff] %v8005
    %8021 = vst [vmem:[%s8019 + $0x8] sm:$0xff] %v8006
    %8022 = vst [vmem:[%s8019 + $0x10] sm:$0xff] %v8007
    %8023 = vst [vmem:[%s8019 + $0x18] sm:$0xff] %v8008
    %8024 = vst [vmem:[%s8019 + $0x20] sm:$0xff] %v8009
    %8025 = vst [vmem:[%s8019 + $0x28] sm:$0xff] %v8010
  $region75: #{discriminator_forward.2} parent=0 // loop_footer
    %s6218 = sadd.s32 1, %s6214
  $region76: #{discriminator_forward.2} parent=0 // loop_footer_branch
    %6213 = sbr.rel target = $region72
  $region77: #{discriminator_forward.2} parent=0 // loop_exit
    _
  // Predicated region
  $region78: #{discriminator_forward.2} parent=0 // pred_check
    _
  $region79: #{discriminator_forward.2} parent=0 // pred_check_branch
    %8027 = sbr.rel (0) target = $region81
  $region80: #{discriminator_forward.2} parent=0 // pred_region
    _
  $region81: #{discriminator_forward.2} parent=0 // pred_fallthru
    _
  // Predicated region
  $region82: #{discriminator_forward.2} parent=0 // pred_check
    _
  $region83: #{discriminator_forward.2} parent=0 // pred_check_branch
    %8029 = sbr.rel (0) target = $region85
  $region84: #{discriminator_forward.2} parent=0 // pred_region
    _
  $region85: #{discriminator_forward.2} parent=0 // pred_fallthru
    _

// kernel: discriminator_forward.3
$region0: #{discriminator_forward.3}
  #allocation0 [shape = 'u32[]', space=smem, size = 0x4, offset = 0x4, fixed_abs, tag = 'smem constant byte address 0x4 - core index']
  #allocation1 [shape = 'u32[144,128]{1,0:T(1,128)}', space=vmem, size = 0x12000, scoped, tag = 'internal scratch']
  %s0 = inlined_call_operand.vmem [shape: bf16[9,4096], index: 0, kind: input, shape index: {}]
  %s1 = inlined_call_operand.vmem [shape: bf16[4096,128], index: 1, kind: input, shape index: {}]
  %s2 = inlined_call_operand.vmem [shape: f32[1,128], index: 2, kind: input, shape index: {}]
  %s3 = inlined_call_operand.vmem [shape: f32[9,128], index: 3, kind: output, shape index: {}]
  %s4 = sld [smem:[#allocation0]]
  $region22: #{discriminator_forward.3} parent=0
    _
  %s6 = ssub.s32 1, %s4
  %s7 = scalar_select 0, %s6, %s4
  // Predicated region
  $region2: #{discriminator_forward.3} parent=0 // pred_check
    _
  $region3: #{discriminator_forward.3} parent=0 // pred_check_branch
    %9 = sbr.rel (0) target = $region5
  $region4: #{discriminator_forward.3} parent=0 // pred_region
    _
  $region5: #{discriminator_forward.3} parent=0 // pred_fallthru
    _
  // Predicated region
  $region6: #{discriminator_forward.3} parent=0 // pred_check
    _
  $region7: #{discriminator_forward.3} parent=0 // pred_check_branch
    %11 = sbr.rel (0) target = $region9
  $region8: #{discriminator_forward.3} parent=0 // pred_region
    _
  $region9: #{discriminator_forward.3} parent=0 // pred_fallthru
    _
  // Predicated region
  $region10: #{discriminator_forward.3} parent=0 // pred_check
    _
  $region11: #{discriminator_forward.3} parent=0 // pred_check_branch
    %13 = sbr.rel (0) target = $region13
  $region12: #{discriminator_forward.3} parent=0 // pred_region
    _
  $region13: #{discriminator_forward.3} parent=0 // pred_fallthru
    _
  %v15 = vld [vmem:[%s0] sm:$0xff]
  %v16 = vld [vmem:[%s0 + $0x8] sm:$0xff]
  %v17 = vld [vmem:[%s0 + $0x10] sm:$0xff]
  %v18 = vld [vmem:[%s0 + $0x18] sm:$0xff]
  %v19 = vld [vmem:[%s0 + $0x20] sm:$0xff]
  %v20 = vld [vmem:[%s0 + $0x28] sm:$0xff]
  %v21 = vld [vmem:[%s0 + $0x30] sm:$0xff]
  %v22 = vld [vmem:[%s0 + $0x38] sm:$0xff]
  %v23 = vld [vmem:[%s0 + $0x40] sm:$0xff]
  %v24 = vld [vmem:[%s0 + $0x48] sm:$0xff]
  %v25 = vld [vmem:[%s0 + $0x50] sm:$0xff]
  %v26 = vld [vmem:[%s0 + $0x58] sm:$0xff]
  %v27 = vld [vmem:[%s0 + $0x60] sm:$0xff]
  %v28 = vld [vmem:[%s0 + $0x68] sm:$0xff]
  %v29 = vld [vmem:[%s0 + $0x70] sm:$0xff]
  %v30 = vld [vmem:[%s0 + $0x78] sm:$0xff]
  %v31 = vld [vmem:[%s0 + $0x80] sm:$0x11]
  %v32 = vld [vmem:[%s0 + $0x88] sm:$0x11]
  %v33 = vld [vmem:[%s0 + $0x90] sm:$0x11]
  %v34 = vld [vmem:[%s0 + $0x98] sm:$0x11]
  %v35 = vld [vmem:[%s0 + $0xa0] sm:$0x11]
  %v36 = vld [vmem:[%s0 + $0xa8] sm:$0x11]
  %v37 = vld [vmem:[%s0 + $0xb0] sm:$0x11]
  %v38 = vld [vmem:[%s0 + $0xb8] sm:$0x11]
  %v39 = vld [vmem:[%s0 + $0xc0] sm:$0x11]
  %v40 = vld [vmem:[%s0 + $0xc8] sm:$0x11]
  %v41 = vld [vmem:[%s0 + $0xd0] sm:$0x11]
  %v42 = vld [vmem:[%s0 + $0xd8] sm:$0x11]
  %v43 = vld [vmem:[%s0 + $0xe0] sm:$0x11]
  %v44 = vld [vmem:[%s0 + $0xe8] sm:$0x11]
  %v45 = vld [vmem:[%s0 + $0xf0] sm:$0x11]
  %v46 = vld [vmem:[%s0 + $0xf8] sm:$0x11]
  %v47 = vld [vmem:[%s1] sm:$0xf]
  %v48 = vld [vmem:[%s1 + $0x4] sm:$0xf]
  %v49 = vld [vmem:[%s1 + $0x8] sm:$0xf]
  %v50 = vld [vmem:[%s1 + $0xc] sm:$0xf]
  %v51 = vld [vmem:[%s1 + $0x10] sm:$0xf]
  %v52 = vld [vmem:[%s1 + $0x14] sm:$0xf]
  %v53 = vld [vmem:[%s1 + $0x18] sm:$0xf]
  %v54 = vld [vmem:[%s1 + $0x1c] sm:$0xf]
  %v55 = vld [vmem:[%s1 + $0x20] sm:$0xf]
  %v56 = vld [vmem:[%s1 + $0x24] sm:$0xf]
  %v57 = vld [vmem:[%s1 + $0x28] sm:$0xf]
  %v58 = vld [vmem:[%s1 + $0x2c] sm:$0xf]
  %v59 = vld [vmem:[%s1 + $0x30] sm:$0xf]
  %v60 = vld [vmem:[%s1 + $0x34] sm:$0xf]
  %v61 = vld [vmem:[%s1 + $0x38] sm:$0xf]
  %v62 = vld [vmem:[%s1 + $0x3c] sm:$0xf]
  %v63 = vld [vmem:[%s1 + $0x40] sm:$0xf]
  %v64 = vld [vmem:[%s1 + $0x44] sm:$0xf]
  %v65 = vld [vmem:[%s1 + $0x48] sm:$0xf]
  %v66 = vld [vmem:[%s1 + $0x4c] sm:$0xf]
  %v67 = vld [vmem:[%s1 + $0x50] sm:$0xf]
  %v68 = vld [vmem:[%s1 + $0x54] sm:$0xf]
  %v69 = vld [vmem:[%s1 + $0x58] sm:$0xf]
  %v70 = vld [vmem:[%s1 + $0x5c] sm:$0xf]
  %v71 = vld [vmem:[%s1 + $0x60] sm:$0xf]
  %v72 = vld [vmem:[%s1 + $0x64] sm:$0xf]
  %v73 = vld [vmem:[%s1 + $0x68] sm:$0xf]
  %v74 = vld [vmem:[%s1 + $0x6c] sm:$0xf]
  %v75 = vld [vmem:[%s1 + $0x70] sm:$0xf]
  %v76 = vld [vmem:[%s1 + $0x74] sm:$0xf]
  %v77 = vld [vmem:[%s1 + $0x78] sm:$0xf]
  %v78 = vld [vmem:[%s1 + $0x7c] sm:$0xf]
  %v79 = vld [vmem:[%s1 + $0x80] sm:$0xf]
  %v80 = vld [vmem:[%s1 + $0x84] sm:$0xf]
  %v81 = vld [vmem:[%s1 + $0x88] sm:$0xf]
  %v82 = vld [vmem:[%s1 + $0x8c] sm:$0xf]
  %v83 = vld [vmem:[%s1 + $0x90] sm:$0xf]
  %v84 = vld [vmem:[%s1 + $0x94] sm:$0xf]
  %v85 = vld [vmem:[%s1 + $0x98] sm:$0xf]
  %v86 = vld [vmem:[%s1 + $0x9c] sm:$0xf]
  %v87 = vld [vmem:[%s1 + $0xa0] sm:$0xf]
  %v88 = vld [vmem:[%s1 + $0xa4] sm:$0xf]
  %v89 = vld [vmem:[%s1 + $0xa8] sm:$0xf]
  %v90 = vld [vmem:[%s1 + $0xac] sm:$0xf]
  %v91 = vld [vmem:[%s1 + $0xb0] sm:$0xf]
  %v92 = vld [vmem:[%s1 + $0xb4] sm:$0xf]
  %v93 = vld [vmem:[%s1 + $0xb8] sm:$0xf]
  %v94 = vld [vmem:[%s1 + $0xbc] sm:$0xf]
  %v95 = vld [vmem:[%s1 + $0xc0] sm:$0xf]
  %v96 = vld [vmem:[%s1 + $0xc4] sm:$0xf]
  %v97 = vld [vmem:[%s1 + $0xc8] sm:$0xf]
  %v98 = vld [vmem:[%s1 + $0xcc] sm:$0xf]
  %v99 = vld [vmem:[%s1 + $0xd0] sm:$0xf]
  %v100 = vld [vmem:[%s1 + $0xd4] sm:$0xf]
  %v101 = vld [vmem:[%s1 + $0xd8] sm:$0xf]
  %v102 = vld [vmem:[%s1 + $0xdc] sm:$0xf]
  %v103 = vld [vmem:[%s1 + $0xe0] sm:$0xf]
  %v104 = vld [vmem:[%s1 + $0xe4] sm:$0xf]
  %v105 = vld [vmem:[%s1 + $0xe8] sm:$0xf]
  %v106 = vld [vmem:[%s1 + $0xec] sm:$0xf]
  %v107 = vld [vmem:[%s1 + $0xf0] sm:$0xf]
  %v108 = vld [vmem:[%s1 + $0xf4] sm:$0xf]
  %v109 = vld [vmem:[%s1 + $0xf8] sm:$0xf]
  %v110 = vld [vmem:[%s1 + $0xfc] sm:$0xf]
  %v111 = vld [vmem:[%s1 + $0x100] sm:$0xf]
  %v112 = vld [vmem:[%s1 + $0x104] sm:$0xf]
  %v113 = vld [vmem:[%s1 + $0x108] sm:$0xf]
  %v114 = vld [vmem:[%s1 + $0x10c] sm:$0xf]
  %v115 = vld [vmem:[%s1 + $0x110] sm:$0xf]
  %v116 = vld [vmem:[%s1 + $0x114] sm:$0xf]
  %v117 = vld [vmem:[%s1 + $0x118] sm:$0xf]
  %v118 = vld [vmem:[%s1 + $0x11c] sm:$0xf]
  %v119 = vld [vmem:[%s1 + $0x120] sm:$0xf]
  %v120 = vld [vmem:[%s1 + $0x124] sm:$0xf]
  %v121 = vld [vmem:[%s1 + $0x128] sm:$0xf]
  %v122 = vld [vmem:[%s1 + $0x12c] sm:$0xf]
  %v123 = vld [vmem:[%s1 + $0x130] sm:$0xf]
  %v124 = vld [vmem:[%s1 + $0x134] sm:$0xf]
  %v125 = vld [vmem:[%s1 + $0x138] sm:$0xf]
  %v126 = vld [vmem:[%s1 + $0x13c] sm:$0xf]
  %v127 = vld [vmem:[%s1 + $0x140] sm:$0xf]
  %v128 = vld [vmem:[%s1 + $0x144] sm:$0xf]
  %v129 = vld [vmem:[%s1 + $0x148] sm:$0xf]
  %v130 = vld [vmem:[%s1 + $0x14c] sm:$0xf]
  %v131 = vld [vmem:[%s1 + $0x150] sm:$0xf]
  %v132 = vld [vmem:[%s1 + $0x154] sm:$0xf]
  %v133 = vld [vmem:[%s1 + $0x158] sm:$0xf]
  %v134 = vld [vmem:[%s1 + $0x15c] sm:$0xf]
  %v135 = vld [vmem:[%s1 + $0x160] sm:$0xf]
  %v136 = vld [vmem:[%s1 + $0x164] sm:$0xf]
  %v137 = vld [vmem:[%s1 + $0x168] sm:$0xf]
  %v138 = vld [vmem:[%s1 + $0x16c] sm:$0xf]
  %v139 = vld [vmem:[%s1 + $0x170] sm:$0xf]
  %v140 = vld [vmem:[%s1 + $0x174] sm:$0xf]
  %v141 = vld [vmem:[%s1 + $0x178] sm:$0xf]
  %v142 = vld [vmem:[%s1 + $0x17c] sm:$0xf]
  %v143 = vld [vmem:[%s1 + $0x180] sm:$0xf]
  %v144 = vld [vmem:[%s1 + $0x184] sm:$0xf]
  %v145 = vld [vmem:[%s1 + $0x188] sm:$0xf]
  %v146 = vld [vmem:[%s1 + $0x18c] sm:$0xf]
  %v147 = vld [vmem:[%s1 + $0x190] sm:$0xf]
  %v148 = vld [vmem:[%s1 + $0x194] sm:$0xf]
  %v149 = vld [vmem:[%s1 + $0x198] sm:$0xf]
  %v150 = vld [vmem:[%s1 + $0x19c] sm:$0xf]
  %v151 = vld [vmem:[%s1 + $0x1a0] sm:$0xf]
  %v152 = vld [vmem:[%s1 + $0x1a4] sm:$0xf]
  %v153 = vld [vmem:[%s1 + $0x1a8] sm:$0xf]
  %v154 = vld [vmem:[%s1 + $0x1ac] sm:$0xf]
  %v155 = vld [vmem:[%s1 + $0x1b0] sm:$0xf]
  %v156 = vld [vmem:[%s1 + $0x1b4] sm:$0xf]
  %v157 = vld [vmem:[%s1 + $0x1b8] sm:$0xf]
  %v158 = vld [vmem:[%s1 + $0x1bc] sm:$0xf]
  %v159 = vld [vmem:[%s1 + $0x1c0] sm:$0xf]
  %v160 = vld [vmem:[%s1 + $0x1c4] sm:$0xf]
  %v161 = vld [vmem:[%s1 + $0x1c8] sm:$0xf]
  %v162 = vld [vmem:[%s1 + $0x1cc] sm:$0xf]
  %v163 = vld [vmem:[%s1 + $0x1d0] sm:$0xf]
  %v164 = vld [vmem:[%s1 + $0x1d4] sm:$0xf]
  %v165 = vld [vmem:[%s1 + $0x1d8] sm:$0xf]
  %v166 = vld [vmem:[%s1 + $0x1dc] sm:$0xf]
  %v167 = vld [vmem:[%s1 + $0x1e0] sm:$0xf]
  %v168 = vld [vmem:[%s1 + $0x1e4] sm:$0xf]
  %v169 = vld [vmem:[%s1 + $0x1e8] sm:$0xf]
  %v170 = vld [vmem:[%s1 + $0x1ec] sm:$0xf]
  %v171 = vld [vmem:[%s1 + $0x1f0] sm:$0xf]
  %v172 = vld [vmem:[%s1 + $0x1f4] sm:$0xf]
  %v173 = vld [vmem:[%s1 + $0x1f8] sm:$0xf]
  %v174 = vld [vmem:[%s1 + $0x1fc] sm:$0xf]
  %v175 = vld [vmem:[%s1 + $0x200] sm:$0xf]
  %v176 = vld [vmem:[%s1 + $0x204] sm:$0xf]
  %v177 = vld [vmem:[%s1 + $0x208] sm:$0xf]
  %v178 = vld [vmem:[%s1 + $0x20c] sm:$0xf]
  %v179 = vld [vmem:[%s1 + $0x210] sm:$0xf]
  %v180 = vld [vmem:[%s1 + $0x214] sm:$0xf]
  %v181 = vld [vmem:[%s1 + $0x218] sm:$0xf]
  %v182 = vld [vmem:[%s1 + $0x21c] sm:$0xf]
  %v183 = vld [vmem:[%s1 + $0x220] sm:$0xf]
  %v184 = vld [vmem:[%s1 + $0x224] sm:$0xf]
  %v185 = vld [vmem:[%s1 + $0x228] sm:$0xf]
  %v186 = vld [vmem:[%s1 + $0x22c] sm:$0xf]
  %v187 = vld [vmem:[%s1 + $0x230] sm:$0xf]
  %v188 = vld [vmem:[%s1 + $0x234] sm:$0xf]
  %v189 = vld [vmem:[%s1 + $0x238] sm:$0xf]
  %v190 = vld [vmem:[%s1 + $0x23c] sm:$0xf]
  %v191 = vld [vmem:[%s1 + $0x240] sm:$0xf]
  %v192 = vld [vmem:[%s1 + $0x244] sm:$0xf]
  %v193 = vld [vmem:[%s1 + $0x248] sm:$0xf]
  %v194 = vld [vmem:[%s1 + $0x24c] sm:$0xf]
  %v195 = vld [vmem:[%s1 + $0x250] sm:$0xf]
  %v196 = vld [vmem:[%s1 + $0x254] sm:$0xf]
  %v197 = vld [vmem:[%s1 + $0x258] sm:$0xf]
  %v198 = vld [vmem:[%s1 + $0x25c] sm:$0xf]
  %v199 = vld [vmem:[%s1 + $0x260] sm:$0xf]
  %v200 = vld [vmem:[%s1 + $0x264] sm:$0xf]
  %v201 = vld [vmem:[%s1 + $0x268] sm:$0xf]
  %v202 = vld [vmem:[%s1 + $0x26c] sm:$0xf]
  %v203 = vld [vmem:[%s1 + $0x270] sm:$0xf]
  %v204 = vld [vmem:[%s1 + $0x274] sm:$0xf]
  %v205 = vld [vmem:[%s1 + $0x278] sm:$0xf]
  %v206 = vld [vmem:[%s1 + $0x27c] sm:$0xf]
  %v207 = vld [vmem:[%s1 + $0x280] sm:$0xf]
  %v208 = vld [vmem:[%s1 + $0x284] sm:$0xf]
  %v209 = vld [vmem:[%s1 + $0x288] sm:$0xf]
  %v210 = vld [vmem:[%s1 + $0x28c] sm:$0xf]
  %v211 = vld [vmem:[%s1 + $0x290] sm:$0xf]
  %v212 = vld [vmem:[%s1 + $0x294] sm:$0xf]
  %v213 = vld [vmem:[%s1 + $0x298] sm:$0xf]
  %v214 = vld [vmem:[%s1 + $0x29c] sm:$0xf]
  %v215 = vld [vmem:[%s1 + $0x2a0] sm:$0xf]
  %v216 = vld [vmem:[%s1 + $0x2a4] sm:$0xf]
  %v217 = vld [vmem:[%s1 + $0x2a8] sm:$0xf]
  %v218 = vld [vmem:[%s1 + $0x2ac] sm:$0xf]
  %v219 = vld [vmem:[%s1 + $0x2b0] sm:$0xf]
  %v220 = vld [vmem:[%s1 + $0x2b4] sm:$0xf]
  %v221 = vld [vmem:[%s1 + $0x2b8] sm:$0xf]
  %v222 = vld [vmem:[%s1 + $0x2bc] sm:$0xf]
  %v223 = vld [vmem:[%s1 + $0x2c0] sm:$0xf]
  %v224 = vld [vmem:[%s1 + $0x2c4] sm:$0xf]
  %v225 = vld [vmem:[%s1 + $0x2c8] sm:$0xf]
  %v226 = vld [vmem:[%s1 + $0x2cc] sm:$0xf]
  %v227 = vld [vmem:[%s1 + $0x2d0] sm:$0xf]
  %v228 = vld [vmem:[%s1 + $0x2d4] sm:$0xf]
  %v229 = vld [vmem:[%s1 + $0x2d8] sm:$0xf]
  %v230 = vld [vmem:[%s1 + $0x2dc] sm:$0xf]
  %v231 = vld [vmem:[%s1 + $0x2e0] sm:$0xf]
  %v232 = vld [vmem:[%s1 + $0x2e4] sm:$0xf]
  %v233 = vld [vmem:[%s1 + $0x2e8] sm:$0xf]
  %v234 = vld [vmem:[%s1 + $0x2ec] sm:$0xf]
  %v235 = vld [vmem:[%s1 + $0x2f0] sm:$0xf]
  %v236 = vld [vmem:[%s1 + $0x2f4] sm:$0xf]
  %v237 = vld [vmem:[%s1 + $0x2f8] sm:$0xf]
  %v238 = vld [vmem:[%s1 + $0x2fc] sm:$0xf]
  %v239 = vld [vmem:[%s1 + $0x300] sm:$0xf]
  %v240 = vld [vmem:[%s1 + $0x304] sm:$0xf]
  %v241 = vld [vmem:[%s1 + $0x308] sm:$0xf]
  %v242 = vld [vmem:[%s1 + $0x30c] sm:$0xf]
  %v243 = vld [vmem:[%s1 + $0x310] sm:$0xf]
  %v244 = vld [vmem:[%s1 + $0x314] sm:$0xf]
  %v245 = vld [vmem:[%s1 + $0x318] sm:$0xf]
  %v246 = vld [vmem:[%s1 + $0x31c] sm:$0xf]
  %v247 = vld [vmem:[%s1 + $0x320] sm:$0xf]
  %v248 = vld [vmem:[%s1 + $0x324] sm:$0xf]
  %v249 = vld [vmem:[%s1 + $0x328] sm:$0xf]
  %v250 = vld [vmem:[%s1 + $0x32c] sm:$0xf]
  %v251 = vld [vmem:[%s1 + $0x330] sm:$0xf]
  %v252 = vld [vmem:[%s1 + $0x334] sm:$0xf]
  %v253 = vld [vmem:[%s1 + $0x338] sm:$0xf]
  %v254 = vld [vmem:[%s1 + $0x33c] sm:$0xf]
  %v255 = vld [vmem:[%s1 + $0x340] sm:$0xf]
  %v256 = vld [vmem:[%s1 + $0x344] sm:$0xf]
  %v257 = vld [vmem:[%s1 + $0x348] sm:$0xf]
  %v258 = vld [vmem:[%s1 + $0x34c] sm:$0xf]
  %v259 = vld [vmem:[%s1 + $0x350] sm:$0xf]
  %v260 = vld [vmem:[%s1 + $0x354] sm:$0xf]
  %v261 = vld [vmem:[%s1 + $0x358] sm:$0xf]
  %v262 = vld [vmem:[%s1 + $0x35c] sm:$0xf]
  %v263 = vld [vmem:[%s1 + $0x360] sm:$0xf]
  %v264 = vld [vmem:[%s1 + $0x364] sm:$0xf]
  %v265 = vld [vmem:[%s1 + $0x368] sm:$0xf]
  %v266 = vld [vmem:[%s1 + $0x36c] sm:$0xf]
  %v267 = vld [vmem:[%s1 + $0x370] sm:$0xf]
  %v268 = vld [vmem:[%s1 + $0x374] sm:$0xf]
  %v269 = vld [vmem:[%s1 + $0x378] sm:$0xf]
  %v270 = vld [vmem:[%s1 + $0x37c] sm:$0xf]
  %v271 = vld [vmem:[%s1 + $0x380] sm:$0xf]
  %v272 = vld [vmem:[%s1 + $0x384] sm:$0xf]
  %v273 = vld [vmem:[%s1 + $0x388] sm:$0xf]
  %v274 = vld [vmem:[%s1 + $0x38c] sm:$0xf]
  %v275 = vld [vmem:[%s1 + $0x390] sm:$0xf]
  %v276 = vld [vmem:[%s1 + $0x394] sm:$0xf]
  %v277 = vld [vmem:[%s1 + $0x398] sm:$0xf]
  %v278 = vld [vmem:[%s1 + $0x39c] sm:$0xf]
  %v279 = vld [vmem:[%s1 + $0x3a0] sm:$0xf]
  %v280 = vld [vmem:[%s1 + $0x3a4] sm:$0xf]
  %v281 = vld [vmem:[%s1 + $0x3a8] sm:$0xf]
  %v282 = vld [vmem:[%s1 + $0x3ac] sm:$0xf]
  %v283 = vld [vmem:[%s1 + $0x3b0] sm:$0xf]
  %v284 = vld [vmem:[%s1 + $0x3b4] sm:$0xf]
  %v285 = vld [vmem:[%s1 + $0x3b8] sm:$0xf]
  %v286 = vld [vmem:[%s1 + $0x3bc] sm:$0xf]
  %v287 = vld [vmem:[%s1 + $0x3c0] sm:$0xf]
  %v288 = vld [vmem:[%s1 + $0x3c4] sm:$0xf]
  %v289 = vld [vmem:[%s1 + $0x3c8] sm:$0xf]
  %v290 = vld [vmem:[%s1 + $0x3cc] sm:$0xf]
  %v291 = vld [vmem:[%s1 + $0x3d0] sm:$0xf]
  %v292 = vld [vmem:[%s1 + $0x3d4] sm:$0xf]
  %v293 = vld [vmem:[%s1 + $0x3d8] sm:$0xf]
  %v294 = vld [vmem:[%s1 + $0x3dc] sm:$0xf]
  %v295 = vld [vmem:[%s1 + $0x3e0] sm:$0xf]
  %v296 = vld [vmem:[%s1 + $0x3e4] sm:$0xf]
  %v297 = vld [vmem:[%s1 + $0x3e8] sm:$0xf]
  %v298 = vld [vmem:[%s1 + $0x3ec] sm:$0xf]
  %v299 = vld [vmem:[%s1 + $0x3f0] sm:$0xf]
  %v300 = vld [vmem:[%s1 + $0x3f4] sm:$0xf]
  %v301 = vld [vmem:[%s1 + $0x3f8] sm:$0xf]
  %v302 = vld [vmem:[%s1 + $0x3fc] sm:$0xf]
  %v303 = vld [vmem:[%s1 + $0x400] sm:$0xf]
  %v304 = vld [vmem:[%s1 + $0x404] sm:$0xf]
  %v305 = vld [vmem:[%s1 + $0x408] sm:$0xf]
  %v306 = vld [vmem:[%s1 + $0x40c] sm:$0xf]
  %v307 = vld [vmem:[%s1 + $0x410] sm:$0xf]
  %v308 = vld [vmem:[%s1 + $0x414] sm:$0xf]
  %v309 = vld [vmem:[%s1 + $0x418] sm:$0xf]
  %v310 = vld [vmem:[%s1 + $0x41c] sm:$0xf]
  %v311 = vld [vmem:[%s1 + $0x420] sm:$0xf]
  %v312 = vld [vmem:[%s1 + $0x424] sm:$0xf]
  %v313 = vld [vmem:[%s1 + $0x428] sm:$0xf]
  %v314 = vld [vmem:[%s1 + $0x42c] sm:$0xf]
  %v315 = vld [vmem:[%s1 + $0x430] sm:$0xf]
  %v316 = vld [vmem:[%s1 + $0x434] sm:$0xf]
  %v317 = vld [vmem:[%s1 + $0x438] sm:$0xf]
  %v318 = vld [vmem:[%s1 + $0x43c] sm:$0xf]
  %v319 = vld [vmem:[%s1 + $0x440] sm:$0xf]
  %v320 = vld [vmem:[%s1 + $0x444] sm:$0xf]
  %v321 = vld [vmem:[%s1 + $0x448] sm:$0xf]
  %v322 = vld [vmem:[%s1 + $0x44c] sm:$0xf]
  %v323 = vld [vmem:[%s1 + $0x450] sm:$0xf]
  %v324 = vld [vmem:[%s1 + $0x454] sm:$0xf]
  %v325 = vld [vmem:[%s1 + $0x458] sm:$0xf]
  %v326 = vld [vmem:[%s1 + $0x45c] sm:$0xf]
  %v327 = vld [vmem:[%s1 + $0x460] sm:$0xf]
  %v328 = vld [vmem:[%s1 + $0x464] sm:$0xf]
  %v329 = vld [vmem:[%s1 + $0x468] sm:$0xf]
  %v330 = vld [vmem:[%s1 + $0x46c] sm:$0xf]
  %v331 = vld [vmem:[%s1 + $0x470] sm:$0xf]
  %v332 = vld [vmem:[%s1 + $0x474] sm:$0xf]
  %v333 = vld [vmem:[%s1 + $0x478] sm:$0xf]
  %v334 = vld [vmem:[%s1 + $0x47c] sm:$0xf]
  %v335 = vld [vmem:[%s1 + $0x480] sm:$0xf]
  %v336 = vld [vmem:[%s1 + $0x484] sm:$0xf]
  %v337 = vld [vmem:[%s1 + $0x488] sm:$0xf]
  %v338 = vld [vmem:[%s1 + $0x48c] sm:$0xf]
  %v339 = vld [vmem:[%s1 + $0x490] sm:$0xf]
  %v340 = vld [vmem:[%s1 + $0x494] sm:$0xf]
  %v341 = vld [vmem:[%s1 + $0x498] sm:$0xf]
  %v342 = vld [vmem:[%s1 + $0x49c] sm:$0xf]
  %v343 = vld [vmem:[%s1 + $0x4a0] sm:$0xf]
  %v344 = vld [vmem:[%s1 + $0x4a4] sm:$0xf]
  %v345 = vld [vmem:[%s1 + $0x4a8] sm:$0xf]
  %v346 = vld [vmem:[%s1 + $0x4ac] sm:$0xf]
  %v347 = vld [vmem:[%s1 + $0x4b0] sm:$0xf]
  %v348 = vld [vmem:[%s1 + $0x4b4] sm:$0xf]
  %v349 = vld [vmem:[%s1 + $0x4b8] sm:$0xf]
  %v350 = vld [vmem:[%s1 + $0x4bc] sm:$0xf]
  %v351 = vld [vmem:[%s1 + $0x4c0] sm:$0xf]
  %v352 = vld [vmem:[%s1 + $0x4c4] sm:$0xf]
  %v353 = vld [vmem:[%s1 + $0x4c8] sm:$0xf]
  %v354 = vld [vmem:[%s1 + $0x4cc] sm:$0xf]
  %v355 = vld [vmem:[%s1 + $0x4d0] sm:$0xf]
  %v356 = vld [vmem:[%s1 + $0x4d4] sm:$0xf]
  %v357 = vld [vmem:[%s1 + $0x4d8] sm:$0xf]
  %v358 = vld [vmem:[%s1 + $0x4dc] sm:$0xf]
  %v359 = vld [vmem:[%s1 + $0x4e0] sm:$0xf]
  %v360 = vld [vmem:[%s1 + $0x4e4] sm:$0xf]
  %v361 = vld [vmem:[%s1 + $0x4e8] sm:$0xf]
  %v362 = vld [vmem:[%s1 + $0x4ec] sm:$0xf]
  %v363 = vld [vmem:[%s1 + $0x4f0] sm:$0xf]
  %v364 = vld [vmem:[%s1 + $0x4f4] sm:$0xf]
  %v365 = vld [vmem:[%s1 + $0x4f8] sm:$0xf]
  %v366 = vld [vmem:[%s1 + $0x4fc] sm:$0xf]
  %v367 = vld [vmem:[%s1 + $0x500] sm:$0xf]
  %v368 = vld [vmem:[%s1 + $0x504] sm:$0xf]
  %v369 = vld [vmem:[%s1 + $0x508] sm:$0xf]
  %v370 = vld [vmem:[%s1 + $0x50c] sm:$0xf]
  %v371 = vld [vmem:[%s1 + $0x510] sm:$0xf]
  %v372 = vld [vmem:[%s1 + $0x514] sm:$0xf]
  %v373 = vld [vmem:[%s1 + $0x518] sm:$0xf]
  %v374 = vld [vmem:[%s1 + $0x51c] sm:$0xf]
  %v375 = vld [vmem:[%s1 + $0x520] sm:$0xf]
  %v376 = vld [vmem:[%s1 + $0x524] sm:$0xf]
  %v377 = vld [vmem:[%s1 + $0x528] sm:$0xf]
  %v378 = vld [vmem:[%s1 + $0x52c] sm:$0xf]
  %v379 = vld [vmem:[%s1 + $0x530] sm:$0xf]
  %v380 = vld [vmem:[%s1 + $0x534] sm:$0xf]
  %v381 = vld [vmem:[%s1 + $0x538] sm:$0xf]
  %v382 = vld [vmem:[%s1 + $0x53c] sm:$0xf]
  %v383 = vld [vmem:[%s1 + $0x540] sm:$0xf]
  %v384 = vld [vmem:[%s1 + $0x544] sm:$0xf]
  %v385 = vld [vmem:[%s1 + $0x548] sm:$0xf]
  %v386 = vld [vmem:[%s1 + $0x54c] sm:$0xf]
  %v387 = vld [vmem:[%s1 + $0x550] sm:$0xf]
  %v388 = vld [vmem:[%s1 + $0x554] sm:$0xf]
  %v389 = vld [vmem:[%s1 + $0x558] sm:$0xf]
  %v390 = vld [vmem:[%s1 + $0x55c] sm:$0xf]
  %v391 = vld [vmem:[%s1 + $0x560] sm:$0xf]
  %v392 = vld [vmem:[%s1 + $0x564] sm:$0xf]
  %v393 = vld [vmem:[%s1 + $0x568] sm:$0xf]
  %v394 = vld [vmem:[%s1 + $0x56c] sm:$0xf]
  %v395 = vld [vmem:[%s1 + $0x570] sm:$0xf]
  %v396 = vld [vmem:[%s1 + $0x574] sm:$0xf]
  %v397 = vld [vmem:[%s1 + $0x578] sm:$0xf]
  %v398 = vld [vmem:[%s1 + $0x57c] sm:$0xf]
  %v399 = vld [vmem:[%s1 + $0x580] sm:$0xf]
  %v400 = vld [vmem:[%s1 + $0x584] sm:$0xf]
  %v401 = vld [vmem:[%s1 + $0x588] sm:$0xf]
  %v402 = vld [vmem:[%s1 + $0x58c] sm:$0xf]
  %v403 = vld [vmem:[%s1 + $0x590] sm:$0xf]
  %v404 = vld [vmem:[%s1 + $0x594] sm:$0xf]
  %v405 = vld [vmem:[%s1 + $0x598] sm:$0xf]
  %v406 = vld [vmem:[%s1 + $0x59c] sm:$0xf]
  %v407 = vld [vmem:[%s1 + $0x5a0] sm:$0xf]
  %v408 = vld [vmem:[%s1 + $0x5a4] sm:$0xf]
  %v409 = vld [vmem:[%s1 + $0x5a8] sm:$0xf]
  %v410 = vld [vmem:[%s1 + $0x5ac] sm:$0xf]
  %v411 = vld [vmem:[%s1 + $0x5b0] sm:$0xf]
  %v412 = vld [vmem:[%s1 + $0x5b4] sm:$0xf]
  %v413 = vld [vmem:[%s1 + $0x5b8] sm:$0xf]
  %v414 = vld [vmem:[%s1 + $0x5bc] sm:$0xf]
  %v415 = vld [vmem:[%s1 + $0x5c0] sm:$0xf]
  %v416 = vld [vmem:[%s1 + $0x5c4] sm:$0xf]
  %v417 = vld [vmem:[%s1 + $0x5c8] sm:$0xf]
  %v418 = vld [vmem:[%s1 + $0x5cc] sm:$0xf]
  %v419 = vld [vmem:[%s1 + $0x5d0] sm:$0xf]
  %v420 = vld [vmem:[%s1 + $0x5d4] sm:$0xf]
  %v421 = vld [vmem:[%s1 + $0x5d8] sm:$0xf]
  %v422 = vld [vmem:[%s1 + $0x5dc] sm:$0xf]
  %v423 = vld [vmem:[%s1 + $0x5e0] sm:$0xf]
  %v424 = vld [vmem:[%s1 + $0x5e4] sm:$0xf]
  %v425 = vld [vmem:[%s1 + $0x5e8] sm:$0xf]
  %v426 = vld [vmem:[%s1 + $0x5ec] sm:$0xf]
  %v427 = vld [vmem:[%s1 + $0x5f0] sm:$0xf]
  %v428 = vld [vmem:[%s1 + $0x5f4] sm:$0xf]
  %v429 = vld [vmem:[%s1 + $0x5f8] sm:$0xf]
  %v430 = vld [vmem:[%s1 + $0x5fc] sm:$0xf]
  %v431 = vld [vmem:[%s1 + $0x600] sm:$0xf]
  %v432 = vld [vmem:[%s1 + $0x604] sm:$0xf]
  %v433 = vld [vmem:[%s1 + $0x608] sm:$0xf]
  %v434 = vld [vmem:[%s1 + $0x60c] sm:$0xf]
  %v435 = vld [vmem:[%s1 + $0x610] sm:$0xf]
  %v436 = vld [vmem:[%s1 + $0x614] sm:$0xf]
  %v437 = vld [vmem:[%s1 + $0x618] sm:$0xf]
  %v438 = vld [vmem:[%s1 + $0x61c] sm:$0xf]
  %v439 = vld [vmem:[%s1 + $0x620] sm:$0xf]
  %v440 = vld [vmem:[%s1 + $0x624] sm:$0xf]
  %v441 = vld [vmem:[%s1 + $0x628] sm:$0xf]
  %v442 = vld [vmem:[%s1 + $0x62c] sm:$0xf]
  %v443 = vld [vmem:[%s1 + $0x630] sm:$0xf]
  %v444 = vld [vmem:[%s1 + $0x634] sm:$0xf]
  %v445 = vld [vmem:[%s1 + $0x638] sm:$0xf]
  %v446 = vld [vmem:[%s1 + $0x63c] sm:$0xf]
  %v447 = vld [vmem:[%s1 + $0x640] sm:$0xf]
  %v448 = vld [vmem:[%s1 + $0x644] sm:$0xf]
  %v449 = vld [vmem:[%s1 + $0x648] sm:$0xf]
  %v450 = vld [vmem:[%s1 + $0x64c] sm:$0xf]
  %v451 = vld [vmem:[%s1 + $0x650] sm:$0xf]
  %v452 = vld [vmem:[%s1 + $0x654] sm:$0xf]
  %v453 = vld [vmem:[%s1 + $0x658] sm:$0xf]
  %v454 = vld [vmem:[%s1 + $0x65c] sm:$0xf]
  %v455 = vld [vmem:[%s1 + $0x660] sm:$0xf]
  %v456 = vld [vmem:[%s1 + $0x664] sm:$0xf]
  %v457 = vld [vmem:[%s1 + $0x668] sm:$0xf]
  %v458 = vld [vmem:[%s1 + $0x66c] sm:$0xf]
  %v459 = vld [vmem:[%s1 + $0x670] sm:$0xf]
  %v460 = vld [vmem:[%s1 + $0x674] sm:$0xf]
  %v461 = vld [vmem:[%s1 + $0x678] sm:$0xf]
  %v462 = vld [vmem:[%s1 + $0x67c] sm:$0xf]
  %v463 = vld [vmem:[%s1 + $0x680] sm:$0xf]
  %v464 = vld [vmem:[%s1 + $0x684] sm:$0xf]
  %v465 = vld [vmem:[%s1 + $0x688] sm:$0xf]
  %v466 = vld [vmem:[%s1 + $0x68c] sm:$0xf]
  %v467 = vld [vmem:[%s1 + $0x690] sm:$0xf]
  %v468 = vld [vmem:[%s1 + $0x694] sm:$0xf]
  %v469 = vld [vmem:[%s1 + $0x698] sm:$0xf]
  %v470 = vld [vmem:[%s1 + $0x69c] sm:$0xf]
  %v471 = vld [vmem:[%s1 + $0x6a0] sm:$0xf]
  %v472 = vld [vmem:[%s1 + $0x6a4] sm:$0xf]
  %v473 = vld [vmem:[%s1 + $0x6a8] sm:$0xf]
  %v474 = vld [vmem:[%s1 + $0x6ac] sm:$0xf]
  %v475 = vld [vmem:[%s1 + $0x6b0] sm:$0xf]
  %v476 = vld [vmem:[%s1 + $0x6b4] sm:$0xf]
  %v477 = vld [vmem:[%s1 + $0x6b8] sm:$0xf]
  %v478 = vld [vmem:[%s1 + $0x6bc] sm:$0xf]
  %v479 = vld [vmem:[%s1 + $0x6c0] sm:$0xf]
  %v480 = vld [vmem:[%s1 + $0x6c4] sm:$0xf]
  %v481 = vld [vmem:[%s1 + $0x6c8] sm:$0xf]
  %v482 = vld [vmem:[%s1 + $0x6cc] sm:$0xf]
  %v483 = vld [vmem:[%s1 + $0x6d0] sm:$0xf]
  %v484 = vld [vmem:[%s1 + $0x6d4] sm:$0xf]
  %v485 = vld [vmem:[%s1 + $0x6d8] sm:$0xf]
  %v486 = vld [vmem:[%s1 + $0x6dc] sm:$0xf]
  %v487 = vld [vmem:[%s1 + $0x6e0] sm:$0xf]
  %v488 = vld [vmem:[%s1 + $0x6e4] sm:$0xf]
  %v489 = vld [vmem:[%s1 + $0x6e8] sm:$0xf]
  %v490 = vld [vmem:[%s1 + $0x6ec] sm:$0xf]
  %v491 = vld [vmem:[%s1 + $0x6f0] sm:$0xf]
  %v492 = vld [vmem:[%s1 + $0x6f4] sm:$0xf]
  %v493 = vld [vmem:[%s1 + $0x6f8] sm:$0xf]
  %v494 = vld [vmem:[%s1 + $0x6fc] sm:$0xf]
  %v495 = vld [vmem:[%s1 + $0x700] sm:$0xf]
  %v496 = vld [vmem:[%s1 + $0x704] sm:$0xf]
  %v497 = vld [vmem:[%s1 + $0x708] sm:$0xf]
  %v498 = vld [vmem:[%s1 + $0x70c] sm:$0xf]
  %v499 = vld [vmem:[%s1 + $0x710] sm:$0xf]
  %v500 = vld [vmem:[%s1 + $0x714] sm:$0xf]
  %v501 = vld [vmem:[%s1 + $0x718] sm:$0xf]
  %v502 = vld [vmem:[%s1 + $0x71c] sm:$0xf]
  %v503 = vld [vmem:[%s1 + $0x720] sm:$0xf]
  %v504 = vld [vmem:[%s1 + $0x724] sm:$0xf]
  %v505 = vld [vmem:[%s1 + $0x728] sm:$0xf]
  %v506 = vld [vmem:[%s1 + $0x72c] sm:$0xf]
  %v507 = vld [vmem:[%s1 + $0x730] sm:$0xf]
  %v508 = vld [vmem:[%s1 + $0x734] sm:$0xf]
  %v509 = vld [vmem:[%s1 + $0x738] sm:$0xf]
  %v510 = vld [vmem:[%s1 + $0x73c] sm:$0xf]
  %v511 = vld [vmem:[%s1 + $0x740] sm:$0xf]
  %v512 = vld [vmem:[%s1 + $0x744] sm:$0xf]
  %v513 = vld [vmem:[%s1 + $0x748] sm:$0xf]
  %v514 = vld [vmem:[%s1 + $0x74c] sm:$0xf]
  %v515 = vld [vmem:[%s1 + $0x750] sm:$0xf]
  %v516 = vld [vmem:[%s1 + $0x754] sm:$0xf]
  %v517 = vld [vmem:[%s1 + $0x758] sm:$0xf]
  %v518 = vld [vmem:[%s1 + $0x75c] sm:$0xf]
  %v519 = vld [vmem:[%s1 + $0x760] sm:$0xf]
  %v520 = vld [vmem:[%s1 + $0x764] sm:$0xf]
  %v521 = vld [vmem:[%s1 + $0x768] sm:$0xf]
  %v522 = vld [vmem:[%s1 + $0x76c] sm:$0xf]
  %v523 = vld [vmem:[%s1 + $0x770] sm:$0xf]
  %v524 = vld [vmem:[%s1 + $0x774] sm:$0xf]
  %v525 = vld [vmem:[%s1 + $0x778] sm:$0xf]
  %v526 = vld [vmem:[%s1 + $0x77c] sm:$0xf]
  %v527 = vld [vmem:[%s1 + $0x780] sm:$0xf]
  %v528 = vld [vmem:[%s1 + $0x784] sm:$0xf]
  %v529 = vld [vmem:[%s1 + $0x788] sm:$0xf]
  %v530 = vld [vmem:[%s1 + $0x78c] sm:$0xf]
  %v531 = vld [vmem:[%s1 + $0x790] sm:$0xf]
  %v532 = vld [vmem:[%s1 + $0x794] sm:$0xf]
  %v533 = vld [vmem:[%s1 + $0x798] sm:$0xf]
  %v534 = vld [vmem:[%s1 + $0x79c] sm:$0xf]
  %v535 = vld [vmem:[%s1 + $0x7a0] sm:$0xf]
  %v536 = vld [vmem:[%s1 + $0x7a4] sm:$0xf]
  %v537 = vld [vmem:[%s1 + $0x7a8] sm:$0xf]
  %v538 = vld [vmem:[%s1 + $0x7ac] sm:$0xf]
  %v539 = vld [vmem:[%s1 + $0x7b0] sm:$0xf]
  %v540 = vld [vmem:[%s1 + $0x7b4] sm:$0xf]
  %v541 = vld [vmem:[%s1 + $0x7b8] sm:$0xf]
  %v542 = vld [vmem:[%s1 + $0x7bc] sm:$0xf]
  %v543 = vld [vmem:[%s1 + $0x7c0] sm:$0xf]
  %v544 = vld [vmem:[%s1 + $0x7c4] sm:$0xf]
  %v545 = vld [vmem:[%s1 + $0x7c8] sm:$0xf]
  %v546 = vld [vmem:[%s1 + $0x7cc] sm:$0xf]
  %v547 = vld [vmem:[%s1 + $0x7d0] sm:$0xf]
  %v548 = vld [vmem:[%s1 + $0x7d4] sm:$0xf]
  %v549 = vld [vmem:[%s1 + $0x7d8] sm:$0xf]
  %v550 = vld [vmem:[%s1 + $0x7dc] sm:$0xf]
  %v551 = vld [vmem:[%s1 + $0x7e0] sm:$0xf]
  %v552 = vld [vmem:[%s1 + $0x7e4] sm:$0xf]
  %v553 = vld [vmem:[%s1 + $0x7e8] sm:$0xf]
  %v554 = vld [vmem:[%s1 + $0x7ec] sm:$0xf]
  %v555 = vld [vmem:[%s1 + $0x7f0] sm:$0xf]
  %v556 = vld [vmem:[%s1 + $0x7f4] sm:$0xf]
  %v557 = vld [vmem:[%s1 + $0x7f8] sm:$0xf]
  %v558 = vld [vmem:[%s1 + $0x7fc] sm:$0xf]
  %v559 = vld [vmem:[%s2] sm:$0x1]
  %v561 = vlaneseq
  %v562 = vshrl.u32 %v561, 7
  %v563 = vsub.s32 0, %v562
  %v564 = vrot.slane %v559, %v563
  %v598 = vunpack.c.l.b16 %v15
  %v599 = vunpack.c.h.b16 %v15
  %v600 = vunpack.c.l.b16 %v16
  %v601 = vunpack.c.h.b16 %v16
  %v602 = vunpack.c.l.b16 %v17
  %v603 = vunpack.c.h.b16 %v17
  %v604 = vunpack.c.l.b16 %v18
  %v605 = vunpack.c.h.b16 %v18
  %v606 = vunpack.c.l.b16 %v19
  %v607 = vunpack.c.h.b16 %v19
  %v608 = vunpack.c.l.b16 %v20
  %v609 = vunpack.c.h.b16 %v20
  %v610 = vunpack.c.l.b16 %v21
  %v611 = vunpack.c.h.b16 %v21
  %v612 = vunpack.c.l.b16 %v22
  %v613 = vunpack.c.h.b16 %v22
  %v614 = vunpack.c.l.b16 %v23
  %v615 = vunpack.c.h.b16 %v23
  %v616 = vunpack.c.l.b16 %v24
  %v617 = vunpack.c.h.b16 %v24
  %v618 = vunpack.c.l.b16 %v25
  %v619 = vunpack.c.h.b16 %v25
  %v620 = vunpack.c.l.b16 %v26
  %v621 = vunpack.c.h.b16 %v26
  %v622 = vunpack.c.l.b16 %v27
  %v623 = vunpack.c.h.b16 %v27
  %v624 = vunpack.c.l.b16 %v28
  %v625 = vunpack.c.h.b16 %v28
  %v626 = vunpack.c.l.b16 %v29
  %v627 = vunpack.c.h.b16 %v29
  %v628 = vunpack.c.l.b16 %v30
  %v629 = vunpack.c.h.b16 %v30
  %v630 = vunpack.c.l.b16 %v31
  %v631 = vunpack.c.h.b16 %v31
  %v632 = vunpack.c.l.b16 %v32
  %v633 = vunpack.c.h.b16 %v32
  %v634 = vunpack.c.l.b16 %v33
  %v635 = vunpack.c.h.b16 %v33
  %v636 = vunpack.c.l.b16 %v34
  %v637 = vunpack.c.h.b16 %v34
  %v638 = vunpack.c.l.b16 %v35
  %v639 = vunpack.c.h.b16 %v35
  %v640 = vunpack.c.l.b16 %v36
  %v641 = vunpack.c.h.b16 %v36
  %v642 = vunpack.c.l.b16 %v37
  %v643 = vunpack.c.h.b16 %v37
  %v644 = vunpack.c.l.b16 %v38
  %v645 = vunpack.c.h.b16 %v38
  %v646 = vunpack.c.l.b16 %v39
  %v647 = vunpack.c.h.b16 %v39
  %v648 = vunpack.c.l.b16 %v40
  %v649 = vunpack.c.h.b16 %v40
  %v650 = vunpack.c.l.b16 %v41
  %v651 = vunpack.c.h.b16 %v41
  %v652 = vunpack.c.l.b16 %v42
  %v653 = vunpack.c.h.b16 %v42
  %v654 = vunpack.c.l.b16 %v43
  %v655 = vunpack.c.h.b16 %v43
  %v656 = vunpack.c.l.b16 %v44
  %v657 = vunpack.c.h.b16 %v44
  %v658 = vunpack.c.l.b16 %v45
  %v659 = vunpack.c.h.b16 %v45
  %v660 = vunpack.c.l.b16 %v46
  %v661 = vunpack.c.h.b16 %v46
  %v662 = vpack.c.b16 %v630, %v598
  %v663 = vpack.c.b16 %v631, %v599
  %v664 = vpack.c.b16 %v632, %v600
  %v665 = vpack.c.b16 %v633, %v601
  %v666 = vpack.c.b16 %v634, %v602
  %v667 = vpack.c.b16 %v635, %v603
  %v668 = vpack.c.b16 %v636, %v604
  %v669 = vpack.c.b16 %v637, %v605
  %v670 = vpack.c.b16 %v638, %v606
  %v671 = vpack.c.b16 %v639, %v607
  %v672 = vpack.c.b16 %v640, %v608
  %v673 = vpack.c.b16 %v641, %v609
  %v674 = vpack.c.b16 %v642, %v610
  %v675 = vpack.c.b16 %v643, %v611
  %v676 = vpack.c.b16 %v644, %v612
  %v677 = vpack.c.b16 %v645, %v613
  %v678 = vpack.c.b16 %v646, %v614
  %v679 = vpack.c.b16 %v647, %v615
  %v680 = vpack.c.b16 %v648, %v616
  %v681 = vpack.c.b16 %v649, %v617
  %v682 = vpack.c.b16 %v650, %v618
  %v683 = vpack.c.b16 %v651, %v619
  %v684 = vpack.c.b16 %v652, %v620
  %v685 = vpack.c.b16 %v653, %v621
  %v686 = vpack.c.b16 %v654, %v622
  %v687 = vpack.c.b16 %v655, %v623
  %v688 = vpack.c.b16 %v656, %v624
  %v689 = vpack.c.b16 %v657, %v625
  %v690 = vpack.c.b16 %v658, %v626
  %v691 = vpack.c.b16 %v659, %v627
  %v692 = vpack.c.b16 %v660, %v628
  %v693 = vpack.c.b16 %v661, %v629
  %v1238 = vunpack.c.l.b16 %v47
  %v1239 = vunpack.c.l.b16 %v48
  %v1240 = vunpack.c.l.b16 %v49
  %v1241 = vunpack.c.l.b16 %v50
  %v1242 = vunpack.c.l.b16 %v51
  %v1243 = vunpack.c.l.b16 %v52
  %v1244 = vunpack.c.l.b16 %v53
  %v1245 = vunpack.c.l.b16 %v54
  %v1246 = vunpack.c.l.b16 %v55
  %v1247 = vunpack.c.l.b16 %v56
  %v1248 = vunpack.c.l.b16 %v57
  %v1249 = vunpack.c.l.b16 %v58
  %v1250 = vunpack.c.l.b16 %v59
  %v1251 = vunpack.c.l.b16 %v60
  %v1252 = vunpack.c.l.b16 %v61
  %v1253 = vunpack.c.l.b16 %v62
  %v1254 = vunpack.c.l.b16 %v63
  %v1255 = vunpack.c.l.b16 %v64
  %v1256 = vunpack.c.l.b16 %v65
  %v1257 = vunpack.c.l.b16 %v66
  %v1258 = vunpack.c.l.b16 %v67
  %v1259 = vunpack.c.l.b16 %v68
  %v1260 = vunpack.c.l.b16 %v69
  %v1261 = vunpack.c.l.b16 %v70
  %v1262 = vunpack.c.l.b16 %v71
  %v1263 = vunpack.c.l.b16 %v72
  %v1264 = vunpack.c.l.b16 %v73
  %v1265 = vunpack.c.l.b16 %v74
  %v1266 = vunpack.c.l.b16 %v75
  %v1267 = vunpack.c.l.b16 %v76
  %v1268 = vunpack.c.l.b16 %v77
  %v1269 = vunpack.c.l.b16 %v78
  %v1270 = vunpack.c.l.b16 %v79
  %v1271 = vunpack.c.l.b16 %v80
  %v1272 = vunpack.c.l.b16 %v81
  %v1273 = vunpack.c.l.b16 %v82
  %v1274 = vunpack.c.l.b16 %v83
  %v1275 = vunpack.c.l.b16 %v84
  %v1276 = vunpack.c.l.b16 %v85
  %v1277 = vunpack.c.l.b16 %v86
  %v1278 = vunpack.c.l.b16 %v87
  %v1279 = vunpack.c.l.b16 %v88
  %v1280 = vunpack.c.l.b16 %v89
  %v1281 = vunpack.c.l.b16 %v90
  %v1282 = vunpack.c.l.b16 %v91
  %v1283 = vunpack.c.l.b16 %v92
  %v1284 = vunpack.c.l.b16 %v93
  %v1285 = vunpack.c.l.b16 %v94
  %v1286 = vunpack.c.l.b16 %v95
  %v1287 = vunpack.c.l.b16 %v96
  %v1288 = vunpack.c.l.b16 %v97
  %v1289 = vunpack.c.l.b16 %v98
  %v1290 = vunpack.c.l.b16 %v99
  %v1291 = vunpack.c.l.b16 %v100
  %v1292 = vunpack.c.l.b16 %v101
  %v1293 = vunpack.c.l.b16 %v102
  %v1294 = vunpack.c.l.b16 %v103
  %v1295 = vunpack.c.l.b16 %v104
  %v1296 = vunpack.c.l.b16 %v105
  %v1297 = vunpack.c.l.b16 %v106
  %v1298 = vunpack.c.l.b16 %v107
  %v1299 = vunpack.c.l.b16 %v108
  %v1300 = vunpack.c.l.b16 %v109
  %v1301 = vunpack.c.l.b16 %v110
  %v1302 = vunpack.c.l.b16 %v111
  %v1303 = vunpack.c.l.b16 %v112
  %v1304 = vunpack.c.l.b16 %v113
  %v1305 = vunpack.c.l.b16 %v114
  %v1306 = vunpack.c.l.b16 %v115
  %v1307 = vunpack.c.l.b16 %v116
  %v1308 = vunpack.c.l.b16 %v117
  %v1309 = vunpack.c.l.b16 %v118
  %v1310 = vunpack.c.l.b16 %v119
  %v1311 = vunpack.c.l.b16 %v120
  %v1312 = vunpack.c.l.b16 %v121
  %v1313 = vunpack.c.l.b16 %v122
  %v1314 = vunpack.c.l.b16 %v123
  %v1315 = vunpack.c.l.b16 %v124
  %v1316 = vunpack.c.l.b16 %v125
  %v1317 = vunpack.c.l.b16 %v126
  %v1318 = vunpack.c.l.b16 %v127
  %v1319 = vunpack.c.l.b16 %v128
  %v1320 = vunpack.c.l.b16 %v129
  %v1321 = vunpack.c.l.b16 %v130
  %v1322 = vunpack.c.l.b16 %v131
  %v1323 = vunpack.c.l.b16 %v132
  %v1324 = vunpack.c.l.b16 %v133
  %v1325 = vunpack.c.l.b16 %v134
  %v1326 = vunpack.c.l.b16 %v135
  %v1327 = vunpack.c.l.b16 %v136
  %v1328 = vunpack.c.l.b16 %v137
  %v1329 = vunpack.c.l.b16 %v138
  %v1330 = vunpack.c.l.b16 %v139
  %v1331 = vunpack.c.l.b16 %v140
  %v1332 = vunpack.c.l.b16 %v141
  %v1333 = vunpack.c.l.b16 %v142
  %v1334 = vunpack.c.l.b16 %v143
  %v1335 = vunpack.c.l.b16 %v144
  %v1336 = vunpack.c.l.b16 %v145
  %v1337 = vunpack.c.l.b16 %v146
  %v1338 = vunpack.c.l.b16 %v147
  %v1339 = vunpack.c.l.b16 %v148
  %v1340 = vunpack.c.l.b16 %v149
  %v1341 = vunpack.c.l.b16 %v150
  %v1342 = vunpack.c.l.b16 %v151
  %v1343 = vunpack.c.l.b16 %v152
  %v1344 = vunpack.c.l.b16 %v153
  %v1345 = vunpack.c.l.b16 %v154
  %v1346 = vunpack.c.l.b16 %v155
  %v1347 = vunpack.c.l.b16 %v156
  %v1348 = vunpack.c.l.b16 %v157
  %v1349 = vunpack.c.l.b16 %v158
  %v1350 = vunpack.c.l.b16 %v159
  %v1351 = vunpack.c.l.b16 %v160
  %v1352 = vunpack.c.l.b16 %v161
  %v1353 = vunpack.c.l.b16 %v162
  %v1354 = vunpack.c.l.b16 %v163
  %v1355 = vunpack.c.l.b16 %v164
  %v1356 = vunpack.c.l.b16 %v165
  %v1357 = vunpack.c.l.b16 %v166
  %v1358 = vunpack.c.l.b16 %v167
  %v1359 = vunpack.c.l.b16 %v168
  %v1360 = vunpack.c.l.b16 %v169
  %v1361 = vunpack.c.l.b16 %v170
  %v1362 = vunpack.c.l.b16 %v171
  %v1363 = vunpack.c.l.b16 %v172
  %v1364 = vunpack.c.l.b16 %v173
  %v1365 = vunpack.c.l.b16 %v174
  %v1366 = vunpack.c.l.b16 %v175
  %v1367 = vunpack.c.l.b16 %v176
  %v1368 = vunpack.c.l.b16 %v177
  %v1369 = vunpack.c.l.b16 %v178
  %v1370 = vunpack.c.l.b16 %v179
  %v1371 = vunpack.c.l.b16 %v180
  %v1372 = vunpack.c.l.b16 %v181
  %v1373 = vunpack.c.l.b16 %v182
  %v1374 = vunpack.c.l.b16 %v183
  %v1375 = vunpack.c.l.b16 %v184
  %v1376 = vunpack.c.l.b16 %v185
  %v1377 = vunpack.c.l.b16 %v186
  %v1378 = vunpack.c.l.b16 %v187
  %v1379 = vunpack.c.l.b16 %v188
  %v1380 = vunpack.c.l.b16 %v189
  %v1381 = vunpack.c.l.b16 %v190
  %v1382 = vunpack.c.l.b16 %v191
  %v1383 = vunpack.c.l.b16 %v192
  %v1384 = vunpack.c.l.b16 %v193
  %v1385 = vunpack.c.l.b16 %v194
  %v1386 = vunpack.c.l.b16 %v195
  %v1387 = vunpack.c.l.b16 %v196
  %v1388 = vunpack.c.l.b16 %v197
  %v1389 = vunpack.c.l.b16 %v198
  %v1390 = vunpack.c.l.b16 %v199
  %v1391 = vunpack.c.l.b16 %v200
  %v1392 = vunpack.c.l.b16 %v201
  %v1393 = vunpack.c.l.b16 %v202
  %v1394 = vunpack.c.l.b16 %v203
  %v1395 = vunpack.c.l.b16 %v204
  %v1396 = vunpack.c.l.b16 %v205
  %v1397 = vunpack.c.l.b16 %v206
  %v1398 = vunpack.c.l.b16 %v207
  %v1399 = vunpack.c.l.b16 %v208
  %v1400 = vunpack.c.l.b16 %v209
  %v1401 = vunpack.c.l.b16 %v210
  %v1402 = vunpack.c.l.b16 %v211
  %v1403 = vunpack.c.l.b16 %v212
  %v1404 = vunpack.c.l.b16 %v213
  %v1405 = vunpack.c.l.b16 %v214
  %v1406 = vunpack.c.l.b16 %v215
  %v1407 = vunpack.c.l.b16 %v216
  %v1408 = vunpack.c.l.b16 %v217
  %v1409 = vunpack.c.l.b16 %v218
  %v1410 = vunpack.c.l.b16 %v219
  %v1411 = vunpack.c.l.b16 %v220
  %v1412 = vunpack.c.l.b16 %v221
  %v1413 = vunpack.c.l.b16 %v222
  %v1414 = vunpack.c.l.b16 %v223
  %v1415 = vunpack.c.l.b16 %v224
  %v1416 = vunpack.c.l.b16 %v225
  %v1417 = vunpack.c.l.b16 %v226
  %v1418 = vunpack.c.l.b16 %v227
  %v1419 = vunpack.c.l.b16 %v228
  %v1420 = vunpack.c.l.b16 %v229
  %v1421 = vunpack.c.l.b16 %v230
  %v1422 = vunpack.c.l.b16 %v231
  %v1423 = vunpack.c.l.b16 %v232
  %v1424 = vunpack.c.l.b16 %v233
  %v1425 = vunpack.c.l.b16 %v234
  %v1426 = vunpack.c.l.b16 %v235
  %v1427 = vunpack.c.l.b16 %v236
  %v1428 = vunpack.c.l.b16 %v237
  %v1429 = vunpack.c.l.b16 %v238
  %v1430 = vunpack.c.l.b16 %v239
  %v1431 = vunpack.c.l.b16 %v240
  %v1432 = vunpack.c.l.b16 %v241
  %v1433 = vunpack.c.l.b16 %v242
  %v1434 = vunpack.c.l.b16 %v243
  %v1435 = vunpack.c.l.b16 %v244
  %v1436 = vunpack.c.l.b16 %v245
  %v1437 = vunpack.c.l.b16 %v246
  %v1438 = vunpack.c.l.b16 %v247
  %v1439 = vunpack.c.l.b16 %v248
  %v1440 = vunpack.c.l.b16 %v249
  %v1441 = vunpack.c.l.b16 %v250
  %v1442 = vunpack.c.l.b16 %v251
  %v1443 = vunpack.c.l.b16 %v252
  %v1444 = vunpack.c.l.b16 %v253
  %v1445 = vunpack.c.l.b16 %v254
  %v1446 = vunpack.c.l.b16 %v255
  %v1447 = vunpack.c.l.b16 %v256
  %v1448 = vunpack.c.l.b16 %v257
  %v1449 = vunpack.c.l.b16 %v258
  %v1450 = vunpack.c.l.b16 %v259
  %v1451 = vunpack.c.l.b16 %v260
  %v1452 = vunpack.c.l.b16 %v261
  %v1453 = vunpack.c.l.b16 %v262
  %v1454 = vunpack.c.l.b16 %v263
  %v1455 = vunpack.c.l.b16 %v264
  %v1456 = vunpack.c.l.b16 %v265
  %v1457 = vunpack.c.l.b16 %v266
  %v1458 = vunpack.c.l.b16 %v267
  %v1459 = vunpack.c.l.b16 %v268
  %v1460 = vunpack.c.l.b16 %v269
  %v1461 = vunpack.c.l.b16 %v270
  %v1462 = vunpack.c.l.b16 %v271
  %v1463 = vunpack.c.l.b16 %v272
  %v1464 = vunpack.c.l.b16 %v273
  %v1465 = vunpack.c.l.b16 %v274
  %v1466 = vunpack.c.l.b16 %v275
  %v1467 = vunpack.c.l.b16 %v276
  %v1468 = vunpack.c.l.b16 %v277
  %v1469 = vunpack.c.l.b16 %v278
  %v1470 = vunpack.c.l.b16 %v279
  %v1471 = vunpack.c.l.b16 %v280
  %v1472 = vunpack.c.l.b16 %v281
  %v1473 = vunpack.c.l.b16 %v282
  %v1474 = vunpack.c.l.b16 %v283
  %v1475 = vunpack.c.l.b16 %v284
  %v1476 = vunpack.c.l.b16 %v285
  %v1477 = vunpack.c.l.b16 %v286
  %v1478 = vunpack.c.l.b16 %v287
  %v1479 = vunpack.c.l.b16 %v288
  %v1480 = vunpack.c.l.b16 %v289
  %v1481 = vunpack.c.l.b16 %v290
  %v1482 = vunpack.c.l.b16 %v291
  %v1483 = vunpack.c.l.b16 %v292
  %v1484 = vunpack.c.l.b16 %v293
  %v1485 = vunpack.c.l.b16 %v294
  %v1486 = vunpack.c.l.b16 %v295
  %v1487 = vunpack.c.l.b16 %v296
  %v1488 = vunpack.c.l.b16 %v297
  %v1489 = vunpack.c.l.b16 %v298
  %v1490 = vunpack.c.l.b16 %v299
  %v1491 = vunpack.c.l.b16 %v300
  %v1492 = vunpack.c.l.b16 %v301
  %v1493 = vunpack.c.l.b16 %v302
  %v1494 = vunpack.c.l.b16 %v303
  %v1495 = vunpack.c.l.b16 %v304
  %v1496 = vunpack.c.l.b16 %v305
  %v1497 = vunpack.c.l.b16 %v306
  %v1498 = vunpack.c.l.b16 %v307
  %v1499 = vunpack.c.l.b16 %v308
  %v1500 = vunpack.c.l.b16 %v309
  %v1501 = vunpack.c.l.b16 %v310
  %v1502 = vunpack.c.l.b16 %v311
  %v1503 = vunpack.c.l.b16 %v312
  %v1504 = vunpack.c.l.b16 %v313
  %v1505 = vunpack.c.l.b16 %v314
  %v1506 = vunpack.c.l.b16 %v315
  %v1507 = vunpack.c.l.b16 %v316
  %v1508 = vunpack.c.l.b16 %v317
  %v1509 = vunpack.c.l.b16 %v318
  %v1510 = vunpack.c.l.b16 %v319
  %v1511 = vunpack.c.l.b16 %v320
  %v1512 = vunpack.c.l.b16 %v321
  %v1513 = vunpack.c.l.b16 %v322
  %v1514 = vunpack.c.l.b16 %v323
  %v1515 = vunpack.c.l.b16 %v324
  %v1516 = vunpack.c.l.b16 %v325
  %v1517 = vunpack.c.l.b16 %v326
  %v1518 = vunpack.c.l.b16 %v327
  %v1519 = vunpack.c.l.b16 %v328
  %v1520 = vunpack.c.l.b16 %v329
  %v1521 = vunpack.c.l.b16 %v330
  %v1522 = vunpack.c.l.b16 %v331
  %v1523 = vunpack.c.l.b16 %v332
  %v1524 = vunpack.c.l.b16 %v333
  %v1525 = vunpack.c.l.b16 %v334
  %v1526 = vunpack.c.l.b16 %v335
  %v1527 = vunpack.c.l.b16 %v336
  %v1528 = vunpack.c.l.b16 %v337
  %v1529 = vunpack.c.l.b16 %v338
  %v1530 = vunpack.c.l.b16 %v339
  %v1531 = vunpack.c.l.b16 %v340
  %v1532 = vunpack.c.l.b16 %v341
  %v1533 = vunpack.c.l.b16 %v342
  %v1534 = vunpack.c.l.b16 %v343
  %v1535 = vunpack.c.l.b16 %v344
  %v1536 = vunpack.c.l.b16 %v345
  %v1537 = vunpack.c.l.b16 %v346
  %v1538 = vunpack.c.l.b16 %v347
  %v1539 = vunpack.c.l.b16 %v348
  %v1540 = vunpack.c.l.b16 %v349
  %v1541 = vunpack.c.l.b16 %v350
  %v1542 = vunpack.c.l.b16 %v351
  %v1543 = vunpack.c.l.b16 %v352
  %v1544 = vunpack.c.l.b16 %v353
  %v1545 = vunpack.c.l.b16 %v354
  %v1546 = vunpack.c.l.b16 %v355
  %v1547 = vunpack.c.l.b16 %v356
  %v1548 = vunpack.c.l.b16 %v357
  %v1549 = vunpack.c.l.b16 %v358
  %v1550 = vunpack.c.l.b16 %v359
  %v1551 = vunpack.c.l.b16 %v360
  %v1552 = vunpack.c.l.b16 %v361
  %v1553 = vunpack.c.l.b16 %v362
  %v1554 = vunpack.c.l.b16 %v363
  %v1555 = vunpack.c.l.b16 %v364
  %v1556 = vunpack.c.l.b16 %v365
  %v1557 = vunpack.c.l.b16 %v366
  %v1558 = vunpack.c.l.b16 %v367
  %v1559 = vunpack.c.l.b16 %v368
  %v1560 = vunpack.c.l.b16 %v369
  %v1561 = vunpack.c.l.b16 %v370
  %v1562 = vunpack.c.l.b16 %v371
  %v1563 = vunpack.c.l.b16 %v372
  %v1564 = vunpack.c.l.b16 %v373
  %v1565 = vunpack.c.l.b16 %v374
  %v1566 = vunpack.c.l.b16 %v375
  %v1567 = vunpack.c.l.b16 %v376
  %v1568 = vunpack.c.l.b16 %v377
  %v1569 = vunpack.c.l.b16 %v378
  %v1570 = vunpack.c.l.b16 %v379
  %v1571 = vunpack.c.l.b16 %v380
  %v1572 = vunpack.c.l.b16 %v381
  %v1573 = vunpack.c.l.b16 %v382
  %v1574 = vunpack.c.l.b16 %v383
  %v1575 = vunpack.c.l.b16 %v384
  %v1576 = vunpack.c.l.b16 %v385
  %v1577 = vunpack.c.l.b16 %v386
  %v1578 = vunpack.c.l.b16 %v387
  %v1579 = vunpack.c.l.b16 %v388
  %v1580 = vunpack.c.l.b16 %v389
  %v1581 = vunpack.c.l.b16 %v390
  %v1582 = vunpack.c.l.b16 %v391
  %v1583 = vunpack.c.l.b16 %v392
  %v1584 = vunpack.c.l.b16 %v393
  %v1585 = vunpack.c.l.b16 %v394
  %v1586 = vunpack.c.l.b16 %v395
  %v1587 = vunpack.c.l.b16 %v396
  %v1588 = vunpack.c.l.b16 %v397
  %v1589 = vunpack.c.l.b16 %v398
  %v1590 = vunpack.c.l.b16 %v399
  %v1591 = vunpack.c.l.b16 %v400
  %v1592 = vunpack.c.l.b16 %v401
  %v1593 = vunpack.c.l.b16 %v402
  %v1594 = vunpack.c.l.b16 %v403
  %v1595 = vunpack.c.l.b16 %v404
  %v1596 = vunpack.c.l.b16 %v405
  %v1597 = vunpack.c.l.b16 %v406
  %v1598 = vunpack.c.l.b16 %v407
  %v1599 = vunpack.c.l.b16 %v408
  %v1600 = vunpack.c.l.b16 %v409
  %v1601 = vunpack.c.l.b16 %v410
  %v1602 = vunpack.c.l.b16 %v411
  %v1603 = vunpack.c.l.b16 %v412
  %v1604 = vunpack.c.l.b16 %v413
  %v1605 = vunpack.c.l.b16 %v414
  %v1606 = vunpack.c.l.b16 %v415
  %v1607 = vunpack.c.l.b16 %v416
  %v1608 = vunpack.c.l.b16 %v417
  %v1609 = vunpack.c.l.b16 %v418
  %v1610 = vunpack.c.l.b16 %v419
  %v1611 = vunpack.c.l.b16 %v420
  %v1612 = vunpack.c.l.b16 %v421
  %v1613 = vunpack.c.l.b16 %v422
  %v1614 = vunpack.c.l.b16 %v423
  %v1615 = vunpack.c.l.b16 %v424
  %v1616 = vunpack.c.l.b16 %v425
  %v1617 = vunpack.c.l.b16 %v426
  %v1618 = vunpack.c.l.b16 %v427
  %v1619 = vunpack.c.l.b16 %v428
  %v1620 = vunpack.c.l.b16 %v429
  %v1621 = vunpack.c.l.b16 %v430
  %v1622 = vunpack.c.l.b16 %v431
  %v1623 = vunpack.c.l.b16 %v432
  %v1624 = vunpack.c.l.b16 %v433
  %v1625 = vunpack.c.l.b16 %v434
  %v1626 = vunpack.c.l.b16 %v435
  %v1627 = vunpack.c.l.b16 %v436
  %v1628 = vunpack.c.l.b16 %v437
  %v1629 = vunpack.c.l.b16 %v438
  %v1630 = vunpack.c.l.b16 %v439
  %v1631 = vunpack.c.l.b16 %v440
  %v1632 = vunpack.c.l.b16 %v441
  %v1633 = vunpack.c.l.b16 %v442
  %v1634 = vunpack.c.l.b16 %v443
  %v1635 = vunpack.c.l.b16 %v444
  %v1636 = vunpack.c.l.b16 %v445
  %v1637 = vunpack.c.l.b16 %v446
  %v1638 = vunpack.c.l.b16 %v447
  %v1639 = vunpack.c.l.b16 %v448
  %v1640 = vunpack.c.l.b16 %v449
  %v1641 = vunpack.c.l.b16 %v450
  %v1642 = vunpack.c.l.b16 %v451
  %v1643 = vunpack.c.l.b16 %v452
  %v1644 = vunpack.c.l.b16 %v453
  %v1645 = vunpack.c.l.b16 %v454
  %v1646 = vunpack.c.l.b16 %v455
  %v1647 = vunpack.c.l.b16 %v456
  %v1648 = vunpack.c.l.b16 %v457
  %v1649 = vunpack.c.l.b16 %v458
  %v1650 = vunpack.c.l.b16 %v459
  %v1651 = vunpack.c.l.b16 %v460
  %v1652 = vunpack.c.l.b16 %v461
  %v1653 = vunpack.c.l.b16 %v462
  %v1654 = vunpack.c.l.b16 %v463
  %v1655 = vunpack.c.l.b16 %v464
  %v1656 = vunpack.c.l.b16 %v465
  %v1657 = vunpack.c.l.b16 %v466
  %v1658 = vunpack.c.l.b16 %v467
  %v1659 = vunpack.c.l.b16 %v468
  %v1660 = vunpack.c.l.b16 %v469
  %v1661 = vunpack.c.l.b16 %v470
  %v1662 = vunpack.c.l.b16 %v471
  %v1663 = vunpack.c.l.b16 %v472
  %v1664 = vunpack.c.l.b16 %v473
  %v1665 = vunpack.c.l.b16 %v474
  %v1666 = vunpack.c.l.b16 %v475
  %v1667 = vunpack.c.l.b16 %v476
  %v1668 = vunpack.c.l.b16 %v477
  %v1669 = vunpack.c.l.b16 %v478
  %v1670 = vunpack.c.l.b16 %v479
  %v1671 = vunpack.c.l.b16 %v480
  %v1672 = vunpack.c.l.b16 %v481
  %v1673 = vunpack.c.l.b16 %v482
  %v1674 = vunpack.c.l.b16 %v483
  %v1675 = vunpack.c.l.b16 %v484
  %v1676 = vunpack.c.l.b16 %v485
  %v1677 = vunpack.c.l.b16 %v486
  %v1678 = vunpack.c.l.b16 %v487
  %v1679 = vunpack.c.l.b16 %v488
  %v1680 = vunpack.c.l.b16 %v489
  %v1681 = vunpack.c.l.b16 %v490
  %v1682 = vunpack.c.l.b16 %v491
  %v1683 = vunpack.c.l.b16 %v492
  %v1684 = vunpack.c.l.b16 %v493
  %v1685 = vunpack.c.l.b16 %v494
  %v1686 = vunpack.c.l.b16 %v495
  %v1687 = vunpack.c.l.b16 %v496
  %v1688 = vunpack.c.l.b16 %v497
  %v1689 = vunpack.c.l.b16 %v498
  %v1690 = vunpack.c.l.b16 %v499
  %v1691 = vunpack.c.l.b16 %v500
  %v1692 = vunpack.c.l.b16 %v501
  %v1693 = vunpack.c.l.b16 %v502
  %v1694 = vunpack.c.l.b16 %v503
  %v1695 = vunpack.c.l.b16 %v504
  %v1696 = vunpack.c.l.b16 %v505
  %v1697 = vunpack.c.l.b16 %v506
  %v1698 = vunpack.c.l.b16 %v507
  %v1699 = vunpack.c.l.b16 %v508
  %v1700 = vunpack.c.l.b16 %v509
  %v1701 = vunpack.c.l.b16 %v510
  %v1702 = vunpack.c.l.b16 %v511
  %v1703 = vunpack.c.l.b16 %v512
  %v1704 = vunpack.c.l.b16 %v513
  %v1705 = vunpack.c.l.b16 %v514
  %v1706 = vunpack.c.l.b16 %v515
  %v1707 = vunpack.c.l.b16 %v516
  %v1708 = vunpack.c.l.b16 %v517
  %v1709 = vunpack.c.l.b16 %v518
  %v1710 = vunpack.c.l.b16 %v519
  %v1711 = vunpack.c.l.b16 %v520
  %v1712 = vunpack.c.l.b16 %v521
  %v1713 = vunpack.c.l.b16 %v522
  %v1714 = vunpack.c.l.b16 %v523
  %v1715 = vunpack.c.l.b16 %v524
  %v1716 = vunpack.c.l.b16 %v525
  %v1717 = vunpack.c.l.b16 %v526
  %v1718 = vunpack.c.l.b16 %v527
  %v1719 = vunpack.c.l.b16 %v528
  %v1720 = vunpack.c.l.b16 %v529
  %v1721 = vunpack.c.l.b16 %v530
  %v1722 = vunpack.c.l.b16 %v531
  %v1723 = vunpack.c.l.b16 %v532
  %v1724 = vunpack.c.l.b16 %v533
  %v1725 = vunpack.c.l.b16 %v534
  %v1726 = vunpack.c.l.b16 %v535
  %v1727 = vunpack.c.l.b16 %v536
  %v1728 = vunpack.c.l.b16 %v537
  %v1729 = vunpack.c.l.b16 %v538
  %v1730 = vunpack.c.l.b16 %v539
  %v1731 = vunpack.c.l.b16 %v540
  %v1732 = vunpack.c.l.b16 %v541
  %v1733 = vunpack.c.l.b16 %v542
  %v1734 = vunpack.c.l.b16 %v543
  %v1735 = vunpack.c.l.b16 %v544
  %v1736 = vunpack.c.l.b16 %v545
  %v1737 = vunpack.c.l.b16 %v546
  %v1738 = vunpack.c.l.b16 %v547
  %v1739 = vunpack.c.l.b16 %v548
  %v1740 = vunpack.c.l.b16 %v549
  %v1741 = vunpack.c.l.b16 %v550
  %v1742 = vunpack.c.l.b16 %v551
  %v1743 = vunpack.c.l.b16 %v552
  %v1744 = vunpack.c.l.b16 %v553
  %v1745 = vunpack.c.l.b16 %v554
  %v1746 = vunpack.c.l.b16 %v555
  %v1747 = vunpack.c.l.b16 %v556
  %v1748 = vunpack.c.l.b16 %v557
  %v1749 = vunpack.c.l.b16 %v558
  %v1750 = vpack.c.b16 %v1239, %v1238
  %v1751 = vpack.c.b16 %v1241, %v1240
  %v1752 = vpack.c.b16 %v1243, %v1242
  %v1753 = vpack.c.b16 %v1245, %v1244
  %v1754 = vpack.c.b16 %v1247, %v1246
  %v1755 = vpack.c.b16 %v1249, %v1248
  %v1756 = vpack.c.b16 %v1251, %v1250
  %v1757 = vpack.c.b16 %v1253, %v1252
  %v1758 = vpack.c.b16 %v1255, %v1254
  %v1759 = vpack.c.b16 %v1257, %v1256
  %v1760 = vpack.c.b16 %v1259, %v1258
  %v1761 = vpack.c.b16 %v1261, %v1260
  %v1762 = vpack.c.b16 %v1263, %v1262
  %v1763 = vpack.c.b16 %v1265, %v1264
  %v1764 = vpack.c.b16 %v1267, %v1266
  %v1765 = vpack.c.b16 %v1269, %v1268
  %v1766 = vpack.c.b16 %v1271, %v1270
  %v1767 = vpack.c.b16 %v1273, %v1272
  %v1768 = vpack.c.b16 %v1275, %v1274
  %v1769 = vpack.c.b16 %v1277, %v1276
  %v1770 = vpack.c.b16 %v1279, %v1278
  %v1771 = vpack.c.b16 %v1281, %v1280
  %v1772 = vpack.c.b16 %v1283, %v1282
  %v1773 = vpack.c.b16 %v1285, %v1284
  %v1774 = vpack.c.b16 %v1287, %v1286
  %v1775 = vpack.c.b16 %v1289, %v1288
  %v1776 = vpack.c.b16 %v1291, %v1290
  %v1777 = vpack.c.b16 %v1293, %v1292
  %v1778 = vpack.c.b16 %v1295, %v1294
  %v1779 = vpack.c.b16 %v1297, %v1296
  %v1780 = vpack.c.b16 %v1299, %v1298
  %v1781 = vpack.c.b16 %v1301, %v1300
  %v1782 = vpack.c.b16 %v1303, %v1302
  %v1783 = vpack.c.b16 %v1305, %v1304
  %v1784 = vpack.c.b16 %v1307, %v1306
  %v1785 = vpack.c.b16 %v1309, %v1308
  %v1786 = vpack.c.b16 %v1311, %v1310
  %v1787 = vpack.c.b16 %v1313, %v1312
  %v1788 = vpack.c.b16 %v1315, %v1314
  %v1789 = vpack.c.b16 %v1317, %v1316
  %v1790 = vpack.c.b16 %v1319, %v1318
  %v1791 = vpack.c.b16 %v1321, %v1320
  %v1792 = vpack.c.b16 %v1323, %v1322
  %v1793 = vpack.c.b16 %v1325, %v1324
  %v1794 = vpack.c.b16 %v1327, %v1326
  %v1795 = vpack.c.b16 %v1329, %v1328
  %v1796 = vpack.c.b16 %v1331, %v1330
  %v1797 = vpack.c.b16 %v1333, %v1332
  %v1798 = vpack.c.b16 %v1335, %v1334
  %v1799 = vpack.c.b16 %v1337, %v1336
  %v1800 = vpack.c.b16 %v1339, %v1338
  %v1801 = vpack.c.b16 %v1341, %v1340
  %v1802 = vpack.c.b16 %v1343, %v1342
  %v1803 = vpack.c.b16 %v1345, %v1344
  %v1804 = vpack.c.b16 %v1347, %v1346
  %v1805 = vpack.c.b16 %v1349, %v1348
  %v1806 = vpack.c.b16 %v1351, %v1350
  %v1807 = vpack.c.b16 %v1353, %v1352
  %v1808 = vpack.c.b16 %v1355, %v1354
  %v1809 = vpack.c.b16 %v1357, %v1356
  %v1810 = vpack.c.b16 %v1359, %v1358
  %v1811 = vpack.c.b16 %v1361, %v1360
  %v1812 = vpack.c.b16 %v1363, %v1362
  %v1813 = vpack.c.b16 %v1365, %v1364
  %v1814 = vpack.c.b16 %v1367, %v1366
  %v1815 = vpack.c.b16 %v1369, %v1368
  %v1816 = vpack.c.b16 %v1371, %v1370
  %v1817 = vpack.c.b16 %v1373, %v1372
  %v1818 = vpack.c.b16 %v1375, %v1374
  %v1819 = vpack.c.b16 %v1377, %v1376
  %v1820 = vpack.c.b16 %v1379, %v1378
  %v1821 = vpack.c.b16 %v1381, %v1380
  %v1822 = vpack.c.b16 %v1383, %v1382
  %v1823 = vpack.c.b16 %v1385, %v1384
  %v1824 = vpack.c.b16 %v1387, %v1386
  %v1825 = vpack.c.b16 %v1389, %v1388
  %v1826 = vpack.c.b16 %v1391, %v1390
  %v1827 = vpack.c.b16 %v1393, %v1392
  %v1828 = vpack.c.b16 %v1395, %v1394
  %v1829 = vpack.c.b16 %v1397, %v1396
  %v1830 = vpack.c.b16 %v1399, %v1398
  %v1831 = vpack.c.b16 %v1401, %v1400
  %v1832 = vpack.c.b16 %v1403, %v1402
  %v1833 = vpack.c.b16 %v1405, %v1404
  %v1834 = vpack.c.b16 %v1407, %v1406
  %v1835 = vpack.c.b16 %v1409, %v1408
  %v1836 = vpack.c.b16 %v1411, %v1410
  %v1837 = vpack.c.b16 %v1413, %v1412
  %v1838 = vpack.c.b16 %v1415, %v1414
  %v1839 = vpack.c.b16 %v1417, %v1416
  %v1840 = vpack.c.b16 %v1419, %v1418
  %v1841 = vpack.c.b16 %v1421, %v1420
  %v1842 = vpack.c.b16 %v1423, %v1422
  %v1843 = vpack.c.b16 %v1425, %v1424
  %v1844 = vpack.c.b16 %v1427, %v1426
  %v1845 = vpack.c.b16 %v1429, %v1428
  %v1846 = vpack.c.b16 %v1431, %v1430
  %v1847 = vpack.c.b16 %v1433, %v1432
  %v1848 = vpack.c.b16 %v1435, %v1434
  %v1849 = vpack.c.b16 %v1437, %v1436
  %v1850 = vpack.c.b16 %v1439, %v1438
  %v1851 = vpack.c.b16 %v1441, %v1440
  %v1852 = vpack.c.b16 %v1443, %v1442
  %v1853 = vpack.c.b16 %v1445, %v1444
  %v1854 = vpack.c.b16 %v1447, %v1446
  %v1855 = vpack.c.b16 %v1449, %v1448
  %v1856 = vpack.c.b16 %v1451, %v1450
  %v1857 = vpack.c.b16 %v1453, %v1452
  %v1858 = vpack.c.b16 %v1455, %v1454
  %v1859 = vpack.c.b16 %v1457, %v1456
  %v1860 = vpack.c.b16 %v1459, %v1458
  %v1861 = vpack.c.b16 %v1461, %v1460
  %v1862 = vpack.c.b16 %v1463, %v1462
  %v1863 = vpack.c.b16 %v1465, %v1464
  %v1864 = vpack.c.b16 %v1467, %v1466
  %v1865 = vpack.c.b16 %v1469, %v1468
  %v1866 = vpack.c.b16 %v1471, %v1470
  %v1867 = vpack.c.b16 %v1473, %v1472
  %v1868 = vpack.c.b16 %v1475, %v1474
  %v1869 = vpack.c.b16 %v1477, %v1476
  %v1870 = vpack.c.b16 %v1479, %v1478
  %v1871 = vpack.c.b16 %v1481, %v1480
  %v1872 = vpack.c.b16 %v1483, %v1482
  %v1873 = vpack.c.b16 %v1485, %v1484
  %v1874 = vpack.c.b16 %v1487, %v1486
  %v1875 = vpack.c.b16 %v1489, %v1488
  %v1876 = vpack.c.b16 %v1491, %v1490
  %v1877 = vpack.c.b16 %v1493, %v1492
  %v1878 = vpack.c.b16 %v1495, %v1494
  %v1879 = vpack.c.b16 %v1497, %v1496
  %v1880 = vpack.c.b16 %v1499, %v1498
  %v1881 = vpack.c.b16 %v1501, %v1500
  %v1882 = vpack.c.b16 %v1503, %v1502
  %v1883 = vpack.c.b16 %v1505, %v1504
  %v1884 = vpack.c.b16 %v1507, %v1506
  %v1885 = vpack.c.b16 %v1509, %v1508
  %v1886 = vpack.c.b16 %v1511, %v1510
  %v1887 = vpack.c.b16 %v1513, %v1512
  %v1888 = vpack.c.b16 %v1515, %v1514
  %v1889 = vpack.c.b16 %v1517, %v1516
  %v1890 = vpack.c.b16 %v1519, %v1518
  %v1891 = vpack.c.b16 %v1521, %v1520
  %v1892 = vpack.c.b16 %v1523, %v1522
  %v1893 = vpack.c.b16 %v1525, %v1524
  %v1894 = vpack.c.b16 %v1527, %v1526
  %v1895 = vpack.c.b16 %v1529, %v1528
  %v1896 = vpack.c.b16 %v1531, %v1530
  %v1897 = vpack.c.b16 %v1533, %v1532
  %v1898 = vpack.c.b16 %v1535, %v1534
  %v1899 = vpack.c.b16 %v1537, %v1536
  %v1900 = vpack.c.b16 %v1539, %v1538
  %v1901 = vpack.c.b16 %v1541, %v1540
  %v1902 = vpack.c.b16 %v1543, %v1542
  %v1903 = vpack.c.b16 %v1545, %v1544
  %v1904 = vpack.c.b16 %v1547, %v1546
  %v1905 = vpack.c.b16 %v1549, %v1548
  %v1906 = vpack.c.b16 %v1551, %v1550
  %v1907 = vpack.c.b16 %v1553, %v1552
  %v1908 = vpack.c.b16 %v1555, %v1554
  %v1909 = vpack.c.b16 %v1557, %v1556
  %v1910 = vpack.c.b16 %v1559, %v1558
  %v1911 = vpack.c.b16 %v1561, %v1560
  %v1912 = vpack.c.b16 %v1563, %v1562
  %v1913 = vpack.c.b16 %v1565, %v1564
  %v1914 = vpack.c.b16 %v1567, %v1566
  %v1915 = vpack.c.b16 %v1569, %v1568
  %v1916 = vpack.c.b16 %v1571, %v1570
  %v1917 = vpack.c.b16 %v1573, %v1572
  %v1918 = vpack.c.b16 %v1575, %v1574
  %v1919 = vpack.c.b16 %v1577, %v1576
  %v1920 = vpack.c.b16 %v1579, %v1578
  %v1921 = vpack.c.b16 %v1581, %v1580
  %v1922 = vpack.c.b16 %v1583, %v1582
  %v1923 = vpack.c.b16 %v1585, %v1584
  %v1924 = vpack.c.b16 %v1587, %v1586
  %v1925 = vpack.c.b16 %v1589, %v1588
  %v1926 = vpack.c.b16 %v1591, %v1590
  %v1927 = vpack.c.b16 %v1593, %v1592
  %v1928 = vpack.c.b16 %v1595, %v1594
  %v1929 = vpack.c.b16 %v1597, %v1596
  %v1930 = vpack.c.b16 %v1599, %v1598
  %v1931 = vpack.c.b16 %v1601, %v1600
  %v1932 = vpack.c.b16 %v1603, %v1602
  %v1933 = vpack.c.b16 %v1605, %v1604
  %v1934 = vpack.c.b16 %v1607, %v1606
  %v1935 = vpack.c.b16 %v1609, %v1608
  %v1936 = vpack.c.b16 %v1611, %v1610
  %v1937 = vpack.c.b16 %v1613, %v1612
  %v1938 = vpack.c.b16 %v1615, %v1614
  %v1939 = vpack.c.b16 %v1617, %v1616
  %v1940 = vpack.c.b16 %v1619, %v1618
  %v1941 = vpack.c.b16 %v1621, %v1620
  %v1942 = vpack.c.b16 %v1623, %v1622
  %v1943 = vpack.c.b16 %v1625, %v1624
  %v1944 = vpack.c.b16 %v1627, %v1626
  %v1945 = vpack.c.b16 %v1629, %v1628
  %v1946 = vpack.c.b16 %v1631, %v1630
  %v1947 = vpack.c.b16 %v1633, %v1632
  %v1948 = vpack.c.b16 %v1635, %v1634
  %v1949 = vpack.c.b16 %v1637, %v1636
  %v1950 = vpack.c.b16 %v1639, %v1638
  %v1951 = vpack.c.b16 %v1641, %v1640
  %v1952 = vpack.c.b16 %v1643, %v1642
  %v1953 = vpack.c.b16 %v1645, %v1644
  %v1954 = vpack.c.b16 %v1647, %v1646
  %v1955 = vpack.c.b16 %v1649, %v1648
  %v1956 = vpack.c.b16 %v1651, %v1650
  %v1957 = vpack.c.b16 %v1653, %v1652
  %v1958 = vpack.c.b16 %v1655, %v1654
  %v1959 = vpack.c.b16 %v1657, %v1656
  %v1960 = vpack.c.b16 %v1659, %v1658
  %v1961 = vpack.c.b16 %v1661, %v1660
  %v1962 = vpack.c.b16 %v1663, %v1662
  %v1963 = vpack.c.b16 %v1665, %v1664
  %v1964 = vpack.c.b16 %v1667, %v1666
  %v1965 = vpack.c.b16 %v1669, %v1668
  %v1966 = vpack.c.b16 %v1671, %v1670
  %v1967 = vpack.c.b16 %v1673, %v1672
  %v1968 = vpack.c.b16 %v1675, %v1674
  %v1969 = vpack.c.b16 %v1677, %v1676
  %v1970 = vpack.c.b16 %v1679, %v1678
  %v1971 = vpack.c.b16 %v1681, %v1680
  %v1972 = vpack.c.b16 %v1683, %v1682
  %v1973 = vpack.c.b16 %v1685, %v1684
  %v1974 = vpack.c.b16 %v1687, %v1686
  %v1975 = vpack.c.b16 %v1689, %v1688
  %v1976 = vpack.c.b16 %v1691, %v1690
  %v1977 = vpack.c.b16 %v1693, %v1692
  %v1978 = vpack.c.b16 %v1695, %v1694
  %v1979 = vpack.c.b16 %v1697, %v1696
  %v1980 = vpack.c.b16 %v1699, %v1698
  %v1981 = vpack.c.b16 %v1701, %v1700
  %v1982 = vpack.c.b16 %v1703, %v1702
  %v1983 = vpack.c.b16 %v1705, %v1704
  %v1984 = vpack.c.b16 %v1707, %v1706
  %v1985 = vpack.c.b16 %v1709, %v1708
  %v1986 = vpack.c.b16 %v1711, %v1710
  %v1987 = vpack.c.b16 %v1713, %v1712
  %v1988 = vpack.c.b16 %v1715, %v1714
  %v1989 = vpack.c.b16 %v1717, %v1716
  %v1990 = vpack.c.b16 %v1719, %v1718
  %v1991 = vpack.c.b16 %v1721, %v1720
  %v1992 = vpack.c.b16 %v1723, %v1722
  %v1993 = vpack.c.b16 %v1725, %v1724
  %v1994 = vpack.c.b16 %v1727, %v1726
  %v1995 = vpack.c.b16 %v1729, %v1728
  %v1996 = vpack.c.b16 %v1731, %v1730
  %v1997 = vpack.c.b16 %v1733, %v1732
  %v1998 = vpack.c.b16 %v1735, %v1734
  %v1999 = vpack.c.b16 %v1737, %v1736
  %v2000 = vpack.c.b16 %v1739, %v1738
  %v2001 = vpack.c.b16 %v1741, %v1740
  %v2002 = vpack.c.b16 %v1743, %v1742
  %v2003 = vpack.c.b16 %v1745, %v1744
  %v2004 = vpack.c.b16 %v1747, %v1746
  %v2005 = vpack.c.b16 %v1749, %v1748
  %2262 = vmatprep.subr.bf16.mxu0 0
  %2263 = vmatpush1.bf16.msra.mxu0 %v1757
  %2264 = vmatprep.subr.bf16.mxu0 0
  %2265 = vmatpush1.bf16.msra.mxu0 %v1756
  %2266 = vmatprep.subr.bf16.mxu0 0
  %2267 = vmatpush1.bf16.msra.mxu0 %v1755
  %2268 = vmatprep.subr.bf16.mxu0 0
  %2269 = vmatpush1.bf16.msra.mxu0 %v1754
  %2270 = vmatprep.subr.bf16.mxu0 0
  %2271 = vmatpush1.bf16.msra.mxu0 %v1753
  %2272 = vmatprep.subr.bf16.mxu0 0
  %2273 = vmatpush1.bf16.msra.mxu0 %v1752
  %2274 = vmatprep.subr.bf16.mxu0 0
  %2275 = vmatpush1.bf16.msra.mxu0 %v1751
  %2276 = vmatprep.subr.bf16.mxu0 0
  %2277 = vmatpush1.bf16.msra.mxu0 %v1750
  %2278 = vmatprep.subr.bf16.mxu0 0
  %2279 = vmatpush2.bf16.msra.mxu0 %v1765
  %2280 = vmatprep.subr.bf16.mxu0 0
  %2281 = vmatpush2.bf16.msra.mxu0 %v1764
  %2282 = vmatprep.subr.bf16.mxu0 0
  %2283 = vmatpush2.bf16.msra.mxu0 %v1763
  %2284 = vmatprep.subr.bf16.mxu0 0
  %2285 = vmatpush2.bf16.msra.mxu0 %v1762
  %2286 = vmatprep.subr.bf16.mxu0 0
  %2287 = vmatpush2.bf16.msra.mxu0 %v1761
  %2288 = vmatprep.subr.bf16.mxu0 0
  %2289 = vmatpush2.bf16.msra.mxu0 %v1760
  %2290 = vmatprep.subr.bf16.mxu0 0
  %2291 = vmatpush2.bf16.msra.mxu0 %v1759
  %2292 = vmatprep.subr.bf16.mxu0 0
  %2293 = vmatpush2.bf16.msra.mxu0 %v1758
  %2294 = vmatprep.mubr.bf16.mxu0 %v663
  %2295 = vmatmul.mubr.bf16.gmra.mxu0 %v662
  %v2296 = vpop.f32.mrf.mxu0
  %v2297 = vadd.f32 %v564, %v2296
  %v2298 = vpop.f32.mrf.mxu0
  %v2299 = vpop.f32.mrf.mxu0
  %v2300 = vadd.f32 %v564, %v2299
  %v2301 = vpop.f32.mrf.mxu0
  %2302 = vdwg.mxu0
  %2303 = vmatprep.subr.bf16.mxu0 0
  %2304 = vmatpush1.bf16.msra.mxu0 %v1773
  %2305 = vmatprep.subr.bf16.mxu0 0
  %2306 = vmatpush1.bf16.msra.mxu0 %v1772
  %2307 = vmatprep.subr.bf16.mxu0 0
  %2308 = vmatpush1.bf16.msra.mxu0 %v1771
  %2309 = vmatprep.subr.bf16.mxu0 0
  %2310 = vmatpush1.bf16.msra.mxu0 %v1770
  %2311 = vmatprep.subr.bf16.mxu0 0
  %2312 = vmatpush1.bf16.msra.mxu0 %v1769
  %2313 = vmatprep.subr.bf16.mxu0 0
  %2314 = vmatpush1.bf16.msra.mxu0 %v1768
  %2315 = vmatprep.subr.bf16.mxu0 0
  %2316 = vmatpush1.bf16.msra.mxu0 %v1767
  %2317 = vmatprep.subr.bf16.mxu0 0
  %2318 = vmatpush1.bf16.msra.mxu0 %v1766
  %2319 = vmatprep.subr.bf16.mxu0 0
  %2320 = vmatpush2.bf16.msra.mxu0 %v1781
  %2321 = vmatprep.subr.bf16.mxu0 0
  %2322 = vmatpush2.bf16.msra.mxu0 %v1780
  %2323 = vmatprep.subr.bf16.mxu0 0
  %2324 = vmatpush2.bf16.msra.mxu0 %v1779
  %2325 = vmatprep.subr.bf16.mxu0 0
  %2326 = vmatpush2.bf16.msra.mxu0 %v1778
  %2327 = vmatprep.subr.bf16.mxu0 0
  %2328 = vmatpush2.bf16.msra.mxu0 %v1777
  %2329 = vmatprep.subr.bf16.mxu0 0
  %2330 = vmatpush2.bf16.msra.mxu0 %v1776
  %2331 = vmatprep.subr.bf16.mxu0 0
  %2332 = vmatpush2.bf16.msra.mxu0 %v1775
  %2333 = vmatprep.subr.bf16.mxu0 0
  %2334 = vmatpush2.bf16.msra.mxu0 %v1774
  %2335 = vmatprep.mubr.bf16.mxu0 %v665
  %2336 = vmatmul.mubr.bf16.gmra.mxu0 %v664
  %v2337 = vpop.f32.mrf.mxu0
  %v2338 = vadd.f32 %v2297, %v2337
  %v2339 = vpop.f32.mrf.mxu0
  %v2340 = vpop.f32.mrf.mxu0
  %v2341 = vadd.f32 %v2300, %v2340
  %v2342 = vpop.f32.mrf.mxu0
  %2343 = vdwg.mxu0
  %2344 = vmatprep.subr.bf16.mxu0 0
  %2345 = vmatpush1.bf16.msra.mxu0 %v1789
  %2346 = vmatprep.subr.bf16.mxu0 0
  %2347 = vmatpush1.bf16.msra.mxu0 %v1788
  %2348 = vmatprep.subr.bf16.mxu0 0
  %2349 = vmatpush1.bf16.msra.mxu0 %v1787
  %2350 = vmatprep.subr.bf16.mxu0 0
  %2351 = vmatpush1.bf16.msra.mxu0 %v1786
  %2352 = vmatprep.subr.bf16.mxu0 0
  %2353 = vmatpush1.bf16.msra.mxu0 %v1785
  %2354 = vmatprep.subr.bf16.mxu0 0
  %2355 = vmatpush1.bf16.msra.mxu0 %v1784
  %2356 = vmatprep.subr.bf16.mxu0 0
  %2357 = vmatpush1.bf16.msra.mxu0 %v1783
  %2358 = vmatprep.subr.bf16.mxu0 0
  %2359 = vmatpush1.bf16.msra.mxu0 %v1782
  %2360 = vmatprep.subr.bf16.mxu0 0
  %2361 = vmatpush2.bf16.msra.mxu0 %v1797
  %2362 = vmatprep.subr.bf16.mxu0 0
  %2363 = vmatpush2.bf16.msra.mxu0 %v1796
  %2364 = vmatprep.subr.bf16.mxu0 0
  %2365 = vmatpush2.bf16.msra.mxu0 %v1795
  %2366 = vmatprep.subr.bf16.mxu0 0
  %2367 = vmatpush2.bf16.msra.mxu0 %v1794
  %2368 = vmatprep.subr.bf16.mxu0 0
  %2369 = vmatpush2.bf16.msra.mxu0 %v1793
  %2370 = vmatprep.subr.bf16.mxu0 0
  %2371 = vmatpush2.bf16.msra.mxu0 %v1792
  %2372 = vmatprep.subr.bf16.mxu0 0
  %2373 = vmatpush2.bf16.msra.mxu0 %v1791
  %2374 = vmatprep.subr.bf16.mxu0 0
  %2375 = vmatpush2.bf16.msra.mxu0 %v1790
  %2376 = vmatprep.mubr.bf16.mxu0 %v667
  %2377 = vmatmul.mubr.bf16.gmra.mxu0 %v666
  %v2378 = vpop.f32.mrf.mxu0
  %v2379 = vadd.f32 %v2338, %v2378
  %v2380 = vpop.f32.mrf.mxu0
  %v2381 = vpop.f32.mrf.mxu0
  %v2382 = vadd.f32 %v2341, %v2381
  %v2383 = vpop.f32.mrf.mxu0
  %2384 = vdwg.mxu0
  %2385 = vmatprep.subr.bf16.mxu0 0
  %2386 = vmatpush1.bf16.msra.mxu0 %v1805
  %2387 = vmatprep.subr.bf16.mxu0 0
  %2388 = vmatpush1.bf16.msra.mxu0 %v1804
  %2389 = vmatprep.subr.bf16.mxu0 0
  %2390 = vmatpush1.bf16.msra.mxu0 %v1803
  %2391 = vmatprep.subr.bf16.mxu0 0
  %2392 = vmatpush1.bf16.msra.mxu0 %v1802
  %2393 = vmatprep.subr.bf16.mxu0 0
  %2394 = vmatpush1.bf16.msra.mxu0 %v1801
  %2395 = vmatprep.subr.bf16.mxu0 0
  %2396 = vmatpush1.bf16.msra.mxu0 %v1800
  %2397 = vmatprep.subr.bf16.mxu0 0
  %2398 = vmatpush1.bf16.msra.mxu0 %v1799
  %2399 = vmatprep.subr.bf16.mxu0 0
  %2400 = vmatpush1.bf16.msra.mxu0 %v1798
  %2401 = vmatprep.subr.bf16.mxu0 0
  %2402 = vmatpush2.bf16.msra.mxu0 %v1813
  %2403 = vmatprep.subr.bf16.mxu0 0
  %2404 = vmatpush2.bf16.msra.mxu0 %v1812
  %2405 = vmatprep.subr.bf16.mxu0 0
  %2406 = vmatpush2.bf16.msra.mxu0 %v1811
  %2407 = vmatprep.subr.bf16.mxu0 0
  %2408 = vmatpush2.bf16.msra.mxu0 %v1810
  %2409 = vmatprep.subr.bf16.mxu0 0
  %2410 = vmatpush2.bf16.msra.mxu0 %v1809
  %2411 = vmatprep.subr.bf16.mxu0 0
  %2412 = vmatpush2.bf16.msra.mxu0 %v1808
  %2413 = vmatprep.subr.bf16.mxu0 0
  %2414 = vmatpush2.bf16.msra.mxu0 %v1807
  %2415 = vmatprep.subr.bf16.mxu0 0
  %2416 = vmatpush2.bf16.msra.mxu0 %v1806
  %2417 = vmatprep.mubr.bf16.mxu0 %v669
  %2418 = vmatmul.mubr.bf16.gmra.mxu0 %v668
  %v2419 = vpop.f32.mrf.mxu0
  %v2420 = vadd.f32 %v2379, %v2419
  %v2421 = vpop.f32.mrf.mxu0
  %v2422 = vpop.f32.mrf.mxu0
  %v2423 = vadd.f32 %v2382, %v2422
  %v2424 = vpop.f32.mrf.mxu0
  %2425 = vdwg.mxu0
  %2426 = vmatprep.subr.bf16.mxu0 0
  %2427 = vmatpush1.bf16.msra.mxu0 %v1821
  %2428 = vmatprep.subr.bf16.mxu0 0
  %2429 = vmatpush1.bf16.msra.mxu0 %v1820
  %2430 = vmatprep.subr.bf16.mxu0 0
  %2431 = vmatpush1.bf16.msra.mxu0 %v1819
  %2432 = vmatprep.subr.bf16.mxu0 0
  %2433 = vmatpush1.bf16.msra.mxu0 %v1818
  %2434 = vmatprep.subr.bf16.mxu0 0
  %2435 = vmatpush1.bf16.msra.mxu0 %v1817
  %2436 = vmatprep.subr.bf16.mxu0 0
  %2437 = vmatpush1.bf16.msra.mxu0 %v1816
  %2438 = vmatprep.subr.bf16.mxu0 0
  %2439 = vmatpush1.bf16.msra.mxu0 %v1815
  %2440 = vmatprep.subr.bf16.mxu0 0
  %2441 = vmatpush1.bf16.msra.mxu0 %v1814
  %2442 = vmatprep.subr.bf16.mxu0 0
  %2443 = vmatpush2.bf16.msra.mxu0 %v1829
  %2444 = vmatprep.subr.bf16.mxu0 0
  %2445 = vmatpush2.bf16.msra.mxu0 %v1828
  %2446 = vmatprep.subr.bf16.mxu0 0
  %2447 = vmatpush2.bf16.msra.mxu0 %v1827
  %2448 = vmatprep.subr.bf16.mxu0 0
  %2449 = vmatpush2.bf16.msra.mxu0 %v1826
  %2450 = vmatprep.subr.bf16.mxu0 0
  %2451 = vmatpush2.bf16.msra.mxu0 %v1825
  %2452 = vmatprep.subr.bf16.mxu0 0
  %2453 = vmatpush2.bf16.msra.mxu0 %v1824
  %2454 = vmatprep.subr.bf16.mxu0 0
  %2455 = vmatpush2.bf16.msra.mxu0 %v1823
  %2456 = vmatprep.subr.bf16.mxu0 0
  %2457 = vmatpush2.bf16.msra.mxu0 %v1822
  %2458 = vmatprep.mubr.bf16.mxu0 %v671
  %2459 = vmatmul.mubr.bf16.gmra.mxu0 %v670
  %v2460 = vpop.f32.mrf.mxu0
  %v2461 = vadd.f32 %v2420, %v2460
  %v2462 = vpop.f32.mrf.mxu0
  %v2463 = vpop.f32.mrf.mxu0
  %v2464 = vadd.f32 %v2423, %v2463
  %v2465 = vpop.f32.mrf.mxu0
  %2466 = vdwg.mxu0
  %2467 = vmatprep.subr.bf16.mxu0 0
  %2468 = vmatpush1.bf16.msra.mxu0 %v1837
  %2469 = vmatprep.subr.bf16.mxu0 0
  %2470 = vmatpush1.bf16.msra.mxu0 %v1836
  %2471 = vmatprep.subr.bf16.mxu0 0
  %2472 = vmatpush1.bf16.msra.mxu0 %v1835
  %2473 = vmatprep.subr.bf16.mxu0 0
  %2474 = vmatpush1.bf16.msra.mxu0 %v1834
  %2475 = vmatprep.subr.bf16.mxu0 0
  %2476 = vmatpush1.bf16.msra.mxu0 %v1833
  %2477 = vmatprep.subr.bf16.mxu0 0
  %2478 = vmatpush1.bf16.msra.mxu0 %v1832
  %2479 = vmatprep.subr.bf16.mxu0 0
  %2480 = vmatpush1.bf16.msra.mxu0 %v1831
  %2481 = vmatprep.subr.bf16.mxu0 0
  %2482 = vmatpush1.bf16.msra.mxu0 %v1830
  %2483 = vmatprep.subr.bf16.mxu0 0
  %2484 = vmatpush2.bf16.msra.mxu0 %v1845
  %2485 = vmatprep.subr.bf16.mxu0 0
  %2486 = vmatpush2.bf16.msra.mxu0 %v1844
  %2487 = vmatprep.subr.bf16.mxu0 0
  %2488 = vmatpush2.bf16.msra.mxu0 %v1843
  %2489 = vmatprep.subr.bf16.mxu0 0
  %2490 = vmatpush2.bf16.msra.mxu0 %v1842
  %2491 = vmatprep.subr.bf16.mxu0 0
  %2492 = vmatpush2.bf16.msra.mxu0 %v1841
  %2493 = vmatprep.subr.bf16.mxu0 0
  %2494 = vmatpush2.bf16.msra.mxu0 %v1840
  %2495 = vmatprep.subr.bf16.mxu0 0
  %2496 = vmatpush2.bf16.msra.mxu0 %v1839
  %2497 = vmatprep.subr.bf16.mxu0 0
  %2498 = vmatpush2.bf16.msra.mxu0 %v1838
  %2499 = vmatprep.mubr.bf16.mxu0 %v673
  %2500 = vmatmul.mubr.bf16.gmra.mxu0 %v672
  %v2501 = vpop.f32.mrf.mxu0
  %v2502 = vadd.f32 %v2461, %v2501
  %v2503 = vpop.f32.mrf.mxu0
  %v2504 = vpop.f32.mrf.mxu0
  %v2505 = vadd.f32 %v2464, %v2504
  %v2506 = vpop.f32.mrf.mxu0
  %2507 = vdwg.mxu0
  %2508 = vmatprep.subr.bf16.mxu0 0
  %2509 = vmatpush1.bf16.msra.mxu0 %v1853
  %2510 = vmatprep.subr.bf16.mxu0 0
  %2511 = vmatpush1.bf16.msra.mxu0 %v1852
  %2512 = vmatprep.subr.bf16.mxu0 0
  %2513 = vmatpush1.bf16.msra.mxu0 %v1851
  %2514 = vmatprep.subr.bf16.mxu0 0
  %2515 = vmatpush1.bf16.msra.mxu0 %v1850
  %2516 = vmatprep.subr.bf16.mxu0 0
  %2517 = vmatpush1.bf16.msra.mxu0 %v1849
  %2518 = vmatprep.subr.bf16.mxu0 0
  %2519 = vmatpush1.bf16.msra.mxu0 %v1848
  %2520 = vmatprep.subr.bf16.mxu0 0
  %2521 = vmatpush1.bf16.msra.mxu0 %v1847
  %2522 = vmatprep.subr.bf16.mxu0 0
  %2523 = vmatpush1.bf16.msra.mxu0 %v1846
  %2524 = vmatprep.subr.bf16.mxu0 0
  %2525 = vmatpush2.bf16.msra.mxu0 %v1861
  %2526 = vmatprep.subr.bf16.mxu0 0
  %2527 = vmatpush2.bf16.msra.mxu0 %v1860
  %2528 = vmatprep.subr.bf16.mxu0 0
  %2529 = vmatpush2.bf16.msra.mxu0 %v1859
  %2530 = vmatprep.subr.bf16.mxu0 0
  %2531 = vmatpush2.bf16.msra.mxu0 %v1858
  %2532 = vmatprep.subr.bf16.mxu0 0
  %2533 = vmatpush2.bf16.msra.mxu0 %v1857
  %2534 = vmatprep.subr.bf16.mxu0 0
  %2535 = vmatpush2.bf16.msra.mxu0 %v1856
  %2536 = vmatprep.subr.bf16.mxu0 0
  %2537 = vmatpush2.bf16.msra.mxu0 %v1855
  %2538 = vmatprep.subr.bf16.mxu0 0
  %2539 = vmatpush2.bf16.msra.mxu0 %v1854
  %2540 = vmatprep.mubr.bf16.mxu0 %v675
  %2541 = vmatmul.mubr.bf16.gmra.mxu0 %v674
  %v2542 = vpop.f32.mrf.mxu0
  %v2543 = vadd.f32 %v2502, %v2542
  %v2544 = vpop.f32.mrf.mxu0
  %v2545 = vpop.f32.mrf.mxu0
  %v2546 = vadd.f32 %v2505, %v2545
  %v2547 = vpop.f32.mrf.mxu0
  %2548 = vdwg.mxu0
  %2549 = vmatprep.subr.bf16.mxu0 0
  %2550 = vmatpush1.bf16.msra.mxu0 %v1869
  %2551 = vmatprep.subr.bf16.mxu0 0
  %2552 = vmatpush1.bf16.msra.mxu0 %v1868
  %2553 = vmatprep.subr.bf16.mxu0 0
  %2554 = vmatpush1.bf16.msra.mxu0 %v1867
  %2555 = vmatprep.subr.bf16.mxu0 0
  %2556 = vmatpush1.bf16.msra.mxu0 %v1866
  %2557 = vmatprep.subr.bf16.mxu0 0
  %2558 = vmatpush1.bf16.msra.mxu0 %v1865
  %2559 = vmatprep.subr.bf16.mxu0 0
  %2560 = vmatpush1.bf16.msra.mxu0 %v1864
  %2561 = vmatprep.subr.bf16.mxu0 0
  %2562 = vmatpush1.bf16.msra.mxu0 %v1863
  %2563 = vmatprep.subr.bf16.mxu0 0
  %2564 = vmatpush1.bf16.msra.mxu0 %v1862
  %2565 = vmatprep.subr.bf16.mxu0 0
  %2566 = vmatpush2.bf16.msra.mxu0 %v1877
  %2567 = vmatprep.subr.bf16.mxu0 0
  %2568 = vmatpush2.bf16.msra.mxu0 %v1876
  %2569 = vmatprep.subr.bf16.mxu0 0
  %2570 = vmatpush2.bf16.msra.mxu0 %v1875
  %2571 = vmatprep.subr.bf16.mxu0 0
  %2572 = vmatpush2.bf16.msra.mxu0 %v1874
  %2573 = vmatprep.subr.bf16.mxu0 0
  %2574 = vmatpush2.bf16.msra.mxu0 %v1873
  %2575 = vmatprep.subr.bf16.mxu0 0
  %2576 = vmatpush2.bf16.msra.mxu0 %v1872
  %2577 = vmatprep.subr.bf16.mxu0 0
  %2578 = vmatpush2.bf16.msra.mxu0 %v1871
  %2579 = vmatprep.subr.bf16.mxu0 0
  %2580 = vmatpush2.bf16.msra.mxu0 %v1870
  %2581 = vmatprep.mubr.bf16.mxu0 %v677
  %2582 = vmatmul.mubr.bf16.gmra.mxu0 %v676
  %v2583 = vpop.f32.mrf.mxu0
  %v2584 = vadd.f32 %v2543, %v2583
  %v2585 = vpop.f32.mrf.mxu0
  %v2586 = vpop.f32.mrf.mxu0
  %v2587 = vadd.f32 %v2546, %v2586
  %v2588 = vpop.f32.mrf.mxu0
  %2589 = vdwg.mxu0
  %2590 = vmatprep.subr.bf16.mxu0 0
  %2591 = vmatpush1.bf16.msra.mxu0 %v1885
  %2592 = vmatprep.subr.bf16.mxu0 0
  %2593 = vmatpush1.bf16.msra.mxu0 %v1884
  %2594 = vmatprep.subr.bf16.mxu0 0
  %2595 = vmatpush1.bf16.msra.mxu0 %v1883
  %2596 = vmatprep.subr.bf16.mxu0 0
  %2597 = vmatpush1.bf16.msra.mxu0 %v1882
  %2598 = vmatprep.subr.bf16.mxu0 0
  %2599 = vmatpush1.bf16.msra.mxu0 %v1881
  %2600 = vmatprep.subr.bf16.mxu0 0
  %2601 = vmatpush1.bf16.msra.mxu0 %v1880
  %2602 = vmatprep.subr.bf16.mxu0 0
  %2603 = vmatpush1.bf16.msra.mxu0 %v1879
  %2604 = vmatprep.subr.bf16.mxu0 0
  %2605 = vmatpush1.bf16.msra.mxu0 %v1878
  %2606 = vmatprep.subr.bf16.mxu0 0
  %2607 = vmatpush2.bf16.msra.mxu0 %v1893
  %2608 = vmatprep.subr.bf16.mxu0 0
  %2609 = vmatpush2.bf16.msra.mxu0 %v1892
  %2610 = vmatprep.subr.bf16.mxu0 0
  %2611 = vmatpush2.bf16.msra.mxu0 %v1891
  %2612 = vmatprep.subr.bf16.mxu0 0
  %2613 = vmatpush2.bf16.msra.mxu0 %v1890
  %2614 = vmatprep.subr.bf16.mxu0 0
  %2615 = vmatpush2.bf16.msra.mxu0 %v1889
  %2616 = vmatprep.subr.bf16.mxu0 0
  %2617 = vmatpush2.bf16.msra.mxu0 %v1888
  %2618 = vmatprep.subr.bf16.mxu0 0
  %2619 = vmatpush2.bf16.msra.mxu0 %v1887
  %2620 = vmatprep.subr.bf16.mxu0 0
  %2621 = vmatpush2.bf16.msra.mxu0 %v1886
  %2622 = vmatprep.mubr.bf16.mxu0 %v679
  %2623 = vmatmul.mubr.bf16.gmra.mxu0 %v678
  %v2624 = vpop.f32.mrf.mxu0
  %v2625 = vadd.f32 %v2584, %v2624
  %v2626 = vpop.f32.mrf.mxu0
  %v2627 = vpop.f32.mrf.mxu0
  %v2628 = vadd.f32 %v2587, %v2627
  %v2629 = vpop.f32.mrf.mxu0
  %2630 = vdwg.mxu0
  %2631 = vmatprep.subr.bf16.mxu0 0
  %2632 = vmatpush1.bf16.msra.mxu0 %v1901
  %2633 = vmatprep.subr.bf16.mxu0 0
  %2634 = vmatpush1.bf16.msra.mxu0 %v1900
  %2635 = vmatprep.subr.bf16.mxu0 0
  %2636 = vmatpush1.bf16.msra.mxu0 %v1899
  %2637 = vmatprep.subr.bf16.mxu0 0
  %2638 = vmatpush1.bf16.msra.mxu0 %v1898
  %2639 = vmatprep.subr.bf16.mxu0 0
  %2640 = vmatpush1.bf16.msra.mxu0 %v1897
  %2641 = vmatprep.subr.bf16.mxu0 0
  %2642 = vmatpush1.bf16.msra.mxu0 %v1896
  %2643 = vmatprep.subr.bf16.mxu0 0
  %2644 = vmatpush1.bf16.msra.mxu0 %v1895
  %2645 = vmatprep.subr.bf16.mxu0 0
  %2646 = vmatpush1.bf16.msra.mxu0 %v1894
  %2647 = vmatprep.subr.bf16.mxu0 0
  %2648 = vmatpush2.bf16.msra.mxu0 %v1909
  %2649 = vmatprep.subr.bf16.mxu0 0
  %2650 = vmatpush2.bf16.msra.mxu0 %v1908
  %2651 = vmatprep.subr.bf16.mxu0 0
  %2652 = vmatpush2.bf16.msra.mxu0 %v1907
  %2653 = vmatprep.subr.bf16.mxu0 0
  %2654 = vmatpush2.bf16.msra.mxu0 %v1906
  %2655 = vmatprep.subr.bf16.mxu0 0
  %2656 = vmatpush2.bf16.msra.mxu0 %v1905
  %2657 = vmatprep.subr.bf16.mxu0 0
  %2658 = vmatpush2.bf16.msra.mxu0 %v1904
  %2659 = vmatprep.subr.bf16.mxu0 0
  %2660 = vmatpush2.bf16.msra.mxu0 %v1903
  %2661 = vmatprep.subr.bf16.mxu0 0
  %2662 = vmatpush2.bf16.msra.mxu0 %v1902
  %2663 = vmatprep.mubr.bf16.mxu0 %v681
  %2664 = vmatmul.mubr.bf16.gmra.mxu0 %v680
  %v2665 = vpop.f32.mrf.mxu0
  %v2666 = vadd.f32 %v2625, %v2665
  %v2667 = vpop.f32.mrf.mxu0
  %v2668 = vpop.f32.mrf.mxu0
  %v2669 = vadd.f32 %v2628, %v2668
  %v2670 = vpop.f32.mrf.mxu0
  %2671 = vdwg.mxu0
  %2672 = vmatprep.subr.bf16.mxu0 0
  %2673 = vmatpush1.bf16.msra.mxu0 %v1917
  %2674 = vmatprep.subr.bf16.mxu0 0
  %2675 = vmatpush1.bf16.msra.mxu0 %v1916
  %2676 = vmatprep.subr.bf16.mxu0 0
  %2677 = vmatpush1.bf16.msra.mxu0 %v1915
  %2678 = vmatprep.subr.bf16.mxu0 0
  %2679 = vmatpush1.bf16.msra.mxu0 %v1914
  %2680 = vmatprep.subr.bf16.mxu0 0
  %2681 = vmatpush1.bf16.msra.mxu0 %v1913
  %2682 = vmatprep.subr.bf16.mxu0 0
  %2683 = vmatpush1.bf16.msra.mxu0 %v1912
  %2684 = vmatprep.subr.bf16.mxu0 0
  %2685 = vmatpush1.bf16.msra.mxu0 %v1911
  %2686 = vmatprep.subr.bf16.mxu0 0
  %2687 = vmatpush1.bf16.msra.mxu0 %v1910
  %2688 = vmatprep.subr.bf16.mxu0 0
  %2689 = vmatpush2.bf16.msra.mxu0 %v1925
  %2690 = vmatprep.subr.bf16.mxu0 0
  %2691 = vmatpush2.bf16.msra.mxu0 %v1924
  %2692 = vmatprep.subr.bf16.mxu0 0
  %2693 = vmatpush2.bf16.msra.mxu0 %v1923
  %2694 = vmatprep.subr.bf16.mxu0 0
  %2695 = vmatpush2.bf16.msra.mxu0 %v1922
  %2696 = vmatprep.subr.bf16.mxu0 0
  %2697 = vmatpush2.bf16.msra.mxu0 %v1921
  %2698 = vmatprep.subr.bf16.mxu0 0
  %2699 = vmatpush2.bf16.msra.mxu0 %v1920
  %2700 = vmatprep.subr.bf16.mxu0 0
  %2701 = vmatpush2.bf16.msra.mxu0 %v1919
  %2702 = vmatprep.subr.bf16.mxu0 0
  %2703 = vmatpush2.bf16.msra.mxu0 %v1918
  %2704 = vmatprep.mubr.bf16.mxu0 %v683
  %2705 = vmatmul.mubr.bf16.gmra.mxu0 %v682
  %v2706 = vpop.f32.mrf.mxu0
  %v2707 = vadd.f32 %v2666, %v2706
  %v2708 = vpop.f32.mrf.mxu0
  %v2709 = vpop.f32.mrf.mxu0
  %v2710 = vadd.f32 %v2669, %v2709
  %v2711 = vpop.f32.mrf.mxu0
  %2712 = vdwg.mxu0
  %2713 = vmatprep.subr.bf16.mxu0 0
  %2714 = vmatpush1.bf16.msra.mxu0 %v1933
  %2715 = vmatprep.subr.bf16.mxu0 0
  %2716 = vmatpush1.bf16.msra.mxu0 %v1932
  %2717 = vmatprep.subr.bf16.mxu0 0
  %2718 = vmatpush1.bf16.msra.mxu0 %v1931
  %2719 = vmatprep.subr.bf16.mxu0 0
  %2720 = vmatpush1.bf16.msra.mxu0 %v1930
  %2721 = vmatprep.subr.bf16.mxu0 0
  %2722 = vmatpush1.bf16.msra.mxu0 %v1929
  %2723 = vmatprep.subr.bf16.mxu0 0
  %2724 = vmatpush1.bf16.msra.mxu0 %v1928
  %2725 = vmatprep.subr.bf16.mxu0 0
  %2726 = vmatpush1.bf16.msra.mxu0 %v1927
  %2727 = vmatprep.subr.bf16.mxu0 0
  %2728 = vmatpush1.bf16.msra.mxu0 %v1926
  %2729 = vmatprep.subr.bf16.mxu0 0
  %2730 = vmatpush2.bf16.msra.mxu0 %v1941
  %2731 = vmatprep.subr.bf16.mxu0 0
  %2732 = vmatpush2.bf16.msra.mxu0 %v1940
  %2733 = vmatprep.subr.bf16.mxu0 0
  %2734 = vmatpush2.bf16.msra.mxu0 %v1939
  %2735 = vmatprep.subr.bf16.mxu0 0
  %2736 = vmatpush2.bf16.msra.mxu0 %v1938
  %2737 = vmatprep.subr.bf16.mxu0 0
  %2738 = vmatpush2.bf16.msra.mxu0 %v1937
  %2739 = vmatprep.subr.bf16.mxu0 0
  %2740 = vmatpush2.bf16.msra.mxu0 %v1936
  %2741 = vmatprep.subr.bf16.mxu0 0
  %2742 = vmatpush2.bf16.msra.mxu0 %v1935
  %2743 = vmatprep.subr.bf16.mxu0 0
  %2744 = vmatpush2.bf16.msra.mxu0 %v1934
  %2745 = vmatprep.mubr.bf16.mxu0 %v685
  %2746 = vmatmul.mubr.bf16.gmra.mxu0 %v684
  %v2747 = vpop.f32.mrf.mxu0
  %v2748 = vadd.f32 %v2707, %v2747
  %v2749 = vpop.f32.mrf.mxu0
  %v2750 = vpop.f32.mrf.mxu0
  %v2751 = vadd.f32 %v2710, %v2750
  %v2752 = vpop.f32.mrf.mxu0
  %2753 = vdwg.mxu0
  %2754 = vmatprep.subr.bf16.mxu0 0
  %2755 = vmatpush1.bf16.msra.mxu0 %v1949
  %2756 = vmatprep.subr.bf16.mxu0 0
  %2757 = vmatpush1.bf16.msra.mxu0 %v1948
  %2758 = vmatprep.subr.bf16.mxu0 0
  %2759 = vmatpush1.bf16.msra.mxu0 %v1947
  %2760 = vmatprep.subr.bf16.mxu0 0
  %2761 = vmatpush1.bf16.msra.mxu0 %v1946
  %2762 = vmatprep.subr.bf16.mxu0 0
  %2763 = vmatpush1.bf16.msra.mxu0 %v1945
  %2764 = vmatprep.subr.bf16.mxu0 0
  %2765 = vmatpush1.bf16.msra.mxu0 %v1944
  %2766 = vmatprep.subr.bf16.mxu0 0
  %2767 = vmatpush1.bf16.msra.mxu0 %v1943
  %2768 = vmatprep.subr.bf16.mxu0 0
  %2769 = vmatpush1.bf16.msra.mxu0 %v1942
  %2770 = vmatprep.subr.bf16.mxu0 0
  %2771 = vmatpush2.bf16.msra.mxu0 %v1957
  %2772 = vmatprep.subr.bf16.mxu0 0
  %2773 = vmatpush2.bf16.msra.mxu0 %v1956
  %2774 = vmatprep.subr.bf16.mxu0 0
  %2775 = vmatpush2.bf16.msra.mxu0 %v1955
  %2776 = vmatprep.subr.bf16.mxu0 0
  %2777 = vmatpush2.bf16.msra.mxu0 %v1954
  %2778 = vmatprep.subr.bf16.mxu0 0
  %2779 = vmatpush2.bf16.msra.mxu0 %v1953
  %2780 = vmatprep.subr.bf16.mxu0 0
  %2781 = vmatpush2.bf16.msra.mxu0 %v1952
  %2782 = vmatprep.subr.bf16.mxu0 0
  %2783 = vmatpush2.bf16.msra.mxu0 %v1951
  %2784 = vmatprep.subr.bf16.mxu0 0
  %2785 = vmatpush2.bf16.msra.mxu0 %v1950
  %2786 = vmatprep.mubr.bf16.mxu0 %v687
  %2787 = vmatmul.mubr.bf16.gmra.mxu0 %v686
  %v2788 = vpop.f32.mrf.mxu0
  %v2789 = vadd.f32 %v2748, %v2788
  %v2790 = vpop.f32.mrf.mxu0
  %v2791 = vpop.f32.mrf.mxu0
  %v2792 = vadd.f32 %v2751, %v2791
  %v2793 = vpop.f32.mrf.mxu0
  %2794 = vdwg.mxu0
  %2795 = vmatprep.subr.bf16.mxu0 0
  %2796 = vmatpush1.bf16.msra.mxu0 %v1965
  %2797 = vmatprep.subr.bf16.mxu0 0
  %2798 = vmatpush1.bf16.msra.mxu0 %v1964
  %2799 = vmatprep.subr.bf16.mxu0 0
  %2800 = vmatpush1.bf16.msra.mxu0 %v1963
  %2801 = vmatprep.subr.bf16.mxu0 0
  %2802 = vmatpush1.bf16.msra.mxu0 %v1962
  %2803 = vmatprep.subr.bf16.mxu0 0
  %2804 = vmatpush1.bf16.msra.mxu0 %v1961
  %2805 = vmatprep.subr.bf16.mxu0 0
  %2806 = vmatpush1.bf16.msra.mxu0 %v1960
  %2807 = vmatprep.subr.bf16.mxu0 0
  %2808 = vmatpush1.bf16.msra.mxu0 %v1959
  %2809 = vmatprep.subr.bf16.mxu0 0
  %2810 = vmatpush1.bf16.msra.mxu0 %v1958
  %2811 = vmatprep.subr.bf16.mxu0 0
  %2812 = vmatpush2.bf16.msra.mxu0 %v1973
  %2813 = vmatprep.subr.bf16.mxu0 0
  %2814 = vmatpush2.bf16.msra.mxu0 %v1972
  %2815 = vmatprep.subr.bf16.mxu0 0
  %2816 = vmatpush2.bf16.msra.mxu0 %v1971
  %2817 = vmatprep.subr.bf16.mxu0 0
  %2818 = vmatpush2.bf16.msra.mxu0 %v1970
  %2819 = vmatprep.subr.bf16.mxu0 0
  %2820 = vmatpush2.bf16.msra.mxu0 %v1969
  %2821 = vmatprep.subr.bf16.mxu0 0
  %2822 = vmatpush2.bf16.msra.mxu0 %v1968
  %2823 = vmatprep.subr.bf16.mxu0 0
  %2824 = vmatpush2.bf16.msra.mxu0 %v1967
  %2825 = vmatprep.subr.bf16.mxu0 0
  %2826 = vmatpush2.bf16.msra.mxu0 %v1966
  %2827 = vmatprep.mubr.bf16.mxu0 %v689
  %2828 = vmatmul.mubr.bf16.gmra.mxu0 %v688
  %v2829 = vpop.f32.mrf.mxu0
  %v2830 = vadd.f32 %v2789, %v2829
  %v2831 = vpop.f32.mrf.mxu0
  %v2832 = vpop.f32.mrf.mxu0
  %v2833 = vadd.f32 %v2792, %v2832
  %v2834 = vpop.f32.mrf.mxu0
  %2835 = vdwg.mxu0
  %2836 = vmatprep.subr.bf16.mxu0 0
  %2837 = vmatpush1.bf16.msra.mxu0 %v1981
  %2838 = vmatprep.subr.bf16.mxu0 0
  %2839 = vmatpush1.bf16.msra.mxu0 %v1980
  %2840 = vmatprep.subr.bf16.mxu0 0
  %2841 = vmatpush1.bf16.msra.mxu0 %v1979
  %2842 = vmatprep.subr.bf16.mxu0 0
  %2843 = vmatpush1.bf16.msra.mxu0 %v1978
  %2844 = vmatprep.subr.bf16.mxu0 0
  %2845 = vmatpush1.bf16.msra.mxu0 %v1977
  %2846 = vmatprep.subr.bf16.mxu0 0
  %2847 = vmatpush1.bf16.msra.mxu0 %v1976
  %2848 = vmatprep.subr.bf16.mxu0 0
  %2849 = vmatpush1.bf16.msra.mxu0 %v1975
  %2850 = vmatprep.subr.bf16.mxu0 0
  %2851 = vmatpush1.bf16.msra.mxu0 %v1974
  %2852 = vmatprep.subr.bf16.mxu0 0
  %2853 = vmatpush2.bf16.msra.mxu0 %v1989
  %2854 = vmatprep.subr.bf16.mxu0 0
  %2855 = vmatpush2.bf16.msra.mxu0 %v1988
  %2856 = vmatprep.subr.bf16.mxu0 0
  %2857 = vmatpush2.bf16.msra.mxu0 %v1987
  %2858 = vmatprep.subr.bf16.mxu0 0
  %2859 = vmatpush2.bf16.msra.mxu0 %v1986
  %2860 = vmatprep.subr.bf16.mxu0 0
  %2861 = vmatpush2.bf16.msra.mxu0 %v1985
  %2862 = vmatprep.subr.bf16.mxu0 0
  %2863 = vmatpush2.bf16.msra.mxu0 %v1984
  %2864 = vmatprep.subr.bf16.mxu0 0
  %2865 = vmatpush2.bf16.msra.mxu0 %v1983
  %2866 = vmatprep.subr.bf16.mxu0 0
  %2867 = vmatpush2.bf16.msra.mxu0 %v1982
  %2868 = vmatprep.mubr.bf16.mxu0 %v691
  %2869 = vmatmul.mubr.bf16.gmra.mxu0 %v690
  %v2870 = vpop.f32.mrf.mxu0
  %v2871 = vadd.f32 %v2830, %v2870
  %v2872 = vpop.f32.mrf.mxu0
  %v2873 = vpop.f32.mrf.mxu0
  %v2874 = vadd.f32 %v2833, %v2873
  %v2875 = vpop.f32.mrf.mxu0
  %2876 = vdwg.mxu0
  %2877 = vmatprep.subr.bf16.mxu0 0
  %2878 = vmatpush1.bf16.msra.mxu0 %v1997
  %2879 = vmatprep.subr.bf16.mxu0 0
  %2880 = vmatpush1.bf16.msra.mxu0 %v1996
  %2881 = vmatprep.subr.bf16.mxu0 0
  %2882 = vmatpush1.bf16.msra.mxu0 %v1995
  %2883 = vmatprep.subr.bf16.mxu0 0
  %2884 = vmatpush1.bf16.msra.mxu0 %v1994
  %2885 = vmatprep.subr.bf16.mxu0 0
  %2886 = vmatpush1.bf16.msra.mxu0 %v1993
  %2887 = vmatprep.subr.bf16.mxu0 0
  %2888 = vmatpush1.bf16.msra.mxu0 %v1992
  %2889 = vmatprep.subr.bf16.mxu0 0
  %2890 = vmatpush1.bf16.msra.mxu0 %v1991
  %2891 = vmatprep.subr.bf16.mxu0 0
  %2892 = vmatpush1.bf16.msra.mxu0 %v1990
  %2893 = vmatprep.subr.bf16.mxu0 0
  %2894 = vmatpush2.bf16.msra.mxu0 %v2005
  %2895 = vmatprep.subr.bf16.mxu0 0
  %2896 = vmatpush2.bf16.msra.mxu0 %v2004
  %2897 = vmatprep.subr.bf16.mxu0 0
  %2898 = vmatpush2.bf16.msra.mxu0 %v2003
  %2899 = vmatprep.subr.bf16.mxu0 0
  %2900 = vmatpush2.bf16.msra.mxu0 %v2002
  %2901 = vmatprep.subr.bf16.mxu0 0
  %2902 = vmatpush2.bf16.msra.mxu0 %v2001
  %2903 = vmatprep.subr.bf16.mxu0 0
  %2904 = vmatpush2.bf16.msra.mxu0 %v2000
  %2905 = vmatprep.subr.bf16.mxu0 0
  %2906 = vmatpush2.bf16.msra.mxu0 %v1999
  %2907 = vmatprep.subr.bf16.mxu0 0
  %2908 = vmatpush2.bf16.msra.mxu0 %v1998
  %2909 = vmatprep.mubr.bf16.mxu0 %v693
  %2910 = vmatmul.mubr.bf16.gmra.mxu0 %v692
  %v2911 = vpop.f32.mrf.mxu0
  %v2912 = vadd.f32 %v2871, %v2911
  %v2913 = vpop.f32.mrf.mxu0
  %v2914 = vpop.f32.mrf.mxu0
  %v2915 = vadd.f32 %v2874, %v2914
  %v2916 = vpop.f32.mrf.mxu0
  %2917 = vdwg.mxu0
  %v2918 = vsub.f32 0.0, %v2912
  %v2919 = vsub.f32 0.0, %v2915
  %v2920 = vmul.f32 %v2918, 1.442695
  %v2921 = vpow.pop %v2920
  %v2922 = vmul.f32 %v2919, 1.442695
  %v2923 = vpow.pop %v2922
  %v2924 = vadd.f32 %v2921, 1.0
  %v2925 = vadd.f32 %v2923, 1.0
  %v2926 = vrcp.pop %v2924
  %v2927 = vmul.f32 1.0, %v2926
  %v2928 = vrcp.pop %v2925
  %v2929 = vmul.f32 1.0, %v2928
  %2930 = vst [vmem:[%s3] sm:$0xff] %v2927
  %2931 = vst [vmem:[%s3 + $0x8] sm:$0x1] %v2929
  // Predicated region
  $region14: #{discriminator_forward.3} parent=0 // pred_check
    _
  $region15: #{discriminator_forward.3} parent=0 // pred_check_branch
    %2933 = sbr.rel (0) target = $region17
  $region16: #{discriminator_forward.3} parent=0 // pred_region
    _
  $region17: #{discriminator_forward.3} parent=0 // pred_fallthru
    _
  // Predicated region
  $region18: #{discriminator_forward.3} parent=0 // pred_check
    _
  $region19: #{discriminator_forward.3} parent=0 // pred_check_branch
    %2935 = sbr.rel (0) target = $region21
  $region20: #{discriminator_forward.3} parent=0 // pred_region
    _
  $region21: #{discriminator_forward.3} parent=0 // pred_fallthru
    _

</llo_original>
